<compile_context>
chip_gen: v7x
topology: tpu7x:2x2x1
jax: 0.10.0
libtpu: 0.0.40
codegen_flags: <defaults>
</compile_context>

<pallas_src>
import jax
import jax.numpy as jnp
from jax.experimental import pallas as pl
from jax.experimental.pallas import tpu as pltpu


HIDDEN = 256
FEAT_ALIGN = 16  # sublane alignment for the split W1 rows (covers bf16 packing)


def _round_up(n, m):
    return ((n + m - 1) // m) * m


def soft_q_kernel(x_ref, a_ref, w1x_ref, w1a_ref, b1_ref, w2_ref, b2_ref,
                  w3t_ref, b3_ref, out_ref):
    """Fused 3-layer MLP for one batch tile.

    h1 = relu(x@W1_obs + a@W1_act + b1);  h2 = relu(h1@W2 + b2)
    q  = (W3ᵀ @ h2ᵀ) + b3  computed lane-packed as a (1, bm) row.
    MXU operands use the weights' dtype (bf16 fast path / f32 strict path);
    accumulation, bias adds and ReLU stay in f32.
    """
    cdt = w2_ref.dtype
    prec = jax.lax.Precision.HIGHEST if cdt == jnp.float32 else None

    h1 = (jnp.dot(x_ref[...], w1x_ref[...], precision=prec,
                  preferred_element_type=jnp.float32)
          + jnp.dot(a_ref[...], w1a_ref[...], precision=prec,
                    preferred_element_type=jnp.float32)
          + b1_ref[...])
    h1 = jnp.maximum(h1, 0.0).astype(cdt)

    h2 = (jnp.dot(h1, w2_ref[...], precision=prec,
                  preferred_element_type=jnp.float32) + b2_ref[...])
    h2 = jnp.maximum(h2, 0.0).astype(cdt)

    # Lane-packed final layer: contract HIDDEN of (1,H) W3ᵀ with HIDDEN of (bm,H) h2
    # -> (1, bm) row, written unmasked into the lane-dense output block.
    q = jax.lax.dot_general(w3t_ref[...], h2,
                            dimension_numbers=(((1,), (1,)), ((), ())),
                            precision=prec,
                            preferred_element_type=jnp.float32)
    out_ref[...] = (q + b3_ref[...]).astype(out_ref.dtype)


def prepare_params(params, obs_dim, *, mxu_dtype=jnp.bfloat16):
    """One-time weight packing (hoisted out of the per-call forward).

    Splits W1 into obs/act halves (so cat([x, a]) never materializes), pads the
    split K dims to FEAT_ALIGN, casts matmul operands to `mxu_dtype`, transposes
    W3 to a (1, HIDDEN) row for the lane-packed output, keeps biases in f32.
    """
    w1, b1, w2, b2, w3, b3 = params
    f32 = jnp.float32
    d_in = w1.shape[0]
    act_dim = d_in - obs_dim
    obs_p = _round_up(obs_dim, FEAT_ALIGN)
    act_p = _round_up(act_dim, FEAT_ALIGN)

    w1_obs = jnp.pad(w1[:obs_dim], ((0, obs_p - obs_dim), (0, 0))).astype(mxu_dtype)
    w1_act = jnp.pad(w1[obs_dim:], ((0, act_p - act_dim), (0, 0))).astype(mxu_dtype)
    w2_c = w2.astype(mxu_dtype)
    w3t = w3.reshape(HIDDEN, 1).T.astype(mxu_dtype)          # (1, HIDDEN)
    return (w1_obs, w1_act,
            b1.reshape(1, HIDDEN).astype(f32),
            w2_c,
            b2.reshape(1, HIDDEN).astype(f32),
            w3t,
            b3.reshape(1, 1).astype(f32))


def soft_q_forward(x, a, prepped, *, bm=1024):
    """x: (B, obs_dim), a: (B, act_dim), prepped: prepare_params(...) -> (B, 1)."""
    w1_obs, w1_act, b1, w2, b2, w3t, b3 = prepped
    B, obs_dim = x.shape
    act_dim = a.shape[1]
    obs_p, act_p = w1_obs.shape[0], w1_act.shape[0]
    mxu_dtype = w2.dtype

    # Balanced batch tiling: large tiles amortize the ~0.35us per-grid-step cost,
    # the tail is balanced instead of padded to a full tile, the tile count is
    # kept even (when >1) so v7x's 2 TensorCores share the "parallel" axis, and
    # tiles stay 128-aligned so the lane-packed output block is an unmasked vst.
    num_tiles = max(1, pl.cdiv(B, bm))
    if num_tiles > 1 and num_tiles % 2:
        num_tiles += 1
    bm_eff = _round_up(pl.cdiv(B, num_tiles), 128)
    B_pad = num_tiles * bm_eff
    pad_b = B_pad - B

    # Single fused pad per input: bf16 (or f32) cast + batch pad + feature pad.
    x_p = jnp.pad(x.astype(mxu_dtype), ((0, pad_b), (0, obs_p - obs_dim)))
    a_p = jnp.pad(a.astype(mxu_dtype), ((0, pad_b), (0, act_p - act_dim)))

    out = pl.pallas_call(
        soft_q_kernel,
        out_shape=jax.ShapeDtypeStruct((1, B_pad), jnp.float32),
        grid_spec=pltpu.PrefetchScalarGridSpec(
            num_scalar_prefetch=0,
            grid=(num_tiles,),
            in_specs=[
                pl.BlockSpec((bm_eff, obs_p), lambda i: (i, 0)),    # obs tile
                pl.BlockSpec((bm_eff, act_p), lambda i: (i, 0)),    # act tile
                pl.BlockSpec((obs_p, HIDDEN), lambda i: (0, 0)),    # W1_obs (resident)
                pl.BlockSpec((act_p, HIDDEN), lambda i: (0, 0)),    # W1_act (resident)
                pl.BlockSpec((1, HIDDEN), lambda i: (0, 0)),        # b1
                pl.BlockSpec((HIDDEN, HIDDEN), lambda i: (0, 0)),   # W2
                pl.BlockSpec((1, HIDDEN), lambda i: (0, 0)),        # b2
                pl.BlockSpec((1, HIDDEN), lambda i: (0, 0)),        # W3ᵀ row
                pl.BlockSpec((1, 1), lambda i: (0, 0)),             # b3 scalar
            ],
            out_specs=pl.BlockSpec((1, bm_eff), lambda i: (0, i)),  # lane-packed Q row
        ),
        compiler_params=pltpu.CompilerParams(
            dimension_semantics=("parallel",),
        ),
    )(x_p, a_p, w1_obs, w1_act, b1, w2, b2, w3t, b3)

    # Drop batch padding; keep exactly B rows before any downstream reduction.
    return out[0, :B].reshape(B, 1)


def init_params(key, obs_dim, act_dim):
    """Deterministic init mimicking nn.Linear's U(-1/sqrt(fan_in), 1/sqrt(fan_in))."""
    d_in = obs_dim + act_dim
    keys = jax.random.split(key, 6)

    def lin(kw, kb, fan_in, fan_out):
        bound = 1.0 / jnp.sqrt(float(fan_in))
        w = jax.random.uniform(kw, (fan_in, fan_out), jnp.float32, -bound, bound)
        b = jax.random.uniform(kb, (1, fan_out), jnp.float32, -bound, bound)
        return w, b

    w1, b1 = lin(keys[0], keys[1], d_in, HIDDEN)
    w2, b2 = lin(keys[2], keys[3], HIDDEN, HIDDEN)
    w3, b3 = lin(keys[4], keys[5], HIDDEN, 1)
    return (w1, b1, w2, b2, w3, b3)


def soft_q_reference(x, a, params):
    """Pure-JAX f32 reference for correctness checking."""
    w1, b1, w2, b2, w3, b3 = params
    xa = jnp.concatenate([x, a], axis=1)
    h1 = jnp.maximum(xa @ w1 + b1, 0.0)
    h2 = jnp.maximum(h1 @ w2 + b2, 0.0)
    return h2 @ w3 + b3


if __name__ == "__main__":
    key = jax.random.PRNGKey(0)
    k_obs, k_act, k_param = jax.random.split(key, 3)

    # Odd sizes exercise batch balancing/padding (300 -> one 384-row tile, or an
    # even 4x128 grid with bm=128) and unaligned feature dims (19, 6).
    batch, obs_dim, act_dim = 300, 19, 6
    x = jax.random.normal(k_obs, (batch, obs_dim), jnp.float32)
    a = jax.random.normal(k_act, (batch, act_dim), jnp.float32)
    params = init_params(k_param, obs_dim, act_dim)

    q_ref = soft_q_reference(x, a, params)

    fwd = jax.jit(soft_q_forward, static_argnames=("bm",))

    # Strict check: f32 MXU path (HIGHEST-precision dots) must match tightly.
    prep_f32 = prepare_params(params, obs_dim, mxu_dtype=jnp.float32)
    q_f32 = jax.block_until_ready(fwd(x, a, prep_f32))
    assert q_f32.shape == (batch, 1)
    assert jnp.allclose(q_f32, q_ref, atol=1e-4, rtol=1e-4), "f32 path mismatch"

    # Fast path: bf16 MXU operands with f32 accumulation (default), single tile.
    prep_bf16 = prepare_params(params, obs_dim)
    q_bf16 = jax.block_until_ready(fwd(x, a, prep_bf16))
    assert q_bf16.shape == (batch, 1)
    assert jnp.allclose(q_bf16, q_ref, atol=5e-2, rtol=5e-2), "bf16 path mismatch"

    # Multi-tile path: even grid length (4 x 128 rows) as used for v7x megacore.
    q_mt = jax.block_until_ready(fwd(x, a, prep_bf16, bm=128))
    assert q_mt.shape == (batch, 1)
    assert jnp.allclose(q_mt, q_ref, atol=5e-2, rtol=5e-2), "multi-tile path mismatch"

    print("KERNEL_OK")
</pallas_src>

<mosaic_0001>
module attributes {stable_mosaic.version = 11 : i64} {
  func.func @soft_q_kernel(%arg0: i32, %arg1: memref<384x32xf32, #tpu.memory_space<vmem>>, %arg2: memref<384x16xf32, #tpu.memory_space<vmem>>, %arg3: memref<32x256xf32, #tpu.memory_space<vmem>>, %arg4: memref<16x256xf32, #tpu.memory_space<vmem>>, %arg5: memref<1x256xf32, #tpu.memory_space<vmem>>, %arg6: memref<256x256xf32, #tpu.memory_space<vmem>>, %arg7: memref<1x256xf32, #tpu.memory_space<vmem>>, %arg8: memref<1x256xf32, #tpu.memory_space<vmem>>, %arg9: memref<1x1xf32, #tpu.memory_space<vmem>>, %arg10: memref<1x384xf32, #tpu.memory_space<vmem>>) attributes {dimension_semantics = [#tpu.dimension_semantics<parallel>], iteration_bounds = array<i64: 1>, scalar_prefetch = 0 : i64, scratch_operands = 0 : i64, tpu.core_type = #tpu.core_type<tc>, window_params = [{transform_indices = @transform_0, window_bounds = array<i64: 384, 32>}, {transform_indices = @transform_1, window_bounds = array<i64: 384, 16>}, {pipeline_mode = #tpu.pipeline_mode<synchronous>, transform_indices = @transform_2, window_bounds = array<i64: 32, 256>}, {pipeline_mode = #tpu.pipeline_mode<synchronous>, transform_indices = @transform_3, window_bounds = array<i64: 16, 256>}, {pipeline_mode = #tpu.pipeline_mode<synchronous>, transform_indices = @transform_4, window_bounds = array<i64: 1, 256>}, {pipeline_mode = #tpu.pipeline_mode<synchronous>, transform_indices = @transform_5, window_bounds = array<i64: 256, 256>}, {pipeline_mode = #tpu.pipeline_mode<synchronous>, transform_indices = @transform_6, window_bounds = array<i64: 1, 256>}, {pipeline_mode = #tpu.pipeline_mode<synchronous>, transform_indices = @transform_7, window_bounds = array<i64: 1, 256>}, {pipeline_mode = #tpu.pipeline_mode<synchronous>, transform_indices = @transform_8, window_bounds = array<i64: 1, 1>}, {transform_indices = @transform_9, window_bounds = array<i64: 1, 384>}]} {
    %c0 = arith.constant 0 : index
    %c0_0 = arith.constant 0 : index
    %0 = vector.load %arg1[%c0, %c0_0] : memref<384x32xf32, #tpu.memory_space<vmem>>, vector<384x32xf32>
    %c0_1 = arith.constant 0 : index
    %c0_2 = arith.constant 0 : index
    %1 = vector.load %arg3[%c0_1, %c0_2] : memref<32x256xf32, #tpu.memory_space<vmem>>, vector<32x256xf32>
    %cst = arith.constant dense<0.000000e+00> : vector<384x256xf32>
    %2 = tpu.matmul %0, %1, %cst {dimension_numbers = #tpu.dot_dimension_numbers<[1], [0], [0], [1], [0, 0, 1, 1], [], []>, precision = #tpu.contract_precision<fp32>} : vector<384x32xf32>, vector<32x256xf32>, vector<384x256xf32> -> vector<384x256xf32>
    %c0_3 = arith.constant 0 : index
    %c0_4 = arith.constant 0 : index
    %3 = vector.load %arg2[%c0_3, %c0_4] : memref<384x16xf32, #tpu.memory_space<vmem>>, vector<384x16xf32>
    %c0_5 = arith.constant 0 : index
    %c0_6 = arith.constant 0 : index
    %4 = vector.load %arg4[%c0_5, %c0_6] : memref<16x256xf32, #tpu.memory_space<vmem>>, vector<16x256xf32>
    %cst_7 = arith.constant dense<0.000000e+00> : vector<384x256xf32>
    %5 = tpu.matmul %3, %4, %cst_7 {dimension_numbers = #tpu.dot_dimension_numbers<[1], [0], [0], [1], [0, 0, 1, 1], [], []>, precision = #tpu.contract_precision<fp32>} : vector<384x16xf32>, vector<16x256xf32>, vector<384x256xf32> -> vector<384x256xf32>
    %6 = arith.addf %2, %5 : vector<384x256xf32>
    %c0_8 = arith.constant 0 : index
    %c0_9 = arith.constant 0 : index
    %7 = vector.load %arg5[%c0_8, %c0_9] : memref<1x256xf32, #tpu.memory_space<vmem>>, vector<1x256xf32>
    %8 = vector.broadcast %7 : vector<1x256xf32> to vector<384x256xf32>
    %9 = arith.addf %6, %8 : vector<384x256xf32>
    %cst_10 = arith.constant 0.000000e+00 : f32
    %10 = vector.broadcast %cst_10 : f32 to vector<384x256xf32>
    %11 = arith.maximumf %9, %10 : vector<384x256xf32>
    %c0_11 = arith.constant 0 : index
    %c0_12 = arith.constant 0 : index
    %12 = vector.load %arg6[%c0_11, %c0_12] : memref<256x256xf32, #tpu.memory_space<vmem>>, vector<256x256xf32>
    %cst_13 = arith.constant dense<0.000000e+00> : vector<384x256xf32>
    %13 = tpu.matmul %11, %12, %cst_13 {dimension_numbers = #tpu.dot_dimension_numbers<[1], [0], [0], [1], [0, 0, 1, 1], [], []>, precision = #tpu.contract_precision<fp32>} : vector<384x256xf32>, vector<256x256xf32>, vector<384x256xf32> -> vector<384x256xf32>
    %c0_14 = arith.constant 0 : index
    %c0_15 = arith.constant 0 : index
    %14 = vector.load %arg7[%c0_14, %c0_15] : memref<1x256xf32, #tpu.memory_space<vmem>>, vector<1x256xf32>
    %15 = vector.broadcast %14 : vector<1x256xf32> to vector<384x256xf32>
    %16 = arith.addf %13, %15 : vector<384x256xf32>
    %cst_16 = arith.constant 0.000000e+00 : f32
    %17 = vector.broadcast %cst_16 : f32 to vector<384x256xf32>
    %18 = arith.maximumf %16, %17 : vector<384x256xf32>
    %c0_17 = arith.constant 0 : index
    %c0_18 = arith.constant 0 : index
    %19 = vector.load %arg8[%c0_17, %c0_18] : memref<1x256xf32, #tpu.memory_space<vmem>>, vector<1x256xf32>
    %cst_19 = arith.constant dense<0.000000e+00> : vector<1x384xf32>
    %20 = tpu.matmul %19, %18, %cst_19 {dimension_numbers = #tpu.dot_dimension_numbers<[1], [1], [0], [0], [0, 0, 1, 0], [], []>, precision = #tpu.contract_precision<fp32>} : vector<1x256xf32>, vector<384x256xf32>, vector<1x384xf32> -> vector<1x384xf32>
    %c0_20 = arith.constant 0 : index
    %c0_21 = arith.constant 0 : index
    %21 = vector.load %arg9[%c0_20, %c0_21] : memref<1x1xf32, #tpu.memory_space<vmem>>, vector<1x1xf32>
    %22 = vector.broadcast %21 : vector<1x1xf32> to vector<1x384xf32>
    %23 = arith.addf %20, %22 : vector<1x384xf32>
    %c0_22 = arith.constant 0 : index
    %c0_23 = arith.constant 0 : index
    %24 = vector.load %arg10[%c0_22, %c0_23] : memref<1x384xf32, #tpu.memory_space<vmem>>, vector<1x384xf32>
    tpu.vector_store %arg10[%c0_22, %c0_23], %23 {strides = array<i32>} : memref<1x384xf32, #tpu.memory_space<vmem>>, vector<1x384xf32>,
    return
  }
  func.func @transform_0(%arg0: i32) -> (i32, i32) {
    %c0_i32 = arith.constant 0 : i32
    %c0_i32_0 = arith.constant 0 : i32
    return %arg0, %c0_i32 : i32, i32
  }
  func.func @transform_1(%arg0: i32) -> (i32, i32) {
    %c0_i32 = arith.constant 0 : i32
    %c0_i32_0 = arith.constant 0 : i32
    return %arg0, %c0_i32 : i32, i32
  }
  func.func @transform_2(%arg0: i32) -> (i32, i32) {
    %c0_i32 = arith.constant 0 : i32
    %c0_i32_0 = arith.constant 0 : i32
    %c0_i32_1 = arith.constant 0 : i32
    return %c0_i32, %c0_i32_0 : i32, i32
  }
  func.func @transform_3(%arg0: i32) -> (i32, i32) {
    %c0_i32 = arith.constant 0 : i32
    %c0_i32_0 = arith.constant 0 : i32
    %c0_i32_1 = arith.constant 0 : i32
    return %c0_i32, %c0_i32_0 : i32, i32
  }
  func.func @transform_4(%arg0: i32) -> (i32, i32) {
    %c0_i32 = arith.constant 0 : i32
    %c0_i32_0 = arith.constant 0 : i32
    %c0_i32_1 = arith.constant 0 : i32
    return %c0_i32, %c0_i32_0 : i32, i32
  }
  func.func @transform_5(%arg0: i32) -> (i32, i32) {
    %c0_i32 = arith.constant 0 : i32
    %c0_i32_0 = arith.constant 0 : i32
    %c0_i32_1 = arith.constant 0 : i32
    return %c0_i32, %c0_i32_0 : i32, i32
  }
  func.func @transform_6(%arg0: i32) -> (i32, i32) {
    %c0_i32 = arith.constant 0 : i32
    %c0_i32_0 = arith.constant 0 : i32
    %c0_i32_1 = arith.constant 0 : i32
    return %c0_i32, %c0_i32_0 : i32, i32
  }
  func.func @transform_7(%arg0: i32) -> (i32, i32) {
    %c0_i32 = arith.constant 0 : i32
    %c0_i32_0 = arith.constant 0 : i32
    %c0_i32_1 = arith.constant 0 : i32
    return %c0_i32, %c0_i32_0 : i32, i32
  }
  func.func @transform_8(%arg0: i32) -> (i32, i32) {
    %c0_i32 = arith.constant 0 : i32
    %c0_i32_0 = arith.constant 0 : i32
    %c0_i32_1 = arith.constant 0 : i32
    return %c0_i32, %c0_i32_0 : i32, i32
  }
  func.func @transform_9(%arg0: i32) -> (i32, i32) {
    %c0_i32 = arith.constant 0 : i32
    %c0_i32_0 = arith.constant 0 : i32
    return %c0_i32, %arg0 : i32, i32
  }
}

</mosaic_0001>

<llo_original>
// kernel: soft_q_forward.1
$region0: #{soft_q_forward.1}
  #allocation0 [shape = 'u32[]', space=smem, size = 0x4, offset = 0x4, fixed_abs, tag = 'smem constant byte address 0x4 - core index']
  #allocation1 [shape = 'u32[144,128]{1,0:T(1,128)}', space=vmem, size = 0x12000, scoped, tag = 'internal scratch']
  #allocation2 [shape = 'f32[1,1]{1,0:T(1,128)S(1)}', space=vmem, size = 0x200, scoped, tag = 'scoped memory for soft_q_forward.1']
  %s0 = inlined_call_operand.vmem [shape: f32[384,32], index: 0, kind: input, shape index: {}]
  %s1 = inlined_call_operand.vmem [shape: f32[384,16], index: 1, kind: input, shape index: {}]
  %s2 = inlined_call_operand.vmem [shape: f32[32,256], index: 2, kind: input, shape index: {}]
  %s3 = inlined_call_operand.vmem [shape: f32[16,256], index: 3, kind: input, shape index: {}]
  %s4 = inlined_call_operand.vmem [shape: f32[1,256], index: 4, kind: input, shape index: {}]
  %s5 = inlined_call_operand.vmem [shape: f32[256,256], index: 5, kind: input, shape index: {}]
  %s6 = inlined_call_operand.vmem [shape: f32[1,256], index: 6, kind: input, shape index: {}]
  %s7 = inlined_call_operand.vmem [shape: f32[1,256], index: 7, kind: input, shape index: {}]
  %s8 = inlined_call_operand.<no memory space> [shape: f32[1,1], index: 8, kind: input, shape index: {}]
  %s9 = inlined_call_operand.vmem [shape: f32[1,384], index: 9, kind: output, shape index: {}]
  %s10 = sld [smem:[#allocation0]]
  $region46: #{soft_q_forward.1} parent=0
    _
  %s12 = ssub.s32 1, %s10
  %s13 = scalar_select 0, %s12, %s10
  %v14 = vstv %s8
  %15 = vst [vmem:[#allocation2] sm:$0x1] %v14
  // Predicated region
  $region2: #{soft_q_forward.1} parent=0 // pred_check
    _
  $region3: #{soft_q_forward.1} parent=0 // pred_check_branch
    %17 = sbr.rel (0) target = $region5
  $region4: #{soft_q_forward.1} parent=0 // pred_region
    _
  $region5: #{soft_q_forward.1} parent=0 // pred_fallthru
    _
  // Predicated region
  $region6: #{soft_q_forward.1} parent=0 // pred_check
    _
  $region7: #{soft_q_forward.1} parent=0 // pred_check_branch
    %19 = sbr.rel (0) target = $region9
  $region8: #{soft_q_forward.1} parent=0 // pred_region
    _
  $region9: #{soft_q_forward.1} parent=0 // pred_fallthru
    _
  // Predicated region
  $region10: #{soft_q_forward.1} parent=0 // pred_check
    _
  $region11: #{soft_q_forward.1} parent=0 // pred_check_branch
    %21 = sbr.rel (0) target = $region13
  $region12: #{soft_q_forward.1} parent=0 // pred_region
    _
  $region13: #{soft_q_forward.1} parent=0 // pred_fallthru
    _
  // Predicated region
  $region14: #{soft_q_forward.1} parent=0 // pred_check
    _
  $region15: #{soft_q_forward.1} parent=0 // pred_check_branch
    %23 = sbr.rel (0) target = $region17
  $region16: #{soft_q_forward.1} parent=0 // pred_region
    _
  $region17: #{soft_q_forward.1} parent=0 // pred_fallthru
    _
  // Predicated region
  $region18: #{soft_q_forward.1} parent=0 // pred_check
    _
  $region19: #{soft_q_forward.1} parent=0 // pred_check_branch
    %25 = sbr.rel (0) target = $region21
  $region20: #{soft_q_forward.1} parent=0 // pred_region
    _
  $region21: #{soft_q_forward.1} parent=0 // pred_fallthru
    _
  // Predicated region
  $region22: #{soft_q_forward.1} parent=0 // pred_check
    _
  $region23: #{soft_q_forward.1} parent=0 // pred_check_branch
    %27 = sbr.rel (0) target = $region25
  $region24: #{soft_q_forward.1} parent=0 // pred_region
    _
  $region25: #{soft_q_forward.1} parent=0 // pred_fallthru
    _
  // Predicated region
  $region26: #{soft_q_forward.1} parent=0 // pred_check
    _
  $region27: #{soft_q_forward.1} parent=0 // pred_check_branch
    %29 = sbr.rel (0) target = $region29
  $region28: #{soft_q_forward.1} parent=0 // pred_region
    _
  $region29: #{soft_q_forward.1} parent=0 // pred_fallthru
    _
  // Predicated region
  $region30: #{soft_q_forward.1} parent=0 // pred_check
    _
  $region31: #{soft_q_forward.1} parent=0 // pred_check_branch
    %31 = sbr.rel (0) target = $region33
  $region32: #{soft_q_forward.1} parent=0 // pred_region
    _
  $region33: #{soft_q_forward.1} parent=0 // pred_fallthru
    _
  // Predicated region
  $region34: #{soft_q_forward.1} parent=0 // pred_check
    _
  $region35: #{soft_q_forward.1} parent=0 // pred_check_branch
    %33 = sbr.rel (0) target = $region37
  $region36: #{soft_q_forward.1} parent=0 // pred_region
    _
  $region37: #{soft_q_forward.1} parent=0 // pred_fallthru
    _
  %v34 = vld [vmem:[%s0] sm:$0xff]
  %v35 = vld [vmem:[%s0 + $0x8] sm:$0xff]
  %v36 = vld [vmem:[%s0 + $0x10] sm:$0xff]
  %v37 = vld [vmem:[%s0 + $0x18] sm:$0xff]
  %v38 = vld [vmem:[%s0 + $0x20] sm:$0xff]
  %v39 = vld [vmem:[%s0 + $0x28] sm:$0xff]
  %v40 = vld [vmem:[%s0 + $0x30] sm:$0xff]
  %v41 = vld [vmem:[%s0 + $0x38] sm:$0xff]
  %v42 = vld [vmem:[%s0 + $0x40] sm:$0xff]
  %v43 = vld [vmem:[%s0 + $0x48] sm:$0xff]
  %v44 = vld [vmem:[%s0 + $0x50] sm:$0xff]
  %v45 = vld [vmem:[%s0 + $0x58] sm:$0xff]
  %v46 = vld [vmem:[%s0 + $0x60] sm:$0xff]
  %v47 = vld [vmem:[%s0 + $0x68] sm:$0xff]
  %v48 = vld [vmem:[%s0 + $0x70] sm:$0xff]
  %v49 = vld [vmem:[%s0 + $0x78] sm:$0xff]
  %v50 = vld [vmem:[%s0 + $0x80] sm:$0xff]
  %v51 = vld [vmem:[%s0 + $0x88] sm:$0xff]
  %v52 = vld [vmem:[%s0 + $0x90] sm:$0xff]
  %v53 = vld [vmem:[%s0 + $0x98] sm:$0xff]
  %v54 = vld [vmem:[%s0 + $0xa0] sm:$0xff]
  %v55 = vld [vmem:[%s0 + $0xa8] sm:$0xff]
  %v56 = vld [vmem:[%s0 + $0xb0] sm:$0xff]
  %v57 = vld [vmem:[%s0 + $0xb8] sm:$0xff]
  %v58 = vld [vmem:[%s0 + $0xc0] sm:$0xff]
  %v59 = vld [vmem:[%s0 + $0xc8] sm:$0xff]
  %v60 = vld [vmem:[%s0 + $0xd0] sm:$0xff]
  %v61 = vld [vmem:[%s0 + $0xd8] sm:$0xff]
  %v62 = vld [vmem:[%s0 + $0xe0] sm:$0xff]
  %v63 = vld [vmem:[%s0 + $0xe8] sm:$0xff]
  %v64 = vld [vmem:[%s0 + $0xf0] sm:$0xff]
  %v65 = vld [vmem:[%s0 + $0xf8] sm:$0xff]
  %v66 = vld [vmem:[%s0 + $0x100] sm:$0xff]
  %v67 = vld [vmem:[%s0 + $0x108] sm:$0xff]
  %v68 = vld [vmem:[%s0 + $0x110] sm:$0xff]
  %v69 = vld [vmem:[%s0 + $0x118] sm:$0xff]
  %v70 = vld [vmem:[%s0 + $0x120] sm:$0xff]
  %v71 = vld [vmem:[%s0 + $0x128] sm:$0xff]
  %v72 = vld [vmem:[%s0 + $0x130] sm:$0xff]
  %v73 = vld [vmem:[%s0 + $0x138] sm:$0xff]
  %v74 = vld [vmem:[%s0 + $0x140] sm:$0xff]
  %v75 = vld [vmem:[%s0 + $0x148] sm:$0xff]
  %v76 = vld [vmem:[%s0 + $0x150] sm:$0xff]
  %v77 = vld [vmem:[%s0 + $0x158] sm:$0xff]
  %v78 = vld [vmem:[%s0 + $0x160] sm:$0xff]
  %v79 = vld [vmem:[%s0 + $0x168] sm:$0xff]
  %v80 = vld [vmem:[%s0 + $0x170] sm:$0xff]
  %v81 = vld [vmem:[%s0 + $0x178] sm:$0xff]
  %v82 = vld [vmem:[%s2] sm:$0xff]
  %v83 = vld [vmem:[%s2 + $0x8] sm:$0xff]
  %v84 = vld [vmem:[%s2 + $0x10] sm:$0xff]
  %v85 = vld [vmem:[%s2 + $0x18] sm:$0xff]
  %v86 = vld [vmem:[%s2 + $0x20] sm:$0xff]
  %v87 = vld [vmem:[%s2 + $0x28] sm:$0xff]
  %v88 = vld [vmem:[%s2 + $0x30] sm:$0xff]
  %v89 = vld [vmem:[%s2 + $0x38] sm:$0xff]
  %v90 = vld [vmem:[%s1] sm:$0xff]
  %v91 = vld [vmem:[%s1 + $0x8] sm:$0xff]
  %v92 = vld [vmem:[%s1 + $0x10] sm:$0xff]
  %v93 = vld [vmem:[%s1 + $0x18] sm:$0xff]
  %v94 = vld [vmem:[%s1 + $0x20] sm:$0xff]
  %v95 = vld [vmem:[%s1 + $0x28] sm:$0xff]
  %v96 = vld [vmem:[%s1 + $0x30] sm:$0xff]
  %v97 = vld [vmem:[%s1 + $0x38] sm:$0xff]
  %v98 = vld [vmem:[%s1 + $0x40] sm:$0xff]
  %v99 = vld [vmem:[%s1 + $0x48] sm:$0xff]
  %v100 = vld [vmem:[%s1 + $0x50] sm:$0xff]
  %v101 = vld [vmem:[%s1 + $0x58] sm:$0xff]
  %v102 = vld [vmem:[%s1 + $0x60] sm:$0xff]
  %v103 = vld [vmem:[%s1 + $0x68] sm:$0xff]
  %v104 = vld [vmem:[%s1 + $0x70] sm:$0xff]
  %v105 = vld [vmem:[%s1 + $0x78] sm:$0xff]
  %v106 = vld [vmem:[%s1 + $0x80] sm:$0xff]
  %v107 = vld [vmem:[%s1 + $0x88] sm:$0xff]
  %v108 = vld [vmem:[%s1 + $0x90] sm:$0xff]
  %v109 = vld [vmem:[%s1 + $0x98] sm:$0xff]
  %v110 = vld [vmem:[%s1 + $0xa0] sm:$0xff]
  %v111 = vld [vmem:[%s1 + $0xa8] sm:$0xff]
  %v112 = vld [vmem:[%s1 + $0xb0] sm:$0xff]
  %v113 = vld [vmem:[%s1 + $0xb8] sm:$0xff]
  %v114 = vld [vmem:[%s1 + $0xc0] sm:$0xff]
  %v115 = vld [vmem:[%s1 + $0xc8] sm:$0xff]
  %v116 = vld [vmem:[%s1 + $0xd0] sm:$0xff]
  %v117 = vld [vmem:[%s1 + $0xd8] sm:$0xff]
  %v118 = vld [vmem:[%s1 + $0xe0] sm:$0xff]
  %v119 = vld [vmem:[%s1 + $0xe8] sm:$0xff]
  %v120 = vld [vmem:[%s1 + $0xf0] sm:$0xff]
  %v121 = vld [vmem:[%s1 + $0xf8] sm:$0xff]
  %v122 = vld [vmem:[%s1 + $0x100] sm:$0xff]
  %v123 = vld [vmem:[%s1 + $0x108] sm:$0xff]
  %v124 = vld [vmem:[%s1 + $0x110] sm:$0xff]
  %v125 = vld [vmem:[%s1 + $0x118] sm:$0xff]
  %v126 = vld [vmem:[%s1 + $0x120] sm:$0xff]
  %v127 = vld [vmem:[%s1 + $0x128] sm:$0xff]
  %v128 = vld [vmem:[%s1 + $0x130] sm:$0xff]
  %v129 = vld [vmem:[%s1 + $0x138] sm:$0xff]
  %v130 = vld [vmem:[%s1 + $0x140] sm:$0xff]
  %v131 = vld [vmem:[%s1 + $0x148] sm:$0xff]
  %v132 = vld [vmem:[%s1 + $0x150] sm:$0xff]
  %v133 = vld [vmem:[%s1 + $0x158] sm:$0xff]
  %v134 = vld [vmem:[%s1 + $0x160] sm:$0xff]
  %v135 = vld [vmem:[%s1 + $0x168] sm:$0xff]
  %v136 = vld [vmem:[%s1 + $0x170] sm:$0xff]
  %v137 = vld [vmem:[%s1 + $0x178] sm:$0xff]
  %v138 = vld [vmem:[%s3] sm:$0xff]
  %v139 = vld [vmem:[%s3 + $0x8] sm:$0xff]
  %v140 = vld [vmem:[%s3 + $0x10] sm:$0xff]
  %v141 = vld [vmem:[%s3 + $0x18] sm:$0xff]
  %vm142 = vcmask 130048
  %v144 = vsel %vm142, %v90, 0
  %v147 = vsel %vm142, %v91, 0
  %v150 = vsel %vm142, %v92, 0
  %v153 = vsel %vm142, %v93, 0
  %v156 = vsel %vm142, %v94, 0
  %v159 = vsel %vm142, %v95, 0
  %v162 = vsel %vm142, %v96, 0
  %v165 = vsel %vm142, %v97, 0
  %v168 = vsel %vm142, %v98, 0
  %v171 = vsel %vm142, %v99, 0
  %v174 = vsel %vm142, %v100, 0
  %v177 = vsel %vm142, %v101, 0
  %v180 = vsel %vm142, %v102, 0
  %v183 = vsel %vm142, %v103, 0
  %v186 = vsel %vm142, %v104, 0
  %v189 = vsel %vm142, %v105, 0
  %v192 = vsel %vm142, %v106, 0
  %v195 = vsel %vm142, %v107, 0
  %v198 = vsel %vm142, %v108, 0
  %v201 = vsel %vm142, %v109, 0
  %v204 = vsel %vm142, %v110, 0
  %v207 = vsel %vm142, %v111, 0
  %v210 = vsel %vm142, %v112, 0
  %v213 = vsel %vm142, %v113, 0
  %v216 = vsel %vm142, %v114, 0
  %v219 = vsel %vm142, %v115, 0
  %v222 = vsel %vm142, %v116, 0
  %v225 = vsel %vm142, %v117, 0
  %v228 = vsel %vm142, %v118, 0
  %v231 = vsel %vm142, %v119, 0
  %v234 = vsel %vm142, %v120, 0
  %v237 = vsel %vm142, %v121, 0
  %v240 = vsel %vm142, %v122, 0
  %v243 = vsel %vm142, %v123, 0
  %v246 = vsel %vm142, %v124, 0
  %v249 = vsel %vm142, %v125, 0
  %v252 = vsel %vm142, %v126, 0
  %v255 = vsel %vm142, %v127, 0
  %v258 = vsel %vm142, %v128, 0
  %v261 = vsel %vm142, %v129, 0
  %v264 = vsel %vm142, %v130, 0
  %v267 = vsel %vm142, %v131, 0
  %v270 = vsel %vm142, %v132, 0
  %v273 = vsel %vm142, %v133, 0
  %v276 = vsel %vm142, %v134, 0
  %v279 = vsel %vm142, %v135, 0
  %v282 = vsel %vm142, %v136, 0
  %v285 = vsel %vm142, %v137, 0
  %v287 = vand.u32 %v139, 4294901760
  %288 = vmatprep.subr.mxu0 %v287
  %v289 = vand.u32 %v138, 4294901760
  %290 = vmatpush1.msra.mxu0 %v289
  %v291 = vand.u32 %v141, 4294901760
  %292 = vmatprep.subr.mxu0 %v291
  %v293 = vand.u32 %v140, 4294901760
  %294 = vmatpush1.msra.mxu0 %v293
  %295 = vmatprep.subr.mxu0 0.0
  %296 = vmatpush1.msra.mxu0 0.0
  %297 = vmatprep.subr.mxu0 0.0
  %298 = vmatpush1.msra.mxu0 0.0
  %299 = vmatprep.subr.mxu0 0.0
  %300 = vmatpush1.msra.mxu0 0.0
  %301 = vmatprep.subr.mxu0 0.0
  %302 = vmatpush1.msra.mxu0 0.0
  %303 = vmatprep.subr.mxu0 0.0
  %304 = vmatpush1.msra.mxu0 0.0
  %305 = vmatprep.subr.mxu0 0.0
  %306 = vmatpush1.msra.mxu0 0.0
  %307 = vmatprep.subr.mxu0 0.0
  %308 = vmatpush1.msra.mxu0 0.0
  %309 = vmatprep.subr.mxu0 0.0
  %310 = vmatpush1.msra.mxu0 0.0
  %311 = vmatprep.subr.mxu0 0.0
  %312 = vmatpush1.msra.mxu0 0.0
  %313 = vmatprep.subr.mxu0 0.0
  %314 = vmatpush1.msra.mxu0 0.0
  %315 = vmatprep.subr.mxu0 0.0
  %316 = vmatpush1.msra.mxu0 0.0
  %317 = vmatprep.subr.mxu0 0.0
  %318 = vmatpush1.msra.mxu0 0.0
  %319 = vmatprep.subr.mxu0 0.0
  %320 = vmatpush1.msra.mxu0 0.0
  %321 = vmatprep.subr.mxu0 0.0
  %322 = vmatpush1.msra.mxu0 0.0
  %323 = vmatprep.subr.mxu0 0.0
  %324 = vmatpush1.msra.mxu0 0.0
  %325 = vmatprep.subr.mxu0 0.0
  %326 = vmatpush1.msra.mxu0 0.0
  %327 = vmatprep.subr.mxu0 0.0
  %328 = vmatpush1.msra.mxu0 0.0
  %329 = vmatprep.subr.mxu0 0.0
  %330 = vmatpush1.msra.mxu0 0.0
  %331 = vmatprep.subr.mxu0 0.0
  %332 = vmatpush1.msra.mxu0 0.0
  %333 = vmatprep.subr.mxu0 0.0
  %334 = vmatpush1.msra.mxu0 0.0
  %335 = vmatprep.subr.mxu0 0.0
  %336 = vmatpush1.msra.mxu0 0.0
  %337 = vmatprep.subr.mxu0 0.0
  %338 = vmatpush1.msra.mxu0 0.0
  %339 = vmatprep.subr.mxu0 0.0
  %340 = vmatpush1.msra.mxu0 0.0
  %341 = vmatprep.subr.mxu0 0.0
  %342 = vmatpush1.msra.mxu0 0.0
  %343 = vmatprep.subr.mxu0 0.0
  %344 = vmatpush1.msra.mxu0 0.0
  %345 = vmatprep.subr.mxu0 0.0
  %346 = vmatpush1.msra.mxu0 0.0
  %347 = vmatprep.subr.mxu0 0.0
  %348 = vmatpush1.msra.mxu0 0.0
  %349 = vmatprep.subr.mxu0 0.0
  %350 = vmatpush1.msra.mxu0 0.0
  %351 = vmatprep.subr.mxu0 0.0
  %352 = vmatpush1.msra.mxu0 0.0
  %353 = vmatprep.subr.mxu0 0.0
  %354 = vmatpush1.msra.mxu0 0.0
  %355 = vmatprep.mubr.f32.mxu0 0.0
  %v356 = vand.u32 %v144, 4294901760
  %v357 = vsub.f32 %v144, %v356
  %v358 = vand.u32 %v357, 4294901760
  %v359 = vsub.f32 %v357, %v358
  %v360 = vand.u32 %v359, 4294901760
  %361 = vmatmul.mubr.f32.gmra.mrb[0].mxu0 %v360
  %v362 = vpop.f32.mrb[0].mxu0
  %v363 = vadd.f32 0.0, %v362
  %v364 = vpop.f32.mrb[0].mxu0
  %v365 = vadd.f32 0.0, %v364
  %366 = vmatprep.mubr.f32.mxu0 0.0
  %v367 = vand.u32 %v147, 4294901760
  %v368 = vsub.f32 %v147, %v367
  %v369 = vand.u32 %v368, 4294901760
  %v370 = vsub.f32 %v368, %v369
  %v371 = vand.u32 %v370, 4294901760
  %372 = vmatmul.mubr.f32.gmra.mrb[0].mxu0 %v371
  %v373 = vpop.f32.mrb[0].mxu0
  %v374 = vadd.f32 0.0, %v373
  %v375 = vpop.f32.mrb[0].mxu0
  %v376 = vadd.f32 0.0, %v375
  %377 = vmatprep.mubr.f32.mxu0 0.0
  %v378 = vand.u32 %v150, 4294901760
  %v379 = vsub.f32 %v150, %v378
  %v380 = vand.u32 %v379, 4294901760
  %v381 = vsub.f32 %v379, %v380
  %v382 = vand.u32 %v381, 4294901760
  %383 = vmatmul.mubr.f32.gmra.mrb[0].mxu0 %v382
  %v384 = vpop.f32.mrb[0].mxu0
  %v385 = vadd.f32 0.0, %v384
  %v386 = vpop.f32.mrb[0].mxu0
  %v387 = vadd.f32 0.0, %v386
  %388 = vmatprep.mubr.f32.mxu0 0.0
  %v389 = vand.u32 %v153, 4294901760
  %v390 = vsub.f32 %v153, %v389
  %v391 = vand.u32 %v390, 4294901760
  %v392 = vsub.f32 %v390, %v391
  %v393 = vand.u32 %v392, 4294901760
  %394 = vmatmul.mubr.f32.gmra.mrb[0].mxu0 %v393
  %v395 = vpop.f32.mrb[0].mxu0
  %v396 = vadd.f32 0.0, %v395
  %v397 = vpop.f32.mrb[0].mxu0
  %v398 = vadd.f32 0.0, %v397
  %399 = vmatprep.mubr.f32.mxu0 0.0
  %v400 = vand.u32 %v156, 4294901760
  %v401 = vsub.f32 %v156, %v400
  %v402 = vand.u32 %v401, 4294901760
  %v403 = vsub.f32 %v401, %v402
  %v404 = vand.u32 %v403, 4294901760
  %405 = vmatmul.mubr.f32.gmra.mrb[0].mxu0 %v404
  %v406 = vpop.f32.mrb[0].mxu0
  %v407 = vadd.f32 0.0, %v406
  %v408 = vpop.f32.mrb[0].mxu0
  %v409 = vadd.f32 0.0, %v408
  %410 = vmatprep.mubr.f32.mxu0 0.0
  %v411 = vand.u32 %v159, 4294901760
  %v412 = vsub.f32 %v159, %v411
  %v413 = vand.u32 %v412, 4294901760
  %v414 = vsub.f32 %v412, %v413
  %v415 = vand.u32 %v414, 4294901760
  %416 = vmatmul.mubr.f32.gmra.mrb[0].mxu0 %v415
  %v417 = vpop.f32.mrb[0].mxu0
  %v418 = vadd.f32 0.0, %v417
  %v419 = vpop.f32.mrb[0].mxu0
  %v420 = vadd.f32 0.0, %v419
  %421 = vmatprep.mubr.f32.mxu0 0.0
  %v422 = vand.u32 %v162, 4294901760
  %v423 = vsub.f32 %v162, %v422
  %v424 = vand.u32 %v423, 4294901760
  %v425 = vsub.f32 %v423, %v424
  %v426 = vand.u32 %v425, 4294901760
  %427 = vmatmul.mubr.f32.gmra.mrb[0].mxu0 %v426
  %v428 = vpop.f32.mrb[0].mxu0
  %v429 = vadd.f32 0.0, %v428
  %v430 = vpop.f32.mrb[0].mxu0
  %v431 = vadd.f32 0.0, %v430
  %432 = vmatprep.mubr.f32.mxu0 0.0
  %v433 = vand.u32 %v165, 4294901760
  %v434 = vsub.f32 %v165, %v433
  %v435 = vand.u32 %v434, 4294901760
  %v436 = vsub.f32 %v434, %v435
  %v437 = vand.u32 %v436, 4294901760
  %438 = vmatmul.mubr.f32.gmra.mrb[0].mxu0 %v437
  %v439 = vpop.f32.mrb[0].mxu0
  %v440 = vadd.f32 0.0, %v439
  %v441 = vpop.f32.mrb[0].mxu0
  %v442 = vadd.f32 0.0, %v441
  %443 = vmatprep.mubr.f32.mxu0 0.0
  %v444 = vand.u32 %v168, 4294901760
  %v445 = vsub.f32 %v168, %v444
  %v446 = vand.u32 %v445, 4294901760
  %v447 = vsub.f32 %v445, %v446
  %v448 = vand.u32 %v447, 4294901760
  %449 = vmatmul.mubr.f32.gmra.mrb[0].mxu0 %v448
  %v450 = vpop.f32.mrb[0].mxu0
  %v451 = vadd.f32 0.0, %v450
  %v452 = vpop.f32.mrb[0].mxu0
  %v453 = vadd.f32 0.0, %v452
  %454 = vmatprep.mubr.f32.mxu0 0.0
  %v455 = vand.u32 %v171, 4294901760
  %v456 = vsub.f32 %v171, %v455
  %v457 = vand.u32 %v456, 4294901760
  %v458 = vsub.f32 %v456, %v457
  %v459 = vand.u32 %v458, 4294901760
  %460 = vmatmul.mubr.f32.gmra.mrb[0].mxu0 %v459
  %v461 = vpop.f32.mrb[0].mxu0
  %v462 = vadd.f32 0.0, %v461
  %v463 = vpop.f32.mrb[0].mxu0
  %v464 = vadd.f32 0.0, %v463
  %465 = vmatprep.mubr.f32.mxu0 0.0
  %v466 = vand.u32 %v174, 4294901760
  %v467 = vsub.f32 %v174, %v466
  %v468 = vand.u32 %v467, 4294901760
  %v469 = vsub.f32 %v467, %v468
  %v470 = vand.u32 %v469, 4294901760
  %471 = vmatmul.mubr.f32.gmra.mrb[0].mxu0 %v470
  %v472 = vpop.f32.mrb[0].mxu0
  %v473 = vadd.f32 0.0, %v472
  %v474 = vpop.f32.mrb[0].mxu0
  %v475 = vadd.f32 0.0, %v474
  %476 = vmatprep.mubr.f32.mxu0 0.0
  %v477 = vand.u32 %v177, 4294901760
  %v478 = vsub.f32 %v177, %v477
  %v479 = vand.u32 %v478, 4294901760
  %v480 = vsub.f32 %v478, %v479
  %v481 = vand.u32 %v480, 4294901760
  %482 = vmatmul.mubr.f32.gmra.mrb[0].mxu0 %v481
  %v483 = vpop.f32.mrb[0].mxu0
  %v484 = vadd.f32 0.0, %v483
  %v485 = vpop.f32.mrb[0].mxu0
  %v486 = vadd.f32 0.0, %v485
  %487 = vmatprep.mubr.f32.mxu0 0.0
  %v488 = vand.u32 %v180, 4294901760
  %v489 = vsub.f32 %v180, %v488
  %v490 = vand.u32 %v489, 4294901760
  %v491 = vsub.f32 %v489, %v490
  %v492 = vand.u32 %v491, 4294901760
  %493 = vmatmul.mubr.f32.gmra.mrb[0].mxu0 %v492
  %v494 = vpop.f32.mrb[0].mxu0
  %v495 = vadd.f32 0.0, %v494
  %v496 = vpop.f32.mrb[0].mxu0
  %v497 = vadd.f32 0.0, %v496
  %498 = vmatprep.mubr.f32.mxu0 0.0
  %v499 = vand.u32 %v183, 4294901760
  %v500 = vsub.f32 %v183, %v499
  %v501 = vand.u32 %v500, 4294901760
  %v502 = vsub.f32 %v500, %v501
  %v503 = vand.u32 %v502, 4294901760
  %504 = vmatmul.mubr.f32.gmra.mrb[0].mxu0 %v503
  %v505 = vpop.f32.mrb[0].mxu0
  %v506 = vadd.f32 0.0, %v505
  %v507 = vpop.f32.mrb[0].mxu0
  %v508 = vadd.f32 0.0, %v507
  %509 = vmatprep.mubr.f32.mxu0 0.0
  %v510 = vand.u32 %v186, 4294901760
  %v511 = vsub.f32 %v186, %v510
  %v512 = vand.u32 %v511, 4294901760
  %v513 = vsub.f32 %v511, %v512
  %v514 = vand.u32 %v513, 4294901760
  %515 = vmatmul.mubr.f32.gmra.mrb[0].mxu0 %v514
  %v516 = vpop.f32.mrb[0].mxu0
  %v517 = vadd.f32 0.0, %v516
  %v518 = vpop.f32.mrb[0].mxu0
  %v519 = vadd.f32 0.0, %v518
  %520 = vmatprep.mubr.f32.mxu0 0.0
  %v521 = vand.u32 %v189, 4294901760
  %v522 = vsub.f32 %v189, %v521
  %v523 = vand.u32 %v522, 4294901760
  %v524 = vsub.f32 %v522, %v523
  %v525 = vand.u32 %v524, 4294901760
  %526 = vmatmul.mubr.f32.gmra.mrb[0].mxu0 %v525
  %v527 = vpop.f32.mrb[0].mxu0
  %v528 = vadd.f32 0.0, %v527
  %v529 = vpop.f32.mrb[0].mxu0
  %v530 = vadd.f32 0.0, %v529
  %531 = vmatprep.mubr.f32.mxu0 0.0
  %v532 = vand.u32 %v192, 4294901760
  %v533 = vsub.f32 %v192, %v532
  %v534 = vand.u32 %v533, 4294901760
  %v535 = vsub.f32 %v533, %v534
  %v536 = vand.u32 %v535, 4294901760
  %537 = vmatmul.mubr.f32.gmra.mrb[0].mxu0 %v536
  %v538 = vpop.f32.mrb[0].mxu0
  %v539 = vadd.f32 0.0, %v538
  %v540 = vpop.f32.mrb[0].mxu0
  %v541 = vadd.f32 0.0, %v540
  %542 = vmatprep.mubr.f32.mxu0 0.0
  %v543 = vand.u32 %v195, 4294901760
  %v544 = vsub.f32 %v195, %v543
  %v545 = vand.u32 %v544, 4294901760
  %v546 = vsub.f32 %v544, %v545
  %v547 = vand.u32 %v546, 4294901760
  %548 = vmatmul.mubr.f32.gmra.mrb[0].mxu0 %v547
  %v549 = vpop.f32.mrb[0].mxu0
  %v550 = vadd.f32 0.0, %v549
  %v551 = vpop.f32.mrb[0].mxu0
  %v552 = vadd.f32 0.0, %v551
  %553 = vmatprep.mubr.f32.mxu0 0.0
  %v554 = vand.u32 %v198, 4294901760
  %v555 = vsub.f32 %v198, %v554
  %v556 = vand.u32 %v555, 4294901760
  %v557 = vsub.f32 %v555, %v556
  %v558 = vand.u32 %v557, 4294901760
  %559 = vmatmul.mubr.f32.gmra.mrb[0].mxu0 %v558
  %v560 = vpop.f32.mrb[0].mxu0
  %v561 = vadd.f32 0.0, %v560
  %v562 = vpop.f32.mrb[0].mxu0
  %v563 = vadd.f32 0.0, %v562
  %564 = vmatprep.mubr.f32.mxu0 0.0
  %v565 = vand.u32 %v201, 4294901760
  %v566 = vsub.f32 %v201, %v565
  %v567 = vand.u32 %v566, 4294901760
  %v568 = vsub.f32 %v566, %v567
  %v569 = vand.u32 %v568, 4294901760
  %570 = vmatmul.mubr.f32.gmra.mrb[0].mxu0 %v569
  %v571 = vpop.f32.mrb[0].mxu0
  %v572 = vadd.f32 0.0, %v571
  %v573 = vpop.f32.mrb[0].mxu0
  %v574 = vadd.f32 0.0, %v573
  %575 = vmatprep.mubr.f32.mxu0 0.0
  %v576 = vand.u32 %v204, 4294901760
  %v577 = vsub.f32 %v204, %v576
  %v578 = vand.u32 %v577, 4294901760
  %v579 = vsub.f32 %v577, %v578
  %v580 = vand.u32 %v579, 4294901760
  %581 = vmatmul.mubr.f32.gmra.mrb[0].mxu0 %v580
  %v582 = vpop.f32.mrb[0].mxu0
  %v583 = vadd.f32 0.0, %v582
  %v584 = vpop.f32.mrb[0].mxu0
  %v585 = vadd.f32 0.0, %v584
  %586 = vmatprep.mubr.f32.mxu0 0.0
  %v587 = vand.u32 %v207, 4294901760
  %v588 = vsub.f32 %v207, %v587
  %v589 = vand.u32 %v588, 4294901760
  %v590 = vsub.f32 %v588, %v589
  %v591 = vand.u32 %v590, 4294901760
  %592 = vmatmul.mubr.f32.gmra.mrb[0].mxu0 %v591
  %v593 = vpop.f32.mrb[0].mxu0
  %v594 = vadd.f32 0.0, %v593
  %v595 = vpop.f32.mrb[0].mxu0
  %v596 = vadd.f32 0.0, %v595
  %597 = vmatprep.mubr.f32.mxu0 0.0
  %v598 = vand.u32 %v210, 4294901760
  %v599 = vsub.f32 %v210, %v598
  %v600 = vand.u32 %v599, 4294901760
  %v601 = vsub.f32 %v599, %v600
  %v602 = vand.u32 %v601, 4294901760
  %603 = vmatmul.mubr.f32.gmra.mrb[0].mxu0 %v602
  %v604 = vpop.f32.mrb[0].mxu0
  %v605 = vadd.f32 0.0, %v604
  %v606 = vpop.f32.mrb[0].mxu0
  %v607 = vadd.f32 0.0, %v606
  %608 = vmatprep.mubr.f32.mxu0 0.0
  %v609 = vand.u32 %v213, 4294901760
  %v610 = vsub.f32 %v213, %v609
  %v611 = vand.u32 %v610, 4294901760
  %v612 = vsub.f32 %v610, %v611
  %v613 = vand.u32 %v612, 4294901760
  %614 = vmatmul.mubr.f32.gmra.mrb[0].mxu0 %v613
  %v615 = vpop.f32.mrb[0].mxu0
  %v616 = vadd.f32 0.0, %v615
  %v617 = vpop.f32.mrb[0].mxu0
  %v618 = vadd.f32 0.0, %v617
  %619 = vmatprep.mubr.f32.mxu0 0.0
  %v620 = vand.u32 %v216, 4294901760
  %v621 = vsub.f32 %v216, %v620
  %v622 = vand.u32 %v621, 4294901760
  %v623 = vsub.f32 %v621, %v622
  %v624 = vand.u32 %v623, 4294901760
  %625 = vmatmul.mubr.f32.gmra.mrb[0].mxu0 %v624
  %v626 = vpop.f32.mrb[0].mxu0
  %v627 = vadd.f32 0.0, %v626
  %v628 = vpop.f32.mrb[0].mxu0
  %v629 = vadd.f32 0.0, %v628
  %630 = vmatprep.mubr.f32.mxu0 0.0
  %v631 = vand.u32 %v219, 4294901760
  %v632 = vsub.f32 %v219, %v631
  %v633 = vand.u32 %v632, 4294901760
  %v634 = vsub.f32 %v632, %v633
  %v635 = vand.u32 %v634, 4294901760
  %636 = vmatmul.mubr.f32.gmra.mrb[0].mxu0 %v635
  %v637 = vpop.f32.mrb[0].mxu0
  %v638 = vadd.f32 0.0, %v637
  %v639 = vpop.f32.mrb[0].mxu0
  %v640 = vadd.f32 0.0, %v639
  %641 = vmatprep.mubr.f32.mxu0 0.0
  %v642 = vand.u32 %v222, 4294901760
  %v643 = vsub.f32 %v222, %v642
  %v644 = vand.u32 %v643, 4294901760
  %v645 = vsub.f32 %v643, %v644
  %v646 = vand.u32 %v645, 4294901760
  %647 = vmatmul.mubr.f32.gmra.mrb[0].mxu0 %v646
  %v648 = vpop.f32.mrb[0].mxu0
  %v649 = vadd.f32 0.0, %v648
  %v650 = vpop.f32.mrb[0].mxu0
  %v651 = vadd.f32 0.0, %v650
  %652 = vmatprep.mubr.f32.mxu0 0.0
  %v653 = vand.u32 %v225, 4294901760
  %v654 = vsub.f32 %v225, %v653
  %v655 = vand.u32 %v654, 4294901760
  %v656 = vsub.f32 %v654, %v655
  %v657 = vand.u32 %v656, 4294901760
  %658 = vmatmul.mubr.f32.gmra.mrb[0].mxu0 %v657
  %v659 = vpop.f32.mrb[0].mxu0
  %v660 = vadd.f32 0.0, %v659
  %v661 = vpop.f32.mrb[0].mxu0
  %v662 = vadd.f32 0.0, %v661
  %663 = vmatprep.mubr.f32.mxu0 0.0
  %v664 = vand.u32 %v228, 4294901760
  %v665 = vsub.f32 %v228, %v664
  %v666 = vand.u32 %v665, 4294901760
  %v667 = vsub.f32 %v665, %v666
  %v668 = vand.u32 %v667, 4294901760
  %669 = vmatmul.mubr.f32.gmra.mrb[0].mxu0 %v668
  %v670 = vpop.f32.mrb[0].mxu0
  %v671 = vadd.f32 0.0, %v670
  %v672 = vpop.f32.mrb[0].mxu0
  %v673 = vadd.f32 0.0, %v672
  %674 = vmatprep.mubr.f32.mxu0 0.0
  %v675 = vand.u32 %v231, 4294901760
  %v676 = vsub.f32 %v231, %v675
  %v677 = vand.u32 %v676, 4294901760
  %v678 = vsub.f32 %v676, %v677
  %v679 = vand.u32 %v678, 4294901760
  %680 = vmatmul.mubr.f32.gmra.mrb[0].mxu0 %v679
  %v681 = vpop.f32.mrb[0].mxu0
  %v682 = vadd.f32 0.0, %v681
  %v683 = vpop.f32.mrb[0].mxu0
  %v684 = vadd.f32 0.0, %v683
  %685 = vmatprep.mubr.f32.mxu0 0.0
  %v686 = vand.u32 %v234, 4294901760
  %v687 = vsub.f32 %v234, %v686
  %v688 = vand.u32 %v687, 4294901760
  %v689 = vsub.f32 %v687, %v688
  %v690 = vand.u32 %v689, 4294901760
  %691 = vmatmul.mubr.f32.gmra.mrb[0].mxu0 %v690
  %v692 = vpop.f32.mrb[0].mxu0
  %v693 = vadd.f32 0.0, %v692
  %v694 = vpop.f32.mrb[0].mxu0
  %v695 = vadd.f32 0.0, %v694
  %696 = vmatprep.mubr.f32.mxu0 0.0
  %v697 = vand.u32 %v237, 4294901760
  %v698 = vsub.f32 %v237, %v697
  %v699 = vand.u32 %v698, 4294901760
  %v700 = vsub.f32 %v698, %v699
  %v701 = vand.u32 %v700, 4294901760
  %702 = vmatmul.mubr.f32.gmra.mrb[0].mxu0 %v701
  %v703 = vpop.f32.mrb[0].mxu0
  %v704 = vadd.f32 0.0, %v703
  %v705 = vpop.f32.mrb[0].mxu0
  %v706 = vadd.f32 0.0, %v705
  %707 = vmatprep.mubr.f32.mxu0 0.0
  %v708 = vand.u32 %v240, 4294901760
  %v709 = vsub.f32 %v240, %v708
  %v710 = vand.u32 %v709, 4294901760
  %v711 = vsub.f32 %v709, %v710
  %v712 = vand.u32 %v711, 4294901760
  %713 = vmatmul.mubr.f32.gmra.mrb[0].mxu0 %v712
  %v714 = vpop.f32.mrb[0].mxu0
  %v715 = vadd.f32 0.0, %v714
  %v716 = vpop.f32.mrb[0].mxu0
  %v717 = vadd.f32 0.0, %v716
  %718 = vmatprep.mubr.f32.mxu0 0.0
  %v719 = vand.u32 %v243, 4294901760
  %v720 = vsub.f32 %v243, %v719
  %v721 = vand.u32 %v720, 4294901760
  %v722 = vsub.f32 %v720, %v721
  %v723 = vand.u32 %v722, 4294901760
  %724 = vmatmul.mubr.f32.gmra.mrb[0].mxu0 %v723
  %v725 = vpop.f32.mrb[0].mxu0
  %v726 = vadd.f32 0.0, %v725
  %v727 = vpop.f32.mrb[0].mxu0
  %v728 = vadd.f32 0.0, %v727
  %729 = vmatprep.mubr.f32.mxu0 0.0
  %v730 = vand.u32 %v246, 4294901760
  %v731 = vsub.f32 %v246, %v730
  %v732 = vand.u32 %v731, 4294901760
  %v733 = vsub.f32 %v731, %v732
  %v734 = vand.u32 %v733, 4294901760
  %735 = vmatmul.mubr.f32.gmra.mrb[0].mxu0 %v734
  %v736 = vpop.f32.mrb[0].mxu0
  %v737 = vadd.f32 0.0, %v736
  %v738 = vpop.f32.mrb[0].mxu0
  %v739 = vadd.f32 0.0, %v738
  %740 = vmatprep.mubr.f32.mxu0 0.0
  %v741 = vand.u32 %v249, 4294901760
  %v742 = vsub.f32 %v249, %v741
  %v743 = vand.u32 %v742, 4294901760
  %v744 = vsub.f32 %v742, %v743
  %v745 = vand.u32 %v744, 4294901760
  %746 = vmatmul.mubr.f32.gmra.mrb[0].mxu0 %v745
  %v747 = vpop.f32.mrb[0].mxu0
  %v748 = vadd.f32 0.0, %v747
  %v749 = vpop.f32.mrb[0].mxu0
  %v750 = vadd.f32 0.0, %v749
  %751 = vmatprep.mubr.f32.mxu0 0.0
  %v752 = vand.u32 %v252, 4294901760
  %v753 = vsub.f32 %v252, %v752
  %v754 = vand.u32 %v753, 4294901760
  %v755 = vsub.f32 %v753, %v754
  %v756 = vand.u32 %v755, 4294901760
  %757 = vmatmul.mubr.f32.gmra.mrb[0].mxu0 %v756
  %v758 = vpop.f32.mrb[0].mxu0
  %v759 = vadd.f32 0.0, %v758
  %v760 = vpop.f32.mrb[0].mxu0
  %v761 = vadd.f32 0.0, %v760
  %762 = vmatprep.mubr.f32.mxu0 0.0
  %v763 = vand.u32 %v255, 4294901760
  %v764 = vsub.f32 %v255, %v763
  %v765 = vand.u32 %v764, 4294901760
  %v766 = vsub.f32 %v764, %v765
  %v767 = vand.u32 %v766, 4294901760
  %768 = vmatmul.mubr.f32.gmra.mrb[0].mxu0 %v767
  %v769 = vpop.f32.mrb[0].mxu0
  %v770 = vadd.f32 0.0, %v769
  %v771 = vpop.f32.mrb[0].mxu0
  %v772 = vadd.f32 0.0, %v771
  %773 = vmatprep.mubr.f32.mxu0 0.0
  %v774 = vand.u32 %v258, 4294901760
  %v775 = vsub.f32 %v258, %v774
  %v776 = vand.u32 %v775, 4294901760
  %v777 = vsub.f32 %v775, %v776
  %v778 = vand.u32 %v777, 4294901760
  %779 = vmatmul.mubr.f32.gmra.mrb[0].mxu0 %v778
  %v780 = vpop.f32.mrb[0].mxu0
  %v781 = vadd.f32 0.0, %v780
  %v782 = vpop.f32.mrb[0].mxu0
  %v783 = vadd.f32 0.0, %v782
  %784 = vmatprep.mubr.f32.mxu0 0.0
  %v785 = vand.u32 %v261, 4294901760
  %v786 = vsub.f32 %v261, %v785
  %v787 = vand.u32 %v786, 4294901760
  %v788 = vsub.f32 %v786, %v787
  %v789 = vand.u32 %v788, 4294901760
  %790 = vmatmul.mubr.f32.gmra.mrb[0].mxu0 %v789
  %v791 = vpop.f32.mrb[0].mxu0
  %v792 = vadd.f32 0.0, %v791
  %v793 = vpop.f32.mrb[0].mxu0
  %v794 = vadd.f32 0.0, %v793
  %795 = vmatprep.mubr.f32.mxu0 0.0
  %v796 = vand.u32 %v264, 4294901760
  %v797 = vsub.f32 %v264, %v796
  %v798 = vand.u32 %v797, 4294901760
  %v799 = vsub.f32 %v797, %v798
  %v800 = vand.u32 %v799, 4294901760
  %801 = vmatmul.mubr.f32.gmra.mrb[0].mxu0 %v800
  %v802 = vpop.f32.mrb[0].mxu0
  %v803 = vadd.f32 0.0, %v802
  %v804 = vpop.f32.mrb[0].mxu0
  %v805 = vadd.f32 0.0, %v804
  %806 = vmatprep.mubr.f32.mxu0 0.0
  %v807 = vand.u32 %v267, 4294901760
  %v808 = vsub.f32 %v267, %v807
  %v809 = vand.u32 %v808, 4294901760
  %v810 = vsub.f32 %v808, %v809
  %v811 = vand.u32 %v810, 4294901760
  %812 = vmatmul.mubr.f32.gmra.mrb[0].mxu0 %v811
  %v813 = vpop.f32.mrb[0].mxu0
  %v814 = vadd.f32 0.0, %v813
  %v815 = vpop.f32.mrb[0].mxu0
  %v816 = vadd.f32 0.0, %v815
  %817 = vmatprep.mubr.f32.mxu0 0.0
  %v818 = vand.u32 %v270, 4294901760
  %v819 = vsub.f32 %v270, %v818
  %v820 = vand.u32 %v819, 4294901760
  %v821 = vsub.f32 %v819, %v820
  %v822 = vand.u32 %v821, 4294901760
  %823 = vmatmul.mubr.f32.gmra.mrb[0].mxu0 %v822
  %v824 = vpop.f32.mrb[0].mxu0
  %v825 = vadd.f32 0.0, %v824
  %v826 = vpop.f32.mrb[0].mxu0
  %v827 = vadd.f32 0.0, %v826
  %828 = vmatprep.mubr.f32.mxu0 0.0
  %v829 = vand.u32 %v273, 4294901760
  %v830 = vsub.f32 %v273, %v829
  %v831 = vand.u32 %v830, 4294901760
  %v832 = vsub.f32 %v830, %v831
  %v833 = vand.u32 %v832, 4294901760
  %834 = vmatmul.mubr.f32.gmra.mrb[0].mxu0 %v833
  %v835 = vpop.f32.mrb[0].mxu0
  %v836 = vadd.f32 0.0, %v835
  %v837 = vpop.f32.mrb[0].mxu0
  %v838 = vadd.f32 0.0, %v837
  %839 = vmatprep.mubr.f32.mxu0 0.0
  %v840 = vand.u32 %v276, 4294901760
  %v841 = vsub.f32 %v276, %v840
  %v842 = vand.u32 %v841, 4294901760
  %v843 = vsub.f32 %v841, %v842
  %v844 = vand.u32 %v843, 4294901760
  %845 = vmatmul.mubr.f32.gmra.mrb[0].mxu0 %v844
  %v846 = vpop.f32.mrb[0].mxu0
  %v847 = vadd.f32 0.0, %v846
  %v848 = vpop.f32.mrb[0].mxu0
  %v849 = vadd.f32 0.0, %v848
  %850 = vmatprep.mubr.f32.mxu0 0.0
  %v851 = vand.u32 %v279, 4294901760
  %v852 = vsub.f32 %v279, %v851
  %v853 = vand.u32 %v852, 4294901760
  %v854 = vsub.f32 %v852, %v853
  %v855 = vand.u32 %v854, 4294901760
  %856 = vmatmul.mubr.f32.gmra.mrb[0].mxu0 %v855
  %v857 = vpop.f32.mrb[0].mxu0
  %v858 = vadd.f32 0.0, %v857
  %v859 = vpop.f32.mrb[0].mxu0
  %v860 = vadd.f32 0.0, %v859
  %861 = vmatprep.mubr.f32.mxu0 0.0
  %v862 = vand.u32 %v282, 4294901760
  %v863 = vsub.f32 %v282, %v862
  %v864 = vand.u32 %v863, 4294901760
  %v865 = vsub.f32 %v863, %v864
  %v866 = vand.u32 %v865, 4294901760
  %867 = vmatmul.mubr.f32.gmra.mrb[0].mxu0 %v866
  %v868 = vpop.f32.mrb[0].mxu0
  %v869 = vadd.f32 0.0, %v868
  %v870 = vpop.f32.mrb[0].mxu0
  %v871 = vadd.f32 0.0, %v870
  %872 = vmatprep.mubr.f32.mxu0 0.0
  %v873 = vand.u32 %v285, 4294901760
  %v874 = vsub.f32 %v285, %v873
  %v875 = vand.u32 %v874, 4294901760
  %v876 = vsub.f32 %v874, %v875
  %v877 = vand.u32 %v876, 4294901760
  %878 = vmatmul.mubr.f32.gmra.mrb[0].mxu0 %v877
  %v879 = vpop.f32.mrb[0].mxu0
  %v880 = vadd.f32 0.0, %v879
  %v881 = vpop.f32.mrb[0].mxu0
  %v882 = vadd.f32 0.0, %v881
  %883 = vdwg.mxu0
  %v884 = vand.u32 %v139, 4294901760
  %v885 = vsub.f32 %v139, %v884
  %v886 = vand.u32 %v885, 4294901760
  %v887 = vsub.f32 %v885, %v886
  %v888 = vand.u32 %v887, 4294901760
  %889 = vmatprep.subr.mxu0 %v888
  %v890 = vand.u32 %v138, 4294901760
  %v891 = vsub.f32 %v138, %v890
  %v892 = vand.u32 %v891, 4294901760
  %v893 = vsub.f32 %v891, %v892
  %v894 = vand.u32 %v893, 4294901760
  %895 = vmatpush1.msra.mxu0 %v894
  %v896 = vand.u32 %v141, 4294901760
  %v897 = vsub.f32 %v141, %v896
  %v898 = vand.u32 %v897, 4294901760
  %v899 = vsub.f32 %v897, %v898
  %v900 = vand.u32 %v899, 4294901760
  %901 = vmatprep.subr.mxu0 %v900
  %v902 = vand.u32 %v140, 4294901760
  %v903 = vsub.f32 %v140, %v902
  %v904 = vand.u32 %v903, 4294901760
  %v905 = vsub.f32 %v903, %v904
  %v906 = vand.u32 %v905, 4294901760
  %907 = vmatpush1.msra.mxu0 %v906
  %908 = vmatprep.subr.mxu0 0.0
  %909 = vmatpush1.msra.mxu0 0.0
  %910 = vmatprep.subr.mxu0 0.0
  %911 = vmatpush1.msra.mxu0 0.0
  %912 = vmatprep.subr.mxu0 0.0
  %913 = vmatpush1.msra.mxu0 0.0
  %914 = vmatprep.subr.mxu0 0.0
  %915 = vmatpush1.msra.mxu0 0.0
  %916 = vmatprep.subr.mxu0 0.0
  %917 = vmatpush1.msra.mxu0 0.0
  %918 = vmatprep.subr.mxu0 0.0
  %919 = vmatpush1.msra.mxu0 0.0
  %920 = vmatprep.subr.mxu0 0.0
  %921 = vmatpush1.msra.mxu0 0.0
  %922 = vmatprep.subr.mxu0 0.0
  %923 = vmatpush1.msra.mxu0 0.0
  %924 = vmatprep.subr.mxu0 0.0
  %925 = vmatpush1.msra.mxu0 0.0
  %926 = vmatprep.subr.mxu0 0.0
  %927 = vmatpush1.msra.mxu0 0.0
  %928 = vmatprep.subr.mxu0 0.0
  %929 = vmatpush1.msra.mxu0 0.0
  %930 = vmatprep.subr.mxu0 0.0
  %931 = vmatpush1.msra.mxu0 0.0
  %932 = vmatprep.subr.mxu0 0.0
  %933 = vmatpush1.msra.mxu0 0.0
  %934 = vmatprep.subr.mxu0 0.0
  %935 = vmatpush1.msra.mxu0 0.0
  %936 = vmatprep.subr.mxu0 0.0
  %937 = vmatpush1.msra.mxu0 0.0
  %938 = vmatprep.subr.mxu0 0.0
  %939 = vmatpush1.msra.mxu0 0.0
  %940 = vmatprep.subr.mxu0 0.0
  %941 = vmatpush1.msra.mxu0 0.0
  %942 = vmatprep.subr.mxu0 0.0
  %943 = vmatpush1.msra.mxu0 0.0
  %944 = vmatprep.subr.mxu0 0.0
  %945 = vmatpush1.msra.mxu0 0.0
  %946 = vmatprep.subr.mxu0 0.0
  %947 = vmatpush1.msra.mxu0 0.0
  %948 = vmatprep.subr.mxu0 0.0
  %949 = vmatpush1.msra.mxu0 0.0
  %950 = vmatprep.subr.mxu0 0.0
  %951 = vmatpush1.msra.mxu0 0.0
  %952 = vmatprep.subr.mxu0 0.0
  %953 = vmatpush1.msra.mxu0 0.0
  %954 = vmatprep.subr.mxu0 0.0
  %955 = vmatpush1.msra.mxu0 0.0
  %956 = vmatprep.subr.mxu0 0.0
  %957 = vmatpush1.msra.mxu0 0.0
  %958 = vmatprep.subr.mxu0 0.0
  %959 = vmatpush1.msra.mxu0 0.0
  %960 = vmatprep.subr.mxu0 0.0
  %961 = vmatpush1.msra.mxu0 0.0
  %962 = vmatprep.subr.mxu0 0.0
  %963 = vmatpush1.msra.mxu0 0.0
  %964 = vmatprep.subr.mxu0 0.0
  %965 = vmatpush1.msra.mxu0 0.0
  %966 = vmatprep.subr.mxu0 0.0
  %967 = vmatpush1.msra.mxu0 0.0
  %968 = vmatprep.mubr.f32.mxu0 0.0
  %v969 = vand.u32 %v144, 4294901760
  %970 = vmatmul.mubr.f32.gmra.mrb[0].mxu0 %v969
  %v971 = vpop.f32.mrb[0].mxu0
  %v972 = vadd.f32 %v363, %v971
  %v973 = vpop.f32.mrb[0].mxu0
  %v974 = vadd.f32 %v365, %v973
  %975 = vmatprep.mubr.f32.mxu0 0.0
  %v976 = vand.u32 %v147, 4294901760
  %977 = vmatmul.mubr.f32.gmra.mrb[0].mxu0 %v976
  %v978 = vpop.f32.mrb[0].mxu0
  %v979 = vadd.f32 %v374, %v978
  %v980 = vpop.f32.mrb[0].mxu0
  %v981 = vadd.f32 %v376, %v980
  %982 = vmatprep.mubr.f32.mxu0 0.0
  %v983 = vand.u32 %v150, 4294901760
  %984 = vmatmul.mubr.f32.gmra.mrb[0].mxu0 %v983
  %v985 = vpop.f32.mrb[0].mxu0
  %v986 = vadd.f32 %v385, %v985
  %v987 = vpop.f32.mrb[0].mxu0
  %v988 = vadd.f32 %v387, %v987
  %989 = vmatprep.mubr.f32.mxu0 0.0
  %v990 = vand.u32 %v153, 4294901760
  %991 = vmatmul.mubr.f32.gmra.mrb[0].mxu0 %v990
  %v992 = vpop.f32.mrb[0].mxu0
  %v993 = vadd.f32 %v396, %v992
  %v994 = vpop.f32.mrb[0].mxu0
  %v995 = vadd.f32 %v398, %v994
  %996 = vmatprep.mubr.f32.mxu0 0.0
  %v997 = vand.u32 %v156, 4294901760
  %998 = vmatmul.mubr.f32.gmra.mrb[0].mxu0 %v997
  %v999 = vpop.f32.mrb[0].mxu0
  %v1000 = vadd.f32 %v407, %v999
  %v1001 = vpop.f32.mrb[0].mxu0
  %v1002 = vadd.f32 %v409, %v1001
  %1003 = vmatprep.mubr.f32.mxu0 0.0
  %v1004 = vand.u32 %v159, 4294901760
  %1005 = vmatmul.mubr.f32.gmra.mrb[0].mxu0 %v1004
  %v1006 = vpop.f32.mrb[0].mxu0
  %v1007 = vadd.f32 %v418, %v1006
  %v1008 = vpop.f32.mrb[0].mxu0
  %v1009 = vadd.f32 %v420, %v1008
  %1010 = vmatprep.mubr.f32.mxu0 0.0
  %v1011 = vand.u32 %v162, 4294901760
  %1012 = vmatmul.mubr.f32.gmra.mrb[0].mxu0 %v1011
  %v1013 = vpop.f32.mrb[0].mxu0
  %v1014 = vadd.f32 %v429, %v1013
  %v1015 = vpop.f32.mrb[0].mxu0
  %v1016 = vadd.f32 %v431, %v1015
  %1017 = vmatprep.mubr.f32.mxu0 0.0
  %v1018 = vand.u32 %v165, 4294901760
  %1019 = vmatmul.mubr.f32.gmra.mrb[0].mxu0 %v1018
  %v1020 = vpop.f32.mrb[0].mxu0
  %v1021 = vadd.f32 %v440, %v1020
  %v1022 = vpop.f32.mrb[0].mxu0
  %v1023 = vadd.f32 %v442, %v1022
  %1024 = vmatprep.mubr.f32.mxu0 0.0
  %v1025 = vand.u32 %v168, 4294901760
  %1026 = vmatmul.mubr.f32.gmra.mrb[0].mxu0 %v1025
  %v1027 = vpop.f32.mrb[0].mxu0
  %v1028 = vadd.f32 %v451, %v1027
  %v1029 = vpop.f32.mrb[0].mxu0
  %v1030 = vadd.f32 %v453, %v1029
  %1031 = vmatprep.mubr.f32.mxu0 0.0
  %v1032 = vand.u32 %v171, 4294901760
  %1033 = vmatmul.mubr.f32.gmra.mrb[0].mxu0 %v1032
  %v1034 = vpop.f32.mrb[0].mxu0
  %v1035 = vadd.f32 %v462, %v1034
  %v1036 = vpop.f32.mrb[0].mxu0
  %v1037 = vadd.f32 %v464, %v1036
  %1038 = vmatprep.mubr.f32.mxu0 0.0
  %v1039 = vand.u32 %v174, 4294901760
  %1040 = vmatmul.mubr.f32.gmra.mrb[0].mxu0 %v1039
  %v1041 = vpop.f32.mrb[0].mxu0
  %v1042 = vadd.f32 %v473, %v1041
  %v1043 = vpop.f32.mrb[0].mxu0
  %v1044 = vadd.f32 %v475, %v1043
  %1045 = vmatprep.mubr.f32.mxu0 0.0
  %v1046 = vand.u32 %v177, 4294901760
  %1047 = vmatmul.mubr.f32.gmra.mrb[0].mxu0 %v1046
  %v1048 = vpop.f32.mrb[0].mxu0
  %v1049 = vadd.f32 %v484, %v1048
  %v1050 = vpop.f32.mrb[0].mxu0
  %v1051 = vadd.f32 %v486, %v1050
  %1052 = vmatprep.mubr.f32.mxu0 0.0
  %v1053 = vand.u32 %v180, 4294901760
  %1054 = vmatmul.mubr.f32.gmra.mrb[0].mxu0 %v1053
  %v1055 = vpop.f32.mrb[0].mxu0
  %v1056 = vadd.f32 %v495, %v1055
  %v1057 = vpop.f32.mrb[0].mxu0
  %v1058 = vadd.f32 %v497, %v1057
  %1059 = vmatprep.mubr.f32.mxu0 0.0
  %v1060 = vand.u32 %v183, 4294901760
  %1061 = vmatmul.mubr.f32.gmra.mrb[0].mxu0 %v1060
  %v1062 = vpop.f32.mrb[0].mxu0
  %v1063 = vadd.f32 %v506, %v1062
  %v1064 = vpop.f32.mrb[0].mxu0
  %v1065 = vadd.f32 %v508, %v1064
  %1066 = vmatprep.mubr.f32.mxu0 0.0
  %v1067 = vand.u32 %v186, 4294901760
  %1068 = vmatmul.mubr.f32.gmra.mrb[0].mxu0 %v1067
  %v1069 = vpop.f32.mrb[0].mxu0
  %v1070 = vadd.f32 %v517, %v1069
  %v1071 = vpop.f32.mrb[0].mxu0
  %v1072 = vadd.f32 %v519, %v1071
  %1073 = vmatprep.mubr.f32.mxu0 0.0
  %v1074 = vand.u32 %v189, 4294901760
  %1075 = vmatmul.mubr.f32.gmra.mrb[0].mxu0 %v1074
  %v1076 = vpop.f32.mrb[0].mxu0
  %v1077 = vadd.f32 %v528, %v1076
  %v1078 = vpop.f32.mrb[0].mxu0
  %v1079 = vadd.f32 %v530, %v1078
  %1080 = vmatprep.mubr.f32.mxu0 0.0
  %v1081 = vand.u32 %v192, 4294901760
  %1082 = vmatmul.mubr.f32.gmra.mrb[0].mxu0 %v1081
  %v1083 = vpop.f32.mrb[0].mxu0
  %v1084 = vadd.f32 %v539, %v1083
  %v1085 = vpop.f32.mrb[0].mxu0
  %v1086 = vadd.f32 %v541, %v1085
  %1087 = vmatprep.mubr.f32.mxu0 0.0
  %v1088 = vand.u32 %v195, 4294901760
  %1089 = vmatmul.mubr.f32.gmra.mrb[0].mxu0 %v1088
  %v1090 = vpop.f32.mrb[0].mxu0
  %v1091 = vadd.f32 %v550, %v1090
  %v1092 = vpop.f32.mrb[0].mxu0
  %v1093 = vadd.f32 %v552, %v1092
  %1094 = vmatprep.mubr.f32.mxu0 0.0
  %v1095 = vand.u32 %v198, 4294901760
  %1096 = vmatmul.mubr.f32.gmra.mrb[0].mxu0 %v1095
  %v1097 = vpop.f32.mrb[0].mxu0
  %v1098 = vadd.f32 %v561, %v1097
  %v1099 = vpop.f32.mrb[0].mxu0
  %v1100 = vadd.f32 %v563, %v1099
  %1101 = vmatprep.mubr.f32.mxu0 0.0
  %v1102 = vand.u32 %v201, 4294901760
  %1103 = vmatmul.mubr.f32.gmra.mrb[0].mxu0 %v1102
  %v1104 = vpop.f32.mrb[0].mxu0
  %v1105 = vadd.f32 %v572, %v1104
  %v1106 = vpop.f32.mrb[0].mxu0
  %v1107 = vadd.f32 %v574, %v1106
  %1108 = vmatprep.mubr.f32.mxu0 0.0
  %v1109 = vand.u32 %v204, 4294901760
  %1110 = vmatmul.mubr.f32.gmra.mrb[0].mxu0 %v1109
  %v1111 = vpop.f32.mrb[0].mxu0
  %v1112 = vadd.f32 %v583, %v1111
  %v1113 = vpop.f32.mrb[0].mxu0
  %v1114 = vadd.f32 %v585, %v1113
  %1115 = vmatprep.mubr.f32.mxu0 0.0
  %v1116 = vand.u32 %v207, 4294901760
  %1117 = vmatmul.mubr.f32.gmra.mrb[0].mxu0 %v1116
  %v1118 = vpop.f32.mrb[0].mxu0
  %v1119 = vadd.f32 %v594, %v1118
  %v1120 = vpop.f32.mrb[0].mxu0
  %v1121 = vadd.f32 %v596, %v1120
  %1122 = vmatprep.mubr.f32.mxu0 0.0
  %v1123 = vand.u32 %v210, 4294901760
  %1124 = vmatmul.mubr.f32.gmra.mrb[0].mxu0 %v1123
  %v1125 = vpop.f32.mrb[0].mxu0
  %v1126 = vadd.f32 %v605, %v1125
  %v1127 = vpop.f32.mrb[0].mxu0
  %v1128 = vadd.f32 %v607, %v1127
  %1129 = vmatprep.mubr.f32.mxu0 0.0
  %v1130 = vand.u32 %v213, 4294901760
  %1131 = vmatmul.mubr.f32.gmra.mrb[0].mxu0 %v1130
  %v1132 = vpop.f32.mrb[0].mxu0
  %v1133 = vadd.f32 %v616, %v1132
  %v1134 = vpop.f32.mrb[0].mxu0
  %v1135 = vadd.f32 %v618, %v1134
  %1136 = vmatprep.mubr.f32.mxu0 0.0
  %v1137 = vand.u32 %v216, 4294901760
  %1138 = vmatmul.mubr.f32.gmra.mrb[0].mxu0 %v1137
  %v1139 = vpop.f32.mrb[0].mxu0
  %v1140 = vadd.f32 %v627, %v1139
  %v1141 = vpop.f32.mrb[0].mxu0
  %v1142 = vadd.f32 %v629, %v1141
  %1143 = vmatprep.mubr.f32.mxu0 0.0
  %v1144 = vand.u32 %v219, 4294901760
  %1145 = vmatmul.mubr.f32.gmra.mrb[0].mxu0 %v1144
  %v1146 = vpop.f32.mrb[0].mxu0
  %v1147 = vadd.f32 %v638, %v1146
  %v1148 = vpop.f32.mrb[0].mxu0
  %v1149 = vadd.f32 %v640, %v1148
  %1150 = vmatprep.mubr.f32.mxu0 0.0
  %v1151 = vand.u32 %v222, 4294901760
  %1152 = vmatmul.mubr.f32.gmra.mrb[0].mxu0 %v1151
  %v1153 = vpop.f32.mrb[0].mxu0
  %v1154 = vadd.f32 %v649, %v1153
  %v1155 = vpop.f32.mrb[0].mxu0
  %v1156 = vadd.f32 %v651, %v1155
  %1157 = vmatprep.mubr.f32.mxu0 0.0
  %v1158 = vand.u32 %v225, 4294901760
  %1159 = vmatmul.mubr.f32.gmra.mrb[0].mxu0 %v1158
  %v1160 = vpop.f32.mrb[0].mxu0
  %v1161 = vadd.f32 %v660, %v1160
  %v1162 = vpop.f32.mrb[0].mxu0
  %v1163 = vadd.f32 %v662, %v1162
  %1164 = vmatprep.mubr.f32.mxu0 0.0
  %v1165 = vand.u32 %v228, 4294901760
  %1166 = vmatmul.mubr.f32.gmra.mrb[0].mxu0 %v1165
  %v1167 = vpop.f32.mrb[0].mxu0
  %v1168 = vadd.f32 %v671, %v1167
  %v1169 = vpop.f32.mrb[0].mxu0
  %v1170 = vadd.f32 %v673, %v1169
  %1171 = vmatprep.mubr.f32.mxu0 0.0
  %v1172 = vand.u32 %v231, 4294901760
  %1173 = vmatmul.mubr.f32.gmra.mrb[0].mxu0 %v1172
  %v1174 = vpop.f32.mrb[0].mxu0
  %v1175 = vadd.f32 %v682, %v1174
  %v1176 = vpop.f32.mrb[0].mxu0
  %v1177 = vadd.f32 %v684, %v1176
  %1178 = vmatprep.mubr.f32.mxu0 0.0
  %v1179 = vand.u32 %v234, 4294901760
  %1180 = vmatmul.mubr.f32.gmra.mrb[0].mxu0 %v1179
  %v1181 = vpop.f32.mrb[0].mxu0
  %v1182 = vadd.f32 %v693, %v1181
  %v1183 = vpop.f32.mrb[0].mxu0
  %v1184 = vadd.f32 %v695, %v1183
  %1185 = vmatprep.mubr.f32.mxu0 0.0
  %v1186 = vand.u32 %v237, 4294901760
  %1187 = vmatmul.mubr.f32.gmra.mrb[0].mxu0 %v1186
  %v1188 = vpop.f32.mrb[0].mxu0
  %v1189 = vadd.f32 %v704, %v1188
  %v1190 = vpop.f32.mrb[0].mxu0
  %v1191 = vadd.f32 %v706, %v1190
  %1192 = vmatprep.mubr.f32.mxu0 0.0
  %v1193 = vand.u32 %v240, 4294901760
  %1194 = vmatmul.mubr.f32.gmra.mrb[0].mxu0 %v1193
  %v1195 = vpop.f32.mrb[0].mxu0
  %v1196 = vadd.f32 %v715, %v1195
  %v1197 = vpop.f32.mrb[0].mxu0
  %v1198 = vadd.f32 %v717, %v1197
  %1199 = vmatprep.mubr.f32.mxu0 0.0
  %v1200 = vand.u32 %v243, 4294901760
  %1201 = vmatmul.mubr.f32.gmra.mrb[0].mxu0 %v1200
  %v1202 = vpop.f32.mrb[0].mxu0
  %v1203 = vadd.f32 %v726, %v1202
  %v1204 = vpop.f32.mrb[0].mxu0
  %v1205 = vadd.f32 %v728, %v1204
  %1206 = vmatprep.mubr.f32.mxu0 0.0
  %v1207 = vand.u32 %v246, 4294901760
  %1208 = vmatmul.mubr.f32.gmra.mrb[0].mxu0 %v1207
  %v1209 = vpop.f32.mrb[0].mxu0
  %v1210 = vadd.f32 %v737, %v1209
  %v1211 = vpop.f32.mrb[0].mxu0
  %v1212 = vadd.f32 %v739, %v1211
  %1213 = vmatprep.mubr.f32.mxu0 0.0
  %v1214 = vand.u32 %v249, 4294901760
  %1215 = vmatmul.mubr.f32.gmra.mrb[0].mxu0 %v1214
  %v1216 = vpop.f32.mrb[0].mxu0
  %v1217 = vadd.f32 %v748, %v1216
  %v1218 = vpop.f32.mrb[0].mxu0
  %v1219 = vadd.f32 %v750, %v1218
  %1220 = vmatprep.mubr.f32.mxu0 0.0
  %v1221 = vand.u32 %v252, 4294901760
  %1222 = vmatmul.mubr.f32.gmra.mrb[0].mxu0 %v1221
  %v1223 = vpop.f32.mrb[0].mxu0
  %v1224 = vadd.f32 %v759, %v1223
  %v1225 = vpop.f32.mrb[0].mxu0
  %v1226 = vadd.f32 %v761, %v1225
  %1227 = vmatprep.mubr.f32.mxu0 0.0
  %v1228 = vand.u32 %v255, 4294901760
  %1229 = vmatmul.mubr.f32.gmra.mrb[0].mxu0 %v1228
  %v1230 = vpop.f32.mrb[0].mxu0
  %v1231 = vadd.f32 %v770, %v1230
  %v1232 = vpop.f32.mrb[0].mxu0
  %v1233 = vadd.f32 %v772, %v1232
  %1234 = vmatprep.mubr.f32.mxu0 0.0
  %v1235 = vand.u32 %v258, 4294901760
  %1236 = vmatmul.mubr.f32.gmra.mrb[0].mxu0 %v1235
  %v1237 = vpop.f32.mrb[0].mxu0
  %v1238 = vadd.f32 %v781, %v1237
  %v1239 = vpop.f32.mrb[0].mxu0
  %v1240 = vadd.f32 %v783, %v1239
  %1241 = vmatprep.mubr.f32.mxu0 0.0
  %v1242 = vand.u32 %v261, 4294901760
  %1243 = vmatmul.mubr.f32.gmra.mrb[0].mxu0 %v1242
  %v1244 = vpop.f32.mrb[0].mxu0
  %v1245 = vadd.f32 %v792, %v1244
  %v1246 = vpop.f32.mrb[0].mxu0
  %v1247 = vadd.f32 %v794, %v1246
  %1248 = vmatprep.mubr.f32.mxu0 0.0
  %v1249 = vand.u32 %v264, 4294901760
  %1250 = vmatmul.mubr.f32.gmra.mrb[0].mxu0 %v1249
  %v1251 = vpop.f32.mrb[0].mxu0
  %v1252 = vadd.f32 %v803, %v1251
  %v1253 = vpop.f32.mrb[0].mxu0
  %v1254 = vadd.f32 %v805, %v1253
  %1255 = vmatprep.mubr.f32.mxu0 0.0
  %v1256 = vand.u32 %v267, 4294901760
  %1257 = vmatmul.mubr.f32.gmra.mrb[0].mxu0 %v1256
  %v1258 = vpop.f32.mrb[0].mxu0
  %v1259 = vadd.f32 %v814, %v1258
  %v1260 = vpop.f32.mrb[0].mxu0
  %v1261 = vadd.f32 %v816, %v1260
  %1262 = vmatprep.mubr.f32.mxu0 0.0
  %v1263 = vand.u32 %v270, 4294901760
  %1264 = vmatmul.mubr.f32.gmra.mrb[0].mxu0 %v1263
  %v1265 = vpop.f32.mrb[0].mxu0
  %v1266 = vadd.f32 %v825, %v1265
  %v1267 = vpop.f32.mrb[0].mxu0
  %v1268 = vadd.f32 %v827, %v1267
  %1269 = vmatprep.mubr.f32.mxu0 0.0
  %v1270 = vand.u32 %v273, 4294901760
  %1271 = vmatmul.mubr.f32.gmra.mrb[0].mxu0 %v1270
  %v1272 = vpop.f32.mrb[0].mxu0
  %v1273 = vadd.f32 %v836, %v1272
  %v1274 = vpop.f32.mrb[0].mxu0
  %v1275 = vadd.f32 %v838, %v1274
  %1276 = vmatprep.mubr.f32.mxu0 0.0
  %v1277 = vand.u32 %v276, 4294901760
  %1278 = vmatmul.mubr.f32.gmra.mrb[0].mxu0 %v1277
  %v1279 = vpop.f32.mrb[0].mxu0
  %v1280 = vadd.f32 %v847, %v1279
  %v1281 = vpop.f32.mrb[0].mxu0
  %v1282 = vadd.f32 %v849, %v1281
  %1283 = vmatprep.mubr.f32.mxu0 0.0
  %v1284 = vand.u32 %v279, 4294901760
  %1285 = vmatmul.mubr.f32.gmra.mrb[0].mxu0 %v1284
  %v1286 = vpop.f32.mrb[0].mxu0
  %v1287 = vadd.f32 %v858, %v1286
  %v1288 = vpop.f32.mrb[0].mxu0
  %v1289 = vadd.f32 %v860, %v1288
  %1290 = vmatprep.mubr.f32.mxu0 0.0
  %v1291 = vand.u32 %v282, 4294901760
  %1292 = vmatmul.mubr.f32.gmra.mrb[0].mxu0 %v1291
  %v1293 = vpop.f32.mrb[0].mxu0
  %v1294 = vadd.f32 %v869, %v1293
  %v1295 = vpop.f32.mrb[0].mxu0
  %v1296 = vadd.f32 %v871, %v1295
  %1297 = vmatprep.mubr.f32.mxu0 0.0
  %v1298 = vand.u32 %v285, 4294901760
  %1299 = vmatmul.mubr.f32.gmra.mrb[0].mxu0 %v1298
  %v1300 = vpop.f32.mrb[0].mxu0
  %v1301 = vadd.f32 %v880, %v1300
  %v1302 = vpop.f32.mrb[0].mxu0
  %v1303 = vadd.f32 %v882, %v1302
  %1304 = vdwg.mxu0
  %v1305 = vand.u32 %v139, 4294901760
  %v1306 = vsub.f32 %v139, %v1305
  %1307 = vmatprep.subr.mxu0 %v1306
  %v1308 = vand.u32 %v138, 4294901760
  %v1309 = vsub.f32 %v138, %v1308
  %1310 = vmatpush1.msra.mxu0 %v1309
  %v1311 = vand.u32 %v141, 4294901760
  %v1312 = vsub.f32 %v141, %v1311
  %1313 = vmatprep.subr.mxu0 %v1312
  %v1314 = vand.u32 %v140, 4294901760
  %v1315 = vsub.f32 %v140, %v1314
  %1316 = vmatpush1.msra.mxu0 %v1315
  %1317 = vmatprep.subr.mxu0 0.0
  %1318 = vmatpush1.msra.mxu0 0.0
  %1319 = vmatprep.subr.mxu0 0.0
  %1320 = vmatpush1.msra.mxu0 0.0
  %1321 = vmatprep.subr.mxu0 0.0
  %1322 = vmatpush1.msra.mxu0 0.0
  %1323 = vmatprep.subr.mxu0 0.0
  %1324 = vmatpush1.msra.mxu0 0.0
  %1325 = vmatprep.subr.mxu0 0.0
  %1326 = vmatpush1.msra.mxu0 0.0
  %1327 = vmatprep.subr.mxu0 0.0
  %1328 = vmatpush1.msra.mxu0 0.0
  %1329 = vmatprep.subr.mxu0 0.0
  %1330 = vmatpush1.msra.mxu0 0.0
  %1331 = vmatprep.subr.mxu0 0.0
  %1332 = vmatpush1.msra.mxu0 0.0
  %1333 = vmatprep.subr.mxu0 0.0
  %1334 = vmatpush1.msra.mxu0 0.0
  %1335 = vmatprep.subr.mxu0 0.0
  %1336 = vmatpush1.msra.mxu0 0.0
  %1337 = vmatprep.subr.mxu0 0.0
  %1338 = vmatpush1.msra.mxu0 0.0
  %1339 = vmatprep.subr.mxu0 0.0
  %1340 = vmatpush1.msra.mxu0 0.0
  %1341 = vmatprep.subr.mxu0 0.0
  %1342 = vmatpush1.msra.mxu0 0.0
  %1343 = vmatprep.subr.mxu0 0.0
  %1344 = vmatpush1.msra.mxu0 0.0
  %1345 = vmatprep.subr.mxu0 0.0
  %1346 = vmatpush1.msra.mxu0 0.0
  %1347 = vmatprep.subr.mxu0 0.0
  %1348 = vmatpush1.msra.mxu0 0.0
  %1349 = vmatprep.subr.mxu0 0.0
  %1350 = vmatpush1.msra.mxu0 0.0
  %1351 = vmatprep.subr.mxu0 0.0
  %1352 = vmatpush1.msra.mxu0 0.0
  %1353 = vmatprep.subr.mxu0 0.0
  %1354 = vmatpush1.msra.mxu0 0.0
  %1355 = vmatprep.subr.mxu0 0.0
  %1356 = vmatpush1.msra.mxu0 0.0
  %1357 = vmatprep.subr.mxu0 0.0
  %1358 = vmatpush1.msra.mxu0 0.0
  %1359 = vmatprep.subr.mxu0 0.0
  %1360 = vmatpush1.msra.mxu0 0.0
  %1361 = vmatprep.subr.mxu0 0.0
  %1362 = vmatpush1.msra.mxu0 0.0
  %1363 = vmatprep.subr.mxu0 0.0
  %1364 = vmatpush1.msra.mxu0 0.0
  %1365 = vmatprep.subr.mxu0 0.0
  %1366 = vmatpush1.msra.mxu0 0.0
  %1367 = vmatprep.subr.mxu0 0.0
  %1368 = vmatpush1.msra.mxu0 0.0
  %1369 = vmatprep.subr.mxu0 0.0
  %1370 = vmatpush1.msra.mxu0 0.0
  %1371 = vmatprep.subr.mxu0 0.0
  %1372 = vmatpush1.msra.mxu0 0.0
  %1373 = vmatprep.subr.mxu0 0.0
  %1374 = vmatpush1.msra.mxu0 0.0
  %1375 = vmatprep.subr.mxu0 0.0
  %1376 = vmatpush1.msra.mxu0 0.0
  %1377 = vmatprep.mubr.f32.mxu0 0.0
  %v1378 = vand.u32 %v144, 4294901760
  %v1379 = vsub.f32 %v144, %v1378
  %1380 = vmatmul.mubr.f32.gmra.mrb[0].mxu0 %v1379
  %v1381 = vpop.f32.mrb[0].mxu0
  %v1382 = vadd.f32 %v972, %v1381
  %v1383 = vpop.f32.mrb[0].mxu0
  %v1384 = vadd.f32 %v974, %v1383
  %1385 = vmatprep.mubr.f32.mxu0 0.0
  %v1386 = vand.u32 %v147, 4294901760
  %v1387 = vsub.f32 %v147, %v1386
  %1388 = vmatmul.mubr.f32.gmra.mrb[0].mxu0 %v1387
  %v1389 = vpop.f32.mrb[0].mxu0
  %v1390 = vadd.f32 %v979, %v1389
  %v1391 = vpop.f32.mrb[0].mxu0
  %v1392 = vadd.f32 %v981, %v1391
  %1393 = vmatprep.mubr.f32.mxu0 0.0
  %v1394 = vand.u32 %v150, 4294901760
  %v1395 = vsub.f32 %v150, %v1394
  %1396 = vmatmul.mubr.f32.gmra.mrb[0].mxu0 %v1395
  %v1397 = vpop.f32.mrb[0].mxu0
  %v1398 = vadd.f32 %v986, %v1397
  %v1399 = vpop.f32.mrb[0].mxu0
  %v1400 = vadd.f32 %v988, %v1399
  %1401 = vmatprep.mubr.f32.mxu0 0.0
  %v1402 = vand.u32 %v153, 4294901760
  %v1403 = vsub.f32 %v153, %v1402
  %1404 = vmatmul.mubr.f32.gmra.mrb[0].mxu0 %v1403
  %v1405 = vpop.f32.mrb[0].mxu0
  %v1406 = vadd.f32 %v993, %v1405
  %v1407 = vpop.f32.mrb[0].mxu0
  %v1408 = vadd.f32 %v995, %v1407
  %1409 = vmatprep.mubr.f32.mxu0 0.0
  %v1410 = vand.u32 %v156, 4294901760
  %v1411 = vsub.f32 %v156, %v1410
  %1412 = vmatmul.mubr.f32.gmra.mrb[0].mxu0 %v1411
  %v1413 = vpop.f32.mrb[0].mxu0
  %v1414 = vadd.f32 %v1000, %v1413
  %v1415 = vpop.f32.mrb[0].mxu0
  %v1416 = vadd.f32 %v1002, %v1415
  %1417 = vmatprep.mubr.f32.mxu0 0.0
  %v1418 = vand.u32 %v159, 4294901760
  %v1419 = vsub.f32 %v159, %v1418
  %1420 = vmatmul.mubr.f32.gmra.mrb[0].mxu0 %v1419
  %v1421 = vpop.f32.mrb[0].mxu0
  %v1422 = vadd.f32 %v1007, %v1421
  %v1423 = vpop.f32.mrb[0].mxu0
  %v1424 = vadd.f32 %v1009, %v1423
  %1425 = vmatprep.mubr.f32.mxu0 0.0
  %v1426 = vand.u32 %v162, 4294901760
  %v1427 = vsub.f32 %v162, %v1426
  %1428 = vmatmul.mubr.f32.gmra.mrb[0].mxu0 %v1427
  %v1429 = vpop.f32.mrb[0].mxu0
  %v1430 = vadd.f32 %v1014, %v1429
  %v1431 = vpop.f32.mrb[0].mxu0
  %v1432 = vadd.f32 %v1016, %v1431
  %1433 = vmatprep.mubr.f32.mxu0 0.0
  %v1434 = vand.u32 %v165, 4294901760
  %v1435 = vsub.f32 %v165, %v1434
  %1436 = vmatmul.mubr.f32.gmra.mrb[0].mxu0 %v1435
  %v1437 = vpop.f32.mrb[0].mxu0
  %v1438 = vadd.f32 %v1021, %v1437
  %v1439 = vpop.f32.mrb[0].mxu0
  %v1440 = vadd.f32 %v1023, %v1439
  %1441 = vmatprep.mubr.f32.mxu0 0.0
  %v1442 = vand.u32 %v168, 4294901760
  %v1443 = vsub.f32 %v168, %v1442
  %1444 = vmatmul.mubr.f32.gmra.mrb[0].mxu0 %v1443
  %v1445 = vpop.f32.mrb[0].mxu0
  %v1446 = vadd.f32 %v1028, %v1445
  %v1447 = vpop.f32.mrb[0].mxu0
  %v1448 = vadd.f32 %v1030, %v1447
  %1449 = vmatprep.mubr.f32.mxu0 0.0
  %v1450 = vand.u32 %v171, 4294901760
  %v1451 = vsub.f32 %v171, %v1450
  %1452 = vmatmul.mubr.f32.gmra.mrb[0].mxu0 %v1451
  %v1453 = vpop.f32.mrb[0].mxu0
  %v1454 = vadd.f32 %v1035, %v1453
  %v1455 = vpop.f32.mrb[0].mxu0
  %v1456 = vadd.f32 %v1037, %v1455
  %1457 = vmatprep.mubr.f32.mxu0 0.0
  %v1458 = vand.u32 %v174, 4294901760
  %v1459 = vsub.f32 %v174, %v1458
  %1460 = vmatmul.mubr.f32.gmra.mrb[0].mxu0 %v1459
  %v1461 = vpop.f32.mrb[0].mxu0
  %v1462 = vadd.f32 %v1042, %v1461
  %v1463 = vpop.f32.mrb[0].mxu0
  %v1464 = vadd.f32 %v1044, %v1463
  %1465 = vmatprep.mubr.f32.mxu0 0.0
  %v1466 = vand.u32 %v177, 4294901760
  %v1467 = vsub.f32 %v177, %v1466
  %1468 = vmatmul.mubr.f32.gmra.mrb[0].mxu0 %v1467
  %v1469 = vpop.f32.mrb[0].mxu0
  %v1470 = vadd.f32 %v1049, %v1469
  %v1471 = vpop.f32.mrb[0].mxu0
  %v1472 = vadd.f32 %v1051, %v1471
  %1473 = vmatprep.mubr.f32.mxu0 0.0
  %v1474 = vand.u32 %v180, 4294901760
  %v1475 = vsub.f32 %v180, %v1474
  %1476 = vmatmul.mubr.f32.gmra.mrb[0].mxu0 %v1475
  %v1477 = vpop.f32.mrb[0].mxu0
  %v1478 = vadd.f32 %v1056, %v1477
  %v1479 = vpop.f32.mrb[0].mxu0
  %v1480 = vadd.f32 %v1058, %v1479
  %1481 = vmatprep.mubr.f32.mxu0 0.0
  %v1482 = vand.u32 %v183, 4294901760
  %v1483 = vsub.f32 %v183, %v1482
  %1484 = vmatmul.mubr.f32.gmra.mrb[0].mxu0 %v1483
  %v1485 = vpop.f32.mrb[0].mxu0
  %v1486 = vadd.f32 %v1063, %v1485
  %v1487 = vpop.f32.mrb[0].mxu0
  %v1488 = vadd.f32 %v1065, %v1487
  %1489 = vmatprep.mubr.f32.mxu0 0.0
  %v1490 = vand.u32 %v186, 4294901760
  %v1491 = vsub.f32 %v186, %v1490
  %1492 = vmatmul.mubr.f32.gmra.mrb[0].mxu0 %v1491
  %v1493 = vpop.f32.mrb[0].mxu0
  %v1494 = vadd.f32 %v1070, %v1493
  %v1495 = vpop.f32.mrb[0].mxu0
  %v1496 = vadd.f32 %v1072, %v1495
  %1497 = vmatprep.mubr.f32.mxu0 0.0
  %v1498 = vand.u32 %v189, 4294901760
  %v1499 = vsub.f32 %v189, %v1498
  %1500 = vmatmul.mubr.f32.gmra.mrb[0].mxu0 %v1499
  %v1501 = vpop.f32.mrb[0].mxu0
  %v1502 = vadd.f32 %v1077, %v1501
  %v1503 = vpop.f32.mrb[0].mxu0
  %v1504 = vadd.f32 %v1079, %v1503
  %1505 = vmatprep.mubr.f32.mxu0 0.0
  %v1506 = vand.u32 %v192, 4294901760
  %v1507 = vsub.f32 %v192, %v1506
  %1508 = vmatmul.mubr.f32.gmra.mrb[0].mxu0 %v1507
  %v1509 = vpop.f32.mrb[0].mxu0
  %v1510 = vadd.f32 %v1084, %v1509
  %v1511 = vpop.f32.mrb[0].mxu0
  %v1512 = vadd.f32 %v1086, %v1511
  %1513 = vmatprep.mubr.f32.mxu0 0.0
  %v1514 = vand.u32 %v195, 4294901760
  %v1515 = vsub.f32 %v195, %v1514
  %1516 = vmatmul.mubr.f32.gmra.mrb[0].mxu0 %v1515
  %v1517 = vpop.f32.mrb[0].mxu0
  %v1518 = vadd.f32 %v1091, %v1517
  %v1519 = vpop.f32.mrb[0].mxu0
  %v1520 = vadd.f32 %v1093, %v1519
  %1521 = vmatprep.mubr.f32.mxu0 0.0
  %v1522 = vand.u32 %v198, 4294901760
  %v1523 = vsub.f32 %v198, %v1522
  %1524 = vmatmul.mubr.f32.gmra.mrb[0].mxu0 %v1523
  %v1525 = vpop.f32.mrb[0].mxu0
  %v1526 = vadd.f32 %v1098, %v1525
  %v1527 = vpop.f32.mrb[0].mxu0
  %v1528 = vadd.f32 %v1100, %v1527
  %1529 = vmatprep.mubr.f32.mxu0 0.0
  %v1530 = vand.u32 %v201, 4294901760
  %v1531 = vsub.f32 %v201, %v1530
  %1532 = vmatmul.mubr.f32.gmra.mrb[0].mxu0 %v1531
  %v1533 = vpop.f32.mrb[0].mxu0
  %v1534 = vadd.f32 %v1105, %v1533
  %v1535 = vpop.f32.mrb[0].mxu0
  %v1536 = vadd.f32 %v1107, %v1535
  %1537 = vmatprep.mubr.f32.mxu0 0.0
  %v1538 = vand.u32 %v204, 4294901760
  %v1539 = vsub.f32 %v204, %v1538
  %1540 = vmatmul.mubr.f32.gmra.mrb[0].mxu0 %v1539
  %v1541 = vpop.f32.mrb[0].mxu0
  %v1542 = vadd.f32 %v1112, %v1541
  %v1543 = vpop.f32.mrb[0].mxu0
  %v1544 = vadd.f32 %v1114, %v1543
  %1545 = vmatprep.mubr.f32.mxu0 0.0
  %v1546 = vand.u32 %v207, 4294901760
  %v1547 = vsub.f32 %v207, %v1546
  %1548 = vmatmul.mubr.f32.gmra.mrb[0].mxu0 %v1547
  %v1549 = vpop.f32.mrb[0].mxu0
  %v1550 = vadd.f32 %v1119, %v1549
  %v1551 = vpop.f32.mrb[0].mxu0
  %v1552 = vadd.f32 %v1121, %v1551
  %1553 = vmatprep.mubr.f32.mxu0 0.0
  %v1554 = vand.u32 %v210, 4294901760
  %v1555 = vsub.f32 %v210, %v1554
  %1556 = vmatmul.mubr.f32.gmra.mrb[0].mxu0 %v1555
  %v1557 = vpop.f32.mrb[0].mxu0
  %v1558 = vadd.f32 %v1126, %v1557
  %v1559 = vpop.f32.mrb[0].mxu0
  %v1560 = vadd.f32 %v1128, %v1559
  %1561 = vmatprep.mubr.f32.mxu0 0.0
  %v1562 = vand.u32 %v213, 4294901760
  %v1563 = vsub.f32 %v213, %v1562
  %1564 = vmatmul.mubr.f32.gmra.mrb[0].mxu0 %v1563
  %v1565 = vpop.f32.mrb[0].mxu0
  %v1566 = vadd.f32 %v1133, %v1565
  %v1567 = vpop.f32.mrb[0].mxu0
  %v1568 = vadd.f32 %v1135, %v1567
  %1569 = vmatprep.mubr.f32.mxu0 0.0
  %v1570 = vand.u32 %v216, 4294901760
  %v1571 = vsub.f32 %v216, %v1570
  %1572 = vmatmul.mubr.f32.gmra.mrb[0].mxu0 %v1571
  %v1573 = vpop.f32.mrb[0].mxu0
  %v1574 = vadd.f32 %v1140, %v1573
  %v1575 = vpop.f32.mrb[0].mxu0
  %v1576 = vadd.f32 %v1142, %v1575
  %1577 = vmatprep.mubr.f32.mxu0 0.0
  %v1578 = vand.u32 %v219, 4294901760
  %v1579 = vsub.f32 %v219, %v1578
  %1580 = vmatmul.mubr.f32.gmra.mrb[0].mxu0 %v1579
  %v1581 = vpop.f32.mrb[0].mxu0
  %v1582 = vadd.f32 %v1147, %v1581
  %v1583 = vpop.f32.mrb[0].mxu0
  %v1584 = vadd.f32 %v1149, %v1583
  %1585 = vmatprep.mubr.f32.mxu0 0.0
  %v1586 = vand.u32 %v222, 4294901760
  %v1587 = vsub.f32 %v222, %v1586
  %1588 = vmatmul.mubr.f32.gmra.mrb[0].mxu0 %v1587
  %v1589 = vpop.f32.mrb[0].mxu0
  %v1590 = vadd.f32 %v1154, %v1589
  %v1591 = vpop.f32.mrb[0].mxu0
  %v1592 = vadd.f32 %v1156, %v1591
  %1593 = vmatprep.mubr.f32.mxu0 0.0
  %v1594 = vand.u32 %v225, 4294901760
  %v1595 = vsub.f32 %v225, %v1594
  %1596 = vmatmul.mubr.f32.gmra.mrb[0].mxu0 %v1595
  %v1597 = vpop.f32.mrb[0].mxu0
  %v1598 = vadd.f32 %v1161, %v1597
  %v1599 = vpop.f32.mrb[0].mxu0
  %v1600 = vadd.f32 %v1163, %v1599
  %1601 = vmatprep.mubr.f32.mxu0 0.0
  %v1602 = vand.u32 %v228, 4294901760
  %v1603 = vsub.f32 %v228, %v1602
  %1604 = vmatmul.mubr.f32.gmra.mrb[0].mxu0 %v1603
  %v1605 = vpop.f32.mrb[0].mxu0
  %v1606 = vadd.f32 %v1168, %v1605
  %v1607 = vpop.f32.mrb[0].mxu0
  %v1608 = vadd.f32 %v1170, %v1607
  %1609 = vmatprep.mubr.f32.mxu0 0.0
  %v1610 = vand.u32 %v231, 4294901760
  %v1611 = vsub.f32 %v231, %v1610
  %1612 = vmatmul.mubr.f32.gmra.mrb[0].mxu0 %v1611
  %v1613 = vpop.f32.mrb[0].mxu0
  %v1614 = vadd.f32 %v1175, %v1613
  %v1615 = vpop.f32.mrb[0].mxu0
  %v1616 = vadd.f32 %v1177, %v1615
  %1617 = vmatprep.mubr.f32.mxu0 0.0
  %v1618 = vand.u32 %v234, 4294901760
  %v1619 = vsub.f32 %v234, %v1618
  %1620 = vmatmul.mubr.f32.gmra.mrb[0].mxu0 %v1619
  %v1621 = vpop.f32.mrb[0].mxu0
  %v1622 = vadd.f32 %v1182, %v1621
  %v1623 = vpop.f32.mrb[0].mxu0
  %v1624 = vadd.f32 %v1184, %v1623
  %1625 = vmatprep.mubr.f32.mxu0 0.0
  %v1626 = vand.u32 %v237, 4294901760
  %v1627 = vsub.f32 %v237, %v1626
  %1628 = vmatmul.mubr.f32.gmra.mrb[0].mxu0 %v1627
  %v1629 = vpop.f32.mrb[0].mxu0
  %v1630 = vadd.f32 %v1189, %v1629
  %v1631 = vpop.f32.mrb[0].mxu0
  %v1632 = vadd.f32 %v1191, %v1631
  %1633 = vmatprep.mubr.f32.mxu0 0.0
  %v1634 = vand.u32 %v240, 4294901760
  %v1635 = vsub.f32 %v240, %v1634
  %1636 = vmatmul.mubr.f32.gmra.mrb[0].mxu0 %v1635
  %v1637 = vpop.f32.mrb[0].mxu0
  %v1638 = vadd.f32 %v1196, %v1637
  %v1639 = vpop.f32.mrb[0].mxu0
  %v1640 = vadd.f32 %v1198, %v1639
  %1641 = vmatprep.mubr.f32.mxu0 0.0
  %v1642 = vand.u32 %v243, 4294901760
  %v1643 = vsub.f32 %v243, %v1642
  %1644 = vmatmul.mubr.f32.gmra.mrb[0].mxu0 %v1643
  %v1645 = vpop.f32.mrb[0].mxu0
  %v1646 = vadd.f32 %v1203, %v1645
  %v1647 = vpop.f32.mrb[0].mxu0
  %v1648 = vadd.f32 %v1205, %v1647
  %1649 = vmatprep.mubr.f32.mxu0 0.0
  %v1650 = vand.u32 %v246, 4294901760
  %v1651 = vsub.f32 %v246, %v1650
  %1652 = vmatmul.mubr.f32.gmra.mrb[0].mxu0 %v1651
  %v1653 = vpop.f32.mrb[0].mxu0
  %v1654 = vadd.f32 %v1210, %v1653
  %v1655 = vpop.f32.mrb[0].mxu0
  %v1656 = vadd.f32 %v1212, %v1655
  %1657 = vmatprep.mubr.f32.mxu0 0.0
  %v1658 = vand.u32 %v249, 4294901760
  %v1659 = vsub.f32 %v249, %v1658
  %1660 = vmatmul.mubr.f32.gmra.mrb[0].mxu0 %v1659
  %v1661 = vpop.f32.mrb[0].mxu0
  %v1662 = vadd.f32 %v1217, %v1661
  %v1663 = vpop.f32.mrb[0].mxu0
  %v1664 = vadd.f32 %v1219, %v1663
  %1665 = vmatprep.mubr.f32.mxu0 0.0
  %v1666 = vand.u32 %v252, 4294901760
  %v1667 = vsub.f32 %v252, %v1666
  %1668 = vmatmul.mubr.f32.gmra.mrb[0].mxu0 %v1667
  %v1669 = vpop.f32.mrb[0].mxu0
  %v1670 = vadd.f32 %v1224, %v1669
  %v1671 = vpop.f32.mrb[0].mxu0
  %v1672 = vadd.f32 %v1226, %v1671
  %1673 = vmatprep.mubr.f32.mxu0 0.0
  %v1674 = vand.u32 %v255, 4294901760
  %v1675 = vsub.f32 %v255, %v1674
  %1676 = vmatmul.mubr.f32.gmra.mrb[0].mxu0 %v1675
  %v1677 = vpop.f32.mrb[0].mxu0
  %v1678 = vadd.f32 %v1231, %v1677
  %v1679 = vpop.f32.mrb[0].mxu0
  %v1680 = vadd.f32 %v1233, %v1679
  %1681 = vmatprep.mubr.f32.mxu0 0.0
  %v1682 = vand.u32 %v258, 4294901760
  %v1683 = vsub.f32 %v258, %v1682
  %1684 = vmatmul.mubr.f32.gmra.mrb[0].mxu0 %v1683
  %v1685 = vpop.f32.mrb[0].mxu0
  %v1686 = vadd.f32 %v1238, %v1685
  %v1687 = vpop.f32.mrb[0].mxu0
  %v1688 = vadd.f32 %v1240, %v1687
  %1689 = vmatprep.mubr.f32.mxu0 0.0
  %v1690 = vand.u32 %v261, 4294901760
  %v1691 = vsub.f32 %v261, %v1690
  %1692 = vmatmul.mubr.f32.gmra.mrb[0].mxu0 %v1691
  %v1693 = vpop.f32.mrb[0].mxu0
  %v1694 = vadd.f32 %v1245, %v1693
  %v1695 = vpop.f32.mrb[0].mxu0
  %v1696 = vadd.f32 %v1247, %v1695
  %1697 = vmatprep.mubr.f32.mxu0 0.0
  %v1698 = vand.u32 %v264, 4294901760
  %v1699 = vsub.f32 %v264, %v1698
  %1700 = vmatmul.mubr.f32.gmra.mrb[0].mxu0 %v1699
  %v1701 = vpop.f32.mrb[0].mxu0
  %v1702 = vadd.f32 %v1252, %v1701
  %v1703 = vpop.f32.mrb[0].mxu0
  %v1704 = vadd.f32 %v1254, %v1703
  %1705 = vmatprep.mubr.f32.mxu0 0.0
  %v1706 = vand.u32 %v267, 4294901760
  %v1707 = vsub.f32 %v267, %v1706
  %1708 = vmatmul.mubr.f32.gmra.mrb[0].mxu0 %v1707
  %v1709 = vpop.f32.mrb[0].mxu0
  %v1710 = vadd.f32 %v1259, %v1709
  %v1711 = vpop.f32.mrb[0].mxu0
  %v1712 = vadd.f32 %v1261, %v1711
  %1713 = vmatprep.mubr.f32.mxu0 0.0
  %v1714 = vand.u32 %v270, 4294901760
  %v1715 = vsub.f32 %v270, %v1714
  %1716 = vmatmul.mubr.f32.gmra.mrb[0].mxu0 %v1715
  %v1717 = vpop.f32.mrb[0].mxu0
  %v1718 = vadd.f32 %v1266, %v1717
  %v1719 = vpop.f32.mrb[0].mxu0
  %v1720 = vadd.f32 %v1268, %v1719
  %1721 = vmatprep.mubr.f32.mxu0 0.0
  %v1722 = vand.u32 %v273, 4294901760
  %v1723 = vsub.f32 %v273, %v1722
  %1724 = vmatmul.mubr.f32.gmra.mrb[0].mxu0 %v1723
  %v1725 = vpop.f32.mrb[0].mxu0
  %v1726 = vadd.f32 %v1273, %v1725
  %v1727 = vpop.f32.mrb[0].mxu0
  %v1728 = vadd.f32 %v1275, %v1727
  %1729 = vmatprep.mubr.f32.mxu0 0.0
  %v1730 = vand.u32 %v276, 4294901760
  %v1731 = vsub.f32 %v276, %v1730
  %1732 = vmatmul.mubr.f32.gmra.mrb[0].mxu0 %v1731
  %v1733 = vpop.f32.mrb[0].mxu0
  %v1734 = vadd.f32 %v1280, %v1733
  %v1735 = vpop.f32.mrb[0].mxu0
  %v1736 = vadd.f32 %v1282, %v1735
  %1737 = vmatprep.mubr.f32.mxu0 0.0
  %v1738 = vand.u32 %v279, 4294901760
  %v1739 = vsub.f32 %v279, %v1738
  %1740 = vmatmul.mubr.f32.gmra.mrb[0].mxu0 %v1739
  %v1741 = vpop.f32.mrb[0].mxu0
  %v1742 = vadd.f32 %v1287, %v1741
  %v1743 = vpop.f32.mrb[0].mxu0
  %v1744 = vadd.f32 %v1289, %v1743
  %1745 = vmatprep.mubr.f32.mxu0 0.0
  %v1746 = vand.u32 %v282, 4294901760
  %v1747 = vsub.f32 %v282, %v1746
  %1748 = vmatmul.mubr.f32.gmra.mrb[0].mxu0 %v1747
  %v1749 = vpop.f32.mrb[0].mxu0
  %v1750 = vadd.f32 %v1294, %v1749
  %v1751 = vpop.f32.mrb[0].mxu0
  %v1752 = vadd.f32 %v1296, %v1751
  %1753 = vmatprep.mubr.f32.mxu0 0.0
  %v1754 = vand.u32 %v285, 4294901760
  %v1755 = vsub.f32 %v285, %v1754
  %1756 = vmatmul.mubr.f32.gmra.mrb[0].mxu0 %v1755
  %v1757 = vpop.f32.mrb[0].mxu0
  %v1758 = vadd.f32 %v1301, %v1757
  %v1759 = vpop.f32.mrb[0].mxu0
  %v1760 = vadd.f32 %v1303, %v1759
  %1761 = vdwg.mxu0
  %v1762 = vand.u32 %v139, 4294901760
  %1763 = vmatprep.subr.mxu0 %v1762
  %v1764 = vand.u32 %v138, 4294901760
  %1765 = vmatpush1.msra.mxu0 %v1764
  %v1766 = vand.u32 %v141, 4294901760
  %1767 = vmatprep.subr.mxu0 %v1766
  %v1768 = vand.u32 %v140, 4294901760
  %1769 = vmatpush1.msra.mxu0 %v1768
  %1770 = vmatprep.subr.mxu0 0.0
  %1771 = vmatpush1.msra.mxu0 0.0
  %1772 = vmatprep.subr.mxu0 0.0
  %1773 = vmatpush1.msra.mxu0 0.0
  %1774 = vmatprep.subr.mxu0 0.0
  %1775 = vmatpush1.msra.mxu0 0.0
  %1776 = vmatprep.subr.mxu0 0.0
  %1777 = vmatpush1.msra.mxu0 0.0
  %1778 = vmatprep.subr.mxu0 0.0
  %1779 = vmatpush1.msra.mxu0 0.0
  %1780 = vmatprep.subr.mxu0 0.0
  %1781 = vmatpush1.msra.mxu0 0.0
  %1782 = vmatprep.subr.mxu0 0.0
  %1783 = vmatpush1.msra.mxu0 0.0
  %1784 = vmatprep.subr.mxu0 0.0
  %1785 = vmatpush1.msra.mxu0 0.0
  %1786 = vmatprep.subr.mxu0 0.0
  %1787 = vmatpush1.msra.mxu0 0.0
  %1788 = vmatprep.subr.mxu0 0.0
  %1789 = vmatpush1.msra.mxu0 0.0
  %1790 = vmatprep.subr.mxu0 0.0
  %1791 = vmatpush1.msra.mxu0 0.0
  %1792 = vmatprep.subr.mxu0 0.0
  %1793 = vmatpush1.msra.mxu0 0.0
  %1794 = vmatprep.subr.mxu0 0.0
  %1795 = vmatpush1.msra.mxu0 0.0
  %1796 = vmatprep.subr.mxu0 0.0
  %1797 = vmatpush1.msra.mxu0 0.0
  %1798 = vmatprep.subr.mxu0 0.0
  %1799 = vmatpush1.msra.mxu0 0.0
  %1800 = vmatprep.subr.mxu0 0.0
  %1801 = vmatpush1.msra.mxu0 0.0
  %1802 = vmatprep.subr.mxu0 0.0
  %1803 = vmatpush1.msra.mxu0 0.0
  %1804 = vmatprep.subr.mxu0 0.0
  %1805 = vmatpush1.msra.mxu0 0.0
  %1806 = vmatprep.subr.mxu0 0.0
  %1807 = vmatpush1.msra.mxu0 0.0
  %1808 = vmatprep.subr.mxu0 0.0
  %1809 = vmatpush1.msra.mxu0 0.0
  %1810 = vmatprep.subr.mxu0 0.0
  %1811 = vmatpush1.msra.mxu0 0.0
  %1812 = vmatprep.subr.mxu0 0.0
  %1813 = vmatpush1.msra.mxu0 0.0
  %1814 = vmatprep.subr.mxu0 0.0
  %1815 = vmatpush1.msra.mxu0 0.0
  %1816 = vmatprep.subr.mxu0 0.0
  %1817 = vmatpush1.msra.mxu0 0.0
  %1818 = vmatprep.subr.mxu0 0.0
  %1819 = vmatpush1.msra.mxu0 0.0
  %1820 = vmatprep.subr.mxu0 0.0
  %1821 = vmatpush1.msra.mxu0 0.0
  %1822 = vmatprep.subr.mxu0 0.0
  %1823 = vmatpush1.msra.mxu0 0.0
  %1824 = vmatprep.subr.mxu0 0.0
  %1825 = vmatpush1.msra.mxu0 0.0
  %1826 = vmatprep.subr.mxu0 0.0
  %1827 = vmatpush1.msra.mxu0 0.0
  %1828 = vmatprep.subr.mxu0 0.0
  %1829 = vmatpush1.msra.mxu0 0.0
  %1830 = vmatprep.mubr.f32.mxu0 0.0
  %v1831 = vand.u32 %v144, 4294901760
  %v1832 = vsub.f32 %v144, %v1831
  %v1833 = vand.u32 %v1832, 4294901760
  %1834 = vmatmul.mubr.f32.gmra.mrb[0].mxu0 %v1833
  %v1835 = vpop.f32.mrb[0].mxu0
  %v1836 = vadd.f32 %v1382, %v1835
  %v1837 = vpop.f32.mrb[0].mxu0
  %v1838 = vadd.f32 %v1384, %v1837
  %1839 = vmatprep.mubr.f32.mxu0 0.0
  %v1840 = vand.u32 %v147, 4294901760
  %v1841 = vsub.f32 %v147, %v1840
  %v1842 = vand.u32 %v1841, 4294901760
  %1843 = vmatmul.mubr.f32.gmra.mrb[0].mxu0 %v1842
  %v1844 = vpop.f32.mrb[0].mxu0
  %v1845 = vadd.f32 %v1390, %v1844
  %v1846 = vpop.f32.mrb[0].mxu0
  %v1847 = vadd.f32 %v1392, %v1846
  %1848 = vmatprep.mubr.f32.mxu0 0.0
  %v1849 = vand.u32 %v150, 4294901760
  %v1850 = vsub.f32 %v150, %v1849
  %v1851 = vand.u32 %v1850, 4294901760
  %1852 = vmatmul.mubr.f32.gmra.mrb[0].mxu0 %v1851
  %v1853 = vpop.f32.mrb[0].mxu0
  %v1854 = vadd.f32 %v1398, %v1853
  %v1855 = vpop.f32.mrb[0].mxu0
  %v1856 = vadd.f32 %v1400, %v1855
  %1857 = vmatprep.mubr.f32.mxu0 0.0
  %v1858 = vand.u32 %v153, 4294901760
  %v1859 = vsub.f32 %v153, %v1858
  %v1860 = vand.u32 %v1859, 4294901760
  %1861 = vmatmul.mubr.f32.gmra.mrb[0].mxu0 %v1860
  %v1862 = vpop.f32.mrb[0].mxu0
  %v1863 = vadd.f32 %v1406, %v1862
  %v1864 = vpop.f32.mrb[0].mxu0
  %v1865 = vadd.f32 %v1408, %v1864
  %1866 = vmatprep.mubr.f32.mxu0 0.0
  %v1867 = vand.u32 %v156, 4294901760
  %v1868 = vsub.f32 %v156, %v1867
  %v1869 = vand.u32 %v1868, 4294901760
  %1870 = vmatmul.mubr.f32.gmra.mrb[0].mxu0 %v1869
  %v1871 = vpop.f32.mrb[0].mxu0
  %v1872 = vadd.f32 %v1414, %v1871
  %v1873 = vpop.f32.mrb[0].mxu0
  %v1874 = vadd.f32 %v1416, %v1873
  %1875 = vmatprep.mubr.f32.mxu0 0.0
  %v1876 = vand.u32 %v159, 4294901760
  %v1877 = vsub.f32 %v159, %v1876
  %v1878 = vand.u32 %v1877, 4294901760
  %1879 = vmatmul.mubr.f32.gmra.mrb[0].mxu0 %v1878
  %v1880 = vpop.f32.mrb[0].mxu0
  %v1881 = vadd.f32 %v1422, %v1880
  %v1882 = vpop.f32.mrb[0].mxu0
  %v1883 = vadd.f32 %v1424, %v1882
  %1884 = vmatprep.mubr.f32.mxu0 0.0
  %v1885 = vand.u32 %v162, 4294901760
  %v1886 = vsub.f32 %v162, %v1885
  %v1887 = vand.u32 %v1886, 4294901760
  %1888 = vmatmul.mubr.f32.gmra.mrb[0].mxu0 %v1887
  %v1889 = vpop.f32.mrb[0].mxu0
  %v1890 = vadd.f32 %v1430, %v1889
  %v1891 = vpop.f32.mrb[0].mxu0
  %v1892 = vadd.f32 %v1432, %v1891
  %1893 = vmatprep.mubr.f32.mxu0 0.0
  %v1894 = vand.u32 %v165, 4294901760
  %v1895 = vsub.f32 %v165, %v1894
  %v1896 = vand.u32 %v1895, 4294901760
  %1897 = vmatmul.mubr.f32.gmra.mrb[0].mxu0 %v1896
  %v1898 = vpop.f32.mrb[0].mxu0
  %v1899 = vadd.f32 %v1438, %v1898
  %v1900 = vpop.f32.mrb[0].mxu0
  %v1901 = vadd.f32 %v1440, %v1900
  %1902 = vmatprep.mubr.f32.mxu0 0.0
  %v1903 = vand.u32 %v168, 4294901760
  %v1904 = vsub.f32 %v168, %v1903
  %v1905 = vand.u32 %v1904, 4294901760
  %1906 = vmatmul.mubr.f32.gmra.mrb[0].mxu0 %v1905
  %v1907 = vpop.f32.mrb[0].mxu0
  %v1908 = vadd.f32 %v1446, %v1907
  %v1909 = vpop.f32.mrb[0].mxu0
  %v1910 = vadd.f32 %v1448, %v1909
  %1911 = vmatprep.mubr.f32.mxu0 0.0
  %v1912 = vand.u32 %v171, 4294901760
  %v1913 = vsub.f32 %v171, %v1912
  %v1914 = vand.u32 %v1913, 4294901760
  %1915 = vmatmul.mubr.f32.gmra.mrb[0].mxu0 %v1914
  %v1916 = vpop.f32.mrb[0].mxu0
  %v1917 = vadd.f32 %v1454, %v1916
  %v1918 = vpop.f32.mrb[0].mxu0
  %v1919 = vadd.f32 %v1456, %v1918
  %1920 = vmatprep.mubr.f32.mxu0 0.0
  %v1921 = vand.u32 %v174, 4294901760
  %v1922 = vsub.f32 %v174, %v1921
  %v1923 = vand.u32 %v1922, 4294901760
  %1924 = vmatmul.mubr.f32.gmra.mrb[0].mxu0 %v1923
  %v1925 = vpop.f32.mrb[0].mxu0
  %v1926 = vadd.f32 %v1462, %v1925
  %v1927 = vpop.f32.mrb[0].mxu0
  %v1928 = vadd.f32 %v1464, %v1927
  %1929 = vmatprep.mubr.f32.mxu0 0.0
  %v1930 = vand.u32 %v177, 4294901760
  %v1931 = vsub.f32 %v177, %v1930
  %v1932 = vand.u32 %v1931, 4294901760
  %1933 = vmatmul.mubr.f32.gmra.mrb[0].mxu0 %v1932
  %v1934 = vpop.f32.mrb[0].mxu0
  %v1935 = vadd.f32 %v1470, %v1934
  %v1936 = vpop.f32.mrb[0].mxu0
  %v1937 = vadd.f32 %v1472, %v1936
  %1938 = vmatprep.mubr.f32.mxu0 0.0
  %v1939 = vand.u32 %v180, 4294901760
  %v1940 = vsub.f32 %v180, %v1939
  %v1941 = vand.u32 %v1940, 4294901760
  %1942 = vmatmul.mubr.f32.gmra.mrb[0].mxu0 %v1941
  %v1943 = vpop.f32.mrb[0].mxu0
  %v1944 = vadd.f32 %v1478, %v1943
  %v1945 = vpop.f32.mrb[0].mxu0
  %v1946 = vadd.f32 %v1480, %v1945
  %1947 = vmatprep.mubr.f32.mxu0 0.0
  %v1948 = vand.u32 %v183, 4294901760
  %v1949 = vsub.f32 %v183, %v1948
  %v1950 = vand.u32 %v1949, 4294901760
  %1951 = vmatmul.mubr.f32.gmra.mrb[0].mxu0 %v1950
  %v1952 = vpop.f32.mrb[0].mxu0
  %v1953 = vadd.f32 %v1486, %v1952
  %v1954 = vpop.f32.mrb[0].mxu0
  %v1955 = vadd.f32 %v1488, %v1954
  %1956 = vmatprep.mubr.f32.mxu0 0.0
  %v1957 = vand.u32 %v186, 4294901760
  %v1958 = vsub.f32 %v186, %v1957
  %v1959 = vand.u32 %v1958, 4294901760
  %1960 = vmatmul.mubr.f32.gmra.mrb[0].mxu0 %v1959
  %v1961 = vpop.f32.mrb[0].mxu0
  %v1962 = vadd.f32 %v1494, %v1961
  %v1963 = vpop.f32.mrb[0].mxu0
  %v1964 = vadd.f32 %v1496, %v1963
  %1965 = vmatprep.mubr.f32.mxu0 0.0
  %v1966 = vand.u32 %v189, 4294901760
  %v1967 = vsub.f32 %v189, %v1966
  %v1968 = vand.u32 %v1967, 4294901760
  %1969 = vmatmul.mubr.f32.gmra.mrb[0].mxu0 %v1968
  %v1970 = vpop.f32.mrb[0].mxu0
  %v1971 = vadd.f32 %v1502, %v1970
  %v1972 = vpop.f32.mrb[0].mxu0
  %v1973 = vadd.f32 %v1504, %v1972
  %1974 = vmatprep.mubr.f32.mxu0 0.0
  %v1975 = vand.u32 %v192, 4294901760
  %v1976 = vsub.f32 %v192, %v1975
  %v1977 = vand.u32 %v1976, 4294901760
  %1978 = vmatmul.mubr.f32.gmra.mrb[0].mxu0 %v1977
  %v1979 = vpop.f32.mrb[0].mxu0
  %v1980 = vadd.f32 %v1510, %v1979
  %v1981 = vpop.f32.mrb[0].mxu0
  %v1982 = vadd.f32 %v1512, %v1981
  %1983 = vmatprep.mubr.f32.mxu0 0.0
  %v1984 = vand.u32 %v195, 4294901760
  %v1985 = vsub.f32 %v195, %v1984
  %v1986 = vand.u32 %v1985, 4294901760
  %1987 = vmatmul.mubr.f32.gmra.mrb[0].mxu0 %v1986
  %v1988 = vpop.f32.mrb[0].mxu0
  %v1989 = vadd.f32 %v1518, %v1988
  %v1990 = vpop.f32.mrb[0].mxu0
  %v1991 = vadd.f32 %v1520, %v1990
  %1992 = vmatprep.mubr.f32.mxu0 0.0
  %v1993 = vand.u32 %v198, 4294901760
  %v1994 = vsub.f32 %v198, %v1993
  %v1995 = vand.u32 %v1994, 4294901760
  %1996 = vmatmul.mubr.f32.gmra.mrb[0].mxu0 %v1995
  %v1997 = vpop.f32.mrb[0].mxu0
  %v1998 = vadd.f32 %v1526, %v1997
  %v1999 = vpop.f32.mrb[0].mxu0
  %v2000 = vadd.f32 %v1528, %v1999
  %2001 = vmatprep.mubr.f32.mxu0 0.0
  %v2002 = vand.u32 %v201, 4294901760
  %v2003 = vsub.f32 %v201, %v2002
  %v2004 = vand.u32 %v2003, 4294901760
  %2005 = vmatmul.mubr.f32.gmra.mrb[0].mxu0 %v2004
  %v2006 = vpop.f32.mrb[0].mxu0
  %v2007 = vadd.f32 %v1534, %v2006
  %v2008 = vpop.f32.mrb[0].mxu0
  %v2009 = vadd.f32 %v1536, %v2008
  %2010 = vmatprep.mubr.f32.mxu0 0.0
  %v2011 = vand.u32 %v204, 4294901760
  %v2012 = vsub.f32 %v204, %v2011
  %v2013 = vand.u32 %v2012, 4294901760
  %2014 = vmatmul.mubr.f32.gmra.mrb[0].mxu0 %v2013
  %v2015 = vpop.f32.mrb[0].mxu0
  %v2016 = vadd.f32 %v1542, %v2015
  %v2017 = vpop.f32.mrb[0].mxu0
  %v2018 = vadd.f32 %v1544, %v2017
  %2019 = vmatprep.mubr.f32.mxu0 0.0
  %v2020 = vand.u32 %v207, 4294901760
  %v2021 = vsub.f32 %v207, %v2020
  %v2022 = vand.u32 %v2021, 4294901760
  %2023 = vmatmul.mubr.f32.gmra.mrb[0].mxu0 %v2022
  %v2024 = vpop.f32.mrb[0].mxu0
  %v2025 = vadd.f32 %v1550, %v2024
  %v2026 = vpop.f32.mrb[0].mxu0
  %v2027 = vadd.f32 %v1552, %v2026
  %2028 = vmatprep.mubr.f32.mxu0 0.0
  %v2029 = vand.u32 %v210, 4294901760
  %v2030 = vsub.f32 %v210, %v2029
  %v2031 = vand.u32 %v2030, 4294901760
  %2032 = vmatmul.mubr.f32.gmra.mrb[0].mxu0 %v2031
  %v2033 = vpop.f32.mrb[0].mxu0
  %v2034 = vadd.f32 %v1558, %v2033
  %v2035 = vpop.f32.mrb[0].mxu0
  %v2036 = vadd.f32 %v1560, %v2035
  %2037 = vmatprep.mubr.f32.mxu0 0.0
  %v2038 = vand.u32 %v213, 4294901760
  %v2039 = vsub.f32 %v213, %v2038
  %v2040 = vand.u32 %v2039, 4294901760
  %2041 = vmatmul.mubr.f32.gmra.mrb[0].mxu0 %v2040
  %v2042 = vpop.f32.mrb[0].mxu0
  %v2043 = vadd.f32 %v1566, %v2042
  %v2044 = vpop.f32.mrb[0].mxu0
  %v2045 = vadd.f32 %v1568, %v2044
  %2046 = vmatprep.mubr.f32.mxu0 0.0
  %v2047 = vand.u32 %v216, 4294901760
  %v2048 = vsub.f32 %v216, %v2047
  %v2049 = vand.u32 %v2048, 4294901760
  %2050 = vmatmul.mubr.f32.gmra.mrb[0].mxu0 %v2049
  %v2051 = vpop.f32.mrb[0].mxu0
  %v2052 = vadd.f32 %v1574, %v2051
  %v2053 = vpop.f32.mrb[0].mxu0
  %v2054 = vadd.f32 %v1576, %v2053
  %2055 = vmatprep.mubr.f32.mxu0 0.0
  %v2056 = vand.u32 %v219, 4294901760
  %v2057 = vsub.f32 %v219, %v2056
  %v2058 = vand.u32 %v2057, 4294901760
  %2059 = vmatmul.mubr.f32.gmra.mrb[0].mxu0 %v2058
  %v2060 = vpop.f32.mrb[0].mxu0
  %v2061 = vadd.f32 %v1582, %v2060
  %v2062 = vpop.f32.mrb[0].mxu0
  %v2063 = vadd.f32 %v1584, %v2062
  %2064 = vmatprep.mubr.f32.mxu0 0.0
  %v2065 = vand.u32 %v222, 4294901760
  %v2066 = vsub.f32 %v222, %v2065
  %v2067 = vand.u32 %v2066, 4294901760
  %2068 = vmatmul.mubr.f32.gmra.mrb[0].mxu0 %v2067
  %v2069 = vpop.f32.mrb[0].mxu0
  %v2070 = vadd.f32 %v1590, %v2069
  %v2071 = vpop.f32.mrb[0].mxu0
  %v2072 = vadd.f32 %v1592, %v2071
  %2073 = vmatprep.mubr.f32.mxu0 0.0
  %v2074 = vand.u32 %v225, 4294901760
  %v2075 = vsub.f32 %v225, %v2074
  %v2076 = vand.u32 %v2075, 4294901760
  %2077 = vmatmul.mubr.f32.gmra.mrb[0].mxu0 %v2076
  %v2078 = vpop.f32.mrb[0].mxu0
  %v2079 = vadd.f32 %v1598, %v2078
  %v2080 = vpop.f32.mrb[0].mxu0
  %v2081 = vadd.f32 %v1600, %v2080
  %2082 = vmatprep.mubr.f32.mxu0 0.0
  %v2083 = vand.u32 %v228, 4294901760
  %v2084 = vsub.f32 %v228, %v2083
  %v2085 = vand.u32 %v2084, 4294901760
  %2086 = vmatmul.mubr.f32.gmra.mrb[0].mxu0 %v2085
  %v2087 = vpop.f32.mrb[0].mxu0
  %v2088 = vadd.f32 %v1606, %v2087
  %v2089 = vpop.f32.mrb[0].mxu0
  %v2090 = vadd.f32 %v1608, %v2089
  %2091 = vmatprep.mubr.f32.mxu0 0.0
  %v2092 = vand.u32 %v231, 4294901760
  %v2093 = vsub.f32 %v231, %v2092
  %v2094 = vand.u32 %v2093, 4294901760
  %2095 = vmatmul.mubr.f32.gmra.mrb[0].mxu0 %v2094
  %v2096 = vpop.f32.mrb[0].mxu0
  %v2097 = vadd.f32 %v1614, %v2096
  %v2098 = vpop.f32.mrb[0].mxu0
  %v2099 = vadd.f32 %v1616, %v2098
  %2100 = vmatprep.mubr.f32.mxu0 0.0
  %v2101 = vand.u32 %v234, 4294901760
  %v2102 = vsub.f32 %v234, %v2101
  %v2103 = vand.u32 %v2102, 4294901760
  %2104 = vmatmul.mubr.f32.gmra.mrb[0].mxu0 %v2103
  %v2105 = vpop.f32.mrb[0].mxu0
  %v2106 = vadd.f32 %v1622, %v2105
  %v2107 = vpop.f32.mrb[0].mxu0
  %v2108 = vadd.f32 %v1624, %v2107
  %2109 = vmatprep.mubr.f32.mxu0 0.0
  %v2110 = vand.u32 %v237, 4294901760
  %v2111 = vsub.f32 %v237, %v2110
  %v2112 = vand.u32 %v2111, 4294901760
  %2113 = vmatmul.mubr.f32.gmra.mrb[0].mxu0 %v2112
  %v2114 = vpop.f32.mrb[0].mxu0
  %v2115 = vadd.f32 %v1630, %v2114
  %v2116 = vpop.f32.mrb[0].mxu0
  %v2117 = vadd.f32 %v1632, %v2116
  %2118 = vmatprep.mubr.f32.mxu0 0.0
  %v2119 = vand.u32 %v240, 4294901760
  %v2120 = vsub.f32 %v240, %v2119
  %v2121 = vand.u32 %v2120, 4294901760
  %2122 = vmatmul.mubr.f32.gmra.mrb[0].mxu0 %v2121
  %v2123 = vpop.f32.mrb[0].mxu0
  %v2124 = vadd.f32 %v1638, %v2123
  %v2125 = vpop.f32.mrb[0].mxu0
  %v2126 = vadd.f32 %v1640, %v2125
  %2127 = vmatprep.mubr.f32.mxu0 0.0
  %v2128 = vand.u32 %v243, 4294901760
  %v2129 = vsub.f32 %v243, %v2128
  %v2130 = vand.u32 %v2129, 4294901760
  %2131 = vmatmul.mubr.f32.gmra.mrb[0].mxu0 %v2130
  %v2132 = vpop.f32.mrb[0].mxu0
  %v2133 = vadd.f32 %v1646, %v2132
  %v2134 = vpop.f32.mrb[0].mxu0
  %v2135 = vadd.f32 %v1648, %v2134
  %2136 = vmatprep.mubr.f32.mxu0 0.0
  %v2137 = vand.u32 %v246, 4294901760
  %v2138 = vsub.f32 %v246, %v2137
  %v2139 = vand.u32 %v2138, 4294901760
  %2140 = vmatmul.mubr.f32.gmra.mrb[0].mxu0 %v2139
  %v2141 = vpop.f32.mrb[0].mxu0
  %v2142 = vadd.f32 %v1654, %v2141
  %v2143 = vpop.f32.mrb[0].mxu0
  %v2144 = vadd.f32 %v1656, %v2143
  %2145 = vmatprep.mubr.f32.mxu0 0.0
  %v2146 = vand.u32 %v249, 4294901760
  %v2147 = vsub.f32 %v249, %v2146
  %v2148 = vand.u32 %v2147, 4294901760
  %2149 = vmatmul.mubr.f32.gmra.mrb[0].mxu0 %v2148
  %v2150 = vpop.f32.mrb[0].mxu0
  %v2151 = vadd.f32 %v1662, %v2150
  %v2152 = vpop.f32.mrb[0].mxu0
  %v2153 = vadd.f32 %v1664, %v2152
  %2154 = vmatprep.mubr.f32.mxu0 0.0
  %v2155 = vand.u32 %v252, 4294901760
  %v2156 = vsub.f32 %v252, %v2155
  %v2157 = vand.u32 %v2156, 4294901760
  %2158 = vmatmul.mubr.f32.gmra.mrb[0].mxu0 %v2157
  %v2159 = vpop.f32.mrb[0].mxu0
  %v2160 = vadd.f32 %v1670, %v2159
  %v2161 = vpop.f32.mrb[0].mxu0
  %v2162 = vadd.f32 %v1672, %v2161
  %2163 = vmatprep.mubr.f32.mxu0 0.0
  %v2164 = vand.u32 %v255, 4294901760
  %v2165 = vsub.f32 %v255, %v2164
  %v2166 = vand.u32 %v2165, 4294901760
  %2167 = vmatmul.mubr.f32.gmra.mrb[0].mxu0 %v2166
  %v2168 = vpop.f32.mrb[0].mxu0
  %v2169 = vadd.f32 %v1678, %v2168
  %v2170 = vpop.f32.mrb[0].mxu0
  %v2171 = vadd.f32 %v1680, %v2170
  %2172 = vmatprep.mubr.f32.mxu0 0.0
  %v2173 = vand.u32 %v258, 4294901760
  %v2174 = vsub.f32 %v258, %v2173
  %v2175 = vand.u32 %v2174, 4294901760
  %2176 = vmatmul.mubr.f32.gmra.mrb[0].mxu0 %v2175
  %v2177 = vpop.f32.mrb[0].mxu0
  %v2178 = vadd.f32 %v1686, %v2177
  %v2179 = vpop.f32.mrb[0].mxu0
  %v2180 = vadd.f32 %v1688, %v2179
  %2181 = vmatprep.mubr.f32.mxu0 0.0
  %v2182 = vand.u32 %v261, 4294901760
  %v2183 = vsub.f32 %v261, %v2182
  %v2184 = vand.u32 %v2183, 4294901760
  %2185 = vmatmul.mubr.f32.gmra.mrb[0].mxu0 %v2184
  %v2186 = vpop.f32.mrb[0].mxu0
  %v2187 = vadd.f32 %v1694, %v2186
  %v2188 = vpop.f32.mrb[0].mxu0
  %v2189 = vadd.f32 %v1696, %v2188
  %2190 = vmatprep.mubr.f32.mxu0 0.0
  %v2191 = vand.u32 %v264, 4294901760
  %v2192 = vsub.f32 %v264, %v2191
  %v2193 = vand.u32 %v2192, 4294901760
  %2194 = vmatmul.mubr.f32.gmra.mrb[0].mxu0 %v2193
  %v2195 = vpop.f32.mrb[0].mxu0
  %v2196 = vadd.f32 %v1702, %v2195
  %v2197 = vpop.f32.mrb[0].mxu0
  %v2198 = vadd.f32 %v1704, %v2197
  %2199 = vmatprep.mubr.f32.mxu0 0.0
  %v2200 = vand.u32 %v267, 4294901760
  %v2201 = vsub.f32 %v267, %v2200
  %v2202 = vand.u32 %v2201, 4294901760
  %2203 = vmatmul.mubr.f32.gmra.mrb[0].mxu0 %v2202
  %v2204 = vpop.f32.mrb[0].mxu0
  %v2205 = vadd.f32 %v1710, %v2204
  %v2206 = vpop.f32.mrb[0].mxu0
  %v2207 = vadd.f32 %v1712, %v2206
  %2208 = vmatprep.mubr.f32.mxu0 0.0
  %v2209 = vand.u32 %v270, 4294901760
  %v2210 = vsub.f32 %v270, %v2209
  %v2211 = vand.u32 %v2210, 4294901760
  %2212 = vmatmul.mubr.f32.gmra.mrb[0].mxu0 %v2211
  %v2213 = vpop.f32.mrb[0].mxu0
  %v2214 = vadd.f32 %v1718, %v2213
  %v2215 = vpop.f32.mrb[0].mxu0
  %v2216 = vadd.f32 %v1720, %v2215
  %2217 = vmatprep.mubr.f32.mxu0 0.0
  %v2218 = vand.u32 %v273, 4294901760
  %v2219 = vsub.f32 %v273, %v2218
  %v2220 = vand.u32 %v2219, 4294901760
  %2221 = vmatmul.mubr.f32.gmra.mrb[0].mxu0 %v2220
  %v2222 = vpop.f32.mrb[0].mxu0
  %v2223 = vadd.f32 %v1726, %v2222
  %v2224 = vpop.f32.mrb[0].mxu0
  %v2225 = vadd.f32 %v1728, %v2224
  %2226 = vmatprep.mubr.f32.mxu0 0.0
  %v2227 = vand.u32 %v276, 4294901760
  %v2228 = vsub.f32 %v276, %v2227
  %v2229 = vand.u32 %v2228, 4294901760
  %2230 = vmatmul.mubr.f32.gmra.mrb[0].mxu0 %v2229
  %v2231 = vpop.f32.mrb[0].mxu0
  %v2232 = vadd.f32 %v1734, %v2231
  %v2233 = vpop.f32.mrb[0].mxu0
  %v2234 = vadd.f32 %v1736, %v2233
  %2235 = vmatprep.mubr.f32.mxu0 0.0
  %v2236 = vand.u32 %v279, 4294901760
  %v2237 = vsub.f32 %v279, %v2236
  %v2238 = vand.u32 %v2237, 4294901760
  %2239 = vmatmul.mubr.f32.gmra.mrb[0].mxu0 %v2238
  %v2240 = vpop.f32.mrb[0].mxu0
  %v2241 = vadd.f32 %v1742, %v2240
  %v2242 = vpop.f32.mrb[0].mxu0
  %v2243 = vadd.f32 %v1744, %v2242
  %2244 = vmatprep.mubr.f32.mxu0 0.0
  %v2245 = vand.u32 %v282, 4294901760
  %v2246 = vsub.f32 %v282, %v2245
  %v2247 = vand.u32 %v2246, 4294901760
  %2248 = vmatmul.mubr.f32.gmra.mrb[0].mxu0 %v2247
  %v2249 = vpop.f32.mrb[0].mxu0
  %v2250 = vadd.f32 %v1750, %v2249
  %v2251 = vpop.f32.mrb[0].mxu0
  %v2252 = vadd.f32 %v1752, %v2251
  %2253 = vmatprep.mubr.f32.mxu0 0.0
  %v2254 = vand.u32 %v285, 4294901760
  %v2255 = vsub.f32 %v285, %v2254
  %v2256 = vand.u32 %v2255, 4294901760
  %2257 = vmatmul.mubr.f32.gmra.mrb[0].mxu0 %v2256
  %v2258 = vpop.f32.mrb[0].mxu0
  %v2259 = vadd.f32 %v1758, %v2258
  %v2260 = vpop.f32.mrb[0].mxu0
  %v2261 = vadd.f32 %v1760, %v2260
  %2262 = vdwg.mxu0
  %v2263 = vand.u32 %v139, 4294901760
  %v2264 = vsub.f32 %v139, %v2263
  %v2265 = vand.u32 %v2264, 4294901760
  %2266 = vmatprep.subr.mxu0 %v2265
  %v2267 = vand.u32 %v138, 4294901760
  %v2268 = vsub.f32 %v138, %v2267
  %v2269 = vand.u32 %v2268, 4294901760
  %2270 = vmatpush1.msra.mxu0 %v2269
  %v2271 = vand.u32 %v141, 4294901760
  %v2272 = vsub.f32 %v141, %v2271
  %v2273 = vand.u32 %v2272, 4294901760
  %2274 = vmatprep.subr.mxu0 %v2273
  %v2275 = vand.u32 %v140, 4294901760
  %v2276 = vsub.f32 %v140, %v2275
  %v2277 = vand.u32 %v2276, 4294901760
  %2278 = vmatpush1.msra.mxu0 %v2277
  %2279 = vmatprep.subr.mxu0 0.0
  %2280 = vmatpush1.msra.mxu0 0.0
  %2281 = vmatprep.subr.mxu0 0.0
  %2282 = vmatpush1.msra.mxu0 0.0
  %2283 = vmatprep.subr.mxu0 0.0
  %2284 = vmatpush1.msra.mxu0 0.0
  %2285 = vmatprep.subr.mxu0 0.0
  %2286 = vmatpush1.msra.mxu0 0.0
  %2287 = vmatprep.subr.mxu0 0.0
  %2288 = vmatpush1.msra.mxu0 0.0
  %2289 = vmatprep.subr.mxu0 0.0
  %2290 = vmatpush1.msra.mxu0 0.0
  %2291 = vmatprep.subr.mxu0 0.0
  %2292 = vmatpush1.msra.mxu0 0.0
  %2293 = vmatprep.subr.mxu0 0.0
  %2294 = vmatpush1.msra.mxu0 0.0
  %2295 = vmatprep.subr.mxu0 0.0
  %2296 = vmatpush1.msra.mxu0 0.0
  %2297 = vmatprep.subr.mxu0 0.0
  %2298 = vmatpush1.msra.mxu0 0.0
  %2299 = vmatprep.subr.mxu0 0.0
  %2300 = vmatpush1.msra.mxu0 0.0
  %2301 = vmatprep.subr.mxu0 0.0
  %2302 = vmatpush1.msra.mxu0 0.0
  %2303 = vmatprep.subr.mxu0 0.0
  %2304 = vmatpush1.msra.mxu0 0.0
  %2305 = vmatprep.subr.mxu0 0.0
  %2306 = vmatpush1.msra.mxu0 0.0
  %2307 = vmatprep.subr.mxu0 0.0
  %2308 = vmatpush1.msra.mxu0 0.0
  %2309 = vmatprep.subr.mxu0 0.0
  %2310 = vmatpush1.msra.mxu0 0.0
  %2311 = vmatprep.subr.mxu0 0.0
  %2312 = vmatpush1.msra.mxu0 0.0
  %2313 = vmatprep.subr.mxu0 0.0
  %2314 = vmatpush1.msra.mxu0 0.0
  %2315 = vmatprep.subr.mxu0 0.0
  %2316 = vmatpush1.msra.mxu0 0.0
  %2317 = vmatprep.subr.mxu0 0.0
  %2318 = vmatpush1.msra.mxu0 0.0
  %2319 = vmatprep.subr.mxu0 0.0
  %2320 = vmatpush1.msra.mxu0 0.0
  %2321 = vmatprep.subr.mxu0 0.0
  %2322 = vmatpush1.msra.mxu0 0.0
  %2323 = vmatprep.subr.mxu0 0.0
  %2324 = vmatpush1.msra.mxu0 0.0
  %2325 = vmatprep.subr.mxu0 0.0
  %2326 = vmatpush1.msra.mxu0 0.0
  %2327 = vmatprep.subr.mxu0 0.0
  %2328 = vmatpush1.msra.mxu0 0.0
  %2329 = vmatprep.subr.mxu0 0.0
  %2330 = vmatpush1.msra.mxu0 0.0
  %2331 = vmatprep.subr.mxu0 0.0
  %2332 = vmatpush1.msra.mxu0 0.0
  %2333 = vmatprep.subr.mxu0 0.0
  %2334 = vmatpush1.msra.mxu0 0.0
  %2335 = vmatprep.subr.mxu0 0.0
  %2336 = vmatpush1.msra.mxu0 0.0
  %2337 = vmatprep.subr.mxu0 0.0
  %2338 = vmatpush1.msra.mxu0 0.0
  %2339 = vmatprep.mubr.f32.mxu0 0.0
  %v2340 = vand.u32 %v144, 4294901760
  %2341 = vmatmul.mubr.f32.gmra.mrb[0].mxu0 %v2340
  %v2342 = vpop.f32.mrb[0].mxu0
  %v2343 = vadd.f32 %v1836, %v2342
  %v2344 = vpop.f32.mrb[0].mxu0
  %v2345 = vadd.f32 %v1838, %v2344
  %2346 = vmatprep.mubr.f32.mxu0 0.0
  %v2347 = vand.u32 %v147, 4294901760
  %2348 = vmatmul.mubr.f32.gmra.mrb[0].mxu0 %v2347
  %v2349 = vpop.f32.mrb[0].mxu0
  %v2350 = vadd.f32 %v1845, %v2349
  %v2351 = vpop.f32.mrb[0].mxu0
  %v2352 = vadd.f32 %v1847, %v2351
  %2353 = vmatprep.mubr.f32.mxu0 0.0
  %v2354 = vand.u32 %v150, 4294901760
  %2355 = vmatmul.mubr.f32.gmra.mrb[0].mxu0 %v2354
  %v2356 = vpop.f32.mrb[0].mxu0
  %v2357 = vadd.f32 %v1854, %v2356
  %v2358 = vpop.f32.mrb[0].mxu0
  %v2359 = vadd.f32 %v1856, %v2358
  %2360 = vmatprep.mubr.f32.mxu0 0.0
  %v2361 = vand.u32 %v153, 4294901760
  %2362 = vmatmul.mubr.f32.gmra.mrb[0].mxu0 %v2361
  %v2363 = vpop.f32.mrb[0].mxu0
  %v2364 = vadd.f32 %v1863, %v2363
  %v2365 = vpop.f32.mrb[0].mxu0
  %v2366 = vadd.f32 %v1865, %v2365
  %2367 = vmatprep.mubr.f32.mxu0 0.0
  %v2368 = vand.u32 %v156, 4294901760
  %2369 = vmatmul.mubr.f32.gmra.mrb[0].mxu0 %v2368
  %v2370 = vpop.f32.mrb[0].mxu0
  %v2371 = vadd.f32 %v1872, %v2370
  %v2372 = vpop.f32.mrb[0].mxu0
  %v2373 = vadd.f32 %v1874, %v2372
  %2374 = vmatprep.mubr.f32.mxu0 0.0
  %v2375 = vand.u32 %v159, 4294901760
  %2376 = vmatmul.mubr.f32.gmra.mrb[0].mxu0 %v2375
  %v2377 = vpop.f32.mrb[0].mxu0
  %v2378 = vadd.f32 %v1881, %v2377
  %v2379 = vpop.f32.mrb[0].mxu0
  %v2380 = vadd.f32 %v1883, %v2379
  %2381 = vmatprep.mubr.f32.mxu0 0.0
  %v2382 = vand.u32 %v162, 4294901760
  %2383 = vmatmul.mubr.f32.gmra.mrb[0].mxu0 %v2382
  %v2384 = vpop.f32.mrb[0].mxu0
  %v2385 = vadd.f32 %v1890, %v2384
  %v2386 = vpop.f32.mrb[0].mxu0
  %v2387 = vadd.f32 %v1892, %v2386
  %2388 = vmatprep.mubr.f32.mxu0 0.0
  %v2389 = vand.u32 %v165, 4294901760
  %2390 = vmatmul.mubr.f32.gmra.mrb[0].mxu0 %v2389
  %v2391 = vpop.f32.mrb[0].mxu0
  %v2392 = vadd.f32 %v1899, %v2391
  %v2393 = vpop.f32.mrb[0].mxu0
  %v2394 = vadd.f32 %v1901, %v2393
  %2395 = vmatprep.mubr.f32.mxu0 0.0
  %v2396 = vand.u32 %v168, 4294901760
  %2397 = vmatmul.mubr.f32.gmra.mrb[0].mxu0 %v2396
  %v2398 = vpop.f32.mrb[0].mxu0
  %v2399 = vadd.f32 %v1908, %v2398
  %v2400 = vpop.f32.mrb[0].mxu0
  %v2401 = vadd.f32 %v1910, %v2400
  %2402 = vmatprep.mubr.f32.mxu0 0.0
  %v2403 = vand.u32 %v171, 4294901760
  %2404 = vmatmul.mubr.f32.gmra.mrb[0].mxu0 %v2403
  %v2405 = vpop.f32.mrb[0].mxu0
  %v2406 = vadd.f32 %v1917, %v2405
  %v2407 = vpop.f32.mrb[0].mxu0
  %v2408 = vadd.f32 %v1919, %v2407
  %2409 = vmatprep.mubr.f32.mxu0 0.0
  %v2410 = vand.u32 %v174, 4294901760
  %2411 = vmatmul.mubr.f32.gmra.mrb[0].mxu0 %v2410
  %v2412 = vpop.f32.mrb[0].mxu0
  %v2413 = vadd.f32 %v1926, %v2412
  %v2414 = vpop.f32.mrb[0].mxu0
  %v2415 = vadd.f32 %v1928, %v2414
  %2416 = vmatprep.mubr.f32.mxu0 0.0
  %v2417 = vand.u32 %v177, 4294901760
  %2418 = vmatmul.mubr.f32.gmra.mrb[0].mxu0 %v2417
  %v2419 = vpop.f32.mrb[0].mxu0
  %v2420 = vadd.f32 %v1935, %v2419
  %v2421 = vpop.f32.mrb[0].mxu0
  %v2422 = vadd.f32 %v1937, %v2421
  %2423 = vmatprep.mubr.f32.mxu0 0.0
  %v2424 = vand.u32 %v180, 4294901760
  %2425 = vmatmul.mubr.f32.gmra.mrb[0].mxu0 %v2424
  %v2426 = vpop.f32.mrb[0].mxu0
  %v2427 = vadd.f32 %v1944, %v2426
  %v2428 = vpop.f32.mrb[0].mxu0
  %v2429 = vadd.f32 %v1946, %v2428
  %2430 = vmatprep.mubr.f32.mxu0 0.0
  %v2431 = vand.u32 %v183, 4294901760
  %2432 = vmatmul.mubr.f32.gmra.mrb[0].mxu0 %v2431
  %v2433 = vpop.f32.mrb[0].mxu0
  %v2434 = vadd.f32 %v1953, %v2433
  %v2435 = vpop.f32.mrb[0].mxu0
  %v2436 = vadd.f32 %v1955, %v2435
  %2437 = vmatprep.mubr.f32.mxu0 0.0
  %v2438 = vand.u32 %v186, 4294901760
  %2439 = vmatmul.mubr.f32.gmra.mrb[0].mxu0 %v2438
  %v2440 = vpop.f32.mrb[0].mxu0
  %v2441 = vadd.f32 %v1962, %v2440
  %v2442 = vpop.f32.mrb[0].mxu0
  %v2443 = vadd.f32 %v1964, %v2442
  %2444 = vmatprep.mubr.f32.mxu0 0.0
  %v2445 = vand.u32 %v189, 4294901760
  %2446 = vmatmul.mubr.f32.gmra.mrb[0].mxu0 %v2445
  %v2447 = vpop.f32.mrb[0].mxu0
  %v2448 = vadd.f32 %v1971, %v2447
  %v2449 = vpop.f32.mrb[0].mxu0
  %v2450 = vadd.f32 %v1973, %v2449
  %2451 = vmatprep.mubr.f32.mxu0 0.0
  %v2452 = vand.u32 %v192, 4294901760
  %2453 = vmatmul.mubr.f32.gmra.mrb[0].mxu0 %v2452
  %v2454 = vpop.f32.mrb[0].mxu0
  %v2455 = vadd.f32 %v1980, %v2454
  %v2456 = vpop.f32.mrb[0].mxu0
  %v2457 = vadd.f32 %v1982, %v2456
  %2458 = vmatprep.mubr.f32.mxu0 0.0
  %v2459 = vand.u32 %v195, 4294901760
  %2460 = vmatmul.mubr.f32.gmra.mrb[0].mxu0 %v2459
  %v2461 = vpop.f32.mrb[0].mxu0
  %v2462 = vadd.f32 %v1989, %v2461
  %v2463 = vpop.f32.mrb[0].mxu0
  %v2464 = vadd.f32 %v1991, %v2463
  %2465 = vmatprep.mubr.f32.mxu0 0.0
  %v2466 = vand.u32 %v198, 4294901760
  %2467 = vmatmul.mubr.f32.gmra.mrb[0].mxu0 %v2466
  %v2468 = vpop.f32.mrb[0].mxu0
  %v2469 = vadd.f32 %v1998, %v2468
  %v2470 = vpop.f32.mrb[0].mxu0
  %v2471 = vadd.f32 %v2000, %v2470
  %2472 = vmatprep.mubr.f32.mxu0 0.0
  %v2473 = vand.u32 %v201, 4294901760
  %2474 = vmatmul.mubr.f32.gmra.mrb[0].mxu0 %v2473
  %v2475 = vpop.f32.mrb[0].mxu0
  %v2476 = vadd.f32 %v2007, %v2475
  %v2477 = vpop.f32.mrb[0].mxu0
  %v2478 = vadd.f32 %v2009, %v2477
  %2479 = vmatprep.mubr.f32.mxu0 0.0
  %v2480 = vand.u32 %v204, 4294901760
  %2481 = vmatmul.mubr.f32.gmra.mrb[0].mxu0 %v2480
  %v2482 = vpop.f32.mrb[0].mxu0
  %v2483 = vadd.f32 %v2016, %v2482
  %v2484 = vpop.f32.mrb[0].mxu0
  %v2485 = vadd.f32 %v2018, %v2484
  %2486 = vmatprep.mubr.f32.mxu0 0.0
  %v2487 = vand.u32 %v207, 4294901760
  %2488 = vmatmul.mubr.f32.gmra.mrb[0].mxu0 %v2487
  %v2489 = vpop.f32.mrb[0].mxu0
  %v2490 = vadd.f32 %v2025, %v2489
  %v2491 = vpop.f32.mrb[0].mxu0
  %v2492 = vadd.f32 %v2027, %v2491
  %2493 = vmatprep.mubr.f32.mxu0 0.0
  %v2494 = vand.u32 %v210, 4294901760
  %2495 = vmatmul.mubr.f32.gmra.mrb[0].mxu0 %v2494
  %v2496 = vpop.f32.mrb[0].mxu0
  %v2497 = vadd.f32 %v2034, %v2496
  %v2498 = vpop.f32.mrb[0].mxu0
  %v2499 = vadd.f32 %v2036, %v2498
  %2500 = vmatprep.mubr.f32.mxu0 0.0
  %v2501 = vand.u32 %v213, 4294901760
  %2502 = vmatmul.mubr.f32.gmra.mrb[0].mxu0 %v2501
  %v2503 = vpop.f32.mrb[0].mxu0
  %v2504 = vadd.f32 %v2043, %v2503
  %v2505 = vpop.f32.mrb[0].mxu0
  %v2506 = vadd.f32 %v2045, %v2505
  %2507 = vmatprep.mubr.f32.mxu0 0.0
  %v2508 = vand.u32 %v216, 4294901760
  %2509 = vmatmul.mubr.f32.gmra.mrb[0].mxu0 %v2508
  %v2510 = vpop.f32.mrb[0].mxu0
  %v2511 = vadd.f32 %v2052, %v2510
  %v2512 = vpop.f32.mrb[0].mxu0
  %v2513 = vadd.f32 %v2054, %v2512
  %2514 = vmatprep.mubr.f32.mxu0 0.0
  %v2515 = vand.u32 %v219, 4294901760
  %2516 = vmatmul.mubr.f32.gmra.mrb[0].mxu0 %v2515
  %v2517 = vpop.f32.mrb[0].mxu0
  %v2518 = vadd.f32 %v2061, %v2517
  %v2519 = vpop.f32.mrb[0].mxu0
  %v2520 = vadd.f32 %v2063, %v2519
  %2521 = vmatprep.mubr.f32.mxu0 0.0
  %v2522 = vand.u32 %v222, 4294901760
  %2523 = vmatmul.mubr.f32.gmra.mrb[0].mxu0 %v2522
  %v2524 = vpop.f32.mrb[0].mxu0
  %v2525 = vadd.f32 %v2070, %v2524
  %v2526 = vpop.f32.mrb[0].mxu0
  %v2527 = vadd.f32 %v2072, %v2526
  %2528 = vmatprep.mubr.f32.mxu0 0.0
  %v2529 = vand.u32 %v225, 4294901760
  %2530 = vmatmul.mubr.f32.gmra.mrb[0].mxu0 %v2529
  %v2531 = vpop.f32.mrb[0].mxu0
  %v2532 = vadd.f32 %v2079, %v2531
  %v2533 = vpop.f32.mrb[0].mxu0
  %v2534 = vadd.f32 %v2081, %v2533
  %2535 = vmatprep.mubr.f32.mxu0 0.0
  %v2536 = vand.u32 %v228, 4294901760
  %2537 = vmatmul.mubr.f32.gmra.mrb[0].mxu0 %v2536
  %v2538 = vpop.f32.mrb[0].mxu0
  %v2539 = vadd.f32 %v2088, %v2538
  %v2540 = vpop.f32.mrb[0].mxu0
  %v2541 = vadd.f32 %v2090, %v2540
  %2542 = vmatprep.mubr.f32.mxu0 0.0
  %v2543 = vand.u32 %v231, 4294901760
  %2544 = vmatmul.mubr.f32.gmra.mrb[0].mxu0 %v2543
  %v2545 = vpop.f32.mrb[0].mxu0
  %v2546 = vadd.f32 %v2097, %v2545
  %v2547 = vpop.f32.mrb[0].mxu0
  %v2548 = vadd.f32 %v2099, %v2547
  %2549 = vmatprep.mubr.f32.mxu0 0.0
  %v2550 = vand.u32 %v234, 4294901760
  %2551 = vmatmul.mubr.f32.gmra.mrb[0].mxu0 %v2550
  %v2552 = vpop.f32.mrb[0].mxu0
  %v2553 = vadd.f32 %v2106, %v2552
  %v2554 = vpop.f32.mrb[0].mxu0
  %v2555 = vadd.f32 %v2108, %v2554
  %2556 = vmatprep.mubr.f32.mxu0 0.0
  %v2557 = vand.u32 %v237, 4294901760
  %2558 = vmatmul.mubr.f32.gmra.mrb[0].mxu0 %v2557
  %v2559 = vpop.f32.mrb[0].mxu0
  %v2560 = vadd.f32 %v2115, %v2559
  %v2561 = vpop.f32.mrb[0].mxu0
  %v2562 = vadd.f32 %v2117, %v2561
  %2563 = vmatprep.mubr.f32.mxu0 0.0
  %v2564 = vand.u32 %v240, 4294901760
  %2565 = vmatmul.mubr.f32.gmra.mrb[0].mxu0 %v2564
  %v2566 = vpop.f32.mrb[0].mxu0
  %v2567 = vadd.f32 %v2124, %v2566
  %v2568 = vpop.f32.mrb[0].mxu0
  %v2569 = vadd.f32 %v2126, %v2568
  %2570 = vmatprep.mubr.f32.mxu0 0.0
  %v2571 = vand.u32 %v243, 4294901760
  %2572 = vmatmul.mubr.f32.gmra.mrb[0].mxu0 %v2571
  %v2573 = vpop.f32.mrb[0].mxu0
  %v2574 = vadd.f32 %v2133, %v2573
  %v2575 = vpop.f32.mrb[0].mxu0
  %v2576 = vadd.f32 %v2135, %v2575
  %2577 = vmatprep.mubr.f32.mxu0 0.0
  %v2578 = vand.u32 %v246, 4294901760
  %2579 = vmatmul.mubr.f32.gmra.mrb[0].mxu0 %v2578
  %v2580 = vpop.f32.mrb[0].mxu0
  %v2581 = vadd.f32 %v2142, %v2580
  %v2582 = vpop.f32.mrb[0].mxu0
  %v2583 = vadd.f32 %v2144, %v2582
  %2584 = vmatprep.mubr.f32.mxu0 0.0
  %v2585 = vand.u32 %v249, 4294901760
  %2586 = vmatmul.mubr.f32.gmra.mrb[0].mxu0 %v2585
  %v2587 = vpop.f32.mrb[0].mxu0
  %v2588 = vadd.f32 %v2151, %v2587
  %v2589 = vpop.f32.mrb[0].mxu0
  %v2590 = vadd.f32 %v2153, %v2589
  %2591 = vmatprep.mubr.f32.mxu0 0.0
  %v2592 = vand.u32 %v252, 4294901760
  %2593 = vmatmul.mubr.f32.gmra.mrb[0].mxu0 %v2592
  %v2594 = vpop.f32.mrb[0].mxu0
  %v2595 = vadd.f32 %v2160, %v2594
  %v2596 = vpop.f32.mrb[0].mxu0
  %v2597 = vadd.f32 %v2162, %v2596
  %2598 = vmatprep.mubr.f32.mxu0 0.0
  %v2599 = vand.u32 %v255, 4294901760
  %2600 = vmatmul.mubr.f32.gmra.mrb[0].mxu0 %v2599
  %v2601 = vpop.f32.mrb[0].mxu0
  %v2602 = vadd.f32 %v2169, %v2601
  %v2603 = vpop.f32.mrb[0].mxu0
  %v2604 = vadd.f32 %v2171, %v2603
  %2605 = vmatprep.mubr.f32.mxu0 0.0
  %v2606 = vand.u32 %v258, 4294901760
  %2607 = vmatmul.mubr.f32.gmra.mrb[0].mxu0 %v2606
  %v2608 = vpop.f32.mrb[0].mxu0
  %v2609 = vadd.f32 %v2178, %v2608
  %v2610 = vpop.f32.mrb[0].mxu0
  %v2611 = vadd.f32 %v2180, %v2610
  %2612 = vmatprep.mubr.f32.mxu0 0.0
  %v2613 = vand.u32 %v261, 4294901760
  %2614 = vmatmul.mubr.f32.gmra.mrb[0].mxu0 %v2613
  %v2615 = vpop.f32.mrb[0].mxu0
  %v2616 = vadd.f32 %v2187, %v2615
  %v2617 = vpop.f32.mrb[0].mxu0
  %v2618 = vadd.f32 %v2189, %v2617
  %2619 = vmatprep.mubr.f32.mxu0 0.0
  %v2620 = vand.u32 %v264, 4294901760
  %2621 = vmatmul.mubr.f32.gmra.mrb[0].mxu0 %v2620
  %v2622 = vpop.f32.mrb[0].mxu0
  %v2623 = vadd.f32 %v2196, %v2622
  %v2624 = vpop.f32.mrb[0].mxu0
  %v2625 = vadd.f32 %v2198, %v2624
  %2626 = vmatprep.mubr.f32.mxu0 0.0
  %v2627 = vand.u32 %v267, 4294901760
  %2628 = vmatmul.mubr.f32.gmra.mrb[0].mxu0 %v2627
  %v2629 = vpop.f32.mrb[0].mxu0
  %v2630 = vadd.f32 %v2205, %v2629
  %v2631 = vpop.f32.mrb[0].mxu0
  %v2632 = vadd.f32 %v2207, %v2631
  %2633 = vmatprep.mubr.f32.mxu0 0.0
  %v2634 = vand.u32 %v270, 4294901760
  %2635 = vmatmul.mubr.f32.gmra.mrb[0].mxu0 %v2634
  %v2636 = vpop.f32.mrb[0].mxu0
  %v2637 = vadd.f32 %v2214, %v2636
  %v2638 = vpop.f32.mrb[0].mxu0
  %v2639 = vadd.f32 %v2216, %v2638
  %2640 = vmatprep.mubr.f32.mxu0 0.0
  %v2641 = vand.u32 %v273, 4294901760
  %2642 = vmatmul.mubr.f32.gmra.mrb[0].mxu0 %v2641
  %v2643 = vpop.f32.mrb[0].mxu0
  %v2644 = vadd.f32 %v2223, %v2643
  %v2645 = vpop.f32.mrb[0].mxu0
  %v2646 = vadd.f32 %v2225, %v2645
  %2647 = vmatprep.mubr.f32.mxu0 0.0
  %v2648 = vand.u32 %v276, 4294901760
  %2649 = vmatmul.mubr.f32.gmra.mrb[0].mxu0 %v2648
  %v2650 = vpop.f32.mrb[0].mxu0
  %v2651 = vadd.f32 %v2232, %v2650
  %v2652 = vpop.f32.mrb[0].mxu0
  %v2653 = vadd.f32 %v2234, %v2652
  %2654 = vmatprep.mubr.f32.mxu0 0.0
  %v2655 = vand.u32 %v279, 4294901760
  %2656 = vmatmul.mubr.f32.gmra.mrb[0].mxu0 %v2655
  %v2657 = vpop.f32.mrb[0].mxu0
  %v2658 = vadd.f32 %v2241, %v2657
  %v2659 = vpop.f32.mrb[0].mxu0
  %v2660 = vadd.f32 %v2243, %v2659
  %2661 = vmatprep.mubr.f32.mxu0 0.0
  %v2662 = vand.u32 %v282, 4294901760
  %2663 = vmatmul.mubr.f32.gmra.mrb[0].mxu0 %v2662
  %v2664 = vpop.f32.mrb[0].mxu0
  %v2665 = vadd.f32 %v2250, %v2664
  %v2666 = vpop.f32.mrb[0].mxu0
  %v2667 = vadd.f32 %v2252, %v2666
  %2668 = vmatprep.mubr.f32.mxu0 0.0
  %v2669 = vand.u32 %v285, 4294901760
  %2670 = vmatmul.mubr.f32.gmra.mrb[0].mxu0 %v2669
  %v2671 = vpop.f32.mrb[0].mxu0
  %v2672 = vadd.f32 %v2259, %v2671
  %v2673 = vpop.f32.mrb[0].mxu0
  %v2674 = vadd.f32 %v2261, %v2673
  %2675 = vdwg.mxu0
  %v2676 = vand.u32 %v139, 4294901760
  %2677 = vmatprep.subr.mxu0 %v2676
  %v2678 = vand.u32 %v138, 4294901760
  %2679 = vmatpush1.msra.mxu0 %v2678
  %v2680 = vand.u32 %v141, 4294901760
  %2681 = vmatprep.subr.mxu0 %v2680
  %v2682 = vand.u32 %v140, 4294901760
  %2683 = vmatpush1.msra.mxu0 %v2682
  %2684 = vmatprep.subr.mxu0 0.0
  %2685 = vmatpush1.msra.mxu0 0.0
  %2686 = vmatprep.subr.mxu0 0.0
  %2687 = vmatpush1.msra.mxu0 0.0
  %2688 = vmatprep.subr.mxu0 0.0
  %2689 = vmatpush1.msra.mxu0 0.0
  %2690 = vmatprep.subr.mxu0 0.0
  %2691 = vmatpush1.msra.mxu0 0.0
  %2692 = vmatprep.subr.mxu0 0.0
  %2693 = vmatpush1.msra.mxu0 0.0
  %2694 = vmatprep.subr.mxu0 0.0
  %2695 = vmatpush1.msra.mxu0 0.0
  %2696 = vmatprep.subr.mxu0 0.0
  %2697 = vmatpush1.msra.mxu0 0.0
  %2698 = vmatprep.subr.mxu0 0.0
  %2699 = vmatpush1.msra.mxu0 0.0
  %2700 = vmatprep.subr.mxu0 0.0
  %2701 = vmatpush1.msra.mxu0 0.0
  %2702 = vmatprep.subr.mxu0 0.0
  %2703 = vmatpush1.msra.mxu0 0.0
  %2704 = vmatprep.subr.mxu0 0.0
  %2705 = vmatpush1.msra.mxu0 0.0
  %2706 = vmatprep.subr.mxu0 0.0
  %2707 = vmatpush1.msra.mxu0 0.0
  %2708 = vmatprep.subr.mxu0 0.0
  %2709 = vmatpush1.msra.mxu0 0.0
  %2710 = vmatprep.subr.mxu0 0.0
  %2711 = vmatpush1.msra.mxu0 0.0
  %2712 = vmatprep.subr.mxu0 0.0
  %2713 = vmatpush1.msra.mxu0 0.0
  %2714 = vmatprep.subr.mxu0 0.0
  %2715 = vmatpush1.msra.mxu0 0.0
  %2716 = vmatprep.subr.mxu0 0.0
  %2717 = vmatpush1.msra.mxu0 0.0
  %2718 = vmatprep.subr.mxu0 0.0
  %2719 = vmatpush1.msra.mxu0 0.0
  %2720 = vmatprep.subr.mxu0 0.0
  %2721 = vmatpush1.msra.mxu0 0.0
  %2722 = vmatprep.subr.mxu0 0.0
  %2723 = vmatpush1.msra.mxu0 0.0
  %2724 = vmatprep.subr.mxu0 0.0
  %2725 = vmatpush1.msra.mxu0 0.0
  %2726 = vmatprep.subr.mxu0 0.0
  %2727 = vmatpush1.msra.mxu0 0.0
  %2728 = vmatprep.subr.mxu0 0.0
  %2729 = vmatpush1.msra.mxu0 0.0
  %2730 = vmatprep.subr.mxu0 0.0
  %2731 = vmatpush1.msra.mxu0 0.0
  %2732 = vmatprep.subr.mxu0 0.0
  %2733 = vmatpush1.msra.mxu0 0.0
  %2734 = vmatprep.subr.mxu0 0.0
  %2735 = vmatpush1.msra.mxu0 0.0
  %2736 = vmatprep.subr.mxu0 0.0
  %2737 = vmatpush1.msra.mxu0 0.0
  %2738 = vmatprep.subr.mxu0 0.0
  %2739 = vmatpush1.msra.mxu0 0.0
  %2740 = vmatprep.subr.mxu0 0.0
  %2741 = vmatpush1.msra.mxu0 0.0
  %2742 = vmatprep.subr.mxu0 0.0
  %2743 = vmatpush1.msra.mxu0 0.0
  %2744 = vmatprep.mubr.f32.mxu0 0.0
  %v2745 = vand.u32 %v144, 4294901760
  %2746 = vmatmul.mubr.f32.gmra.mrb[0].mxu0 %v2745
  %v2747 = vpop.f32.mrb[0].mxu0
  %v2748 = vadd.f32 %v2343, %v2747
  %v2749 = vpop.f32.mrb[0].mxu0
  %v2750 = vadd.f32 %v2345, %v2749
  %2751 = vmatprep.mubr.f32.mxu0 0.0
  %v2752 = vand.u32 %v147, 4294901760
  %2753 = vmatmul.mubr.f32.gmra.mrb[0].mxu0 %v2752
  %v2754 = vpop.f32.mrb[0].mxu0
  %v2755 = vadd.f32 %v2350, %v2754
  %v2756 = vpop.f32.mrb[0].mxu0
  %v2757 = vadd.f32 %v2352, %v2756
  %2758 = vmatprep.mubr.f32.mxu0 0.0
  %v2759 = vand.u32 %v150, 4294901760
  %2760 = vmatmul.mubr.f32.gmra.mrb[0].mxu0 %v2759
  %v2761 = vpop.f32.mrb[0].mxu0
  %v2762 = vadd.f32 %v2357, %v2761
  %v2763 = vpop.f32.mrb[0].mxu0
  %v2764 = vadd.f32 %v2359, %v2763
  %2765 = vmatprep.mubr.f32.mxu0 0.0
  %v2766 = vand.u32 %v153, 4294901760
  %2767 = vmatmul.mubr.f32.gmra.mrb[0].mxu0 %v2766
  %v2768 = vpop.f32.mrb[0].mxu0
  %v2769 = vadd.f32 %v2364, %v2768
  %v2770 = vpop.f32.mrb[0].mxu0
  %v2771 = vadd.f32 %v2366, %v2770
  %2772 = vmatprep.mubr.f32.mxu0 0.0
  %v2773 = vand.u32 %v156, 4294901760
  %2774 = vmatmul.mubr.f32.gmra.mrb[0].mxu0 %v2773
  %v2775 = vpop.f32.mrb[0].mxu0
  %v2776 = vadd.f32 %v2371, %v2775
  %v2777 = vpop.f32.mrb[0].mxu0
  %v2778 = vadd.f32 %v2373, %v2777
  %2779 = vmatprep.mubr.f32.mxu0 0.0
  %v2780 = vand.u32 %v159, 4294901760
  %2781 = vmatmul.mubr.f32.gmra.mrb[0].mxu0 %v2780
  %v2782 = vpop.f32.mrb[0].mxu0
  %v2783 = vadd.f32 %v2378, %v2782
  %v2784 = vpop.f32.mrb[0].mxu0
  %v2785 = vadd.f32 %v2380, %v2784
  %2786 = vmatprep.mubr.f32.mxu0 0.0
  %v2787 = vand.u32 %v162, 4294901760
  %2788 = vmatmul.mubr.f32.gmra.mrb[0].mxu0 %v2787
  %v2789 = vpop.f32.mrb[0].mxu0
  %v2790 = vadd.f32 %v2385, %v2789
  %v2791 = vpop.f32.mrb[0].mxu0
  %v2792 = vadd.f32 %v2387, %v2791
  %2793 = vmatprep.mubr.f32.mxu0 0.0
  %v2794 = vand.u32 %v165, 4294901760
  %2795 = vmatmul.mubr.f32.gmra.mrb[0].mxu0 %v2794
  %v2796 = vpop.f32.mrb[0].mxu0
  %v2797 = vadd.f32 %v2392, %v2796
  %v2798 = vpop.f32.mrb[0].mxu0
  %v2799 = vadd.f32 %v2394, %v2798
  %2800 = vmatprep.mubr.f32.mxu0 0.0
  %v2801 = vand.u32 %v168, 4294901760
  %2802 = vmatmul.mubr.f32.gmra.mrb[0].mxu0 %v2801
  %v2803 = vpop.f32.mrb[0].mxu0
  %v2804 = vadd.f32 %v2399, %v2803
  %v2805 = vpop.f32.mrb[0].mxu0
  %v2806 = vadd.f32 %v2401, %v2805
  %2807 = vmatprep.mubr.f32.mxu0 0.0
  %v2808 = vand.u32 %v171, 4294901760
  %2809 = vmatmul.mubr.f32.gmra.mrb[0].mxu0 %v2808
  %v2810 = vpop.f32.mrb[0].mxu0
  %v2811 = vadd.f32 %v2406, %v2810
  %v2812 = vpop.f32.mrb[0].mxu0
  %v2813 = vadd.f32 %v2408, %v2812
  %2814 = vmatprep.mubr.f32.mxu0 0.0
  %v2815 = vand.u32 %v174, 4294901760
  %2816 = vmatmul.mubr.f32.gmra.mrb[0].mxu0 %v2815
  %v2817 = vpop.f32.mrb[0].mxu0
  %v2818 = vadd.f32 %v2413, %v2817
  %v2819 = vpop.f32.mrb[0].mxu0
  %v2820 = vadd.f32 %v2415, %v2819
  %2821 = vmatprep.mubr.f32.mxu0 0.0
  %v2822 = vand.u32 %v177, 4294901760
  %2823 = vmatmul.mubr.f32.gmra.mrb[0].mxu0 %v2822
  %v2824 = vpop.f32.mrb[0].mxu0
  %v2825 = vadd.f32 %v2420, %v2824
  %v2826 = vpop.f32.mrb[0].mxu0
  %v2827 = vadd.f32 %v2422, %v2826
  %2828 = vmatprep.mubr.f32.mxu0 0.0
  %v2829 = vand.u32 %v180, 4294901760
  %2830 = vmatmul.mubr.f32.gmra.mrb[0].mxu0 %v2829
  %v2831 = vpop.f32.mrb[0].mxu0
  %v2832 = vadd.f32 %v2427, %v2831
  %v2833 = vpop.f32.mrb[0].mxu0
  %v2834 = vadd.f32 %v2429, %v2833
  %2835 = vmatprep.mubr.f32.mxu0 0.0
  %v2836 = vand.u32 %v183, 4294901760
  %2837 = vmatmul.mubr.f32.gmra.mrb[0].mxu0 %v2836
  %v2838 = vpop.f32.mrb[0].mxu0
  %v2839 = vadd.f32 %v2434, %v2838
  %v2840 = vpop.f32.mrb[0].mxu0
  %v2841 = vadd.f32 %v2436, %v2840
  %2842 = vmatprep.mubr.f32.mxu0 0.0
  %v2843 = vand.u32 %v186, 4294901760
  %2844 = vmatmul.mubr.f32.gmra.mrb[0].mxu0 %v2843
  %v2845 = vpop.f32.mrb[0].mxu0
  %v2846 = vadd.f32 %v2441, %v2845
  %v2847 = vpop.f32.mrb[0].mxu0
  %v2848 = vadd.f32 %v2443, %v2847
  %2849 = vmatprep.mubr.f32.mxu0 0.0
  %v2850 = vand.u32 %v189, 4294901760
  %2851 = vmatmul.mubr.f32.gmra.mrb[0].mxu0 %v2850
  %v2852 = vpop.f32.mrb[0].mxu0
  %v2853 = vadd.f32 %v2448, %v2852
  %v2854 = vpop.f32.mrb[0].mxu0
  %v2855 = vadd.f32 %v2450, %v2854
  %2856 = vmatprep.mubr.f32.mxu0 0.0
  %v2857 = vand.u32 %v192, 4294901760
  %2858 = vmatmul.mubr.f32.gmra.mrb[0].mxu0 %v2857
  %v2859 = vpop.f32.mrb[0].mxu0
  %v2860 = vadd.f32 %v2455, %v2859
  %v2861 = vpop.f32.mrb[0].mxu0
  %v2862 = vadd.f32 %v2457, %v2861
  %2863 = vmatprep.mubr.f32.mxu0 0.0
  %v2864 = vand.u32 %v195, 4294901760
  %2865 = vmatmul.mubr.f32.gmra.mrb[0].mxu0 %v2864
  %v2866 = vpop.f32.mrb[0].mxu0
  %v2867 = vadd.f32 %v2462, %v2866
  %v2868 = vpop.f32.mrb[0].mxu0
  %v2869 = vadd.f32 %v2464, %v2868
  %2870 = vmatprep.mubr.f32.mxu0 0.0
  %v2871 = vand.u32 %v198, 4294901760
  %2872 = vmatmul.mubr.f32.gmra.mrb[0].mxu0 %v2871
  %v2873 = vpop.f32.mrb[0].mxu0
  %v2874 = vadd.f32 %v2469, %v2873
  %v2875 = vpop.f32.mrb[0].mxu0
  %v2876 = vadd.f32 %v2471, %v2875
  %2877 = vmatprep.mubr.f32.mxu0 0.0
  %v2878 = vand.u32 %v201, 4294901760
  %2879 = vmatmul.mubr.f32.gmra.mrb[0].mxu0 %v2878
  %v2880 = vpop.f32.mrb[0].mxu0
  %v2881 = vadd.f32 %v2476, %v2880
  %v2882 = vpop.f32.mrb[0].mxu0
  %v2883 = vadd.f32 %v2478, %v2882
  %2884 = vmatprep.mubr.f32.mxu0 0.0
  %v2885 = vand.u32 %v204, 4294901760
  %2886 = vmatmul.mubr.f32.gmra.mrb[0].mxu0 %v2885
  %v2887 = vpop.f32.mrb[0].mxu0
  %v2888 = vadd.f32 %v2483, %v2887
  %v2889 = vpop.f32.mrb[0].mxu0
  %v2890 = vadd.f32 %v2485, %v2889
  %2891 = vmatprep.mubr.f32.mxu0 0.0
  %v2892 = vand.u32 %v207, 4294901760
  %2893 = vmatmul.mubr.f32.gmra.mrb[0].mxu0 %v2892
  %v2894 = vpop.f32.mrb[0].mxu0
  %v2895 = vadd.f32 %v2490, %v2894
  %v2896 = vpop.f32.mrb[0].mxu0
  %v2897 = vadd.f32 %v2492, %v2896
  %2898 = vmatprep.mubr.f32.mxu0 0.0
  %v2899 = vand.u32 %v210, 4294901760
  %2900 = vmatmul.mubr.f32.gmra.mrb[0].mxu0 %v2899
  %v2901 = vpop.f32.mrb[0].mxu0
  %v2902 = vadd.f32 %v2497, %v2901
  %v2903 = vpop.f32.mrb[0].mxu0
  %v2904 = vadd.f32 %v2499, %v2903
  %2905 = vmatprep.mubr.f32.mxu0 0.0
  %v2906 = vand.u32 %v213, 4294901760
  %2907 = vmatmul.mubr.f32.gmra.mrb[0].mxu0 %v2906
  %v2908 = vpop.f32.mrb[0].mxu0
  %v2909 = vadd.f32 %v2504, %v2908
  %v2910 = vpop.f32.mrb[0].mxu0
  %v2911 = vadd.f32 %v2506, %v2910
  %2912 = vmatprep.mubr.f32.mxu0 0.0
  %v2913 = vand.u32 %v216, 4294901760
  %2914 = vmatmul.mubr.f32.gmra.mrb[0].mxu0 %v2913
  %v2915 = vpop.f32.mrb[0].mxu0
  %v2916 = vadd.f32 %v2511, %v2915
  %v2917 = vpop.f32.mrb[0].mxu0
  %v2918 = vadd.f32 %v2513, %v2917
  %2919 = vmatprep.mubr.f32.mxu0 0.0
  %v2920 = vand.u32 %v219, 4294901760
  %2921 = vmatmul.mubr.f32.gmra.mrb[0].mxu0 %v2920
  %v2922 = vpop.f32.mrb[0].mxu0
  %v2923 = vadd.f32 %v2518, %v2922
  %v2924 = vpop.f32.mrb[0].mxu0
  %v2925 = vadd.f32 %v2520, %v2924
  %2926 = vmatprep.mubr.f32.mxu0 0.0
  %v2927 = vand.u32 %v222, 4294901760
  %2928 = vmatmul.mubr.f32.gmra.mrb[0].mxu0 %v2927
  %v2929 = vpop.f32.mrb[0].mxu0
  %v2930 = vadd.f32 %v2525, %v2929
  %v2931 = vpop.f32.mrb[0].mxu0
  %v2932 = vadd.f32 %v2527, %v2931
  %2933 = vmatprep.mubr.f32.mxu0 0.0
  %v2934 = vand.u32 %v225, 4294901760
  %2935 = vmatmul.mubr.f32.gmra.mrb[0].mxu0 %v2934
  %v2936 = vpop.f32.mrb[0].mxu0
  %v2937 = vadd.f32 %v2532, %v2936
  %v2938 = vpop.f32.mrb[0].mxu0
  %v2939 = vadd.f32 %v2534, %v2938
  %2940 = vmatprep.mubr.f32.mxu0 0.0
  %v2941 = vand.u32 %v228, 4294901760
  %2942 = vmatmul.mubr.f32.gmra.mrb[0].mxu0 %v2941
  %v2943 = vpop.f32.mrb[0].mxu0
  %v2944 = vadd.f32 %v2539, %v2943
  %v2945 = vpop.f32.mrb[0].mxu0
  %v2946 = vadd.f32 %v2541, %v2945
  %2947 = vmatprep.mubr.f32.mxu0 0.0
  %v2948 = vand.u32 %v231, 4294901760
  %2949 = vmatmul.mubr.f32.gmra.mrb[0].mxu0 %v2948
  %v2950 = vpop.f32.mrb[0].mxu0
  %v2951 = vadd.f32 %v2546, %v2950
  %v2952 = vpop.f32.mrb[0].mxu0
  %v2953 = vadd.f32 %v2548, %v2952
  %2954 = vmatprep.mubr.f32.mxu0 0.0
  %v2955 = vand.u32 %v234, 4294901760
  %2956 = vmatmul.mubr.f32.gmra.mrb[0].mxu0 %v2955
  %v2957 = vpop.f32.mrb[0].mxu0
  %v2958 = vadd.f32 %v2553, %v2957
  %v2959 = vpop.f32.mrb[0].mxu0
  %v2960 = vadd.f32 %v2555, %v2959
  %2961 = vmatprep.mubr.f32.mxu0 0.0
  %v2962 = vand.u32 %v237, 4294901760
  %2963 = vmatmul.mubr.f32.gmra.mrb[0].mxu0 %v2962
  %v2964 = vpop.f32.mrb[0].mxu0
  %v2965 = vadd.f32 %v2560, %v2964
  %v2966 = vpop.f32.mrb[0].mxu0
  %v2967 = vadd.f32 %v2562, %v2966
  %2968 = vmatprep.mubr.f32.mxu0 0.0
  %v2969 = vand.u32 %v240, 4294901760
  %2970 = vmatmul.mubr.f32.gmra.mrb[0].mxu0 %v2969
  %v2971 = vpop.f32.mrb[0].mxu0
  %v2972 = vadd.f32 %v2567, %v2971
  %v2973 = vpop.f32.mrb[0].mxu0
  %v2974 = vadd.f32 %v2569, %v2973
  %2975 = vmatprep.mubr.f32.mxu0 0.0
  %v2976 = vand.u32 %v243, 4294901760
  %2977 = vmatmul.mubr.f32.gmra.mrb[0].mxu0 %v2976
  %v2978 = vpop.f32.mrb[0].mxu0
  %v2979 = vadd.f32 %v2574, %v2978
  %v2980 = vpop.f32.mrb[0].mxu0
  %v2981 = vadd.f32 %v2576, %v2980
  %2982 = vmatprep.mubr.f32.mxu0 0.0
  %v2983 = vand.u32 %v246, 4294901760
  %2984 = vmatmul.mubr.f32.gmra.mrb[0].mxu0 %v2983
  %v2985 = vpop.f32.mrb[0].mxu0
  %v2986 = vadd.f32 %v2581, %v2985
  %v2987 = vpop.f32.mrb[0].mxu0
  %v2988 = vadd.f32 %v2583, %v2987
  %2989 = vmatprep.mubr.f32.mxu0 0.0
  %v2990 = vand.u32 %v249, 4294901760
  %2991 = vmatmul.mubr.f32.gmra.mrb[0].mxu0 %v2990
  %v2992 = vpop.f32.mrb[0].mxu0
  %v2993 = vadd.f32 %v2588, %v2992
  %v2994 = vpop.f32.mrb[0].mxu0
  %v2995 = vadd.f32 %v2590, %v2994
  %2996 = vmatprep.mubr.f32.mxu0 0.0
  %v2997 = vand.u32 %v252, 4294901760
  %2998 = vmatmul.mubr.f32.gmra.mrb[0].mxu0 %v2997
  %v2999 = vpop.f32.mrb[0].mxu0
  %v3000 = vadd.f32 %v2595, %v2999
  %v3001 = vpop.f32.mrb[0].mxu0
  %v3002 = vadd.f32 %v2597, %v3001
  %3003 = vmatprep.mubr.f32.mxu0 0.0
  %v3004 = vand.u32 %v255, 4294901760
  %3005 = vmatmul.mubr.f32.gmra.mrb[0].mxu0 %v3004
  %v3006 = vpop.f32.mrb[0].mxu0
  %v3007 = vadd.f32 %v2602, %v3006
  %v3008 = vpop.f32.mrb[0].mxu0
  %v3009 = vadd.f32 %v2604, %v3008
  %3010 = vmatprep.mubr.f32.mxu0 0.0
  %v3011 = vand.u32 %v258, 4294901760
  %3012 = vmatmul.mubr.f32.gmra.mrb[0].mxu0 %v3011
  %v3013 = vpop.f32.mrb[0].mxu0
  %v3014 = vadd.f32 %v2609, %v3013
  %v3015 = vpop.f32.mrb[0].mxu0
  %v3016 = vadd.f32 %v2611, %v3015
  %3017 = vmatprep.mubr.f32.mxu0 0.0
  %v3018 = vand.u32 %v261, 4294901760
  %3019 = vmatmul.mubr.f32.gmra.mrb[0].mxu0 %v3018
  %v3020 = vpop.f32.mrb[0].mxu0
  %v3021 = vadd.f32 %v2616, %v3020
  %v3022 = vpop.f32.mrb[0].mxu0
  %v3023 = vadd.f32 %v2618, %v3022
  %3024 = vmatprep.mubr.f32.mxu0 0.0
  %v3025 = vand.u32 %v264, 4294901760
  %3026 = vmatmul.mubr.f32.gmra.mrb[0].mxu0 %v3025
  %v3027 = vpop.f32.mrb[0].mxu0
  %v3028 = vadd.f32 %v2623, %v3027
  %v3029 = vpop.f32.mrb[0].mxu0
  %v3030 = vadd.f32 %v2625, %v3029
  %3031 = vmatprep.mubr.f32.mxu0 0.0
  %v3032 = vand.u32 %v267, 4294901760
  %3033 = vmatmul.mubr.f32.gmra.mrb[0].mxu0 %v3032
  %v3034 = vpop.f32.mrb[0].mxu0
  %v3035 = vadd.f32 %v2630, %v3034
  %v3036 = vpop.f32.mrb[0].mxu0
  %v3037 = vadd.f32 %v2632, %v3036
  %3038 = vmatprep.mubr.f32.mxu0 0.0
  %v3039 = vand.u32 %v270, 4294901760
  %3040 = vmatmul.mubr.f32.gmra.mrb[0].mxu0 %v3039
  %v3041 = vpop.f32.mrb[0].mxu0
  %v3042 = vadd.f32 %v2637, %v3041
  %v3043 = vpop.f32.mrb[0].mxu0
  %v3044 = vadd.f32 %v2639, %v3043
  %3045 = vmatprep.mubr.f32.mxu0 0.0
  %v3046 = vand.u32 %v273, 4294901760
  %3047 = vmatmul.mubr.f32.gmra.mrb[0].mxu0 %v3046
  %v3048 = vpop.f32.mrb[0].mxu0
  %v3049 = vadd.f32 %v2644, %v3048
  %v3050 = vpop.f32.mrb[0].mxu0
  %v3051 = vadd.f32 %v2646, %v3050
  %3052 = vmatprep.mubr.f32.mxu0 0.0
  %v3053 = vand.u32 %v276, 4294901760
  %3054 = vmatmul.mubr.f32.gmra.mrb[0].mxu0 %v3053
  %v3055 = vpop.f32.mrb[0].mxu0
  %v3056 = vadd.f32 %v2651, %v3055
  %v3057 = vpop.f32.mrb[0].mxu0
  %v3058 = vadd.f32 %v2653, %v3057
  %3059 = vmatprep.mubr.f32.mxu0 0.0
  %v3060 = vand.u32 %v279, 4294901760
  %3061 = vmatmul.mubr.f32.gmra.mrb[0].mxu0 %v3060
  %v3062 = vpop.f32.mrb[0].mxu0
  %v3063 = vadd.f32 %v2658, %v3062
  %v3064 = vpop.f32.mrb[0].mxu0
  %v3065 = vadd.f32 %v2660, %v3064
  %3066 = vmatprep.mubr.f32.mxu0 0.0
  %v3067 = vand.u32 %v282, 4294901760
  %3068 = vmatmul.mubr.f32.gmra.mrb[0].mxu0 %v3067
  %v3069 = vpop.f32.mrb[0].mxu0
  %v3070 = vadd.f32 %v2665, %v3069
  %v3071 = vpop.f32.mrb[0].mxu0
  %v3072 = vadd.f32 %v2667, %v3071
  %3073 = vmatprep.mubr.f32.mxu0 0.0
  %v3074 = vand.u32 %v285, 4294901760
  %3075 = vmatmul.mubr.f32.gmra.mrb[0].mxu0 %v3074
  %v3076 = vpop.f32.mrb[0].mxu0
  %v3077 = vadd.f32 %v2672, %v3076
  %v3078 = vpop.f32.mrb[0].mxu0
  %v3079 = vadd.f32 %v2674, %v3078
  %3080 = vdwg.mxu0
  %vm3081 = vcmask 261120
  %v3083 = vsel %vm3081, %v34, 0
  %v3086 = vsel %vm3081, %v35, 0
  %v3089 = vsel %vm3081, %v36, 0
  %v3092 = vsel %vm3081, %v37, 0
  %v3095 = vsel %vm3081, %v38, 0
  %v3098 = vsel %vm3081, %v39, 0
  %v3101 = vsel %vm3081, %v40, 0
  %v3104 = vsel %vm3081, %v41, 0
  %v3107 = vsel %vm3081, %v42, 0
  %v3110 = vsel %vm3081, %v43, 0
  %v3113 = vsel %vm3081, %v44, 0
  %v3116 = vsel %vm3081, %v45, 0
  %v3119 = vsel %vm3081, %v46, 0
  %v3122 = vsel %vm3081, %v47, 0
  %v3125 = vsel %vm3081, %v48, 0
  %v3128 = vsel %vm3081, %v49, 0
  %v3131 = vsel %vm3081, %v50, 0
  %v3134 = vsel %vm3081, %v51, 0
  %v3137 = vsel %vm3081, %v52, 0
  %v3140 = vsel %vm3081, %v53, 0
  %v3143 = vsel %vm3081, %v54, 0
  %v3146 = vsel %vm3081, %v55, 0
  %v3149 = vsel %vm3081, %v56, 0
  %v3152 = vsel %vm3081, %v57, 0
  %v3155 = vsel %vm3081, %v58, 0
  %v3158 = vsel %vm3081, %v59, 0
  %v3161 = vsel %vm3081, %v60, 0
  %v3164 = vsel %vm3081, %v61, 0
  %v3167 = vsel %vm3081, %v62, 0
  %v3170 = vsel %vm3081, %v63, 0
  %v3173 = vsel %vm3081, %v64, 0
  %v3176 = vsel %vm3081, %v65, 0
  %v3179 = vsel %vm3081, %v66, 0
  %v3182 = vsel %vm3081, %v67, 0
  %v3185 = vsel %vm3081, %v68, 0
  %v3188 = vsel %vm3081, %v69, 0
  %v3191 = vsel %vm3081, %v70, 0
  %v3194 = vsel %vm3081, %v71, 0
  %v3197 = vsel %vm3081, %v72, 0
  %v3200 = vsel %vm3081, %v73, 0
  %v3203 = vsel %vm3081, %v74, 0
  %v3206 = vsel %vm3081, %v75, 0
  %v3209 = vsel %vm3081, %v76, 0
  %v3212 = vsel %vm3081, %v77, 0
  %v3215 = vsel %vm3081, %v78, 0
  %v3218 = vsel %vm3081, %v79, 0
  %v3221 = vsel %vm3081, %v80, 0
  %v3224 = vsel %vm3081, %v81, 0
  %v3226 = vand.u32 %v83, 4294901760
  %3227 = vmatprep.subr.mxu0 %v3226
  %v3228 = vand.u32 %v82, 4294901760
  %3229 = vmatpush1.msra.mxu0 %v3228
  %v3230 = vand.u32 %v85, 4294901760
  %3231 = vmatprep.subr.mxu0 %v3230
  %v3232 = vand.u32 %v84, 4294901760
  %3233 = vmatpush1.msra.mxu0 %v3232
  %v3234 = vand.u32 %v87, 4294901760
  %3235 = vmatprep.subr.mxu0 %v3234
  %v3236 = vand.u32 %v86, 4294901760
  %3237 = vmatpush1.msra.mxu0 %v3236
  %v3238 = vand.u32 %v89, 4294901760
  %3239 = vmatprep.subr.mxu0 %v3238
  %v3240 = vand.u32 %v88, 4294901760
  %3241 = vmatpush1.msra.mxu0 %v3240
  %3242 = vmatprep.subr.mxu0 0.0
  %3243 = vmatpush1.msra.mxu0 0.0
  %3244 = vmatprep.subr.mxu0 0.0
  %3245 = vmatpush1.msra.mxu0 0.0
  %3246 = vmatprep.subr.mxu0 0.0
  %3247 = vmatpush1.msra.mxu0 0.0
  %3248 = vmatprep.subr.mxu0 0.0
  %3249 = vmatpush1.msra.mxu0 0.0
  %3250 = vmatprep.subr.mxu0 0.0
  %3251 = vmatpush1.msra.mxu0 0.0
  %3252 = vmatprep.subr.mxu0 0.0
  %3253 = vmatpush1.msra.mxu0 0.0
  %3254 = vmatprep.subr.mxu0 0.0
  %3255 = vmatpush1.msra.mxu0 0.0
  %3256 = vmatprep.subr.mxu0 0.0
  %3257 = vmatpush1.msra.mxu0 0.0
  %3258 = vmatprep.subr.mxu0 0.0
  %3259 = vmatpush1.msra.mxu0 0.0
  %3260 = vmatprep.subr.mxu0 0.0
  %3261 = vmatpush1.msra.mxu0 0.0
  %3262 = vmatprep.subr.mxu0 0.0
  %3263 = vmatpush1.msra.mxu0 0.0
  %3264 = vmatprep.subr.mxu0 0.0
  %3265 = vmatpush1.msra.mxu0 0.0
  %3266 = vmatprep.subr.mxu0 0.0
  %3267 = vmatpush1.msra.mxu0 0.0
  %3268 = vmatprep.subr.mxu0 0.0
  %3269 = vmatpush1.msra.mxu0 0.0
  %3270 = vmatprep.subr.mxu0 0.0
  %3271 = vmatpush1.msra.mxu0 0.0
  %3272 = vmatprep.subr.mxu0 0.0
  %3273 = vmatpush1.msra.mxu0 0.0
  %3274 = vmatprep.subr.mxu0 0.0
  %3275 = vmatpush1.msra.mxu0 0.0
  %3276 = vmatprep.subr.mxu0 0.0
  %3277 = vmatpush1.msra.mxu0 0.0
  %3278 = vmatprep.subr.mxu0 0.0
  %3279 = vmatpush1.msra.mxu0 0.0
  %3280 = vmatprep.subr.mxu0 0.0
  %3281 = vmatpush1.msra.mxu0 0.0
  %3282 = vmatprep.subr.mxu0 0.0
  %3283 = vmatpush1.msra.mxu0 0.0
  %3284 = vmatprep.subr.mxu0 0.0
  %3285 = vmatpush1.msra.mxu0 0.0
  %3286 = vmatprep.subr.mxu0 0.0
  %3287 = vmatpush1.msra.mxu0 0.0
  %3288 = vmatprep.subr.mxu0 0.0
  %3289 = vmatpush1.msra.mxu0 0.0
  %3290 = vmatprep.subr.mxu0 0.0
  %3291 = vmatpush1.msra.mxu0 0.0
  %3292 = vmatprep.subr.mxu0 0.0
  %3293 = vmatpush1.msra.mxu0 0.0
  %3294 = vmatprep.subr.mxu0 0.0
  %3295 = vmatpush1.msra.mxu0 0.0
  %3296 = vmatprep.subr.mxu0 0.0
  %3297 = vmatpush1.msra.mxu0 0.0
  %3298 = vmatprep.mubr.f32.mxu0 0.0
  %v3299 = vand.u32 %v3083, 4294901760
  %v3300 = vsub.f32 %v3083, %v3299
  %v3301 = vand.u32 %v3300, 4294901760
  %v3302 = vsub.f32 %v3300, %v3301
  %v3303 = vand.u32 %v3302, 4294901760
  %3304 = vmatmul.mubr.f32.gmra.mrb[0].mxu0 %v3303
  %v3305 = vpop.f32.mrb[0].mxu0
  %v3306 = vadd.f32 %v2748, %v3305
  %v3307 = vpop.f32.mrb[0].mxu0
  %v3308 = vadd.f32 %v2750, %v3307
  %3309 = vmatprep.mubr.f32.mxu0 0.0
  %v3310 = vand.u32 %v3086, 4294901760
  %v3311 = vsub.f32 %v3086, %v3310
  %v3312 = vand.u32 %v3311, 4294901760
  %v3313 = vsub.f32 %v3311, %v3312
  %v3314 = vand.u32 %v3313, 4294901760
  %3315 = vmatmul.mubr.f32.gmra.mrb[0].mxu0 %v3314
  %v3316 = vpop.f32.mrb[0].mxu0
  %v3317 = vadd.f32 %v2755, %v3316
  %v3318 = vpop.f32.mrb[0].mxu0
  %v3319 = vadd.f32 %v2757, %v3318
  %3320 = vmatprep.mubr.f32.mxu0 0.0
  %v3321 = vand.u32 %v3089, 4294901760
  %v3322 = vsub.f32 %v3089, %v3321
  %v3323 = vand.u32 %v3322, 4294901760
  %v3324 = vsub.f32 %v3322, %v3323
  %v3325 = vand.u32 %v3324, 4294901760
  %3326 = vmatmul.mubr.f32.gmra.mrb[0].mxu0 %v3325
  %v3327 = vpop.f32.mrb[0].mxu0
  %v3328 = vadd.f32 %v2762, %v3327
  %v3329 = vpop.f32.mrb[0].mxu0
  %v3330 = vadd.f32 %v2764, %v3329
  %3331 = vmatprep.mubr.f32.mxu0 0.0
  %v3332 = vand.u32 %v3092, 4294901760
  %v3333 = vsub.f32 %v3092, %v3332
  %v3334 = vand.u32 %v3333, 4294901760
  %v3335 = vsub.f32 %v3333, %v3334
  %v3336 = vand.u32 %v3335, 4294901760
  %3337 = vmatmul.mubr.f32.gmra.mrb[0].mxu0 %v3336
  %v3338 = vpop.f32.mrb[0].mxu0
  %v3339 = vadd.f32 %v2769, %v3338
  %v3340 = vpop.f32.mrb[0].mxu0
  %v3341 = vadd.f32 %v2771, %v3340
  %3342 = vmatprep.mubr.f32.mxu0 0.0
  %v3343 = vand.u32 %v3095, 4294901760
  %v3344 = vsub.f32 %v3095, %v3343
  %v3345 = vand.u32 %v3344, 4294901760
  %v3346 = vsub.f32 %v3344, %v3345
  %v3347 = vand.u32 %v3346, 4294901760
  %3348 = vmatmul.mubr.f32.gmra.mrb[0].mxu0 %v3347
  %v3349 = vpop.f32.mrb[0].mxu0
  %v3350 = vadd.f32 %v2776, %v3349
  %v3351 = vpop.f32.mrb[0].mxu0
  %v3352 = vadd.f32 %v2778, %v3351
  %3353 = vmatprep.mubr.f32.mxu0 0.0
  %v3354 = vand.u32 %v3098, 4294901760
  %v3355 = vsub.f32 %v3098, %v3354
  %v3356 = vand.u32 %v3355, 4294901760
  %v3357 = vsub.f32 %v3355, %v3356
  %v3358 = vand.u32 %v3357, 4294901760
  %3359 = vmatmul.mubr.f32.gmra.mrb[0].mxu0 %v3358
  %v3360 = vpop.f32.mrb[0].mxu0
  %v3361 = vadd.f32 %v2783, %v3360
  %v3362 = vpop.f32.mrb[0].mxu0
  %v3363 = vadd.f32 %v2785, %v3362
  %3364 = vmatprep.mubr.f32.mxu0 0.0
  %v3365 = vand.u32 %v3101, 4294901760
  %v3366 = vsub.f32 %v3101, %v3365
  %v3367 = vand.u32 %v3366, 4294901760
  %v3368 = vsub.f32 %v3366, %v3367
  %v3369 = vand.u32 %v3368, 4294901760
  %3370 = vmatmul.mubr.f32.gmra.mrb[0].mxu0 %v3369
  %v3371 = vpop.f32.mrb[0].mxu0
  %v3372 = vadd.f32 %v2790, %v3371
  %v3373 = vpop.f32.mrb[0].mxu0
  %v3374 = vadd.f32 %v2792, %v3373
  %3375 = vmatprep.mubr.f32.mxu0 0.0
  %v3376 = vand.u32 %v3104, 4294901760
  %v3377 = vsub.f32 %v3104, %v3376
  %v3378 = vand.u32 %v3377, 4294901760
  %v3379 = vsub.f32 %v3377, %v3378
  %v3380 = vand.u32 %v3379, 4294901760
  %3381 = vmatmul.mubr.f32.gmra.mrb[0].mxu0 %v3380
  %v3382 = vpop.f32.mrb[0].mxu0
  %v3383 = vadd.f32 %v2797, %v3382
  %v3384 = vpop.f32.mrb[0].mxu0
  %v3385 = vadd.f32 %v2799, %v3384
  %3386 = vmatprep.mubr.f32.mxu0 0.0
  %v3387 = vand.u32 %v3107, 4294901760
  %v3388 = vsub.f32 %v3107, %v3387
  %v3389 = vand.u32 %v3388, 4294901760
  %v3390 = vsub.f32 %v3388, %v3389
  %v3391 = vand.u32 %v3390, 4294901760
  %3392 = vmatmul.mubr.f32.gmra.mrb[0].mxu0 %v3391
  %v3393 = vpop.f32.mrb[0].mxu0
  %v3394 = vadd.f32 %v2804, %v3393
  %v3395 = vpop.f32.mrb[0].mxu0
  %v3396 = vadd.f32 %v2806, %v3395
  %3397 = vmatprep.mubr.f32.mxu0 0.0
  %v3398 = vand.u32 %v3110, 4294901760
  %v3399 = vsub.f32 %v3110, %v3398
  %v3400 = vand.u32 %v3399, 4294901760
  %v3401 = vsub.f32 %v3399, %v3400
  %v3402 = vand.u32 %v3401, 4294901760
  %3403 = vmatmul.mubr.f32.gmra.mrb[0].mxu0 %v3402
  %v3404 = vpop.f32.mrb[0].mxu0
  %v3405 = vadd.f32 %v2811, %v3404
  %v3406 = vpop.f32.mrb[0].mxu0
  %v3407 = vadd.f32 %v2813, %v3406
  %3408 = vmatprep.mubr.f32.mxu0 0.0
  %v3409 = vand.u32 %v3113, 4294901760
  %v3410 = vsub.f32 %v3113, %v3409
  %v3411 = vand.u32 %v3410, 4294901760
  %v3412 = vsub.f32 %v3410, %v3411
  %v3413 = vand.u32 %v3412, 4294901760
  %3414 = vmatmul.mubr.f32.gmra.mrb[0].mxu0 %v3413
  %v3415 = vpop.f32.mrb[0].mxu0
  %v3416 = vadd.f32 %v2818, %v3415
  %v3417 = vpop.f32.mrb[0].mxu0
  %v3418 = vadd.f32 %v2820, %v3417
  %3419 = vmatprep.mubr.f32.mxu0 0.0
  %v3420 = vand.u32 %v3116, 4294901760
  %v3421 = vsub.f32 %v3116, %v3420
  %v3422 = vand.u32 %v3421, 4294901760
  %v3423 = vsub.f32 %v3421, %v3422
  %v3424 = vand.u32 %v3423, 4294901760
  %3425 = vmatmul.mubr.f32.gmra.mrb[0].mxu0 %v3424
  %v3426 = vpop.f32.mrb[0].mxu0
  %v3427 = vadd.f32 %v2825, %v3426
  %v3428 = vpop.f32.mrb[0].mxu0
  %v3429 = vadd.f32 %v2827, %v3428
  %3430 = vmatprep.mubr.f32.mxu0 0.0
  %v3431 = vand.u32 %v3119, 4294901760
  %v3432 = vsub.f32 %v3119, %v3431
  %v3433 = vand.u32 %v3432, 4294901760
  %v3434 = vsub.f32 %v3432, %v3433
  %v3435 = vand.u32 %v3434, 4294901760
  %3436 = vmatmul.mubr.f32.gmra.mrb[0].mxu0 %v3435
  %v3437 = vpop.f32.mrb[0].mxu0
  %v3438 = vadd.f32 %v2832, %v3437
  %v3439 = vpop.f32.mrb[0].mxu0
  %v3440 = vadd.f32 %v2834, %v3439
  %3441 = vmatprep.mubr.f32.mxu0 0.0
  %v3442 = vand.u32 %v3122, 4294901760
  %v3443 = vsub.f32 %v3122, %v3442
  %v3444 = vand.u32 %v3443, 4294901760
  %v3445 = vsub.f32 %v3443, %v3444
  %v3446 = vand.u32 %v3445, 4294901760
  %3447 = vmatmul.mubr.f32.gmra.mrb[0].mxu0 %v3446
  %v3448 = vpop.f32.mrb[0].mxu0
  %v3449 = vadd.f32 %v2839, %v3448
  %v3450 = vpop.f32.mrb[0].mxu0
  %v3451 = vadd.f32 %v2841, %v3450
  %3452 = vmatprep.mubr.f32.mxu0 0.0
  %v3453 = vand.u32 %v3125, 4294901760
  %v3454 = vsub.f32 %v3125, %v3453
  %v3455 = vand.u32 %v3454, 4294901760
  %v3456 = vsub.f32 %v3454, %v3455
  %v3457 = vand.u32 %v3456, 4294901760
  %3458 = vmatmul.mubr.f32.gmra.mrb[0].mxu0 %v3457
  %v3459 = vpop.f32.mrb[0].mxu0
  %v3460 = vadd.f32 %v2846, %v3459
  %v3461 = vpop.f32.mrb[0].mxu0
  %v3462 = vadd.f32 %v2848, %v3461
  %3463 = vmatprep.mubr.f32.mxu0 0.0
  %v3464 = vand.u32 %v3128, 4294901760
  %v3465 = vsub.f32 %v3128, %v3464
  %v3466 = vand.u32 %v3465, 4294901760
  %v3467 = vsub.f32 %v3465, %v3466
  %v3468 = vand.u32 %v3467, 4294901760
  %3469 = vmatmul.mubr.f32.gmra.mrb[0].mxu0 %v3468
  %v3470 = vpop.f32.mrb[0].mxu0
  %v3471 = vadd.f32 %v2853, %v3470
  %v3472 = vpop.f32.mrb[0].mxu0
  %v3473 = vadd.f32 %v2855, %v3472
  %3474 = vmatprep.mubr.f32.mxu0 0.0
  %v3475 = vand.u32 %v3131, 4294901760
  %v3476 = vsub.f32 %v3131, %v3475
  %v3477 = vand.u32 %v3476, 4294901760
  %v3478 = vsub.f32 %v3476, %v3477
  %v3479 = vand.u32 %v3478, 4294901760
  %3480 = vmatmul.mubr.f32.gmra.mrb[0].mxu0 %v3479
  %v3481 = vpop.f32.mrb[0].mxu0
  %v3482 = vadd.f32 %v2860, %v3481
  %v3483 = vpop.f32.mrb[0].mxu0
  %v3484 = vadd.f32 %v2862, %v3483
  %3485 = vmatprep.mubr.f32.mxu0 0.0
  %v3486 = vand.u32 %v3134, 4294901760
  %v3487 = vsub.f32 %v3134, %v3486
  %v3488 = vand.u32 %v3487, 4294901760
  %v3489 = vsub.f32 %v3487, %v3488
  %v3490 = vand.u32 %v3489, 4294901760
  %3491 = vmatmul.mubr.f32.gmra.mrb[0].mxu0 %v3490
  %v3492 = vpop.f32.mrb[0].mxu0
  %v3493 = vadd.f32 %v2867, %v3492
  %v3494 = vpop.f32.mrb[0].mxu0
  %v3495 = vadd.f32 %v2869, %v3494
  %3496 = vmatprep.mubr.f32.mxu0 0.0
  %v3497 = vand.u32 %v3137, 4294901760
  %v3498 = vsub.f32 %v3137, %v3497
  %v3499 = vand.u32 %v3498, 4294901760
  %v3500 = vsub.f32 %v3498, %v3499
  %v3501 = vand.u32 %v3500, 4294901760
  %3502 = vmatmul.mubr.f32.gmra.mrb[0].mxu0 %v3501
  %v3503 = vpop.f32.mrb[0].mxu0
  %v3504 = vadd.f32 %v2874, %v3503
  %v3505 = vpop.f32.mrb[0].mxu0
  %v3506 = vadd.f32 %v2876, %v3505
  %3507 = vmatprep.mubr.f32.mxu0 0.0
  %v3508 = vand.u32 %v3140, 4294901760
  %v3509 = vsub.f32 %v3140, %v3508
  %v3510 = vand.u32 %v3509, 4294901760
  %v3511 = vsub.f32 %v3509, %v3510
  %v3512 = vand.u32 %v3511, 4294901760
  %3513 = vmatmul.mubr.f32.gmra.mrb[0].mxu0 %v3512
  %v3514 = vpop.f32.mrb[0].mxu0
  %v3515 = vadd.f32 %v2881, %v3514
  %v3516 = vpop.f32.mrb[0].mxu0
  %v3517 = vadd.f32 %v2883, %v3516
  %3518 = vmatprep.mubr.f32.mxu0 0.0
  %v3519 = vand.u32 %v3143, 4294901760
  %v3520 = vsub.f32 %v3143, %v3519
  %v3521 = vand.u32 %v3520, 4294901760
  %v3522 = vsub.f32 %v3520, %v3521
  %v3523 = vand.u32 %v3522, 4294901760
  %3524 = vmatmul.mubr.f32.gmra.mrb[0].mxu0 %v3523
  %v3525 = vpop.f32.mrb[0].mxu0
  %v3526 = vadd.f32 %v2888, %v3525
  %v3527 = vpop.f32.mrb[0].mxu0
  %v3528 = vadd.f32 %v2890, %v3527
  %3529 = vmatprep.mubr.f32.mxu0 0.0
  %v3530 = vand.u32 %v3146, 4294901760
  %v3531 = vsub.f32 %v3146, %v3530
  %v3532 = vand.u32 %v3531, 4294901760
  %v3533 = vsub.f32 %v3531, %v3532
  %v3534 = vand.u32 %v3533, 4294901760
  %3535 = vmatmul.mubr.f32.gmra.mrb[0].mxu0 %v3534
  %v3536 = vpop.f32.mrb[0].mxu0
  %v3537 = vadd.f32 %v2895, %v3536
  %v3538 = vpop.f32.mrb[0].mxu0
  %v3539 = vadd.f32 %v2897, %v3538
  %3540 = vmatprep.mubr.f32.mxu0 0.0
  %v3541 = vand.u32 %v3149, 4294901760
  %v3542 = vsub.f32 %v3149, %v3541
  %v3543 = vand.u32 %v3542, 4294901760
  %v3544 = vsub.f32 %v3542, %v3543
  %v3545 = vand.u32 %v3544, 4294901760
  %3546 = vmatmul.mubr.f32.gmra.mrb[0].mxu0 %v3545
  %v3547 = vpop.f32.mrb[0].mxu0
  %v3548 = vadd.f32 %v2902, %v3547
  %v3549 = vpop.f32.mrb[0].mxu0
  %v3550 = vadd.f32 %v2904, %v3549
  %3551 = vmatprep.mubr.f32.mxu0 0.0
  %v3552 = vand.u32 %v3152, 4294901760
  %v3553 = vsub.f32 %v3152, %v3552
  %v3554 = vand.u32 %v3553, 4294901760
  %v3555 = vsub.f32 %v3553, %v3554
  %v3556 = vand.u32 %v3555, 4294901760
  %3557 = vmatmul.mubr.f32.gmra.mrb[0].mxu0 %v3556
  %v3558 = vpop.f32.mrb[0].mxu0
  %v3559 = vadd.f32 %v2909, %v3558
  %v3560 = vpop.f32.mrb[0].mxu0
  %v3561 = vadd.f32 %v2911, %v3560
  %3562 = vmatprep.mubr.f32.mxu0 0.0
  %v3563 = vand.u32 %v3155, 4294901760
  %v3564 = vsub.f32 %v3155, %v3563
  %v3565 = vand.u32 %v3564, 4294901760
  %v3566 = vsub.f32 %v3564, %v3565
  %v3567 = vand.u32 %v3566, 4294901760
  %3568 = vmatmul.mubr.f32.gmra.mrb[0].mxu0 %v3567
  %v3569 = vpop.f32.mrb[0].mxu0
  %v3570 = vadd.f32 %v2916, %v3569
  %v3571 = vpop.f32.mrb[0].mxu0
  %v3572 = vadd.f32 %v2918, %v3571
  %3573 = vmatprep.mubr.f32.mxu0 0.0
  %v3574 = vand.u32 %v3158, 4294901760
  %v3575 = vsub.f32 %v3158, %v3574
  %v3576 = vand.u32 %v3575, 4294901760
  %v3577 = vsub.f32 %v3575, %v3576
  %v3578 = vand.u32 %v3577, 4294901760
  %3579 = vmatmul.mubr.f32.gmra.mrb[0].mxu0 %v3578
  %v3580 = vpop.f32.mrb[0].mxu0
  %v3581 = vadd.f32 %v2923, %v3580
  %v3582 = vpop.f32.mrb[0].mxu0
  %v3583 = vadd.f32 %v2925, %v3582
  %3584 = vmatprep.mubr.f32.mxu0 0.0
  %v3585 = vand.u32 %v3161, 4294901760
  %v3586 = vsub.f32 %v3161, %v3585
  %v3587 = vand.u32 %v3586, 4294901760
  %v3588 = vsub.f32 %v3586, %v3587
  %v3589 = vand.u32 %v3588, 4294901760
  %3590 = vmatmul.mubr.f32.gmra.mrb[0].mxu0 %v3589
  %v3591 = vpop.f32.mrb[0].mxu0
  %v3592 = vadd.f32 %v2930, %v3591
  %v3593 = vpop.f32.mrb[0].mxu0
  %v3594 = vadd.f32 %v2932, %v3593
  %3595 = vmatprep.mubr.f32.mxu0 0.0
  %v3596 = vand.u32 %v3164, 4294901760
  %v3597 = vsub.f32 %v3164, %v3596
  %v3598 = vand.u32 %v3597, 4294901760
  %v3599 = vsub.f32 %v3597, %v3598
  %v3600 = vand.u32 %v3599, 4294901760
  %3601 = vmatmul.mubr.f32.gmra.mrb[0].mxu0 %v3600
  %v3602 = vpop.f32.mrb[0].mxu0
  %v3603 = vadd.f32 %v2937, %v3602
  %v3604 = vpop.f32.mrb[0].mxu0
  %v3605 = vadd.f32 %v2939, %v3604
  %3606 = vmatprep.mubr.f32.mxu0 0.0
  %v3607 = vand.u32 %v3167, 4294901760
  %v3608 = vsub.f32 %v3167, %v3607
  %v3609 = vand.u32 %v3608, 4294901760
  %v3610 = vsub.f32 %v3608, %v3609
  %v3611 = vand.u32 %v3610, 4294901760
  %3612 = vmatmul.mubr.f32.gmra.mrb[0].mxu0 %v3611
  %v3613 = vpop.f32.mrb[0].mxu0
  %v3614 = vadd.f32 %v2944, %v3613
  %v3615 = vpop.f32.mrb[0].mxu0
  %v3616 = vadd.f32 %v2946, %v3615
  %3617 = vmatprep.mubr.f32.mxu0 0.0
  %v3618 = vand.u32 %v3170, 4294901760
  %v3619 = vsub.f32 %v3170, %v3618
  %v3620 = vand.u32 %v3619, 4294901760
  %v3621 = vsub.f32 %v3619, %v3620
  %v3622 = vand.u32 %v3621, 4294901760
  %3623 = vmatmul.mubr.f32.gmra.mrb[0].mxu0 %v3622
  %v3624 = vpop.f32.mrb[0].mxu0
  %v3625 = vadd.f32 %v2951, %v3624
  %v3626 = vpop.f32.mrb[0].mxu0
  %v3627 = vadd.f32 %v2953, %v3626
  %3628 = vmatprep.mubr.f32.mxu0 0.0
  %v3629 = vand.u32 %v3173, 4294901760
  %v3630 = vsub.f32 %v3173, %v3629
  %v3631 = vand.u32 %v3630, 4294901760
  %v3632 = vsub.f32 %v3630, %v3631
  %v3633 = vand.u32 %v3632, 4294901760
  %3634 = vmatmul.mubr.f32.gmra.mrb[0].mxu0 %v3633
  %v3635 = vpop.f32.mrb[0].mxu0
  %v3636 = vadd.f32 %v2958, %v3635
  %v3637 = vpop.f32.mrb[0].mxu0
  %v3638 = vadd.f32 %v2960, %v3637
  %3639 = vmatprep.mubr.f32.mxu0 0.0
  %v3640 = vand.u32 %v3176, 4294901760
  %v3641 = vsub.f32 %v3176, %v3640
  %v3642 = vand.u32 %v3641, 4294901760
  %v3643 = vsub.f32 %v3641, %v3642
  %v3644 = vand.u32 %v3643, 4294901760
  %3645 = vmatmul.mubr.f32.gmra.mrb[0].mxu0 %v3644
  %v3646 = vpop.f32.mrb[0].mxu0
  %v3647 = vadd.f32 %v2965, %v3646
  %v3648 = vpop.f32.mrb[0].mxu0
  %v3649 = vadd.f32 %v2967, %v3648
  %3650 = vmatprep.mubr.f32.mxu0 0.0
  %v3651 = vand.u32 %v3179, 4294901760
  %v3652 = vsub.f32 %v3179, %v3651
  %v3653 = vand.u32 %v3652, 4294901760
  %v3654 = vsub.f32 %v3652, %v3653
  %v3655 = vand.u32 %v3654, 4294901760
  %3656 = vmatmul.mubr.f32.gmra.mrb[0].mxu0 %v3655
  %v3657 = vpop.f32.mrb[0].mxu0
  %v3658 = vadd.f32 %v2972, %v3657
  %v3659 = vpop.f32.mrb[0].mxu0
  %v3660 = vadd.f32 %v2974, %v3659
  %3661 = vmatprep.mubr.f32.mxu0 0.0
  %v3662 = vand.u32 %v3182, 4294901760
  %v3663 = vsub.f32 %v3182, %v3662
  %v3664 = vand.u32 %v3663, 4294901760
  %v3665 = vsub.f32 %v3663, %v3664
  %v3666 = vand.u32 %v3665, 4294901760
  %3667 = vmatmul.mubr.f32.gmra.mrb[0].mxu0 %v3666
  %v3668 = vpop.f32.mrb[0].mxu0
  %v3669 = vadd.f32 %v2979, %v3668
  %v3670 = vpop.f32.mrb[0].mxu0
  %v3671 = vadd.f32 %v2981, %v3670
  %3672 = vmatprep.mubr.f32.mxu0 0.0
  %v3673 = vand.u32 %v3185, 4294901760
  %v3674 = vsub.f32 %v3185, %v3673
  %v3675 = vand.u32 %v3674, 4294901760
  %v3676 = vsub.f32 %v3674, %v3675
  %v3677 = vand.u32 %v3676, 4294901760
  %3678 = vmatmul.mubr.f32.gmra.mrb[0].mxu0 %v3677
  %v3679 = vpop.f32.mrb[0].mxu0
  %v3680 = vadd.f32 %v2986, %v3679
  %v3681 = vpop.f32.mrb[0].mxu0
  %v3682 = vadd.f32 %v2988, %v3681
  %3683 = vmatprep.mubr.f32.mxu0 0.0
  %v3684 = vand.u32 %v3188, 4294901760
  %v3685 = vsub.f32 %v3188, %v3684
  %v3686 = vand.u32 %v3685, 4294901760
  %v3687 = vsub.f32 %v3685, %v3686
  %v3688 = vand.u32 %v3687, 4294901760
  %3689 = vmatmul.mubr.f32.gmra.mrb[0].mxu0 %v3688
  %v3690 = vpop.f32.mrb[0].mxu0
  %v3691 = vadd.f32 %v2993, %v3690
  %v3692 = vpop.f32.mrb[0].mxu0
  %v3693 = vadd.f32 %v2995, %v3692
  %3694 = vmatprep.mubr.f32.mxu0 0.0
  %v3695 = vand.u32 %v3191, 4294901760
  %v3696 = vsub.f32 %v3191, %v3695
  %v3697 = vand.u32 %v3696, 4294901760
  %v3698 = vsub.f32 %v3696, %v3697
  %v3699 = vand.u32 %v3698, 4294901760
  %3700 = vmatmul.mubr.f32.gmra.mrb[0].mxu0 %v3699
  %v3701 = vpop.f32.mrb[0].mxu0
  %v3702 = vadd.f32 %v3000, %v3701
  %v3703 = vpop.f32.mrb[0].mxu0
  %v3704 = vadd.f32 %v3002, %v3703
  %3705 = vmatprep.mubr.f32.mxu0 0.0
  %v3706 = vand.u32 %v3194, 4294901760
  %v3707 = vsub.f32 %v3194, %v3706
  %v3708 = vand.u32 %v3707, 4294901760
  %v3709 = vsub.f32 %v3707, %v3708
  %v3710 = vand.u32 %v3709, 4294901760
  %3711 = vmatmul.mubr.f32.gmra.mrb[0].mxu0 %v3710
  %v3712 = vpop.f32.mrb[0].mxu0
  %v3713 = vadd.f32 %v3007, %v3712
  %v3714 = vpop.f32.mrb[0].mxu0
  %v3715 = vadd.f32 %v3009, %v3714
  %3716 = vmatprep.mubr.f32.mxu0 0.0
  %v3717 = vand.u32 %v3197, 4294901760
  %v3718 = vsub.f32 %v3197, %v3717
  %v3719 = vand.u32 %v3718, 4294901760
  %v3720 = vsub.f32 %v3718, %v3719
  %v3721 = vand.u32 %v3720, 4294901760
  %3722 = vmatmul.mubr.f32.gmra.mrb[0].mxu0 %v3721
  %v3723 = vpop.f32.mrb[0].mxu0
  %v3724 = vadd.f32 %v3014, %v3723
  %v3725 = vpop.f32.mrb[0].mxu0
  %v3726 = vadd.f32 %v3016, %v3725
  %3727 = vmatprep.mubr.f32.mxu0 0.0
  %v3728 = vand.u32 %v3200, 4294901760
  %v3729 = vsub.f32 %v3200, %v3728
  %v3730 = vand.u32 %v3729, 4294901760
  %v3731 = vsub.f32 %v3729, %v3730
  %v3732 = vand.u32 %v3731, 4294901760
  %3733 = vmatmul.mubr.f32.gmra.mrb[0].mxu0 %v3732
  %v3734 = vpop.f32.mrb[0].mxu0
  %v3735 = vadd.f32 %v3021, %v3734
  %v3736 = vpop.f32.mrb[0].mxu0
  %v3737 = vadd.f32 %v3023, %v3736
  %3738 = vmatprep.mubr.f32.mxu0 0.0
  %v3739 = vand.u32 %v3203, 4294901760
  %v3740 = vsub.f32 %v3203, %v3739
  %v3741 = vand.u32 %v3740, 4294901760
  %v3742 = vsub.f32 %v3740, %v3741
  %v3743 = vand.u32 %v3742, 4294901760
  %3744 = vmatmul.mubr.f32.gmra.mrb[0].mxu0 %v3743
  %v3745 = vpop.f32.mrb[0].mxu0
  %v3746 = vadd.f32 %v3028, %v3745
  %v3747 = vpop.f32.mrb[0].mxu0
  %v3748 = vadd.f32 %v3030, %v3747
  %3749 = vmatprep.mubr.f32.mxu0 0.0
  %v3750 = vand.u32 %v3206, 4294901760
  %v3751 = vsub.f32 %v3206, %v3750
  %v3752 = vand.u32 %v3751, 4294901760
  %v3753 = vsub.f32 %v3751, %v3752
  %v3754 = vand.u32 %v3753, 4294901760
  %3755 = vmatmul.mubr.f32.gmra.mrb[0].mxu0 %v3754
  %v3756 = vpop.f32.mrb[0].mxu0
  %v3757 = vadd.f32 %v3035, %v3756
  %v3758 = vpop.f32.mrb[0].mxu0
  %v3759 = vadd.f32 %v3037, %v3758
  %3760 = vmatprep.mubr.f32.mxu0 0.0
  %v3761 = vand.u32 %v3209, 4294901760
  %v3762 = vsub.f32 %v3209, %v3761
  %v3763 = vand.u32 %v3762, 4294901760
  %v3764 = vsub.f32 %v3762, %v3763
  %v3765 = vand.u32 %v3764, 4294901760
  %3766 = vmatmul.mubr.f32.gmra.mrb[0].mxu0 %v3765
  %v3767 = vpop.f32.mrb[0].mxu0
  %v3768 = vadd.f32 %v3042, %v3767
  %v3769 = vpop.f32.mrb[0].mxu0
  %v3770 = vadd.f32 %v3044, %v3769
  %3771 = vmatprep.mubr.f32.mxu0 0.0
  %v3772 = vand.u32 %v3212, 4294901760
  %v3773 = vsub.f32 %v3212, %v3772
  %v3774 = vand.u32 %v3773, 4294901760
  %v3775 = vsub.f32 %v3773, %v3774
  %v3776 = vand.u32 %v3775, 4294901760
  %3777 = vmatmul.mubr.f32.gmra.mrb[0].mxu0 %v3776
  %v3778 = vpop.f32.mrb[0].mxu0
  %v3779 = vadd.f32 %v3049, %v3778
  %v3780 = vpop.f32.mrb[0].mxu0
  %v3781 = vadd.f32 %v3051, %v3780
  %3782 = vmatprep.mubr.f32.mxu0 0.0
  %v3783 = vand.u32 %v3215, 4294901760
  %v3784 = vsub.f32 %v3215, %v3783
  %v3785 = vand.u32 %v3784, 4294901760
  %v3786 = vsub.f32 %v3784, %v3785
  %v3787 = vand.u32 %v3786, 4294901760
  %3788 = vmatmul.mubr.f32.gmra.mrb[0].mxu0 %v3787
  %v3789 = vpop.f32.mrb[0].mxu0
  %v3790 = vadd.f32 %v3056, %v3789
  %v3791 = vpop.f32.mrb[0].mxu0
  %v3792 = vadd.f32 %v3058, %v3791
  %3793 = vmatprep.mubr.f32.mxu0 0.0
  %v3794 = vand.u32 %v3218, 4294901760
  %v3795 = vsub.f32 %v3218, %v3794
  %v3796 = vand.u32 %v3795, 4294901760
  %v3797 = vsub.f32 %v3795, %v3796
  %v3798 = vand.u32 %v3797, 4294901760
  %3799 = vmatmul.mubr.f32.gmra.mrb[0].mxu0 %v3798
  %v3800 = vpop.f32.mrb[0].mxu0
  %v3801 = vadd.f32 %v3063, %v3800
  %v3802 = vpop.f32.mrb[0].mxu0
  %v3803 = vadd.f32 %v3065, %v3802
  %3804 = vmatprep.mubr.f32.mxu0 0.0
  %v3805 = vand.u32 %v3221, 4294901760
  %v3806 = vsub.f32 %v3221, %v3805
  %v3807 = vand.u32 %v3806, 4294901760
  %v3808 = vsub.f32 %v3806, %v3807
  %v3809 = vand.u32 %v3808, 4294901760
  %3810 = vmatmul.mubr.f32.gmra.mrb[0].mxu0 %v3809
  %v3811 = vpop.f32.mrb[0].mxu0
  %v3812 = vadd.f32 %v3070, %v3811
  %v3813 = vpop.f32.mrb[0].mxu0
  %v3814 = vadd.f32 %v3072, %v3813
  %3815 = vmatprep.mubr.f32.mxu0 0.0
  %v3816 = vand.u32 %v3224, 4294901760
  %v3817 = vsub.f32 %v3224, %v3816
  %v3818 = vand.u32 %v3817, 4294901760
  %v3819 = vsub.f32 %v3817, %v3818
  %v3820 = vand.u32 %v3819, 4294901760
  %3821 = vmatmul.mubr.f32.gmra.mrb[0].mxu0 %v3820
  %v3822 = vpop.f32.mrb[0].mxu0
  %v3823 = vadd.f32 %v3077, %v3822
  %v3824 = vpop.f32.mrb[0].mxu0
  %v3825 = vadd.f32 %v3079, %v3824
  %3826 = vdwg.mxu0
  %v3827 = vand.u32 %v83, 4294901760
  %v3828 = vsub.f32 %v83, %v3827
  %v3829 = vand.u32 %v3828, 4294901760
  %v3830 = vsub.f32 %v3828, %v3829
  %v3831 = vand.u32 %v3830, 4294901760
  %3832 = vmatprep.subr.mxu0 %v3831
  %v3833 = vand.u32 %v82, 4294901760
  %v3834 = vsub.f32 %v82, %v3833
  %v3835 = vand.u32 %v3834, 4294901760
  %v3836 = vsub.f32 %v3834, %v3835
  %v3837 = vand.u32 %v3836, 4294901760
  %3838 = vmatpush1.msra.mxu0 %v3837
  %v3839 = vand.u32 %v85, 4294901760
  %v3840 = vsub.f32 %v85, %v3839
  %v3841 = vand.u32 %v3840, 4294901760
  %v3842 = vsub.f32 %v3840, %v3841
  %v3843 = vand.u32 %v3842, 4294901760
  %3844 = vmatprep.subr.mxu0 %v3843
  %v3845 = vand.u32 %v84, 4294901760
  %v3846 = vsub.f32 %v84, %v3845
  %v3847 = vand.u32 %v3846, 4294901760
  %v3848 = vsub.f32 %v3846, %v3847
  %v3849 = vand.u32 %v3848, 4294901760
  %3850 = vmatpush1.msra.mxu0 %v3849
  %v3851 = vand.u32 %v87, 4294901760
  %v3852 = vsub.f32 %v87, %v3851
  %v3853 = vand.u32 %v3852, 4294901760
  %v3854 = vsub.f32 %v3852, %v3853
  %v3855 = vand.u32 %v3854, 4294901760
  %3856 = vmatprep.subr.mxu0 %v3855
  %v3857 = vand.u32 %v86, 4294901760
  %v3858 = vsub.f32 %v86, %v3857
  %v3859 = vand.u32 %v3858, 4294901760
  %v3860 = vsub.f32 %v3858, %v3859
  %v3861 = vand.u32 %v3860, 4294901760
  %3862 = vmatpush1.msra.mxu0 %v3861
  %v3863 = vand.u32 %v89, 4294901760
  %v3864 = vsub.f32 %v89, %v3863
  %v3865 = vand.u32 %v3864, 4294901760
  %v3866 = vsub.f32 %v3864, %v3865
  %v3867 = vand.u32 %v3866, 4294901760
  %3868 = vmatprep.subr.mxu0 %v3867
  %v3869 = vand.u32 %v88, 4294901760
  %v3870 = vsub.f32 %v88, %v3869
  %v3871 = vand.u32 %v3870, 4294901760
  %v3872 = vsub.f32 %v3870, %v3871
  %v3873 = vand.u32 %v3872, 4294901760
  %3874 = vmatpush1.msra.mxu0 %v3873
  %3875 = vmatprep.subr.mxu0 0.0
  %3876 = vmatpush1.msra.mxu0 0.0
  %3877 = vmatprep.subr.mxu0 0.0
  %3878 = vmatpush1.msra.mxu0 0.0
  %3879 = vmatprep.subr.mxu0 0.0
  %3880 = vmatpush1.msra.mxu0 0.0
  %3881 = vmatprep.subr.mxu0 0.0
  %3882 = vmatpush1.msra.mxu0 0.0
  %3883 = vmatprep.subr.mxu0 0.0
  %3884 = vmatpush1.msra.mxu0 0.0
  %3885 = vmatprep.subr.mxu0 0.0
  %3886 = vmatpush1.msra.mxu0 0.0
  %3887 = vmatprep.subr.mxu0 0.0
  %3888 = vmatpush1.msra.mxu0 0.0
  %3889 = vmatprep.subr.mxu0 0.0
  %3890 = vmatpush1.msra.mxu0 0.0
  %3891 = vmatprep.subr.mxu0 0.0
  %3892 = vmatpush1.msra.mxu0 0.0
  %3893 = vmatprep.subr.mxu0 0.0
  %3894 = vmatpush1.msra.mxu0 0.0
  %3895 = vmatprep.subr.mxu0 0.0
  %3896 = vmatpush1.msra.mxu0 0.0
  %3897 = vmatprep.subr.mxu0 0.0
  %3898 = vmatpush1.msra.mxu0 0.0
  %3899 = vmatprep.subr.mxu0 0.0
  %3900 = vmatpush1.msra.mxu0 0.0
  %3901 = vmatprep.subr.mxu0 0.0
  %3902 = vmatpush1.msra.mxu0 0.0
  %3903 = vmatprep.subr.mxu0 0.0
  %3904 = vmatpush1.msra.mxu0 0.0
  %3905 = vmatprep.subr.mxu0 0.0
  %3906 = vmatpush1.msra.mxu0 0.0
  %3907 = vmatprep.subr.mxu0 0.0
  %3908 = vmatpush1.msra.mxu0 0.0
  %3909 = vmatprep.subr.mxu0 0.0
  %3910 = vmatpush1.msra.mxu0 0.0
  %3911 = vmatprep.subr.mxu0 0.0
  %3912 = vmatpush1.msra.mxu0 0.0
  %3913 = vmatprep.subr.mxu0 0.0
  %3914 = vmatpush1.msra.mxu0 0.0
  %3915 = vmatprep.subr.mxu0 0.0
  %3916 = vmatpush1.msra.mxu0 0.0
  %3917 = vmatprep.subr.mxu0 0.0
  %3918 = vmatpush1.msra.mxu0 0.0
  %3919 = vmatprep.subr.mxu0 0.0
  %3920 = vmatpush1.msra.mxu0 0.0
  %3921 = vmatprep.subr.mxu0 0.0
  %3922 = vmatpush1.msra.mxu0 0.0
  %3923 = vmatprep.subr.mxu0 0.0
  %3924 = vmatpush1.msra.mxu0 0.0
  %3925 = vmatprep.subr.mxu0 0.0
  %3926 = vmatpush1.msra.mxu0 0.0
  %3927 = vmatprep.subr.mxu0 0.0
  %3928 = vmatpush1.msra.mxu0 0.0
  %3929 = vmatprep.subr.mxu0 0.0
  %3930 = vmatpush1.msra.mxu0 0.0
  %3931 = vmatprep.mubr.f32.mxu0 0.0
  %v3932 = vand.u32 %v3083, 4294901760
  %3933 = vmatmul.mubr.f32.gmra.mrb[0].mxu0 %v3932
  %v3934 = vpop.f32.mrb[0].mxu0
  %v3935 = vadd.f32 %v3306, %v3934
  %v3936 = vpop.f32.mrb[0].mxu0
  %v3937 = vadd.f32 %v3308, %v3936
  %3938 = vmatprep.mubr.f32.mxu0 0.0
  %v3939 = vand.u32 %v3086, 4294901760
  %3940 = vmatmul.mubr.f32.gmra.mrb[0].mxu0 %v3939
  %v3941 = vpop.f32.mrb[0].mxu0
  %v3942 = vadd.f32 %v3317, %v3941
  %v3943 = vpop.f32.mrb[0].mxu0
  %v3944 = vadd.f32 %v3319, %v3943
  %3945 = vmatprep.mubr.f32.mxu0 0.0
  %v3946 = vand.u32 %v3089, 4294901760
  %3947 = vmatmul.mubr.f32.gmra.mrb[0].mxu0 %v3946
  %v3948 = vpop.f32.mrb[0].mxu0
  %v3949 = vadd.f32 %v3328, %v3948
  %v3950 = vpop.f32.mrb[0].mxu0
  %v3951 = vadd.f32 %v3330, %v3950
  %3952 = vmatprep.mubr.f32.mxu0 0.0
  %v3953 = vand.u32 %v3092, 4294901760
  %3954 = vmatmul.mubr.f32.gmra.mrb[0].mxu0 %v3953
  %v3955 = vpop.f32.mrb[0].mxu0
  %v3956 = vadd.f32 %v3339, %v3955
  %v3957 = vpop.f32.mrb[0].mxu0
  %v3958 = vadd.f32 %v3341, %v3957
  %3959 = vmatprep.mubr.f32.mxu0 0.0
  %v3960 = vand.u32 %v3095, 4294901760
  %3961 = vmatmul.mubr.f32.gmra.mrb[0].mxu0 %v3960
  %v3962 = vpop.f32.mrb[0].mxu0
  %v3963 = vadd.f32 %v3350, %v3962
  %v3964 = vpop.f32.mrb[0].mxu0
  %v3965 = vadd.f32 %v3352, %v3964
  %3966 = vmatprep.mubr.f32.mxu0 0.0
  %v3967 = vand.u32 %v3098, 4294901760
  %3968 = vmatmul.mubr.f32.gmra.mrb[0].mxu0 %v3967
  %v3969 = vpop.f32.mrb[0].mxu0
  %v3970 = vadd.f32 %v3361, %v3969
  %v3971 = vpop.f32.mrb[0].mxu0
  %v3972 = vadd.f32 %v3363, %v3971
  %3973 = vmatprep.mubr.f32.mxu0 0.0
  %v3974 = vand.u32 %v3101, 4294901760
  %3975 = vmatmul.mubr.f32.gmra.mrb[0].mxu0 %v3974
  %v3976 = vpop.f32.mrb[0].mxu0
  %v3977 = vadd.f32 %v3372, %v3976
  %v3978 = vpop.f32.mrb[0].mxu0
  %v3979 = vadd.f32 %v3374, %v3978
  %3980 = vmatprep.mubr.f32.mxu0 0.0
  %v3981 = vand.u32 %v3104, 4294901760
  %3982 = vmatmul.mubr.f32.gmra.mrb[0].mxu0 %v3981
  %v3983 = vpop.f32.mrb[0].mxu0
  %v3984 = vadd.f32 %v3383, %v3983
  %v3985 = vpop.f32.mrb[0].mxu0
  %v3986 = vadd.f32 %v3385, %v3985
  %3987 = vmatprep.mubr.f32.mxu0 0.0
  %v3988 = vand.u32 %v3107, 4294901760
  %3989 = vmatmul.mubr.f32.gmra.mrb[0].mxu0 %v3988
  %v3990 = vpop.f32.mrb[0].mxu0
  %v3991 = vadd.f32 %v3394, %v3990
  %v3992 = vpop.f32.mrb[0].mxu0
  %v3993 = vadd.f32 %v3396, %v3992
  %3994 = vmatprep.mubr.f32.mxu0 0.0
  %v3995 = vand.u32 %v3110, 4294901760
  %3996 = vmatmul.mubr.f32.gmra.mrb[0].mxu0 %v3995
  %v3997 = vpop.f32.mrb[0].mxu0
  %v3998 = vadd.f32 %v3405, %v3997
  %v3999 = vpop.f32.mrb[0].mxu0
  %v4000 = vadd.f32 %v3407, %v3999
  %4001 = vmatprep.mubr.f32.mxu0 0.0
  %v4002 = vand.u32 %v3113, 4294901760
  %4003 = vmatmul.mubr.f32.gmra.mrb[0].mxu0 %v4002
  %v4004 = vpop.f32.mrb[0].mxu0
  %v4005 = vadd.f32 %v3416, %v4004
  %v4006 = vpop.f32.mrb[0].mxu0
  %v4007 = vadd.f32 %v3418, %v4006
  %4008 = vmatprep.mubr.f32.mxu0 0.0
  %v4009 = vand.u32 %v3116, 4294901760
  %4010 = vmatmul.mubr.f32.gmra.mrb[0].mxu0 %v4009
  %v4011 = vpop.f32.mrb[0].mxu0
  %v4012 = vadd.f32 %v3427, %v4011
  %v4013 = vpop.f32.mrb[0].mxu0
  %v4014 = vadd.f32 %v3429, %v4013
  %4015 = vmatprep.mubr.f32.mxu0 0.0
  %v4016 = vand.u32 %v3119, 4294901760
  %4017 = vmatmul.mubr.f32.gmra.mrb[0].mxu0 %v4016
  %v4018 = vpop.f32.mrb[0].mxu0
  %v4019 = vadd.f32 %v3438, %v4018
  %v4020 = vpop.f32.mrb[0].mxu0
  %v4021 = vadd.f32 %v3440, %v4020
  %4022 = vmatprep.mubr.f32.mxu0 0.0
  %v4023 = vand.u32 %v3122, 4294901760
  %4024 = vmatmul.mubr.f32.gmra.mrb[0].mxu0 %v4023
  %v4025 = vpop.f32.mrb[0].mxu0
  %v4026 = vadd.f32 %v3449, %v4025
  %v4027 = vpop.f32.mrb[0].mxu0
  %v4028 = vadd.f32 %v3451, %v4027
  %4029 = vmatprep.mubr.f32.mxu0 0.0
  %v4030 = vand.u32 %v3125, 4294901760
  %4031 = vmatmul.mubr.f32.gmra.mrb[0].mxu0 %v4030
  %v4032 = vpop.f32.mrb[0].mxu0
  %v4033 = vadd.f32 %v3460, %v4032
  %v4034 = vpop.f32.mrb[0].mxu0
  %v4035 = vadd.f32 %v3462, %v4034
  %4036 = vmatprep.mubr.f32.mxu0 0.0
  %v4037 = vand.u32 %v3128, 4294901760
  %4038 = vmatmul.mubr.f32.gmra.mrb[0].mxu0 %v4037
  %v4039 = vpop.f32.mrb[0].mxu0
  %v4040 = vadd.f32 %v3471, %v4039
  %v4041 = vpop.f32.mrb[0].mxu0
  %v4042 = vadd.f32 %v3473, %v4041
  %4043 = vmatprep.mubr.f32.mxu0 0.0
  %v4044 = vand.u32 %v3131, 4294901760
  %4045 = vmatmul.mubr.f32.gmra.mrb[0].mxu0 %v4044
  %v4046 = vpop.f32.mrb[0].mxu0
  %v4047 = vadd.f32 %v3482, %v4046
  %v4048 = vpop.f32.mrb[0].mxu0
  %v4049 = vadd.f32 %v3484, %v4048
  %4050 = vmatprep.mubr.f32.mxu0 0.0
  %v4051 = vand.u32 %v3134, 4294901760
  %4052 = vmatmul.mubr.f32.gmra.mrb[0].mxu0 %v4051
  %v4053 = vpop.f32.mrb[0].mxu0
  %v4054 = vadd.f32 %v3493, %v4053
  %v4055 = vpop.f32.mrb[0].mxu0
  %v4056 = vadd.f32 %v3495, %v4055
  %4057 = vmatprep.mubr.f32.mxu0 0.0
  %v4058 = vand.u32 %v3137, 4294901760
  %4059 = vmatmul.mubr.f32.gmra.mrb[0].mxu0 %v4058
  %v4060 = vpop.f32.mrb[0].mxu0
  %v4061 = vadd.f32 %v3504, %v4060
  %v4062 = vpop.f32.mrb[0].mxu0
  %v4063 = vadd.f32 %v3506, %v4062
  %4064 = vmatprep.mubr.f32.mxu0 0.0
  %v4065 = vand.u32 %v3140, 4294901760
  %4066 = vmatmul.mubr.f32.gmra.mrb[0].mxu0 %v4065
  %v4067 = vpop.f32.mrb[0].mxu0
  %v4068 = vadd.f32 %v3515, %v4067
  %v4069 = vpop.f32.mrb[0].mxu0
  %v4070 = vadd.f32 %v3517, %v4069
  %4071 = vmatprep.mubr.f32.mxu0 0.0
  %v4072 = vand.u32 %v3143, 4294901760
  %4073 = vmatmul.mubr.f32.gmra.mrb[0].mxu0 %v4072
  %v4074 = vpop.f32.mrb[0].mxu0
  %v4075 = vadd.f32 %v3526, %v4074
  %v4076 = vpop.f32.mrb[0].mxu0
  %v4077 = vadd.f32 %v3528, %v4076
  %4078 = vmatprep.mubr.f32.mxu0 0.0
  %v4079 = vand.u32 %v3146, 4294901760
  %4080 = vmatmul.mubr.f32.gmra.mrb[0].mxu0 %v4079
  %v4081 = vpop.f32.mrb[0].mxu0
  %v4082 = vadd.f32 %v3537, %v4081
  %v4083 = vpop.f32.mrb[0].mxu0
  %v4084 = vadd.f32 %v3539, %v4083
  %4085 = vmatprep.mubr.f32.mxu0 0.0
  %v4086 = vand.u32 %v3149, 4294901760
  %4087 = vmatmul.mubr.f32.gmra.mrb[0].mxu0 %v4086
  %v4088 = vpop.f32.mrb[0].mxu0
  %v4089 = vadd.f32 %v3548, %v4088
  %v4090 = vpop.f32.mrb[0].mxu0
  %v4091 = vadd.f32 %v3550, %v4090
  %4092 = vmatprep.mubr.f32.mxu0 0.0
  %v4093 = vand.u32 %v3152, 4294901760
  %4094 = vmatmul.mubr.f32.gmra.mrb[0].mxu0 %v4093
  %v4095 = vpop.f32.mrb[0].mxu0
  %v4096 = vadd.f32 %v3559, %v4095
  %v4097 = vpop.f32.mrb[0].mxu0
  %v4098 = vadd.f32 %v3561, %v4097
  %4099 = vmatprep.mubr.f32.mxu0 0.0
  %v4100 = vand.u32 %v3155, 4294901760
  %4101 = vmatmul.mubr.f32.gmra.mrb[0].mxu0 %v4100
  %v4102 = vpop.f32.mrb[0].mxu0
  %v4103 = vadd.f32 %v3570, %v4102
  %v4104 = vpop.f32.mrb[0].mxu0
  %v4105 = vadd.f32 %v3572, %v4104
  %4106 = vmatprep.mubr.f32.mxu0 0.0
  %v4107 = vand.u32 %v3158, 4294901760
  %4108 = vmatmul.mubr.f32.gmra.mrb[0].mxu0 %v4107
  %v4109 = vpop.f32.mrb[0].mxu0
  %v4110 = vadd.f32 %v3581, %v4109
  %v4111 = vpop.f32.mrb[0].mxu0
  %v4112 = vadd.f32 %v3583, %v4111
  %4113 = vmatprep.mubr.f32.mxu0 0.0
  %v4114 = vand.u32 %v3161, 4294901760
  %4115 = vmatmul.mubr.f32.gmra.mrb[0].mxu0 %v4114
  %v4116 = vpop.f32.mrb[0].mxu0
  %v4117 = vadd.f32 %v3592, %v4116
  %v4118 = vpop.f32.mrb[0].mxu0
  %v4119 = vadd.f32 %v3594, %v4118
  %4120 = vmatprep.mubr.f32.mxu0 0.0
  %v4121 = vand.u32 %v3164, 4294901760
  %4122 = vmatmul.mubr.f32.gmra.mrb[0].mxu0 %v4121
  %v4123 = vpop.f32.mrb[0].mxu0
  %v4124 = vadd.f32 %v3603, %v4123
  %v4125 = vpop.f32.mrb[0].mxu0
  %v4126 = vadd.f32 %v3605, %v4125
  %4127 = vmatprep.mubr.f32.mxu0 0.0
  %v4128 = vand.u32 %v3167, 4294901760
  %4129 = vmatmul.mubr.f32.gmra.mrb[0].mxu0 %v4128
  %v4130 = vpop.f32.mrb[0].mxu0
  %v4131 = vadd.f32 %v3614, %v4130
  %v4132 = vpop.f32.mrb[0].mxu0
  %v4133 = vadd.f32 %v3616, %v4132
  %4134 = vmatprep.mubr.f32.mxu0 0.0
  %v4135 = vand.u32 %v3170, 4294901760
  %4136 = vmatmul.mubr.f32.gmra.mrb[0].mxu0 %v4135
  %v4137 = vpop.f32.mrb[0].mxu0
  %v4138 = vadd.f32 %v3625, %v4137
  %v4139 = vpop.f32.mrb[0].mxu0
  %v4140 = vadd.f32 %v3627, %v4139
  %4141 = vmatprep.mubr.f32.mxu0 0.0
  %v4142 = vand.u32 %v3173, 4294901760
  %4143 = vmatmul.mubr.f32.gmra.mrb[0].mxu0 %v4142
  %v4144 = vpop.f32.mrb[0].mxu0
  %v4145 = vadd.f32 %v3636, %v4144
  %v4146 = vpop.f32.mrb[0].mxu0
  %v4147 = vadd.f32 %v3638, %v4146
  %4148 = vmatprep.mubr.f32.mxu0 0.0
  %v4149 = vand.u32 %v3176, 4294901760
  %4150 = vmatmul.mubr.f32.gmra.mrb[0].mxu0 %v4149
  %v4151 = vpop.f32.mrb[0].mxu0
  %v4152 = vadd.f32 %v3647, %v4151
  %v4153 = vpop.f32.mrb[0].mxu0
  %v4154 = vadd.f32 %v3649, %v4153
  %4155 = vmatprep.mubr.f32.mxu0 0.0
  %v4156 = vand.u32 %v3179, 4294901760
  %4157 = vmatmul.mubr.f32.gmra.mrb[0].mxu0 %v4156
  %v4158 = vpop.f32.mrb[0].mxu0
  %v4159 = vadd.f32 %v3658, %v4158
  %v4160 = vpop.f32.mrb[0].mxu0
  %v4161 = vadd.f32 %v3660, %v4160
  %4162 = vmatprep.mubr.f32.mxu0 0.0
  %v4163 = vand.u32 %v3182, 4294901760
  %4164 = vmatmul.mubr.f32.gmra.mrb[0].mxu0 %v4163
  %v4165 = vpop.f32.mrb[0].mxu0
  %v4166 = vadd.f32 %v3669, %v4165
  %v4167 = vpop.f32.mrb[0].mxu0
  %v4168 = vadd.f32 %v3671, %v4167
  %4169 = vmatprep.mubr.f32.mxu0 0.0
  %v4170 = vand.u32 %v3185, 4294901760
  %4171 = vmatmul.mubr.f32.gmra.mrb[0].mxu0 %v4170
  %v4172 = vpop.f32.mrb[0].mxu0
  %v4173 = vadd.f32 %v3680, %v4172
  %v4174 = vpop.f32.mrb[0].mxu0
  %v4175 = vadd.f32 %v3682, %v4174
  %4176 = vmatprep.mubr.f32.mxu0 0.0
  %v4177 = vand.u32 %v3188, 4294901760
  %4178 = vmatmul.mubr.f32.gmra.mrb[0].mxu0 %v4177
  %v4179 = vpop.f32.mrb[0].mxu0
  %v4180 = vadd.f32 %v3691, %v4179
  %v4181 = vpop.f32.mrb[0].mxu0
  %v4182 = vadd.f32 %v3693, %v4181
  %4183 = vmatprep.mubr.f32.mxu0 0.0
  %v4184 = vand.u32 %v3191, 4294901760
  %4185 = vmatmul.mubr.f32.gmra.mrb[0].mxu0 %v4184
  %v4186 = vpop.f32.mrb[0].mxu0
  %v4187 = vadd.f32 %v3702, %v4186
  %v4188 = vpop.f32.mrb[0].mxu0
  %v4189 = vadd.f32 %v3704, %v4188
  %4190 = vmatprep.mubr.f32.mxu0 0.0
  %v4191 = vand.u32 %v3194, 4294901760
  %4192 = vmatmul.mubr.f32.gmra.mrb[0].mxu0 %v4191
  %v4193 = vpop.f32.mrb[0].mxu0
  %v4194 = vadd.f32 %v3713, %v4193
  %v4195 = vpop.f32.mrb[0].mxu0
  %v4196 = vadd.f32 %v3715, %v4195
  %4197 = vmatprep.mubr.f32.mxu0 0.0
  %v4198 = vand.u32 %v3197, 4294901760
  %4199 = vmatmul.mubr.f32.gmra.mrb[0].mxu0 %v4198
  %v4200 = vpop.f32.mrb[0].mxu0
  %v4201 = vadd.f32 %v3724, %v4200
  %v4202 = vpop.f32.mrb[0].mxu0
  %v4203 = vadd.f32 %v3726, %v4202
  %4204 = vmatprep.mubr.f32.mxu0 0.0
  %v4205 = vand.u32 %v3200, 4294901760
  %4206 = vmatmul.mubr.f32.gmra.mrb[0].mxu0 %v4205
  %v4207 = vpop.f32.mrb[0].mxu0
  %v4208 = vadd.f32 %v3735, %v4207
  %v4209 = vpop.f32.mrb[0].mxu0
  %v4210 = vadd.f32 %v3737, %v4209
  %4211 = vmatprep.mubr.f32.mxu0 0.0
  %v4212 = vand.u32 %v3203, 4294901760
  %4213 = vmatmul.mubr.f32.gmra.mrb[0].mxu0 %v4212
  %v4214 = vpop.f32.mrb[0].mxu0
  %v4215 = vadd.f32 %v3746, %v4214
  %v4216 = vpop.f32.mrb[0].mxu0
  %v4217 = vadd.f32 %v3748, %v4216
  %4218 = vmatprep.mubr.f32.mxu0 0.0
  %v4219 = vand.u32 %v3206, 4294901760
  %4220 = vmatmul.mubr.f32.gmra.mrb[0].mxu0 %v4219
  %v4221 = vpop.f32.mrb[0].mxu0
  %v4222 = vadd.f32 %v3757, %v4221
  %v4223 = vpop.f32.mrb[0].mxu0
  %v4224 = vadd.f32 %v3759, %v4223
  %4225 = vmatprep.mubr.f32.mxu0 0.0
  %v4226 = vand.u32 %v3209, 4294901760
  %4227 = vmatmul.mubr.f32.gmra.mrb[0].mxu0 %v4226
  %v4228 = vpop.f32.mrb[0].mxu0
  %v4229 = vadd.f32 %v3768, %v4228
  %v4230 = vpop.f32.mrb[0].mxu0
  %v4231 = vadd.f32 %v3770, %v4230
  %4232 = vmatprep.mubr.f32.mxu0 0.0
  %v4233 = vand.u32 %v3212, 4294901760
  %4234 = vmatmul.mubr.f32.gmra.mrb[0].mxu0 %v4233
  %v4235 = vpop.f32.mrb[0].mxu0
  %v4236 = vadd.f32 %v3779, %v4235
  %v4237 = vpop.f32.mrb[0].mxu0
  %v4238 = vadd.f32 %v3781, %v4237
  %4239 = vmatprep.mubr.f32.mxu0 0.0
  %v4240 = vand.u32 %v3215, 4294901760
  %4241 = vmatmul.mubr.f32.gmra.mrb[0].mxu0 %v4240
  %v4242 = vpop.f32.mrb[0].mxu0
  %v4243 = vadd.f32 %v3790, %v4242
  %v4244 = vpop.f32.mrb[0].mxu0
  %v4245 = vadd.f32 %v3792, %v4244
  %4246 = vmatprep.mubr.f32.mxu0 0.0
  %v4247 = vand.u32 %v3218, 4294901760
  %4248 = vmatmul.mubr.f32.gmra.mrb[0].mxu0 %v4247
  %v4249 = vpop.f32.mrb[0].mxu0
  %v4250 = vadd.f32 %v3801, %v4249
  %v4251 = vpop.f32.mrb[0].mxu0
  %v4252 = vadd.f32 %v3803, %v4251
  %4253 = vmatprep.mubr.f32.mxu0 0.0
  %v4254 = vand.u32 %v3221, 4294901760
  %4255 = vmatmul.mubr.f32.gmra.mrb[0].mxu0 %v4254
  %v4256 = vpop.f32.mrb[0].mxu0
  %v4257 = vadd.f32 %v3812, %v4256
  %v4258 = vpop.f32.mrb[0].mxu0
  %v4259 = vadd.f32 %v3814, %v4258
  %4260 = vmatprep.mubr.f32.mxu0 0.0
  %v4261 = vand.u32 %v3224, 4294901760
  %4262 = vmatmul.mubr.f32.gmra.mrb[0].mxu0 %v4261
  %v4263 = vpop.f32.mrb[0].mxu0
  %v4264 = vadd.f32 %v3823, %v4263
  %v4265 = vpop.f32.mrb[0].mxu0
  %v4266 = vadd.f32 %v3825, %v4265
  %4267 = vdwg.mxu0
  %v4268 = vand.u32 %v83, 4294901760
  %v4269 = vsub.f32 %v83, %v4268
  %4270 = vmatprep.subr.mxu0 %v4269
  %v4271 = vand.u32 %v82, 4294901760
  %v4272 = vsub.f32 %v82, %v4271
  %4273 = vmatpush1.msra.mxu0 %v4272
  %v4274 = vand.u32 %v85, 4294901760
  %v4275 = vsub.f32 %v85, %v4274
  %4276 = vmatprep.subr.mxu0 %v4275
  %v4277 = vand.u32 %v84, 4294901760
  %v4278 = vsub.f32 %v84, %v4277
  %4279 = vmatpush1.msra.mxu0 %v4278
  %v4280 = vand.u32 %v87, 4294901760
  %v4281 = vsub.f32 %v87, %v4280
  %4282 = vmatprep.subr.mxu0 %v4281
  %v4283 = vand.u32 %v86, 4294901760
  %v4284 = vsub.f32 %v86, %v4283
  %4285 = vmatpush1.msra.mxu0 %v4284
  %v4286 = vand.u32 %v89, 4294901760
  %v4287 = vsub.f32 %v89, %v4286
  %4288 = vmatprep.subr.mxu0 %v4287
  %v4289 = vand.u32 %v88, 4294901760
  %v4290 = vsub.f32 %v88, %v4289
  %4291 = vmatpush1.msra.mxu0 %v4290
  %4292 = vmatprep.subr.mxu0 0.0
  %4293 = vmatpush1.msra.mxu0 0.0
  %4294 = vmatprep.subr.mxu0 0.0
  %4295 = vmatpush1.msra.mxu0 0.0
  %4296 = vmatprep.subr.mxu0 0.0
  %4297 = vmatpush1.msra.mxu0 0.0
  %4298 = vmatprep.subr.mxu0 0.0
  %4299 = vmatpush1.msra.mxu0 0.0
  %4300 = vmatprep.subr.mxu0 0.0
  %4301 = vmatpush1.msra.mxu0 0.0
  %4302 = vmatprep.subr.mxu0 0.0
  %4303 = vmatpush1.msra.mxu0 0.0
  %4304 = vmatprep.subr.mxu0 0.0
  %4305 = vmatpush1.msra.mxu0 0.0
  %4306 = vmatprep.subr.mxu0 0.0
  %4307 = vmatpush1.msra.mxu0 0.0
  %4308 = vmatprep.subr.mxu0 0.0
  %4309 = vmatpush1.msra.mxu0 0.0
  %4310 = vmatprep.subr.mxu0 0.0
  %4311 = vmatpush1.msra.mxu0 0.0
  %4312 = vmatprep.subr.mxu0 0.0
  %4313 = vmatpush1.msra.mxu0 0.0
  %4314 = vmatprep.subr.mxu0 0.0
  %4315 = vmatpush1.msra.mxu0 0.0
  %4316 = vmatprep.subr.mxu0 0.0
  %4317 = vmatpush1.msra.mxu0 0.0
  %4318 = vmatprep.subr.mxu0 0.0
  %4319 = vmatpush1.msra.mxu0 0.0
  %4320 = vmatprep.subr.mxu0 0.0
  %4321 = vmatpush1.msra.mxu0 0.0
  %4322 = vmatprep.subr.mxu0 0.0
  %4323 = vmatpush1.msra.mxu0 0.0
  %4324 = vmatprep.subr.mxu0 0.0
  %4325 = vmatpush1.msra.mxu0 0.0
  %4326 = vmatprep.subr.mxu0 0.0
  %4327 = vmatpush1.msra.mxu0 0.0
  %4328 = vmatprep.subr.mxu0 0.0
  %4329 = vmatpush1.msra.mxu0 0.0
  %4330 = vmatprep.subr.mxu0 0.0
  %4331 = vmatpush1.msra.mxu0 0.0
  %4332 = vmatprep.subr.mxu0 0.0
  %4333 = vmatpush1.msra.mxu0 0.0
  %4334 = vmatprep.subr.mxu0 0.0
  %4335 = vmatpush1.msra.mxu0 0.0
  %4336 = vmatprep.subr.mxu0 0.0
  %4337 = vmatpush1.msra.mxu0 0.0
  %4338 = vmatprep.subr.mxu0 0.0
  %4339 = vmatpush1.msra.mxu0 0.0
  %4340 = vmatprep.subr.mxu0 0.0
  %4341 = vmatpush1.msra.mxu0 0.0
  %4342 = vmatprep.subr.mxu0 0.0
  %4343 = vmatpush1.msra.mxu0 0.0
  %4344 = vmatprep.subr.mxu0 0.0
  %4345 = vmatpush1.msra.mxu0 0.0
  %4346 = vmatprep.subr.mxu0 0.0
  %4347 = vmatpush1.msra.mxu0 0.0
  %4348 = vmatprep.mubr.f32.mxu0 0.0
  %v4349 = vand.u32 %v3083, 4294901760
  %v4350 = vsub.f32 %v3083, %v4349
  %4351 = vmatmul.mubr.f32.gmra.mrb[0].mxu0 %v4350
  %v4352 = vpop.f32.mrb[0].mxu0
  %v4353 = vadd.f32 %v3935, %v4352
  %v4354 = vpop.f32.mrb[0].mxu0
  %v4355 = vadd.f32 %v3937, %v4354
  %4356 = vmatprep.mubr.f32.mxu0 0.0
  %v4357 = vand.u32 %v3086, 4294901760
  %v4358 = vsub.f32 %v3086, %v4357
  %4359 = vmatmul.mubr.f32.gmra.mrb[0].mxu0 %v4358
  %v4360 = vpop.f32.mrb[0].mxu0
  %v4361 = vadd.f32 %v3942, %v4360
  %v4362 = vpop.f32.mrb[0].mxu0
  %v4363 = vadd.f32 %v3944, %v4362
  %4364 = vmatprep.mubr.f32.mxu0 0.0
  %v4365 = vand.u32 %v3089, 4294901760
  %v4366 = vsub.f32 %v3089, %v4365
  %4367 = vmatmul.mubr.f32.gmra.mrb[0].mxu0 %v4366
  %v4368 = vpop.f32.mrb[0].mxu0
  %v4369 = vadd.f32 %v3949, %v4368
  %v4370 = vpop.f32.mrb[0].mxu0
  %v4371 = vadd.f32 %v3951, %v4370
  %4372 = vmatprep.mubr.f32.mxu0 0.0
  %v4373 = vand.u32 %v3092, 4294901760
  %v4374 = vsub.f32 %v3092, %v4373
  %4375 = vmatmul.mubr.f32.gmra.mrb[0].mxu0 %v4374
  %v4376 = vpop.f32.mrb[0].mxu0
  %v4377 = vadd.f32 %v3956, %v4376
  %v4378 = vpop.f32.mrb[0].mxu0
  %v4379 = vadd.f32 %v3958, %v4378
  %4380 = vmatprep.mubr.f32.mxu0 0.0
  %v4381 = vand.u32 %v3095, 4294901760
  %v4382 = vsub.f32 %v3095, %v4381
  %4383 = vmatmul.mubr.f32.gmra.mrb[0].mxu0 %v4382
  %v4384 = vpop.f32.mrb[0].mxu0
  %v4385 = vadd.f32 %v3963, %v4384
  %v4386 = vpop.f32.mrb[0].mxu0
  %v4387 = vadd.f32 %v3965, %v4386
  %4388 = vmatprep.mubr.f32.mxu0 0.0
  %v4389 = vand.u32 %v3098, 4294901760
  %v4390 = vsub.f32 %v3098, %v4389
  %4391 = vmatmul.mubr.f32.gmra.mrb[0].mxu0 %v4390
  %v4392 = vpop.f32.mrb[0].mxu0
  %v4393 = vadd.f32 %v3970, %v4392
  %v4394 = vpop.f32.mrb[0].mxu0
  %v4395 = vadd.f32 %v3972, %v4394
  %4396 = vmatprep.mubr.f32.mxu0 0.0
  %v4397 = vand.u32 %v3101, 4294901760
  %v4398 = vsub.f32 %v3101, %v4397
  %4399 = vmatmul.mubr.f32.gmra.mrb[0].mxu0 %v4398
  %v4400 = vpop.f32.mrb[0].mxu0
  %v4401 = vadd.f32 %v3977, %v4400
  %v4402 = vpop.f32.mrb[0].mxu0
  %v4403 = vadd.f32 %v3979, %v4402
  %4404 = vmatprep.mubr.f32.mxu0 0.0
  %v4405 = vand.u32 %v3104, 4294901760
  %v4406 = vsub.f32 %v3104, %v4405
  %4407 = vmatmul.mubr.f32.gmra.mrb[0].mxu0 %v4406
  %v4408 = vpop.f32.mrb[0].mxu0
  %v4409 = vadd.f32 %v3984, %v4408
  %v4410 = vpop.f32.mrb[0].mxu0
  %v4411 = vadd.f32 %v3986, %v4410
  %4412 = vmatprep.mubr.f32.mxu0 0.0
  %v4413 = vand.u32 %v3107, 4294901760
  %v4414 = vsub.f32 %v3107, %v4413
  %4415 = vmatmul.mubr.f32.gmra.mrb[0].mxu0 %v4414
  %v4416 = vpop.f32.mrb[0].mxu0
  %v4417 = vadd.f32 %v3991, %v4416
  %v4418 = vpop.f32.mrb[0].mxu0
  %v4419 = vadd.f32 %v3993, %v4418
  %4420 = vmatprep.mubr.f32.mxu0 0.0
  %v4421 = vand.u32 %v3110, 4294901760
  %v4422 = vsub.f32 %v3110, %v4421
  %4423 = vmatmul.mubr.f32.gmra.mrb[0].mxu0 %v4422
  %v4424 = vpop.f32.mrb[0].mxu0
  %v4425 = vadd.f32 %v3998, %v4424
  %v4426 = vpop.f32.mrb[0].mxu0
  %v4427 = vadd.f32 %v4000, %v4426
  %4428 = vmatprep.mubr.f32.mxu0 0.0
  %v4429 = vand.u32 %v3113, 4294901760
  %v4430 = vsub.f32 %v3113, %v4429
  %4431 = vmatmul.mubr.f32.gmra.mrb[0].mxu0 %v4430
  %v4432 = vpop.f32.mrb[0].mxu0
  %v4433 = vadd.f32 %v4005, %v4432
  %v4434 = vpop.f32.mrb[0].mxu0
  %v4435 = vadd.f32 %v4007, %v4434
  %4436 = vmatprep.mubr.f32.mxu0 0.0
  %v4437 = vand.u32 %v3116, 4294901760
  %v4438 = vsub.f32 %v3116, %v4437
  %4439 = vmatmul.mubr.f32.gmra.mrb[0].mxu0 %v4438
  %v4440 = vpop.f32.mrb[0].mxu0
  %v4441 = vadd.f32 %v4012, %v4440
  %v4442 = vpop.f32.mrb[0].mxu0
  %v4443 = vadd.f32 %v4014, %v4442
  %4444 = vmatprep.mubr.f32.mxu0 0.0
  %v4445 = vand.u32 %v3119, 4294901760
  %v4446 = vsub.f32 %v3119, %v4445
  %4447 = vmatmul.mubr.f32.gmra.mrb[0].mxu0 %v4446
  %v4448 = vpop.f32.mrb[0].mxu0
  %v4449 = vadd.f32 %v4019, %v4448
  %v4450 = vpop.f32.mrb[0].mxu0
  %v4451 = vadd.f32 %v4021, %v4450
  %4452 = vmatprep.mubr.f32.mxu0 0.0
  %v4453 = vand.u32 %v3122, 4294901760
  %v4454 = vsub.f32 %v3122, %v4453
  %4455 = vmatmul.mubr.f32.gmra.mrb[0].mxu0 %v4454
  %v4456 = vpop.f32.mrb[0].mxu0
  %v4457 = vadd.f32 %v4026, %v4456
  %v4458 = vpop.f32.mrb[0].mxu0
  %v4459 = vadd.f32 %v4028, %v4458
  %4460 = vmatprep.mubr.f32.mxu0 0.0
  %v4461 = vand.u32 %v3125, 4294901760
  %v4462 = vsub.f32 %v3125, %v4461
  %4463 = vmatmul.mubr.f32.gmra.mrb[0].mxu0 %v4462
  %v4464 = vpop.f32.mrb[0].mxu0
  %v4465 = vadd.f32 %v4033, %v4464
  %v4466 = vpop.f32.mrb[0].mxu0
  %v4467 = vadd.f32 %v4035, %v4466
  %4468 = vmatprep.mubr.f32.mxu0 0.0
  %v4469 = vand.u32 %v3128, 4294901760
  %v4470 = vsub.f32 %v3128, %v4469
  %4471 = vmatmul.mubr.f32.gmra.mrb[0].mxu0 %v4470
  %v4472 = vpop.f32.mrb[0].mxu0
  %v4473 = vadd.f32 %v4040, %v4472
  %v4474 = vpop.f32.mrb[0].mxu0
  %v4475 = vadd.f32 %v4042, %v4474
  %4476 = vmatprep.mubr.f32.mxu0 0.0
  %v4477 = vand.u32 %v3131, 4294901760
  %v4478 = vsub.f32 %v3131, %v4477
  %4479 = vmatmul.mubr.f32.gmra.mrb[0].mxu0 %v4478
  %v4480 = vpop.f32.mrb[0].mxu0
  %v4481 = vadd.f32 %v4047, %v4480
  %v4482 = vpop.f32.mrb[0].mxu0
  %v4483 = vadd.f32 %v4049, %v4482
  %4484 = vmatprep.mubr.f32.mxu0 0.0
  %v4485 = vand.u32 %v3134, 4294901760
  %v4486 = vsub.f32 %v3134, %v4485
  %4487 = vmatmul.mubr.f32.gmra.mrb[0].mxu0 %v4486
  %v4488 = vpop.f32.mrb[0].mxu0
  %v4489 = vadd.f32 %v4054, %v4488
  %v4490 = vpop.f32.mrb[0].mxu0
  %v4491 = vadd.f32 %v4056, %v4490
  %4492 = vmatprep.mubr.f32.mxu0 0.0
  %v4493 = vand.u32 %v3137, 4294901760
  %v4494 = vsub.f32 %v3137, %v4493
  %4495 = vmatmul.mubr.f32.gmra.mrb[0].mxu0 %v4494
  %v4496 = vpop.f32.mrb[0].mxu0
  %v4497 = vadd.f32 %v4061, %v4496
  %v4498 = vpop.f32.mrb[0].mxu0
  %v4499 = vadd.f32 %v4063, %v4498
  %4500 = vmatprep.mubr.f32.mxu0 0.0
  %v4501 = vand.u32 %v3140, 4294901760
  %v4502 = vsub.f32 %v3140, %v4501
  %4503 = vmatmul.mubr.f32.gmra.mrb[0].mxu0 %v4502
  %v4504 = vpop.f32.mrb[0].mxu0
  %v4505 = vadd.f32 %v4068, %v4504
  %v4506 = vpop.f32.mrb[0].mxu0
  %v4507 = vadd.f32 %v4070, %v4506
  %4508 = vmatprep.mubr.f32.mxu0 0.0
  %v4509 = vand.u32 %v3143, 4294901760
  %v4510 = vsub.f32 %v3143, %v4509
  %4511 = vmatmul.mubr.f32.gmra.mrb[0].mxu0 %v4510
  %v4512 = vpop.f32.mrb[0].mxu0
  %v4513 = vadd.f32 %v4075, %v4512
  %v4514 = vpop.f32.mrb[0].mxu0
  %v4515 = vadd.f32 %v4077, %v4514
  %4516 = vmatprep.mubr.f32.mxu0 0.0
  %v4517 = vand.u32 %v3146, 4294901760
  %v4518 = vsub.f32 %v3146, %v4517
  %4519 = vmatmul.mubr.f32.gmra.mrb[0].mxu0 %v4518
  %v4520 = vpop.f32.mrb[0].mxu0
  %v4521 = vadd.f32 %v4082, %v4520
  %v4522 = vpop.f32.mrb[0].mxu0
  %v4523 = vadd.f32 %v4084, %v4522
  %4524 = vmatprep.mubr.f32.mxu0 0.0
  %v4525 = vand.u32 %v3149, 4294901760
  %v4526 = vsub.f32 %v3149, %v4525
  %4527 = vmatmul.mubr.f32.gmra.mrb[0].mxu0 %v4526
  %v4528 = vpop.f32.mrb[0].mxu0
  %v4529 = vadd.f32 %v4089, %v4528
  %v4530 = vpop.f32.mrb[0].mxu0
  %v4531 = vadd.f32 %v4091, %v4530
  %4532 = vmatprep.mubr.f32.mxu0 0.0
  %v4533 = vand.u32 %v3152, 4294901760
  %v4534 = vsub.f32 %v3152, %v4533
  %4535 = vmatmul.mubr.f32.gmra.mrb[0].mxu0 %v4534
  %v4536 = vpop.f32.mrb[0].mxu0
  %v4537 = vadd.f32 %v4096, %v4536
  %v4538 = vpop.f32.mrb[0].mxu0
  %v4539 = vadd.f32 %v4098, %v4538
  %4540 = vmatprep.mubr.f32.mxu0 0.0
  %v4541 = vand.u32 %v3155, 4294901760
  %v4542 = vsub.f32 %v3155, %v4541
  %4543 = vmatmul.mubr.f32.gmra.mrb[0].mxu0 %v4542
  %v4544 = vpop.f32.mrb[0].mxu0
  %v4545 = vadd.f32 %v4103, %v4544
  %v4546 = vpop.f32.mrb[0].mxu0
  %v4547 = vadd.f32 %v4105, %v4546
  %4548 = vmatprep.mubr.f32.mxu0 0.0
  %v4549 = vand.u32 %v3158, 4294901760
  %v4550 = vsub.f32 %v3158, %v4549
  %4551 = vmatmul.mubr.f32.gmra.mrb[0].mxu0 %v4550
  %v4552 = vpop.f32.mrb[0].mxu0
  %v4553 = vadd.f32 %v4110, %v4552
  %v4554 = vpop.f32.mrb[0].mxu0
  %v4555 = vadd.f32 %v4112, %v4554
  %4556 = vmatprep.mubr.f32.mxu0 0.0
  %v4557 = vand.u32 %v3161, 4294901760
  %v4558 = vsub.f32 %v3161, %v4557
  %4559 = vmatmul.mubr.f32.gmra.mrb[0].mxu0 %v4558
  %v4560 = vpop.f32.mrb[0].mxu0
  %v4561 = vadd.f32 %v4117, %v4560
  %v4562 = vpop.f32.mrb[0].mxu0
  %v4563 = vadd.f32 %v4119, %v4562
  %4564 = vmatprep.mubr.f32.mxu0 0.0
  %v4565 = vand.u32 %v3164, 4294901760
  %v4566 = vsub.f32 %v3164, %v4565
  %4567 = vmatmul.mubr.f32.gmra.mrb[0].mxu0 %v4566
  %v4568 = vpop.f32.mrb[0].mxu0
  %v4569 = vadd.f32 %v4124, %v4568
  %v4570 = vpop.f32.mrb[0].mxu0
  %v4571 = vadd.f32 %v4126, %v4570
  %4572 = vmatprep.mubr.f32.mxu0 0.0
  %v4573 = vand.u32 %v3167, 4294901760
  %v4574 = vsub.f32 %v3167, %v4573
  %4575 = vmatmul.mubr.f32.gmra.mrb[0].mxu0 %v4574
  %v4576 = vpop.f32.mrb[0].mxu0
  %v4577 = vadd.f32 %v4131, %v4576
  %v4578 = vpop.f32.mrb[0].mxu0
  %v4579 = vadd.f32 %v4133, %v4578
  %4580 = vmatprep.mubr.f32.mxu0 0.0
  %v4581 = vand.u32 %v3170, 4294901760
  %v4582 = vsub.f32 %v3170, %v4581
  %4583 = vmatmul.mubr.f32.gmra.mrb[0].mxu0 %v4582
  %v4584 = vpop.f32.mrb[0].mxu0
  %v4585 = vadd.f32 %v4138, %v4584
  %v4586 = vpop.f32.mrb[0].mxu0
  %v4587 = vadd.f32 %v4140, %v4586
  %4588 = vmatprep.mubr.f32.mxu0 0.0
  %v4589 = vand.u32 %v3173, 4294901760
  %v4590 = vsub.f32 %v3173, %v4589
  %4591 = vmatmul.mubr.f32.gmra.mrb[0].mxu0 %v4590
  %v4592 = vpop.f32.mrb[0].mxu0
  %v4593 = vadd.f32 %v4145, %v4592
  %v4594 = vpop.f32.mrb[0].mxu0
  %v4595 = vadd.f32 %v4147, %v4594
  %4596 = vmatprep.mubr.f32.mxu0 0.0
  %v4597 = vand.u32 %v3176, 4294901760
  %v4598 = vsub.f32 %v3176, %v4597
  %4599 = vmatmul.mubr.f32.gmra.mrb[0].mxu0 %v4598
  %v4600 = vpop.f32.mrb[0].mxu0
  %v4601 = vadd.f32 %v4152, %v4600
  %v4602 = vpop.f32.mrb[0].mxu0
  %v4603 = vadd.f32 %v4154, %v4602
  %4604 = vmatprep.mubr.f32.mxu0 0.0
  %v4605 = vand.u32 %v3179, 4294901760
  %v4606 = vsub.f32 %v3179, %v4605
  %4607 = vmatmul.mubr.f32.gmra.mrb[0].mxu0 %v4606
  %v4608 = vpop.f32.mrb[0].mxu0
  %v4609 = vadd.f32 %v4159, %v4608
  %v4610 = vpop.f32.mrb[0].mxu0
  %v4611 = vadd.f32 %v4161, %v4610
  %4612 = vmatprep.mubr.f32.mxu0 0.0
  %v4613 = vand.u32 %v3182, 4294901760
  %v4614 = vsub.f32 %v3182, %v4613
  %4615 = vmatmul.mubr.f32.gmra.mrb[0].mxu0 %v4614
  %v4616 = vpop.f32.mrb[0].mxu0
  %v4617 = vadd.f32 %v4166, %v4616
  %v4618 = vpop.f32.mrb[0].mxu0
  %v4619 = vadd.f32 %v4168, %v4618
  %4620 = vmatprep.mubr.f32.mxu0 0.0
  %v4621 = vand.u32 %v3185, 4294901760
  %v4622 = vsub.f32 %v3185, %v4621
  %4623 = vmatmul.mubr.f32.gmra.mrb[0].mxu0 %v4622
  %v4624 = vpop.f32.mrb[0].mxu0
  %v4625 = vadd.f32 %v4173, %v4624
  %v4626 = vpop.f32.mrb[0].mxu0
  %v4627 = vadd.f32 %v4175, %v4626
  %4628 = vmatprep.mubr.f32.mxu0 0.0
  %v4629 = vand.u32 %v3188, 4294901760
  %v4630 = vsub.f32 %v3188, %v4629
  %4631 = vmatmul.mubr.f32.gmra.mrb[0].mxu0 %v4630
  %v4632 = vpop.f32.mrb[0].mxu0
  %v4633 = vadd.f32 %v4180, %v4632
  %v4634 = vpop.f32.mrb[0].mxu0
  %v4635 = vadd.f32 %v4182, %v4634
  %4636 = vmatprep.mubr.f32.mxu0 0.0
  %v4637 = vand.u32 %v3191, 4294901760
  %v4638 = vsub.f32 %v3191, %v4637
  %4639 = vmatmul.mubr.f32.gmra.mrb[0].mxu0 %v4638
  %v4640 = vpop.f32.mrb[0].mxu0
  %v4641 = vadd.f32 %v4187, %v4640
  %v4642 = vpop.f32.mrb[0].mxu0
  %v4643 = vadd.f32 %v4189, %v4642
  %4644 = vmatprep.mubr.f32.mxu0 0.0
  %v4645 = vand.u32 %v3194, 4294901760
  %v4646 = vsub.f32 %v3194, %v4645
  %4647 = vmatmul.mubr.f32.gmra.mrb[0].mxu0 %v4646
  %v4648 = vpop.f32.mrb[0].mxu0
  %v4649 = vadd.f32 %v4194, %v4648
  %v4650 = vpop.f32.mrb[0].mxu0
  %v4651 = vadd.f32 %v4196, %v4650
  %4652 = vmatprep.mubr.f32.mxu0 0.0
  %v4653 = vand.u32 %v3197, 4294901760
  %v4654 = vsub.f32 %v3197, %v4653
  %4655 = vmatmul.mubr.f32.gmra.mrb[0].mxu0 %v4654
  %v4656 = vpop.f32.mrb[0].mxu0
  %v4657 = vadd.f32 %v4201, %v4656
  %v4658 = vpop.f32.mrb[0].mxu0
  %v4659 = vadd.f32 %v4203, %v4658
  %4660 = vmatprep.mubr.f32.mxu0 0.0
  %v4661 = vand.u32 %v3200, 4294901760
  %v4662 = vsub.f32 %v3200, %v4661
  %4663 = vmatmul.mubr.f32.gmra.mrb[0].mxu0 %v4662
  %v4664 = vpop.f32.mrb[0].mxu0
  %v4665 = vadd.f32 %v4208, %v4664
  %v4666 = vpop.f32.mrb[0].mxu0
  %v4667 = vadd.f32 %v4210, %v4666
  %4668 = vmatprep.mubr.f32.mxu0 0.0
  %v4669 = vand.u32 %v3203, 4294901760
  %v4670 = vsub.f32 %v3203, %v4669
  %4671 = vmatmul.mubr.f32.gmra.mrb[0].mxu0 %v4670
  %v4672 = vpop.f32.mrb[0].mxu0
  %v4673 = vadd.f32 %v4215, %v4672
  %v4674 = vpop.f32.mrb[0].mxu0
  %v4675 = vadd.f32 %v4217, %v4674
  %4676 = vmatprep.mubr.f32.mxu0 0.0
  %v4677 = vand.u32 %v3206, 4294901760
  %v4678 = vsub.f32 %v3206, %v4677
  %4679 = vmatmul.mubr.f32.gmra.mrb[0].mxu0 %v4678
  %v4680 = vpop.f32.mrb[0].mxu0
  %v4681 = vadd.f32 %v4222, %v4680
  %v4682 = vpop.f32.mrb[0].mxu0
  %v4683 = vadd.f32 %v4224, %v4682
  %4684 = vmatprep.mubr.f32.mxu0 0.0
  %v4685 = vand.u32 %v3209, 4294901760
  %v4686 = vsub.f32 %v3209, %v4685
  %4687 = vmatmul.mubr.f32.gmra.mrb[0].mxu0 %v4686
  %v4688 = vpop.f32.mrb[0].mxu0
  %v4689 = vadd.f32 %v4229, %v4688
  %v4690 = vpop.f32.mrb[0].mxu0
  %v4691 = vadd.f32 %v4231, %v4690
  %4692 = vmatprep.mubr.f32.mxu0 0.0
  %v4693 = vand.u32 %v3212, 4294901760
  %v4694 = vsub.f32 %v3212, %v4693
  %4695 = vmatmul.mubr.f32.gmra.mrb[0].mxu0 %v4694
  %v4696 = vpop.f32.mrb[0].mxu0
  %v4697 = vadd.f32 %v4236, %v4696
  %v4698 = vpop.f32.mrb[0].mxu0
  %v4699 = vadd.f32 %v4238, %v4698
  %4700 = vmatprep.mubr.f32.mxu0 0.0
  %v4701 = vand.u32 %v3215, 4294901760
  %v4702 = vsub.f32 %v3215, %v4701
  %4703 = vmatmul.mubr.f32.gmra.mrb[0].mxu0 %v4702
  %v4704 = vpop.f32.mrb[0].mxu0
  %v4705 = vadd.f32 %v4243, %v4704
  %v4706 = vpop.f32.mrb[0].mxu0
  %v4707 = vadd.f32 %v4245, %v4706
  %4708 = vmatprep.mubr.f32.mxu0 0.0
  %v4709 = vand.u32 %v3218, 4294901760
  %v4710 = vsub.f32 %v3218, %v4709
  %4711 = vmatmul.mubr.f32.gmra.mrb[0].mxu0 %v4710
  %v4712 = vpop.f32.mrb[0].mxu0
  %v4713 = vadd.f32 %v4250, %v4712
  %v4714 = vpop.f32.mrb[0].mxu0
  %v4715 = vadd.f32 %v4252, %v4714
  %4716 = vmatprep.mubr.f32.mxu0 0.0
  %v4717 = vand.u32 %v3221, 4294901760
  %v4718 = vsub.f32 %v3221, %v4717
  %4719 = vmatmul.mubr.f32.gmra.mrb[0].mxu0 %v4718
  %v4720 = vpop.f32.mrb[0].mxu0
  %v4721 = vadd.f32 %v4257, %v4720
  %v4722 = vpop.f32.mrb[0].mxu0
  %v4723 = vadd.f32 %v4259, %v4722
  %4724 = vmatprep.mubr.f32.mxu0 0.0
  %v4725 = vand.u32 %v3224, 4294901760
  %v4726 = vsub.f32 %v3224, %v4725
  %4727 = vmatmul.mubr.f32.gmra.mrb[0].mxu0 %v4726
  %v4728 = vpop.f32.mrb[0].mxu0
  %v4729 = vadd.f32 %v4264, %v4728
  %v4730 = vpop.f32.mrb[0].mxu0
  %v4731 = vadd.f32 %v4266, %v4730
  %4732 = vdwg.mxu0
  %v4733 = vand.u32 %v83, 4294901760
  %4734 = vmatprep.subr.mxu0 %v4733
  %v4735 = vand.u32 %v82, 4294901760
  %4736 = vmatpush1.msra.mxu0 %v4735
  %v4737 = vand.u32 %v85, 4294901760
  %4738 = vmatprep.subr.mxu0 %v4737
  %v4739 = vand.u32 %v84, 4294901760
  %4740 = vmatpush1.msra.mxu0 %v4739
  %v4741 = vand.u32 %v87, 4294901760
  %4742 = vmatprep.subr.mxu0 %v4741
  %v4743 = vand.u32 %v86, 4294901760
  %4744 = vmatpush1.msra.mxu0 %v4743
  %v4745 = vand.u32 %v89, 4294901760
  %4746 = vmatprep.subr.mxu0 %v4745
  %v4747 = vand.u32 %v88, 4294901760
  %4748 = vmatpush1.msra.mxu0 %v4747
  %4749 = vmatprep.subr.mxu0 0.0
  %4750 = vmatpush1.msra.mxu0 0.0
  %4751 = vmatprep.subr.mxu0 0.0
  %4752 = vmatpush1.msra.mxu0 0.0
  %4753 = vmatprep.subr.mxu0 0.0
  %4754 = vmatpush1.msra.mxu0 0.0
  %4755 = vmatprep.subr.mxu0 0.0
  %4756 = vmatpush1.msra.mxu0 0.0
  %4757 = vmatprep.subr.mxu0 0.0
  %4758 = vmatpush1.msra.mxu0 0.0
  %4759 = vmatprep.subr.mxu0 0.0
  %4760 = vmatpush1.msra.mxu0 0.0
  %4761 = vmatprep.subr.mxu0 0.0
  %4762 = vmatpush1.msra.mxu0 0.0
  %4763 = vmatprep.subr.mxu0 0.0
  %4764 = vmatpush1.msra.mxu0 0.0
  %4765 = vmatprep.subr.mxu0 0.0
  %4766 = vmatpush1.msra.mxu0 0.0
  %4767 = vmatprep.subr.mxu0 0.0
  %4768 = vmatpush1.msra.mxu0 0.0
  %4769 = vmatprep.subr.mxu0 0.0
  %4770 = vmatpush1.msra.mxu0 0.0
  %4771 = vmatprep.subr.mxu0 0.0
  %4772 = vmatpush1.msra.mxu0 0.0
  %4773 = vmatprep.subr.mxu0 0.0
  %4774 = vmatpush1.msra.mxu0 0.0
  %4775 = vmatprep.subr.mxu0 0.0
  %4776 = vmatpush1.msra.mxu0 0.0
  %4777 = vmatprep.subr.mxu0 0.0
  %4778 = vmatpush1.msra.mxu0 0.0
  %4779 = vmatprep.subr.mxu0 0.0
  %4780 = vmatpush1.msra.mxu0 0.0
  %4781 = vmatprep.subr.mxu0 0.0
  %4782 = vmatpush1.msra.mxu0 0.0
  %4783 = vmatprep.subr.mxu0 0.0
  %4784 = vmatpush1.msra.mxu0 0.0
  %4785 = vmatprep.subr.mxu0 0.0
  %4786 = vmatpush1.msra.mxu0 0.0
  %4787 = vmatprep.subr.mxu0 0.0
  %4788 = vmatpush1.msra.mxu0 0.0
  %4789 = vmatprep.subr.mxu0 0.0
  %4790 = vmatpush1.msra.mxu0 0.0
  %4791 = vmatprep.subr.mxu0 0.0
  %4792 = vmatpush1.msra.mxu0 0.0
  %4793 = vmatprep.subr.mxu0 0.0
  %4794 = vmatpush1.msra.mxu0 0.0
  %4795 = vmatprep.subr.mxu0 0.0
  %4796 = vmatpush1.msra.mxu0 0.0
  %4797 = vmatprep.subr.mxu0 0.0
  %4798 = vmatpush1.msra.mxu0 0.0
  %4799 = vmatprep.subr.mxu0 0.0
  %4800 = vmatpush1.msra.mxu0 0.0
  %4801 = vmatprep.subr.mxu0 0.0
  %4802 = vmatpush1.msra.mxu0 0.0
  %4803 = vmatprep.subr.mxu0 0.0
  %4804 = vmatpush1.msra.mxu0 0.0
  %4805 = vmatprep.mubr.f32.mxu0 0.0
  %v4806 = vand.u32 %v3083, 4294901760
  %v4807 = vsub.f32 %v3083, %v4806
  %v4808 = vand.u32 %v4807, 4294901760
  %4809 = vmatmul.mubr.f32.gmra.mrb[0].mxu0 %v4808
  %v4810 = vpop.f32.mrb[0].mxu0
  %v4811 = vadd.f32 %v4353, %v4810
  %v4812 = vpop.f32.mrb[0].mxu0
  %v4813 = vadd.f32 %v4355, %v4812
  %4814 = vmatprep.mubr.f32.mxu0 0.0
  %v4815 = vand.u32 %v3086, 4294901760
  %v4816 = vsub.f32 %v3086, %v4815
  %v4817 = vand.u32 %v4816, 4294901760
  %4818 = vmatmul.mubr.f32.gmra.mrb[0].mxu0 %v4817
  %v4819 = vpop.f32.mrb[0].mxu0
  %v4820 = vadd.f32 %v4361, %v4819
  %v4821 = vpop.f32.mrb[0].mxu0
  %v4822 = vadd.f32 %v4363, %v4821
  %4823 = vmatprep.mubr.f32.mxu0 0.0
  %v4824 = vand.u32 %v3089, 4294901760
  %v4825 = vsub.f32 %v3089, %v4824
  %v4826 = vand.u32 %v4825, 4294901760
  %4827 = vmatmul.mubr.f32.gmra.mrb[0].mxu0 %v4826
  %v4828 = vpop.f32.mrb[0].mxu0
  %v4829 = vadd.f32 %v4369, %v4828
  %v4830 = vpop.f32.mrb[0].mxu0
  %v4831 = vadd.f32 %v4371, %v4830
  %4832 = vmatprep.mubr.f32.mxu0 0.0
  %v4833 = vand.u32 %v3092, 4294901760
  %v4834 = vsub.f32 %v3092, %v4833
  %v4835 = vand.u32 %v4834, 4294901760
  %4836 = vmatmul.mubr.f32.gmra.mrb[0].mxu0 %v4835
  %v4837 = vpop.f32.mrb[0].mxu0
  %v4838 = vadd.f32 %v4377, %v4837
  %v4839 = vpop.f32.mrb[0].mxu0
  %v4840 = vadd.f32 %v4379, %v4839
  %4841 = vmatprep.mubr.f32.mxu0 0.0
  %v4842 = vand.u32 %v3095, 4294901760
  %v4843 = vsub.f32 %v3095, %v4842
  %v4844 = vand.u32 %v4843, 4294901760
  %4845 = vmatmul.mubr.f32.gmra.mrb[0].mxu0 %v4844
  %v4846 = vpop.f32.mrb[0].mxu0
  %v4847 = vadd.f32 %v4385, %v4846
  %v4848 = vpop.f32.mrb[0].mxu0
  %v4849 = vadd.f32 %v4387, %v4848
  %4850 = vmatprep.mubr.f32.mxu0 0.0
  %v4851 = vand.u32 %v3098, 4294901760
  %v4852 = vsub.f32 %v3098, %v4851
  %v4853 = vand.u32 %v4852, 4294901760
  %4854 = vmatmul.mubr.f32.gmra.mrb[0].mxu0 %v4853
  %v4855 = vpop.f32.mrb[0].mxu0
  %v4856 = vadd.f32 %v4393, %v4855
  %v4857 = vpop.f32.mrb[0].mxu0
  %v4858 = vadd.f32 %v4395, %v4857
  %4859 = vmatprep.mubr.f32.mxu0 0.0
  %v4860 = vand.u32 %v3101, 4294901760
  %v4861 = vsub.f32 %v3101, %v4860
  %v4862 = vand.u32 %v4861, 4294901760
  %4863 = vmatmul.mubr.f32.gmra.mrb[0].mxu0 %v4862
  %v4864 = vpop.f32.mrb[0].mxu0
  %v4865 = vadd.f32 %v4401, %v4864
  %v4866 = vpop.f32.mrb[0].mxu0
  %v4867 = vadd.f32 %v4403, %v4866
  %4868 = vmatprep.mubr.f32.mxu0 0.0
  %v4869 = vand.u32 %v3104, 4294901760
  %v4870 = vsub.f32 %v3104, %v4869
  %v4871 = vand.u32 %v4870, 4294901760
  %4872 = vmatmul.mubr.f32.gmra.mrb[0].mxu0 %v4871
  %v4873 = vpop.f32.mrb[0].mxu0
  %v4874 = vadd.f32 %v4409, %v4873
  %v4875 = vpop.f32.mrb[0].mxu0
  %v4876 = vadd.f32 %v4411, %v4875
  %4877 = vmatprep.mubr.f32.mxu0 0.0
  %v4878 = vand.u32 %v3107, 4294901760
  %v4879 = vsub.f32 %v3107, %v4878
  %v4880 = vand.u32 %v4879, 4294901760
  %4881 = vmatmul.mubr.f32.gmra.mrb[0].mxu0 %v4880
  %v4882 = vpop.f32.mrb[0].mxu0
  %v4883 = vadd.f32 %v4417, %v4882
  %v4884 = vpop.f32.mrb[0].mxu0
  %v4885 = vadd.f32 %v4419, %v4884
  %4886 = vmatprep.mubr.f32.mxu0 0.0
  %v4887 = vand.u32 %v3110, 4294901760
  %v4888 = vsub.f32 %v3110, %v4887
  %v4889 = vand.u32 %v4888, 4294901760
  %4890 = vmatmul.mubr.f32.gmra.mrb[0].mxu0 %v4889
  %v4891 = vpop.f32.mrb[0].mxu0
  %v4892 = vadd.f32 %v4425, %v4891
  %v4893 = vpop.f32.mrb[0].mxu0
  %v4894 = vadd.f32 %v4427, %v4893
  %4895 = vmatprep.mubr.f32.mxu0 0.0
  %v4896 = vand.u32 %v3113, 4294901760
  %v4897 = vsub.f32 %v3113, %v4896
  %v4898 = vand.u32 %v4897, 4294901760
  %4899 = vmatmul.mubr.f32.gmra.mrb[0].mxu0 %v4898
  %v4900 = vpop.f32.mrb[0].mxu0
  %v4901 = vadd.f32 %v4433, %v4900
  %v4902 = vpop.f32.mrb[0].mxu0
  %v4903 = vadd.f32 %v4435, %v4902
  %4904 = vmatprep.mubr.f32.mxu0 0.0
  %v4905 = vand.u32 %v3116, 4294901760
  %v4906 = vsub.f32 %v3116, %v4905
  %v4907 = vand.u32 %v4906, 4294901760
  %4908 = vmatmul.mubr.f32.gmra.mrb[0].mxu0 %v4907
  %v4909 = vpop.f32.mrb[0].mxu0
  %v4910 = vadd.f32 %v4441, %v4909
  %v4911 = vpop.f32.mrb[0].mxu0
  %v4912 = vadd.f32 %v4443, %v4911
  %4913 = vmatprep.mubr.f32.mxu0 0.0
  %v4914 = vand.u32 %v3119, 4294901760
  %v4915 = vsub.f32 %v3119, %v4914
  %v4916 = vand.u32 %v4915, 4294901760
  %4917 = vmatmul.mubr.f32.gmra.mrb[0].mxu0 %v4916
  %v4918 = vpop.f32.mrb[0].mxu0
  %v4919 = vadd.f32 %v4449, %v4918
  %v4920 = vpop.f32.mrb[0].mxu0
  %v4921 = vadd.f32 %v4451, %v4920
  %4922 = vmatprep.mubr.f32.mxu0 0.0
  %v4923 = vand.u32 %v3122, 4294901760
  %v4924 = vsub.f32 %v3122, %v4923
  %v4925 = vand.u32 %v4924, 4294901760
  %4926 = vmatmul.mubr.f32.gmra.mrb[0].mxu0 %v4925
  %v4927 = vpop.f32.mrb[0].mxu0
  %v4928 = vadd.f32 %v4457, %v4927
  %v4929 = vpop.f32.mrb[0].mxu0
  %v4930 = vadd.f32 %v4459, %v4929
  %4931 = vmatprep.mubr.f32.mxu0 0.0
  %v4932 = vand.u32 %v3125, 4294901760
  %v4933 = vsub.f32 %v3125, %v4932
  %v4934 = vand.u32 %v4933, 4294901760
  %4935 = vmatmul.mubr.f32.gmra.mrb[0].mxu0 %v4934
  %v4936 = vpop.f32.mrb[0].mxu0
  %v4937 = vadd.f32 %v4465, %v4936
  %v4938 = vpop.f32.mrb[0].mxu0
  %v4939 = vadd.f32 %v4467, %v4938
  %4940 = vmatprep.mubr.f32.mxu0 0.0
  %v4941 = vand.u32 %v3128, 4294901760
  %v4942 = vsub.f32 %v3128, %v4941
  %v4943 = vand.u32 %v4942, 4294901760
  %4944 = vmatmul.mubr.f32.gmra.mrb[0].mxu0 %v4943
  %v4945 = vpop.f32.mrb[0].mxu0
  %v4946 = vadd.f32 %v4473, %v4945
  %v4947 = vpop.f32.mrb[0].mxu0
  %v4948 = vadd.f32 %v4475, %v4947
  %4949 = vmatprep.mubr.f32.mxu0 0.0
  %v4950 = vand.u32 %v3131, 4294901760
  %v4951 = vsub.f32 %v3131, %v4950
  %v4952 = vand.u32 %v4951, 4294901760
  %4953 = vmatmul.mubr.f32.gmra.mrb[0].mxu0 %v4952
  %v4954 = vpop.f32.mrb[0].mxu0
  %v4955 = vadd.f32 %v4481, %v4954
  %v4956 = vpop.f32.mrb[0].mxu0
  %v4957 = vadd.f32 %v4483, %v4956
  %4958 = vmatprep.mubr.f32.mxu0 0.0
  %v4959 = vand.u32 %v3134, 4294901760
  %v4960 = vsub.f32 %v3134, %v4959
  %v4961 = vand.u32 %v4960, 4294901760
  %4962 = vmatmul.mubr.f32.gmra.mrb[0].mxu0 %v4961
  %v4963 = vpop.f32.mrb[0].mxu0
  %v4964 = vadd.f32 %v4489, %v4963
  %v4965 = vpop.f32.mrb[0].mxu0
  %v4966 = vadd.f32 %v4491, %v4965
  %4967 = vmatprep.mubr.f32.mxu0 0.0
  %v4968 = vand.u32 %v3137, 4294901760
  %v4969 = vsub.f32 %v3137, %v4968
  %v4970 = vand.u32 %v4969, 4294901760
  %4971 = vmatmul.mubr.f32.gmra.mrb[0].mxu0 %v4970
  %v4972 = vpop.f32.mrb[0].mxu0
  %v4973 = vadd.f32 %v4497, %v4972
  %v4974 = vpop.f32.mrb[0].mxu0
  %v4975 = vadd.f32 %v4499, %v4974
  %4976 = vmatprep.mubr.f32.mxu0 0.0
  %v4977 = vand.u32 %v3140, 4294901760
  %v4978 = vsub.f32 %v3140, %v4977
  %v4979 = vand.u32 %v4978, 4294901760
  %4980 = vmatmul.mubr.f32.gmra.mrb[0].mxu0 %v4979
  %v4981 = vpop.f32.mrb[0].mxu0
  %v4982 = vadd.f32 %v4505, %v4981
  %v4983 = vpop.f32.mrb[0].mxu0
  %v4984 = vadd.f32 %v4507, %v4983
  %4985 = vmatprep.mubr.f32.mxu0 0.0
  %v4986 = vand.u32 %v3143, 4294901760
  %v4987 = vsub.f32 %v3143, %v4986
  %v4988 = vand.u32 %v4987, 4294901760
  %4989 = vmatmul.mubr.f32.gmra.mrb[0].mxu0 %v4988
  %v4990 = vpop.f32.mrb[0].mxu0
  %v4991 = vadd.f32 %v4513, %v4990
  %v4992 = vpop.f32.mrb[0].mxu0
  %v4993 = vadd.f32 %v4515, %v4992
  %4994 = vmatprep.mubr.f32.mxu0 0.0
  %v4995 = vand.u32 %v3146, 4294901760
  %v4996 = vsub.f32 %v3146, %v4995
  %v4997 = vand.u32 %v4996, 4294901760
  %4998 = vmatmul.mubr.f32.gmra.mrb[0].mxu0 %v4997
  %v4999 = vpop.f32.mrb[0].mxu0
  %v5000 = vadd.f32 %v4521, %v4999
  %v5001 = vpop.f32.mrb[0].mxu0
  %v5002 = vadd.f32 %v4523, %v5001
  %5003 = vmatprep.mubr.f32.mxu0 0.0
  %v5004 = vand.u32 %v3149, 4294901760
  %v5005 = vsub.f32 %v3149, %v5004
  %v5006 = vand.u32 %v5005, 4294901760
  %5007 = vmatmul.mubr.f32.gmra.mrb[0].mxu0 %v5006
  %v5008 = vpop.f32.mrb[0].mxu0
  %v5009 = vadd.f32 %v4529, %v5008
  %v5010 = vpop.f32.mrb[0].mxu0
  %v5011 = vadd.f32 %v4531, %v5010
  %5012 = vmatprep.mubr.f32.mxu0 0.0
  %v5013 = vand.u32 %v3152, 4294901760
  %v5014 = vsub.f32 %v3152, %v5013
  %v5015 = vand.u32 %v5014, 4294901760
  %5016 = vmatmul.mubr.f32.gmra.mrb[0].mxu0 %v5015
  %v5017 = vpop.f32.mrb[0].mxu0
  %v5018 = vadd.f32 %v4537, %v5017
  %v5019 = vpop.f32.mrb[0].mxu0
  %v5020 = vadd.f32 %v4539, %v5019
  %5021 = vmatprep.mubr.f32.mxu0 0.0
  %v5022 = vand.u32 %v3155, 4294901760
  %v5023 = vsub.f32 %v3155, %v5022
  %v5024 = vand.u32 %v5023, 4294901760
  %5025 = vmatmul.mubr.f32.gmra.mrb[0].mxu0 %v5024
  %v5026 = vpop.f32.mrb[0].mxu0
  %v5027 = vadd.f32 %v4545, %v5026
  %v5028 = vpop.f32.mrb[0].mxu0
  %v5029 = vadd.f32 %v4547, %v5028
  %5030 = vmatprep.mubr.f32.mxu0 0.0
  %v5031 = vand.u32 %v3158, 4294901760
  %v5032 = vsub.f32 %v3158, %v5031
  %v5033 = vand.u32 %v5032, 4294901760
  %5034 = vmatmul.mubr.f32.gmra.mrb[0].mxu0 %v5033
  %v5035 = vpop.f32.mrb[0].mxu0
  %v5036 = vadd.f32 %v4553, %v5035
  %v5037 = vpop.f32.mrb[0].mxu0
  %v5038 = vadd.f32 %v4555, %v5037
  %5039 = vmatprep.mubr.f32.mxu0 0.0
  %v5040 = vand.u32 %v3161, 4294901760
  %v5041 = vsub.f32 %v3161, %v5040
  %v5042 = vand.u32 %v5041, 4294901760
  %5043 = vmatmul.mubr.f32.gmra.mrb[0].mxu0 %v5042
  %v5044 = vpop.f32.mrb[0].mxu0
  %v5045 = vadd.f32 %v4561, %v5044
  %v5046 = vpop.f32.mrb[0].mxu0
  %v5047 = vadd.f32 %v4563, %v5046
  %5048 = vmatprep.mubr.f32.mxu0 0.0
  %v5049 = vand.u32 %v3164, 4294901760
  %v5050 = vsub.f32 %v3164, %v5049
  %v5051 = vand.u32 %v5050, 4294901760
  %5052 = vmatmul.mubr.f32.gmra.mrb[0].mxu0 %v5051
  %v5053 = vpop.f32.mrb[0].mxu0
  %v5054 = vadd.f32 %v4569, %v5053
  %v5055 = vpop.f32.mrb[0].mxu0
  %v5056 = vadd.f32 %v4571, %v5055
  %5057 = vmatprep.mubr.f32.mxu0 0.0
  %v5058 = vand.u32 %v3167, 4294901760
  %v5059 = vsub.f32 %v3167, %v5058
  %v5060 = vand.u32 %v5059, 4294901760
  %5061 = vmatmul.mubr.f32.gmra.mrb[0].mxu0 %v5060
  %v5062 = vpop.f32.mrb[0].mxu0
  %v5063 = vadd.f32 %v4577, %v5062
  %v5064 = vpop.f32.mrb[0].mxu0
  %v5065 = vadd.f32 %v4579, %v5064
  %5066 = vmatprep.mubr.f32.mxu0 0.0
  %v5067 = vand.u32 %v3170, 4294901760
  %v5068 = vsub.f32 %v3170, %v5067
  %v5069 = vand.u32 %v5068, 4294901760
  %5070 = vmatmul.mubr.f32.gmra.mrb[0].mxu0 %v5069
  %v5071 = vpop.f32.mrb[0].mxu0
  %v5072 = vadd.f32 %v4585, %v5071
  %v5073 = vpop.f32.mrb[0].mxu0
  %v5074 = vadd.f32 %v4587, %v5073
  %5075 = vmatprep.mubr.f32.mxu0 0.0
  %v5076 = vand.u32 %v3173, 4294901760
  %v5077 = vsub.f32 %v3173, %v5076
  %v5078 = vand.u32 %v5077, 4294901760
  %5079 = vmatmul.mubr.f32.gmra.mrb[0].mxu0 %v5078
  %v5080 = vpop.f32.mrb[0].mxu0
  %v5081 = vadd.f32 %v4593, %v5080
  %v5082 = vpop.f32.mrb[0].mxu0
  %v5083 = vadd.f32 %v4595, %v5082
  %5084 = vmatprep.mubr.f32.mxu0 0.0
  %v5085 = vand.u32 %v3176, 4294901760
  %v5086 = vsub.f32 %v3176, %v5085
  %v5087 = vand.u32 %v5086, 4294901760
  %5088 = vmatmul.mubr.f32.gmra.mrb[0].mxu0 %v5087
  %v5089 = vpop.f32.mrb[0].mxu0
  %v5090 = vadd.f32 %v4601, %v5089
  %v5091 = vpop.f32.mrb[0].mxu0
  %v5092 = vadd.f32 %v4603, %v5091
  %5093 = vmatprep.mubr.f32.mxu0 0.0
  %v5094 = vand.u32 %v3179, 4294901760
  %v5095 = vsub.f32 %v3179, %v5094
  %v5096 = vand.u32 %v5095, 4294901760
  %5097 = vmatmul.mubr.f32.gmra.mrb[0].mxu0 %v5096
  %v5098 = vpop.f32.mrb[0].mxu0
  %v5099 = vadd.f32 %v4609, %v5098
  %v5100 = vpop.f32.mrb[0].mxu0
  %v5101 = vadd.f32 %v4611, %v5100
  %5102 = vmatprep.mubr.f32.mxu0 0.0
  %v5103 = vand.u32 %v3182, 4294901760
  %v5104 = vsub.f32 %v3182, %v5103
  %v5105 = vand.u32 %v5104, 4294901760
  %5106 = vmatmul.mubr.f32.gmra.mrb[0].mxu0 %v5105
  %v5107 = vpop.f32.mrb[0].mxu0
  %v5108 = vadd.f32 %v4617, %v5107
  %v5109 = vpop.f32.mrb[0].mxu0
  %v5110 = vadd.f32 %v4619, %v5109
  %5111 = vmatprep.mubr.f32.mxu0 0.0
  %v5112 = vand.u32 %v3185, 4294901760
  %v5113 = vsub.f32 %v3185, %v5112
  %v5114 = vand.u32 %v5113, 4294901760
  %5115 = vmatmul.mubr.f32.gmra.mrb[0].mxu0 %v5114
  %v5116 = vpop.f32.mrb[0].mxu0
  %v5117 = vadd.f32 %v4625, %v5116
  %v5118 = vpop.f32.mrb[0].mxu0
  %v5119 = vadd.f32 %v4627, %v5118
  %5120 = vmatprep.mubr.f32.mxu0 0.0
  %v5121 = vand.u32 %v3188, 4294901760
  %v5122 = vsub.f32 %v3188, %v5121
  %v5123 = vand.u32 %v5122, 4294901760
  %5124 = vmatmul.mubr.f32.gmra.mrb[0].mxu0 %v5123
  %v5125 = vpop.f32.mrb[0].mxu0
  %v5126 = vadd.f32 %v4633, %v5125
  %v5127 = vpop.f32.mrb[0].mxu0
  %v5128 = vadd.f32 %v4635, %v5127
  %5129 = vmatprep.mubr.f32.mxu0 0.0
  %v5130 = vand.u32 %v3191, 4294901760
  %v5131 = vsub.f32 %v3191, %v5130
  %v5132 = vand.u32 %v5131, 4294901760
  %5133 = vmatmul.mubr.f32.gmra.mrb[0].mxu0 %v5132
  %v5134 = vpop.f32.mrb[0].mxu0
  %v5135 = vadd.f32 %v4641, %v5134
  %v5136 = vpop.f32.mrb[0].mxu0
  %v5137 = vadd.f32 %v4643, %v5136
  %5138 = vmatprep.mubr.f32.mxu0 0.0
  %v5139 = vand.u32 %v3194, 4294901760
  %v5140 = vsub.f32 %v3194, %v5139
  %v5141 = vand.u32 %v5140, 4294901760
  %5142 = vmatmul.mubr.f32.gmra.mrb[0].mxu0 %v5141
  %v5143 = vpop.f32.mrb[0].mxu0
  %v5144 = vadd.f32 %v4649, %v5143
  %v5145 = vpop.f32.mrb[0].mxu0
  %v5146 = vadd.f32 %v4651, %v5145
  %5147 = vmatprep.mubr.f32.mxu0 0.0
  %v5148 = vand.u32 %v3197, 4294901760
  %v5149 = vsub.f32 %v3197, %v5148
  %v5150 = vand.u32 %v5149, 4294901760
  %5151 = vmatmul.mubr.f32.gmra.mrb[0].mxu0 %v5150
  %v5152 = vpop.f32.mrb[0].mxu0
  %v5153 = vadd.f32 %v4657, %v5152
  %v5154 = vpop.f32.mrb[0].mxu0
  %v5155 = vadd.f32 %v4659, %v5154
  %5156 = vmatprep.mubr.f32.mxu0 0.0
  %v5157 = vand.u32 %v3200, 4294901760
  %v5158 = vsub.f32 %v3200, %v5157
  %v5159 = vand.u32 %v5158, 4294901760
  %5160 = vmatmul.mubr.f32.gmra.mrb[0].mxu0 %v5159
  %v5161 = vpop.f32.mrb[0].mxu0
  %v5162 = vadd.f32 %v4665, %v5161
  %v5163 = vpop.f32.mrb[0].mxu0
  %v5164 = vadd.f32 %v4667, %v5163
  %5165 = vmatprep.mubr.f32.mxu0 0.0
  %v5166 = vand.u32 %v3203, 4294901760
  %v5167 = vsub.f32 %v3203, %v5166
  %v5168 = vand.u32 %v5167, 4294901760
  %5169 = vmatmul.mubr.f32.gmra.mrb[0].mxu0 %v5168
  %v5170 = vpop.f32.mrb[0].mxu0
  %v5171 = vadd.f32 %v4673, %v5170
  %v5172 = vpop.f32.mrb[0].mxu0
  %v5173 = vadd.f32 %v4675, %v5172
  %5174 = vmatprep.mubr.f32.mxu0 0.0
  %v5175 = vand.u32 %v3206, 4294901760
  %v5176 = vsub.f32 %v3206, %v5175
  %v5177 = vand.u32 %v5176, 4294901760
  %5178 = vmatmul.mubr.f32.gmra.mrb[0].mxu0 %v5177
  %v5179 = vpop.f32.mrb[0].mxu0
  %v5180 = vadd.f32 %v4681, %v5179
  %v5181 = vpop.f32.mrb[0].mxu0
  %v5182 = vadd.f32 %v4683, %v5181
  %5183 = vmatprep.mubr.f32.mxu0 0.0
  %v5184 = vand.u32 %v3209, 4294901760
  %v5185 = vsub.f32 %v3209, %v5184
  %v5186 = vand.u32 %v5185, 4294901760
  %5187 = vmatmul.mubr.f32.gmra.mrb[0].mxu0 %v5186
  %v5188 = vpop.f32.mrb[0].mxu0
  %v5189 = vadd.f32 %v4689, %v5188
  %v5190 = vpop.f32.mrb[0].mxu0
  %v5191 = vadd.f32 %v4691, %v5190
  %5192 = vmatprep.mubr.f32.mxu0 0.0
  %v5193 = vand.u32 %v3212, 4294901760
  %v5194 = vsub.f32 %v3212, %v5193
  %v5195 = vand.u32 %v5194, 4294901760
  %5196 = vmatmul.mubr.f32.gmra.mrb[0].mxu0 %v5195
  %v5197 = vpop.f32.mrb[0].mxu0
  %v5198 = vadd.f32 %v4697, %v5197
  %v5199 = vpop.f32.mrb[0].mxu0
  %v5200 = vadd.f32 %v4699, %v5199
  %5201 = vmatprep.mubr.f32.mxu0 0.0
  %v5202 = vand.u32 %v3215, 4294901760
  %v5203 = vsub.f32 %v3215, %v5202
  %v5204 = vand.u32 %v5203, 4294901760
  %5205 = vmatmul.mubr.f32.gmra.mrb[0].mxu0 %v5204
  %v5206 = vpop.f32.mrb[0].mxu0
  %v5207 = vadd.f32 %v4705, %v5206
  %v5208 = vpop.f32.mrb[0].mxu0
  %v5209 = vadd.f32 %v4707, %v5208
  %5210 = vmatprep.mubr.f32.mxu0 0.0
  %v5211 = vand.u32 %v3218, 4294901760
  %v5212 = vsub.f32 %v3218, %v5211
  %v5213 = vand.u32 %v5212, 4294901760
  %5214 = vmatmul.mubr.f32.gmra.mrb[0].mxu0 %v5213
  %v5215 = vpop.f32.mrb[0].mxu0
  %v5216 = vadd.f32 %v4713, %v5215
  %v5217 = vpop.f32.mrb[0].mxu0
  %v5218 = vadd.f32 %v4715, %v5217
  %5219 = vmatprep.mubr.f32.mxu0 0.0
  %v5220 = vand.u32 %v3221, 4294901760
  %v5221 = vsub.f32 %v3221, %v5220
  %v5222 = vand.u32 %v5221, 4294901760
  %5223 = vmatmul.mubr.f32.gmra.mrb[0].mxu0 %v5222
  %v5224 = vpop.f32.mrb[0].mxu0
  %v5225 = vadd.f32 %v4721, %v5224
  %v5226 = vpop.f32.mrb[0].mxu0
  %v5227 = vadd.f32 %v4723, %v5226
  %5228 = vmatprep.mubr.f32.mxu0 0.0
  %v5229 = vand.u32 %v3224, 4294901760
  %v5230 = vsub.f32 %v3224, %v5229
  %v5231 = vand.u32 %v5230, 4294901760
  %5232 = vmatmul.mubr.f32.gmra.mrb[0].mxu0 %v5231
  %v5233 = vpop.f32.mrb[0].mxu0
  %v5234 = vadd.f32 %v4729, %v5233
  %v5235 = vpop.f32.mrb[0].mxu0
  %v5236 = vadd.f32 %v4731, %v5235
  %5237 = vdwg.mxu0
  %v5238 = vand.u32 %v83, 4294901760
  %v5239 = vsub.f32 %v83, %v5238
  %v5240 = vand.u32 %v5239, 4294901760
  %5241 = vmatprep.subr.mxu0 %v5240
  %v5242 = vand.u32 %v82, 4294901760
  %v5243 = vsub.f32 %v82, %v5242
  %v5244 = vand.u32 %v5243, 4294901760
  %5245 = vmatpush1.msra.mxu0 %v5244
  %v5246 = vand.u32 %v85, 4294901760
  %v5247 = vsub.f32 %v85, %v5246
  %v5248 = vand.u32 %v5247, 4294901760
  %5249 = vmatprep.subr.mxu0 %v5248
  %v5250 = vand.u32 %v84, 4294901760
  %v5251 = vsub.f32 %v84, %v5250
  %v5252 = vand.u32 %v5251, 4294901760
  %5253 = vmatpush1.msra.mxu0 %v5252
  %v5254 = vand.u32 %v87, 4294901760
  %v5255 = vsub.f32 %v87, %v5254
  %v5256 = vand.u32 %v5255, 4294901760
  %5257 = vmatprep.subr.mxu0 %v5256
  %v5258 = vand.u32 %v86, 4294901760
  %v5259 = vsub.f32 %v86, %v5258
  %v5260 = vand.u32 %v5259, 4294901760
  %5261 = vmatpush1.msra.mxu0 %v5260
  %v5262 = vand.u32 %v89, 4294901760
  %v5263 = vsub.f32 %v89, %v5262
  %v5264 = vand.u32 %v5263, 4294901760
  %5265 = vmatprep.subr.mxu0 %v5264
  %v5266 = vand.u32 %v88, 4294901760
  %v5267 = vsub.f32 %v88, %v5266
  %v5268 = vand.u32 %v5267, 4294901760
  %5269 = vmatpush1.msra.mxu0 %v5268
  %5270 = vmatprep.subr.mxu0 0.0
  %5271 = vmatpush1.msra.mxu0 0.0
  %5272 = vmatprep.subr.mxu0 0.0
  %5273 = vmatpush1.msra.mxu0 0.0
  %5274 = vmatprep.subr.mxu0 0.0
  %5275 = vmatpush1.msra.mxu0 0.0
  %5276 = vmatprep.subr.mxu0 0.0
  %5277 = vmatpush1.msra.mxu0 0.0
  %5278 = vmatprep.subr.mxu0 0.0
  %5279 = vmatpush1.msra.mxu0 0.0
  %5280 = vmatprep.subr.mxu0 0.0
  %5281 = vmatpush1.msra.mxu0 0.0
  %5282 = vmatprep.subr.mxu0 0.0
  %5283 = vmatpush1.msra.mxu0 0.0
  %5284 = vmatprep.subr.mxu0 0.0
  %5285 = vmatpush1.msra.mxu0 0.0
  %5286 = vmatprep.subr.mxu0 0.0
  %5287 = vmatpush1.msra.mxu0 0.0
  %5288 = vmatprep.subr.mxu0 0.0
  %5289 = vmatpush1.msra.mxu0 0.0
  %5290 = vmatprep.subr.mxu0 0.0
  %5291 = vmatpush1.msra.mxu0 0.0
  %5292 = vmatprep.subr.mxu0 0.0
  %5293 = vmatpush1.msra.mxu0 0.0
  %5294 = vmatprep.subr.mxu0 0.0
  %5295 = vmatpush1.msra.mxu0 0.0
  %5296 = vmatprep.subr.mxu0 0.0
  %5297 = vmatpush1.msra.mxu0 0.0
  %5298 = vmatprep.subr.mxu0 0.0
  %5299 = vmatpush1.msra.mxu0 0.0
  %5300 = vmatprep.subr.mxu0 0.0
  %5301 = vmatpush1.msra.mxu0 0.0
  %5302 = vmatprep.subr.mxu0 0.0
  %5303 = vmatpush1.msra.mxu0 0.0
  %5304 = vmatprep.subr.mxu0 0.0
  %5305 = vmatpush1.msra.mxu0 0.0
  %5306 = vmatprep.subr.mxu0 0.0
  %5307 = vmatpush1.msra.mxu0 0.0
  %5308 = vmatprep.subr.mxu0 0.0
  %5309 = vmatpush1.msra.mxu0 0.0
  %5310 = vmatprep.subr.mxu0 0.0
  %5311 = vmatpush1.msra.mxu0 0.0
  %5312 = vmatprep.subr.mxu0 0.0
  %5313 = vmatpush1.msra.mxu0 0.0
  %5314 = vmatprep.subr.mxu0 0.0
  %5315 = vmatpush1.msra.mxu0 0.0
  %5316 = vmatprep.subr.mxu0 0.0
  %5317 = vmatpush1.msra.mxu0 0.0
  %5318 = vmatprep.subr.mxu0 0.0
  %5319 = vmatpush1.msra.mxu0 0.0
  %5320 = vmatprep.subr.mxu0 0.0
  %5321 = vmatpush1.msra.mxu0 0.0
  %5322 = vmatprep.subr.mxu0 0.0
  %5323 = vmatpush1.msra.mxu0 0.0
  %5324 = vmatprep.subr.mxu0 0.0
  %5325 = vmatpush1.msra.mxu0 0.0
  %5326 = vmatprep.mubr.f32.mxu0 0.0
  %v5327 = vand.u32 %v3083, 4294901760
  %5328 = vmatmul.mubr.f32.gmra.mrb[0].mxu0 %v5327
  %v5329 = vpop.f32.mrb[0].mxu0
  %v5330 = vadd.f32 %v4811, %v5329
  %v5331 = vpop.f32.mrb[0].mxu0
  %v5332 = vadd.f32 %v4813, %v5331
  %5333 = vmatprep.mubr.f32.mxu0 0.0
  %v5334 = vand.u32 %v3086, 4294901760
  %5335 = vmatmul.mubr.f32.gmra.mrb[0].mxu0 %v5334
  %v5336 = vpop.f32.mrb[0].mxu0
  %v5337 = vadd.f32 %v4820, %v5336
  %v5338 = vpop.f32.mrb[0].mxu0
  %v5339 = vadd.f32 %v4822, %v5338
  %5340 = vmatprep.mubr.f32.mxu0 0.0
  %v5341 = vand.u32 %v3089, 4294901760
  %5342 = vmatmul.mubr.f32.gmra.mrb[0].mxu0 %v5341
  %v5343 = vpop.f32.mrb[0].mxu0
  %v5344 = vadd.f32 %v4829, %v5343
  %v5345 = vpop.f32.mrb[0].mxu0
  %v5346 = vadd.f32 %v4831, %v5345
  %5347 = vmatprep.mubr.f32.mxu0 0.0
  %v5348 = vand.u32 %v3092, 4294901760
  %5349 = vmatmul.mubr.f32.gmra.mrb[0].mxu0 %v5348
  %v5350 = vpop.f32.mrb[0].mxu0
  %v5351 = vadd.f32 %v4838, %v5350
  %v5352 = vpop.f32.mrb[0].mxu0
  %v5353 = vadd.f32 %v4840, %v5352
  %5354 = vmatprep.mubr.f32.mxu0 0.0
  %v5355 = vand.u32 %v3095, 4294901760
  %5356 = vmatmul.mubr.f32.gmra.mrb[0].mxu0 %v5355
  %v5357 = vpop.f32.mrb[0].mxu0
  %v5358 = vadd.f32 %v4847, %v5357
  %v5359 = vpop.f32.mrb[0].mxu0
  %v5360 = vadd.f32 %v4849, %v5359
  %5361 = vmatprep.mubr.f32.mxu0 0.0
  %v5362 = vand.u32 %v3098, 4294901760
  %5363 = vmatmul.mubr.f32.gmra.mrb[0].mxu0 %v5362
  %v5364 = vpop.f32.mrb[0].mxu0
  %v5365 = vadd.f32 %v4856, %v5364
  %v5366 = vpop.f32.mrb[0].mxu0
  %v5367 = vadd.f32 %v4858, %v5366
  %5368 = vmatprep.mubr.f32.mxu0 0.0
  %v5369 = vand.u32 %v3101, 4294901760
  %5370 = vmatmul.mubr.f32.gmra.mrb[0].mxu0 %v5369
  %v5371 = vpop.f32.mrb[0].mxu0
  %v5372 = vadd.f32 %v4865, %v5371
  %v5373 = vpop.f32.mrb[0].mxu0
  %v5374 = vadd.f32 %v4867, %v5373
  %5375 = vmatprep.mubr.f32.mxu0 0.0
  %v5376 = vand.u32 %v3104, 4294901760
  %5377 = vmatmul.mubr.f32.gmra.mrb[0].mxu0 %v5376
  %v5378 = vpop.f32.mrb[0].mxu0
  %v5379 = vadd.f32 %v4874, %v5378
  %v5380 = vpop.f32.mrb[0].mxu0
  %v5381 = vadd.f32 %v4876, %v5380
  %5382 = vmatprep.mubr.f32.mxu0 0.0
  %v5383 = vand.u32 %v3107, 4294901760
  %5384 = vmatmul.mubr.f32.gmra.mrb[0].mxu0 %v5383
  %v5385 = vpop.f32.mrb[0].mxu0
  %v5386 = vadd.f32 %v4883, %v5385
  %v5387 = vpop.f32.mrb[0].mxu0
  %v5388 = vadd.f32 %v4885, %v5387
  %5389 = vmatprep.mubr.f32.mxu0 0.0
  %v5390 = vand.u32 %v3110, 4294901760
  %5391 = vmatmul.mubr.f32.gmra.mrb[0].mxu0 %v5390
  %v5392 = vpop.f32.mrb[0].mxu0
  %v5393 = vadd.f32 %v4892, %v5392
  %v5394 = vpop.f32.mrb[0].mxu0
  %v5395 = vadd.f32 %v4894, %v5394
  %5396 = vmatprep.mubr.f32.mxu0 0.0
  %v5397 = vand.u32 %v3113, 4294901760
  %5398 = vmatmul.mubr.f32.gmra.mrb[0].mxu0 %v5397
  %v5399 = vpop.f32.mrb[0].mxu0
  %v5400 = vadd.f32 %v4901, %v5399
  %v5401 = vpop.f32.mrb[0].mxu0
  %v5402 = vadd.f32 %v4903, %v5401
  %5403 = vmatprep.mubr.f32.mxu0 0.0
  %v5404 = vand.u32 %v3116, 4294901760
  %5405 = vmatmul.mubr.f32.gmra.mrb[0].mxu0 %v5404
  %v5406 = vpop.f32.mrb[0].mxu0
  %v5407 = vadd.f32 %v4910, %v5406
  %v5408 = vpop.f32.mrb[0].mxu0
  %v5409 = vadd.f32 %v4912, %v5408
  %5410 = vmatprep.mubr.f32.mxu0 0.0
  %v5411 = vand.u32 %v3119, 4294901760
  %5412 = vmatmul.mubr.f32.gmra.mrb[0].mxu0 %v5411
  %v5413 = vpop.f32.mrb[0].mxu0
  %v5414 = vadd.f32 %v4919, %v5413
  %v5415 = vpop.f32.mrb[0].mxu0
  %v5416 = vadd.f32 %v4921, %v5415
  %5417 = vmatprep.mubr.f32.mxu0 0.0
  %v5418 = vand.u32 %v3122, 4294901760
  %5419 = vmatmul.mubr.f32.gmra.mrb[0].mxu0 %v5418
  %v5420 = vpop.f32.mrb[0].mxu0
  %v5421 = vadd.f32 %v4928, %v5420
  %v5422 = vpop.f32.mrb[0].mxu0
  %v5423 = vadd.f32 %v4930, %v5422
  %5424 = vmatprep.mubr.f32.mxu0 0.0
  %v5425 = vand.u32 %v3125, 4294901760
  %5426 = vmatmul.mubr.f32.gmra.mrb[0].mxu0 %v5425
  %v5427 = vpop.f32.mrb[0].mxu0
  %v5428 = vadd.f32 %v4937, %v5427
  %v5429 = vpop.f32.mrb[0].mxu0
  %v5430 = vadd.f32 %v4939, %v5429
  %5431 = vmatprep.mubr.f32.mxu0 0.0
  %v5432 = vand.u32 %v3128, 4294901760
  %5433 = vmatmul.mubr.f32.gmra.mrb[0].mxu0 %v5432
  %v5434 = vpop.f32.mrb[0].mxu0
  %v5435 = vadd.f32 %v4946, %v5434
  %v5436 = vpop.f32.mrb[0].mxu0
  %v5437 = vadd.f32 %v4948, %v5436
  %5438 = vmatprep.mubr.f32.mxu0 0.0
  %v5439 = vand.u32 %v3131, 4294901760
  %5440 = vmatmul.mubr.f32.gmra.mrb[0].mxu0 %v5439
  %v5441 = vpop.f32.mrb[0].mxu0
  %v5442 = vadd.f32 %v4955, %v5441
  %v5443 = vpop.f32.mrb[0].mxu0
  %v5444 = vadd.f32 %v4957, %v5443
  %5445 = vmatprep.mubr.f32.mxu0 0.0
  %v5446 = vand.u32 %v3134, 4294901760
  %5447 = vmatmul.mubr.f32.gmra.mrb[0].mxu0 %v5446
  %v5448 = vpop.f32.mrb[0].mxu0
  %v5449 = vadd.f32 %v4964, %v5448
  %v5450 = vpop.f32.mrb[0].mxu0
  %v5451 = vadd.f32 %v4966, %v5450
  %5452 = vmatprep.mubr.f32.mxu0 0.0
  %v5453 = vand.u32 %v3137, 4294901760
  %5454 = vmatmul.mubr.f32.gmra.mrb[0].mxu0 %v5453
  %v5455 = vpop.f32.mrb[0].mxu0
  %v5456 = vadd.f32 %v4973, %v5455
  %v5457 = vpop.f32.mrb[0].mxu0
  %v5458 = vadd.f32 %v4975, %v5457
  %5459 = vmatprep.mubr.f32.mxu0 0.0
  %v5460 = vand.u32 %v3140, 4294901760
  %5461 = vmatmul.mubr.f32.gmra.mrb[0].mxu0 %v5460
  %v5462 = vpop.f32.mrb[0].mxu0
  %v5463 = vadd.f32 %v4982, %v5462
  %v5464 = vpop.f32.mrb[0].mxu0
  %v5465 = vadd.f32 %v4984, %v5464
  %5466 = vmatprep.mubr.f32.mxu0 0.0
  %v5467 = vand.u32 %v3143, 4294901760
  %5468 = vmatmul.mubr.f32.gmra.mrb[0].mxu0 %v5467
  %v5469 = vpop.f32.mrb[0].mxu0
  %v5470 = vadd.f32 %v4991, %v5469
  %v5471 = vpop.f32.mrb[0].mxu0
  %v5472 = vadd.f32 %v4993, %v5471
  %5473 = vmatprep.mubr.f32.mxu0 0.0
  %v5474 = vand.u32 %v3146, 4294901760
  %5475 = vmatmul.mubr.f32.gmra.mrb[0].mxu0 %v5474
  %v5476 = vpop.f32.mrb[0].mxu0
  %v5477 = vadd.f32 %v5000, %v5476
  %v5478 = vpop.f32.mrb[0].mxu0
  %v5479 = vadd.f32 %v5002, %v5478
  %5480 = vmatprep.mubr.f32.mxu0 0.0
  %v5481 = vand.u32 %v3149, 4294901760
  %5482 = vmatmul.mubr.f32.gmra.mrb[0].mxu0 %v5481
  %v5483 = vpop.f32.mrb[0].mxu0
  %v5484 = vadd.f32 %v5009, %v5483
  %v5485 = vpop.f32.mrb[0].mxu0
  %v5486 = vadd.f32 %v5011, %v5485
  %5487 = vmatprep.mubr.f32.mxu0 0.0
  %v5488 = vand.u32 %v3152, 4294901760
  %5489 = vmatmul.mubr.f32.gmra.mrb[0].mxu0 %v5488
  %v5490 = vpop.f32.mrb[0].mxu0
  %v5491 = vadd.f32 %v5018, %v5490
  %v5492 = vpop.f32.mrb[0].mxu0
  %v5493 = vadd.f32 %v5020, %v5492
  %5494 = vmatprep.mubr.f32.mxu0 0.0
  %v5495 = vand.u32 %v3155, 4294901760
  %5496 = vmatmul.mubr.f32.gmra.mrb[0].mxu0 %v5495
  %v5497 = vpop.f32.mrb[0].mxu0
  %v5498 = vadd.f32 %v5027, %v5497
  %v5499 = vpop.f32.mrb[0].mxu0
  %v5500 = vadd.f32 %v5029, %v5499
  %5501 = vmatprep.mubr.f32.mxu0 0.0
  %v5502 = vand.u32 %v3158, 4294901760
  %5503 = vmatmul.mubr.f32.gmra.mrb[0].mxu0 %v5502
  %v5504 = vpop.f32.mrb[0].mxu0
  %v5505 = vadd.f32 %v5036, %v5504
  %v5506 = vpop.f32.mrb[0].mxu0
  %v5507 = vadd.f32 %v5038, %v5506
  %5508 = vmatprep.mubr.f32.mxu0 0.0
  %v5509 = vand.u32 %v3161, 4294901760
  %5510 = vmatmul.mubr.f32.gmra.mrb[0].mxu0 %v5509
  %v5511 = vpop.f32.mrb[0].mxu0
  %v5512 = vadd.f32 %v5045, %v5511
  %v5513 = vpop.f32.mrb[0].mxu0
  %v5514 = vadd.f32 %v5047, %v5513
  %5515 = vmatprep.mubr.f32.mxu0 0.0
  %v5516 = vand.u32 %v3164, 4294901760
  %5517 = vmatmul.mubr.f32.gmra.mrb[0].mxu0 %v5516
  %v5518 = vpop.f32.mrb[0].mxu0
  %v5519 = vadd.f32 %v5054, %v5518
  %v5520 = vpop.f32.mrb[0].mxu0
  %v5521 = vadd.f32 %v5056, %v5520
  %5522 = vmatprep.mubr.f32.mxu0 0.0
  %v5523 = vand.u32 %v3167, 4294901760
  %5524 = vmatmul.mubr.f32.gmra.mrb[0].mxu0 %v5523
  %v5525 = vpop.f32.mrb[0].mxu0
  %v5526 = vadd.f32 %v5063, %v5525
  %v5527 = vpop.f32.mrb[0].mxu0
  %v5528 = vadd.f32 %v5065, %v5527
  %5529 = vmatprep.mubr.f32.mxu0 0.0
  %v5530 = vand.u32 %v3170, 4294901760
  %5531 = vmatmul.mubr.f32.gmra.mrb[0].mxu0 %v5530
  %v5532 = vpop.f32.mrb[0].mxu0
  %v5533 = vadd.f32 %v5072, %v5532
  %v5534 = vpop.f32.mrb[0].mxu0
  %v5535 = vadd.f32 %v5074, %v5534
  %5536 = vmatprep.mubr.f32.mxu0 0.0
  %v5537 = vand.u32 %v3173, 4294901760
  %5538 = vmatmul.mubr.f32.gmra.mrb[0].mxu0 %v5537
  %v5539 = vpop.f32.mrb[0].mxu0
  %v5540 = vadd.f32 %v5081, %v5539
  %v5541 = vpop.f32.mrb[0].mxu0
  %v5542 = vadd.f32 %v5083, %v5541
  %5543 = vmatprep.mubr.f32.mxu0 0.0
  %v5544 = vand.u32 %v3176, 4294901760
  %5545 = vmatmul.mubr.f32.gmra.mrb[0].mxu0 %v5544
  %v5546 = vpop.f32.mrb[0].mxu0
  %v5547 = vadd.f32 %v5090, %v5546
  %v5548 = vpop.f32.mrb[0].mxu0
  %v5549 = vadd.f32 %v5092, %v5548
  %5550 = vmatprep.mubr.f32.mxu0 0.0
  %v5551 = vand.u32 %v3179, 4294901760
  %5552 = vmatmul.mubr.f32.gmra.mrb[0].mxu0 %v5551
  %v5553 = vpop.f32.mrb[0].mxu0
  %v5554 = vadd.f32 %v5099, %v5553
  %v5555 = vpop.f32.mrb[0].mxu0
  %v5556 = vadd.f32 %v5101, %v5555
  %5557 = vmatprep.mubr.f32.mxu0 0.0
  %v5558 = vand.u32 %v3182, 4294901760
  %5559 = vmatmul.mubr.f32.gmra.mrb[0].mxu0 %v5558
  %v5560 = vpop.f32.mrb[0].mxu0
  %v5561 = vadd.f32 %v5108, %v5560
  %v5562 = vpop.f32.mrb[0].mxu0
  %v5563 = vadd.f32 %v5110, %v5562
  %5564 = vmatprep.mubr.f32.mxu0 0.0
  %v5565 = vand.u32 %v3185, 4294901760
  %5566 = vmatmul.mubr.f32.gmra.mrb[0].mxu0 %v5565
  %v5567 = vpop.f32.mrb[0].mxu0
  %v5568 = vadd.f32 %v5117, %v5567
  %v5569 = vpop.f32.mrb[0].mxu0
  %v5570 = vadd.f32 %v5119, %v5569
  %5571 = vmatprep.mubr.f32.mxu0 0.0
  %v5572 = vand.u32 %v3188, 4294901760
  %5573 = vmatmul.mubr.f32.gmra.mrb[0].mxu0 %v5572
  %v5574 = vpop.f32.mrb[0].mxu0
  %v5575 = vadd.f32 %v5126, %v5574
  %v5576 = vpop.f32.mrb[0].mxu0
  %v5577 = vadd.f32 %v5128, %v5576
  %5578 = vmatprep.mubr.f32.mxu0 0.0
  %v5579 = vand.u32 %v3191, 4294901760
  %5580 = vmatmul.mubr.f32.gmra.mrb[0].mxu0 %v5579
  %v5581 = vpop.f32.mrb[0].mxu0
  %v5582 = vadd.f32 %v5135, %v5581
  %v5583 = vpop.f32.mrb[0].mxu0
  %v5584 = vadd.f32 %v5137, %v5583
  %5585 = vmatprep.mubr.f32.mxu0 0.0
  %v5586 = vand.u32 %v3194, 4294901760
  %5587 = vmatmul.mubr.f32.gmra.mrb[0].mxu0 %v5586
  %v5588 = vpop.f32.mrb[0].mxu0
  %v5589 = vadd.f32 %v5144, %v5588
  %v5590 = vpop.f32.mrb[0].mxu0
  %v5591 = vadd.f32 %v5146, %v5590
  %5592 = vmatprep.mubr.f32.mxu0 0.0
  %v5593 = vand.u32 %v3197, 4294901760
  %5594 = vmatmul.mubr.f32.gmra.mrb[0].mxu0 %v5593
  %v5595 = vpop.f32.mrb[0].mxu0
  %v5596 = vadd.f32 %v5153, %v5595
  %v5597 = vpop.f32.mrb[0].mxu0
  %v5598 = vadd.f32 %v5155, %v5597
  %5599 = vmatprep.mubr.f32.mxu0 0.0
  %v5600 = vand.u32 %v3200, 4294901760
  %5601 = vmatmul.mubr.f32.gmra.mrb[0].mxu0 %v5600
  %v5602 = vpop.f32.mrb[0].mxu0
  %v5603 = vadd.f32 %v5162, %v5602
  %v5604 = vpop.f32.mrb[0].mxu0
  %v5605 = vadd.f32 %v5164, %v5604
  %5606 = vmatprep.mubr.f32.mxu0 0.0
  %v5607 = vand.u32 %v3203, 4294901760
  %5608 = vmatmul.mubr.f32.gmra.mrb[0].mxu0 %v5607
  %v5609 = vpop.f32.mrb[0].mxu0
  %v5610 = vadd.f32 %v5171, %v5609
  %v5611 = vpop.f32.mrb[0].mxu0
  %v5612 = vadd.f32 %v5173, %v5611
  %5613 = vmatprep.mubr.f32.mxu0 0.0
  %v5614 = vand.u32 %v3206, 4294901760
  %5615 = vmatmul.mubr.f32.gmra.mrb[0].mxu0 %v5614
  %v5616 = vpop.f32.mrb[0].mxu0
  %v5617 = vadd.f32 %v5180, %v5616
  %v5618 = vpop.f32.mrb[0].mxu0
  %v5619 = vadd.f32 %v5182, %v5618
  %5620 = vmatprep.mubr.f32.mxu0 0.0
  %v5621 = vand.u32 %v3209, 4294901760
  %5622 = vmatmul.mubr.f32.gmra.mrb[0].mxu0 %v5621
  %v5623 = vpop.f32.mrb[0].mxu0
  %v5624 = vadd.f32 %v5189, %v5623
  %v5625 = vpop.f32.mrb[0].mxu0
  %v5626 = vadd.f32 %v5191, %v5625
  %5627 = vmatprep.mubr.f32.mxu0 0.0
  %v5628 = vand.u32 %v3212, 4294901760
  %5629 = vmatmul.mubr.f32.gmra.mrb[0].mxu0 %v5628
  %v5630 = vpop.f32.mrb[0].mxu0
  %v5631 = vadd.f32 %v5198, %v5630
  %v5632 = vpop.f32.mrb[0].mxu0
  %v5633 = vadd.f32 %v5200, %v5632
  %5634 = vmatprep.mubr.f32.mxu0 0.0
  %v5635 = vand.u32 %v3215, 4294901760
  %5636 = vmatmul.mubr.f32.gmra.mrb[0].mxu0 %v5635
  %v5637 = vpop.f32.mrb[0].mxu0
  %v5638 = vadd.f32 %v5207, %v5637
  %v5639 = vpop.f32.mrb[0].mxu0
  %v5640 = vadd.f32 %v5209, %v5639
  %5641 = vmatprep.mubr.f32.mxu0 0.0
  %v5642 = vand.u32 %v3218, 4294901760
  %5643 = vmatmul.mubr.f32.gmra.mrb[0].mxu0 %v5642
  %v5644 = vpop.f32.mrb[0].mxu0
  %v5645 = vadd.f32 %v5216, %v5644
  %v5646 = vpop.f32.mrb[0].mxu0
  %v5647 = vadd.f32 %v5218, %v5646
  %5648 = vmatprep.mubr.f32.mxu0 0.0
  %v5649 = vand.u32 %v3221, 4294901760
  %5650 = vmatmul.mubr.f32.gmra.mrb[0].mxu0 %v5649
  %v5651 = vpop.f32.mrb[0].mxu0
  %v5652 = vadd.f32 %v5225, %v5651
  %v5653 = vpop.f32.mrb[0].mxu0
  %v5654 = vadd.f32 %v5227, %v5653
  %5655 = vmatprep.mubr.f32.mxu0 0.0
  %v5656 = vand.u32 %v3224, 4294901760
  %5657 = vmatmul.mubr.f32.gmra.mrb[0].mxu0 %v5656
  %v5658 = vpop.f32.mrb[0].mxu0
  %v5659 = vadd.f32 %v5234, %v5658
  %v5660 = vpop.f32.mrb[0].mxu0
  %v5661 = vadd.f32 %v5236, %v5660
  %5662 = vdwg.mxu0
  %v5663 = vand.u32 %v83, 4294901760
  %5664 = vmatprep.subr.mxu0 %v5663
  %v5665 = vand.u32 %v82, 4294901760
  %5666 = vmatpush1.msra.mxu0 %v5665
  %v5667 = vand.u32 %v85, 4294901760
  %5668 = vmatprep.subr.mxu0 %v5667
  %v5669 = vand.u32 %v84, 4294901760
  %5670 = vmatpush1.msra.mxu0 %v5669
  %v5671 = vand.u32 %v87, 4294901760
  %5672 = vmatprep.subr.mxu0 %v5671
  %v5673 = vand.u32 %v86, 4294901760
  %5674 = vmatpush1.msra.mxu0 %v5673
  %v5675 = vand.u32 %v89, 4294901760
  %5676 = vmatprep.subr.mxu0 %v5675
  %v5677 = vand.u32 %v88, 4294901760
  %5678 = vmatpush1.msra.mxu0 %v5677
  %5679 = vmatprep.subr.mxu0 0.0
  %5680 = vmatpush1.msra.mxu0 0.0
  %5681 = vmatprep.subr.mxu0 0.0
  %5682 = vmatpush1.msra.mxu0 0.0
  %5683 = vmatprep.subr.mxu0 0.0
  %5684 = vmatpush1.msra.mxu0 0.0
  %5685 = vmatprep.subr.mxu0 0.0
  %5686 = vmatpush1.msra.mxu0 0.0
  %5687 = vmatprep.subr.mxu0 0.0
  %5688 = vmatpush1.msra.mxu0 0.0
  %5689 = vmatprep.subr.mxu0 0.0
  %5690 = vmatpush1.msra.mxu0 0.0
  %5691 = vmatprep.subr.mxu0 0.0
  %5692 = vmatpush1.msra.mxu0 0.0
  %5693 = vmatprep.subr.mxu0 0.0
  %5694 = vmatpush1.msra.mxu0 0.0
  %5695 = vmatprep.subr.mxu0 0.0
  %5696 = vmatpush1.msra.mxu0 0.0
  %5697 = vmatprep.subr.mxu0 0.0
  %5698 = vmatpush1.msra.mxu0 0.0
  %5699 = vmatprep.subr.mxu0 0.0
  %5700 = vmatpush1.msra.mxu0 0.0
  %5701 = vmatprep.subr.mxu0 0.0
  %5702 = vmatpush1.msra.mxu0 0.0
  %5703 = vmatprep.subr.mxu0 0.0
  %5704 = vmatpush1.msra.mxu0 0.0
  %5705 = vmatprep.subr.mxu0 0.0
  %5706 = vmatpush1.msra.mxu0 0.0
  %5707 = vmatprep.subr.mxu0 0.0
  %5708 = vmatpush1.msra.mxu0 0.0
  %5709 = vmatprep.subr.mxu0 0.0
  %5710 = vmatpush1.msra.mxu0 0.0
  %5711 = vmatprep.subr.mxu0 0.0
  %5712 = vmatpush1.msra.mxu0 0.0
  %5713 = vmatprep.subr.mxu0 0.0
  %5714 = vmatpush1.msra.mxu0 0.0
  %5715 = vmatprep.subr.mxu0 0.0
  %5716 = vmatpush1.msra.mxu0 0.0
  %5717 = vmatprep.subr.mxu0 0.0
  %5718 = vmatpush1.msra.mxu0 0.0
  %5719 = vmatprep.subr.mxu0 0.0
  %5720 = vmatpush1.msra.mxu0 0.0
  %5721 = vmatprep.subr.mxu0 0.0
  %5722 = vmatpush1.msra.mxu0 0.0
  %5723 = vmatprep.subr.mxu0 0.0
  %5724 = vmatpush1.msra.mxu0 0.0
  %5725 = vmatprep.subr.mxu0 0.0
  %5726 = vmatpush1.msra.mxu0 0.0
  %5727 = vmatprep.subr.mxu0 0.0
  %5728 = vmatpush1.msra.mxu0 0.0
  %5729 = vmatprep.subr.mxu0 0.0
  %5730 = vmatpush1.msra.mxu0 0.0
  %5731 = vmatprep.subr.mxu0 0.0
  %5732 = vmatpush1.msra.mxu0 0.0
  %5733 = vmatprep.subr.mxu0 0.0
  %5734 = vmatpush1.msra.mxu0 0.0
  %5735 = vmatprep.mubr.f32.mxu0 0.0
  %v5736 = vand.u32 %v3083, 4294901760
  %5737 = vmatmul.mubr.f32.gmra.mrb[0].mxu0 %v5736
  %v5738 = vpop.f32.mrb[0].mxu0
  %v5739 = vadd.f32 %v5330, %v5738
  %v5740 = vpop.f32.mrb[0].mxu0
  %v5741 = vadd.f32 %v5332, %v5740
  %5742 = vmatprep.mubr.f32.mxu0 0.0
  %v5743 = vand.u32 %v3086, 4294901760
  %5744 = vmatmul.mubr.f32.gmra.mrb[0].mxu0 %v5743
  %v5745 = vpop.f32.mrb[0].mxu0
  %v5746 = vadd.f32 %v5337, %v5745
  %v5747 = vpop.f32.mrb[0].mxu0
  %v5748 = vadd.f32 %v5339, %v5747
  %5749 = vmatprep.mubr.f32.mxu0 0.0
  %v5750 = vand.u32 %v3089, 4294901760
  %5751 = vmatmul.mubr.f32.gmra.mrb[0].mxu0 %v5750
  %v5752 = vpop.f32.mrb[0].mxu0
  %v5753 = vadd.f32 %v5344, %v5752
  %v5754 = vpop.f32.mrb[0].mxu0
  %v5755 = vadd.f32 %v5346, %v5754
  %5756 = vmatprep.mubr.f32.mxu0 0.0
  %v5757 = vand.u32 %v3092, 4294901760
  %5758 = vmatmul.mubr.f32.gmra.mrb[0].mxu0 %v5757
  %v5759 = vpop.f32.mrb[0].mxu0
  %v5760 = vadd.f32 %v5351, %v5759
  %v5761 = vpop.f32.mrb[0].mxu0
  %v5762 = vadd.f32 %v5353, %v5761
  %5763 = vmatprep.mubr.f32.mxu0 0.0
  %v5764 = vand.u32 %v3095, 4294901760
  %5765 = vmatmul.mubr.f32.gmra.mrb[0].mxu0 %v5764
  %v5766 = vpop.f32.mrb[0].mxu0
  %v5767 = vadd.f32 %v5358, %v5766
  %v5768 = vpop.f32.mrb[0].mxu0
  %v5769 = vadd.f32 %v5360, %v5768
  %5770 = vmatprep.mubr.f32.mxu0 0.0
  %v5771 = vand.u32 %v3098, 4294901760
  %5772 = vmatmul.mubr.f32.gmra.mrb[0].mxu0 %v5771
  %v5773 = vpop.f32.mrb[0].mxu0
  %v5774 = vadd.f32 %v5365, %v5773
  %v5775 = vpop.f32.mrb[0].mxu0
  %v5776 = vadd.f32 %v5367, %v5775
  %5777 = vmatprep.mubr.f32.mxu0 0.0
  %v5778 = vand.u32 %v3101, 4294901760
  %5779 = vmatmul.mubr.f32.gmra.mrb[0].mxu0 %v5778
  %v5780 = vpop.f32.mrb[0].mxu0
  %v5781 = vadd.f32 %v5372, %v5780
  %v5782 = vpop.f32.mrb[0].mxu0
  %v5783 = vadd.f32 %v5374, %v5782
  %5784 = vmatprep.mubr.f32.mxu0 0.0
  %v5785 = vand.u32 %v3104, 4294901760
  %5786 = vmatmul.mubr.f32.gmra.mrb[0].mxu0 %v5785
  %v5787 = vpop.f32.mrb[0].mxu0
  %v5788 = vadd.f32 %v5379, %v5787
  %v5789 = vpop.f32.mrb[0].mxu0
  %v5790 = vadd.f32 %v5381, %v5789
  %5791 = vmatprep.mubr.f32.mxu0 0.0
  %v5792 = vand.u32 %v3107, 4294901760
  %5793 = vmatmul.mubr.f32.gmra.mrb[0].mxu0 %v5792
  %v5794 = vpop.f32.mrb[0].mxu0
  %v5795 = vadd.f32 %v5386, %v5794
  %v5796 = vpop.f32.mrb[0].mxu0
  %v5797 = vadd.f32 %v5388, %v5796
  %5798 = vmatprep.mubr.f32.mxu0 0.0
  %v5799 = vand.u32 %v3110, 4294901760
  %5800 = vmatmul.mubr.f32.gmra.mrb[0].mxu0 %v5799
  %v5801 = vpop.f32.mrb[0].mxu0
  %v5802 = vadd.f32 %v5393, %v5801
  %v5803 = vpop.f32.mrb[0].mxu0
  %v5804 = vadd.f32 %v5395, %v5803
  %5805 = vmatprep.mubr.f32.mxu0 0.0
  %v5806 = vand.u32 %v3113, 4294901760
  %5807 = vmatmul.mubr.f32.gmra.mrb[0].mxu0 %v5806
  %v5808 = vpop.f32.mrb[0].mxu0
  %v5809 = vadd.f32 %v5400, %v5808
  %v5810 = vpop.f32.mrb[0].mxu0
  %v5811 = vadd.f32 %v5402, %v5810
  %5812 = vmatprep.mubr.f32.mxu0 0.0
  %v5813 = vand.u32 %v3116, 4294901760
  %5814 = vmatmul.mubr.f32.gmra.mrb[0].mxu0 %v5813
  %v5815 = vpop.f32.mrb[0].mxu0
  %v5816 = vadd.f32 %v5407, %v5815
  %v5817 = vpop.f32.mrb[0].mxu0
  %v5818 = vadd.f32 %v5409, %v5817
  %5819 = vmatprep.mubr.f32.mxu0 0.0
  %v5820 = vand.u32 %v3119, 4294901760
  %5821 = vmatmul.mubr.f32.gmra.mrb[0].mxu0 %v5820
  %v5822 = vpop.f32.mrb[0].mxu0
  %v5823 = vadd.f32 %v5414, %v5822
  %v5824 = vpop.f32.mrb[0].mxu0
  %v5825 = vadd.f32 %v5416, %v5824
  %5826 = vmatprep.mubr.f32.mxu0 0.0
  %v5827 = vand.u32 %v3122, 4294901760
  %5828 = vmatmul.mubr.f32.gmra.mrb[0].mxu0 %v5827
  %v5829 = vpop.f32.mrb[0].mxu0
  %v5830 = vadd.f32 %v5421, %v5829
  %v5831 = vpop.f32.mrb[0].mxu0
  %v5832 = vadd.f32 %v5423, %v5831
  %5833 = vmatprep.mubr.f32.mxu0 0.0
  %v5834 = vand.u32 %v3125, 4294901760
  %5835 = vmatmul.mubr.f32.gmra.mrb[0].mxu0 %v5834
  %v5836 = vpop.f32.mrb[0].mxu0
  %v5837 = vadd.f32 %v5428, %v5836
  %v5838 = vpop.f32.mrb[0].mxu0
  %v5839 = vadd.f32 %v5430, %v5838
  %5840 = vmatprep.mubr.f32.mxu0 0.0
  %v5841 = vand.u32 %v3128, 4294901760
  %5842 = vmatmul.mubr.f32.gmra.mrb[0].mxu0 %v5841
  %v5843 = vpop.f32.mrb[0].mxu0
  %v5844 = vadd.f32 %v5435, %v5843
  %v5845 = vpop.f32.mrb[0].mxu0
  %v5846 = vadd.f32 %v5437, %v5845
  %5847 = vmatprep.mubr.f32.mxu0 0.0
  %v5848 = vand.u32 %v3131, 4294901760
  %5849 = vmatmul.mubr.f32.gmra.mrb[0].mxu0 %v5848
  %v5850 = vpop.f32.mrb[0].mxu0
  %v5851 = vadd.f32 %v5442, %v5850
  %v5852 = vpop.f32.mrb[0].mxu0
  %v5853 = vadd.f32 %v5444, %v5852
  %5854 = vmatprep.mubr.f32.mxu0 0.0
  %v5855 = vand.u32 %v3134, 4294901760
  %5856 = vmatmul.mubr.f32.gmra.mrb[0].mxu0 %v5855
  %v5857 = vpop.f32.mrb[0].mxu0
  %v5858 = vadd.f32 %v5449, %v5857
  %v5859 = vpop.f32.mrb[0].mxu0
  %v5860 = vadd.f32 %v5451, %v5859
  %5861 = vmatprep.mubr.f32.mxu0 0.0
  %v5862 = vand.u32 %v3137, 4294901760
  %5863 = vmatmul.mubr.f32.gmra.mrb[0].mxu0 %v5862
  %v5864 = vpop.f32.mrb[0].mxu0
  %v5865 = vadd.f32 %v5456, %v5864
  %v5866 = vpop.f32.mrb[0].mxu0
  %v5867 = vadd.f32 %v5458, %v5866
  %5868 = vmatprep.mubr.f32.mxu0 0.0
  %v5869 = vand.u32 %v3140, 4294901760
  %5870 = vmatmul.mubr.f32.gmra.mrb[0].mxu0 %v5869
  %v5871 = vpop.f32.mrb[0].mxu0
  %v5872 = vadd.f32 %v5463, %v5871
  %v5873 = vpop.f32.mrb[0].mxu0
  %v5874 = vadd.f32 %v5465, %v5873
  %5875 = vmatprep.mubr.f32.mxu0 0.0
  %v5876 = vand.u32 %v3143, 4294901760
  %5877 = vmatmul.mubr.f32.gmra.mrb[0].mxu0 %v5876
  %v5878 = vpop.f32.mrb[0].mxu0
  %v5879 = vadd.f32 %v5470, %v5878
  %v5880 = vpop.f32.mrb[0].mxu0
  %v5881 = vadd.f32 %v5472, %v5880
  %5882 = vmatprep.mubr.f32.mxu0 0.0
  %v5883 = vand.u32 %v3146, 4294901760
  %5884 = vmatmul.mubr.f32.gmra.mrb[0].mxu0 %v5883
  %v5885 = vpop.f32.mrb[0].mxu0
  %v5886 = vadd.f32 %v5477, %v5885
  %v5887 = vpop.f32.mrb[0].mxu0
  %v5888 = vadd.f32 %v5479, %v5887
  %5889 = vmatprep.mubr.f32.mxu0 0.0
  %v5890 = vand.u32 %v3149, 4294901760
  %5891 = vmatmul.mubr.f32.gmra.mrb[0].mxu0 %v5890
  %v5892 = vpop.f32.mrb[0].mxu0
  %v5893 = vadd.f32 %v5484, %v5892
  %v5894 = vpop.f32.mrb[0].mxu0
  %v5895 = vadd.f32 %v5486, %v5894
  %5896 = vmatprep.mubr.f32.mxu0 0.0
  %v5897 = vand.u32 %v3152, 4294901760
  %5898 = vmatmul.mubr.f32.gmra.mrb[0].mxu0 %v5897
  %v5899 = vpop.f32.mrb[0].mxu0
  %v5900 = vadd.f32 %v5491, %v5899
  %v5901 = vpop.f32.mrb[0].mxu0
  %v5902 = vadd.f32 %v5493, %v5901
  %5903 = vmatprep.mubr.f32.mxu0 0.0
  %v5904 = vand.u32 %v3155, 4294901760
  %5905 = vmatmul.mubr.f32.gmra.mrb[0].mxu0 %v5904
  %v5906 = vpop.f32.mrb[0].mxu0
  %v5907 = vadd.f32 %v5498, %v5906
  %v5908 = vpop.f32.mrb[0].mxu0
  %v5909 = vadd.f32 %v5500, %v5908
  %5910 = vmatprep.mubr.f32.mxu0 0.0
  %v5911 = vand.u32 %v3158, 4294901760
  %5912 = vmatmul.mubr.f32.gmra.mrb[0].mxu0 %v5911
  %v5913 = vpop.f32.mrb[0].mxu0
  %v5914 = vadd.f32 %v5505, %v5913
  %v5915 = vpop.f32.mrb[0].mxu0
  %v5916 = vadd.f32 %v5507, %v5915
  %5917 = vmatprep.mubr.f32.mxu0 0.0
  %v5918 = vand.u32 %v3161, 4294901760
  %5919 = vmatmul.mubr.f32.gmra.mrb[0].mxu0 %v5918
  %v5920 = vpop.f32.mrb[0].mxu0
  %v5921 = vadd.f32 %v5512, %v5920
  %v5922 = vpop.f32.mrb[0].mxu0
  %v5923 = vadd.f32 %v5514, %v5922
  %5924 = vmatprep.mubr.f32.mxu0 0.0
  %v5925 = vand.u32 %v3164, 4294901760
  %5926 = vmatmul.mubr.f32.gmra.mrb[0].mxu0 %v5925
  %v5927 = vpop.f32.mrb[0].mxu0
  %v5928 = vadd.f32 %v5519, %v5927
  %v5929 = vpop.f32.mrb[0].mxu0
  %v5930 = vadd.f32 %v5521, %v5929
  %5931 = vmatprep.mubr.f32.mxu0 0.0
  %v5932 = vand.u32 %v3167, 4294901760
  %5933 = vmatmul.mubr.f32.gmra.mrb[0].mxu0 %v5932
  %v5934 = vpop.f32.mrb[0].mxu0
  %v5935 = vadd.f32 %v5526, %v5934
  %v5936 = vpop.f32.mrb[0].mxu0
  %v5937 = vadd.f32 %v5528, %v5936
  %5938 = vmatprep.mubr.f32.mxu0 0.0
  %v5939 = vand.u32 %v3170, 4294901760
  %5940 = vmatmul.mubr.f32.gmra.mrb[0].mxu0 %v5939
  %v5941 = vpop.f32.mrb[0].mxu0
  %v5942 = vadd.f32 %v5533, %v5941
  %v5943 = vpop.f32.mrb[0].mxu0
  %v5944 = vadd.f32 %v5535, %v5943
  %5945 = vmatprep.mubr.f32.mxu0 0.0
  %v5946 = vand.u32 %v3173, 4294901760
  %5947 = vmatmul.mubr.f32.gmra.mrb[0].mxu0 %v5946
  %v5948 = vpop.f32.mrb[0].mxu0
  %v5949 = vadd.f32 %v5540, %v5948
  %v5950 = vpop.f32.mrb[0].mxu0
  %v5951 = vadd.f32 %v5542, %v5950
  %5952 = vmatprep.mubr.f32.mxu0 0.0
  %v5953 = vand.u32 %v3176, 4294901760
  %5954 = vmatmul.mubr.f32.gmra.mrb[0].mxu0 %v5953
  %v5955 = vpop.f32.mrb[0].mxu0
  %v5956 = vadd.f32 %v5547, %v5955
  %v5957 = vpop.f32.mrb[0].mxu0
  %v5958 = vadd.f32 %v5549, %v5957
  %5959 = vmatprep.mubr.f32.mxu0 0.0
  %v5960 = vand.u32 %v3179, 4294901760
  %5961 = vmatmul.mubr.f32.gmra.mrb[0].mxu0 %v5960
  %v5962 = vpop.f32.mrb[0].mxu0
  %v5963 = vadd.f32 %v5554, %v5962
  %v5964 = vpop.f32.mrb[0].mxu0
  %v5965 = vadd.f32 %v5556, %v5964
  %5966 = vmatprep.mubr.f32.mxu0 0.0
  %v5967 = vand.u32 %v3182, 4294901760
  %5968 = vmatmul.mubr.f32.gmra.mrb[0].mxu0 %v5967
  %v5969 = vpop.f32.mrb[0].mxu0
  %v5970 = vadd.f32 %v5561, %v5969
  %v5971 = vpop.f32.mrb[0].mxu0
  %v5972 = vadd.f32 %v5563, %v5971
  %5973 = vmatprep.mubr.f32.mxu0 0.0
  %v5974 = vand.u32 %v3185, 4294901760
  %5975 = vmatmul.mubr.f32.gmra.mrb[0].mxu0 %v5974
  %v5976 = vpop.f32.mrb[0].mxu0
  %v5977 = vadd.f32 %v5568, %v5976
  %v5978 = vpop.f32.mrb[0].mxu0
  %v5979 = vadd.f32 %v5570, %v5978
  %5980 = vmatprep.mubr.f32.mxu0 0.0
  %v5981 = vand.u32 %v3188, 4294901760
  %5982 = vmatmul.mubr.f32.gmra.mrb[0].mxu0 %v5981
  %v5983 = vpop.f32.mrb[0].mxu0
  %v5984 = vadd.f32 %v5575, %v5983
  %v5985 = vpop.f32.mrb[0].mxu0
  %v5986 = vadd.f32 %v5577, %v5985
  %5987 = vmatprep.mubr.f32.mxu0 0.0
  %v5988 = vand.u32 %v3191, 4294901760
  %5989 = vmatmul.mubr.f32.gmra.mrb[0].mxu0 %v5988
  %v5990 = vpop.f32.mrb[0].mxu0
  %v5991 = vadd.f32 %v5582, %v5990
  %v5992 = vpop.f32.mrb[0].mxu0
  %v5993 = vadd.f32 %v5584, %v5992
  %5994 = vmatprep.mubr.f32.mxu0 0.0
  %v5995 = vand.u32 %v3194, 4294901760
  %5996 = vmatmul.mubr.f32.gmra.mrb[0].mxu0 %v5995
  %v5997 = vpop.f32.mrb[0].mxu0
  %v5998 = vadd.f32 %v5589, %v5997
  %v5999 = vpop.f32.mrb[0].mxu0
  %v6000 = vadd.f32 %v5591, %v5999
  %6001 = vmatprep.mubr.f32.mxu0 0.0
  %v6002 = vand.u32 %v3197, 4294901760
  %6003 = vmatmul.mubr.f32.gmra.mrb[0].mxu0 %v6002
  %v6004 = vpop.f32.mrb[0].mxu0
  %v6005 = vadd.f32 %v5596, %v6004
  %v6006 = vpop.f32.mrb[0].mxu0
  %v6007 = vadd.f32 %v5598, %v6006
  %6008 = vmatprep.mubr.f32.mxu0 0.0
  %v6009 = vand.u32 %v3200, 4294901760
  %6010 = vmatmul.mubr.f32.gmra.mrb[0].mxu0 %v6009
  %v6011 = vpop.f32.mrb[0].mxu0
  %v6012 = vadd.f32 %v5603, %v6011
  %v6013 = vpop.f32.mrb[0].mxu0
  %v6014 = vadd.f32 %v5605, %v6013
  %6015 = vmatprep.mubr.f32.mxu0 0.0
  %v6016 = vand.u32 %v3203, 4294901760
  %6017 = vmatmul.mubr.f32.gmra.mrb[0].mxu0 %v6016
  %v6018 = vpop.f32.mrb[0].mxu0
  %v6019 = vadd.f32 %v5610, %v6018
  %v6020 = vpop.f32.mrb[0].mxu0
  %v6021 = vadd.f32 %v5612, %v6020
  %6022 = vmatprep.mubr.f32.mxu0 0.0
  %v6023 = vand.u32 %v3206, 4294901760
  %6024 = vmatmul.mubr.f32.gmra.mrb[0].mxu0 %v6023
  %v6025 = vpop.f32.mrb[0].mxu0
  %v6026 = vadd.f32 %v5617, %v6025
  %v6027 = vpop.f32.mrb[0].mxu0
  %v6028 = vadd.f32 %v5619, %v6027
  %6029 = vmatprep.mubr.f32.mxu0 0.0
  %v6030 = vand.u32 %v3209, 4294901760
  %6031 = vmatmul.mubr.f32.gmra.mrb[0].mxu0 %v6030
  %v6032 = vpop.f32.mrb[0].mxu0
  %v6033 = vadd.f32 %v5624, %v6032
  %v6034 = vpop.f32.mrb[0].mxu0
  %v6035 = vadd.f32 %v5626, %v6034
  %6036 = vmatprep.mubr.f32.mxu0 0.0
  %v6037 = vand.u32 %v3212, 4294901760
  %6038 = vmatmul.mubr.f32.gmra.mrb[0].mxu0 %v6037
  %v6039 = vpop.f32.mrb[0].mxu0
  %v6040 = vadd.f32 %v5631, %v6039
  %v6041 = vpop.f32.mrb[0].mxu0
  %v6042 = vadd.f32 %v5633, %v6041
  %6043 = vmatprep.mubr.f32.mxu0 0.0
  %v6044 = vand.u32 %v3215, 4294901760
  %6045 = vmatmul.mubr.f32.gmra.mrb[0].mxu0 %v6044
  %v6046 = vpop.f32.mrb[0].mxu0
  %v6047 = vadd.f32 %v5638, %v6046
  %v6048 = vpop.f32.mrb[0].mxu0
  %v6049 = vadd.f32 %v5640, %v6048
  %6050 = vmatprep.mubr.f32.mxu0 0.0
  %v6051 = vand.u32 %v3218, 4294901760
  %6052 = vmatmul.mubr.f32.gmra.mrb[0].mxu0 %v6051
  %v6053 = vpop.f32.mrb[0].mxu0
  %v6054 = vadd.f32 %v5645, %v6053
  %v6055 = vpop.f32.mrb[0].mxu0
  %v6056 = vadd.f32 %v5647, %v6055
  %6057 = vmatprep.mubr.f32.mxu0 0.0
  %v6058 = vand.u32 %v3221, 4294901760
  %6059 = vmatmul.mubr.f32.gmra.mrb[0].mxu0 %v6058
  %v6060 = vpop.f32.mrb[0].mxu0
  %v6061 = vadd.f32 %v5652, %v6060
  %v6062 = vpop.f32.mrb[0].mxu0
  %v6063 = vadd.f32 %v5654, %v6062
  %6064 = vmatprep.mubr.f32.mxu0 0.0
  %v6065 = vand.u32 %v3224, 4294901760
  %6066 = vmatmul.mubr.f32.gmra.mrb[0].mxu0 %v6065
  %v6067 = vpop.f32.mrb[0].mxu0
  %v6068 = vadd.f32 %v5659, %v6067
  %v6069 = vpop.f32.mrb[0].mxu0
  %v6070 = vadd.f32 %v5661, %v6069
  %6071 = vdwg.mxu0
  %v6072 = vld [vmem:[%s4] sm:$0x3]
  %v6074 = vlaneseq
  %v6075 = vshrl.u32 %v6074, 7
  %v6076 = vsub.s32 0, %v6075
  %v6077 = vrot.slane %v6072, %v6076
  %v6078 = vlaneseq
  %v6079 = vshrl.u32 %v6078, 7
  %v6080 = vsub.s32 1, %v6079
  %v6081 = vrot.slane %v6072, %v6080
  %v6084 = vadd.f32 %v5739, %v6077
  %v6085 = vadd.f32 %v5741, %v6081
  %v6086 = vadd.f32 %v5746, %v6077
  %v6087 = vadd.f32 %v5748, %v6081
  %v6088 = vadd.f32 %v5753, %v6077
  %v6089 = vadd.f32 %v5755, %v6081
  %v6090 = vadd.f32 %v5760, %v6077
  %v6091 = vadd.f32 %v5762, %v6081
  %v6092 = vadd.f32 %v5767, %v6077
  %v6093 = vadd.f32 %v5769, %v6081
  %v6094 = vadd.f32 %v5774, %v6077
  %v6095 = vadd.f32 %v5776, %v6081
  %v6096 = vadd.f32 %v5781, %v6077
  %v6097 = vadd.f32 %v5783, %v6081
  %v6098 = vadd.f32 %v5788, %v6077
  %v6099 = vadd.f32 %v5790, %v6081
  %v6100 = vadd.f32 %v5795, %v6077
  %v6101 = vadd.f32 %v5797, %v6081
  %v6102 = vadd.f32 %v5802, %v6077
  %v6103 = vadd.f32 %v5804, %v6081
  %v6104 = vadd.f32 %v5809, %v6077
  %v6105 = vadd.f32 %v5811, %v6081
  %v6106 = vadd.f32 %v5816, %v6077
  %v6107 = vadd.f32 %v5818, %v6081
  %v6108 = vadd.f32 %v5823, %v6077
  %v6109 = vadd.f32 %v5825, %v6081
  %v6110 = vadd.f32 %v5830, %v6077
  %v6111 = vadd.f32 %v5832, %v6081
  %v6112 = vadd.f32 %v5837, %v6077
  %v6113 = vadd.f32 %v5839, %v6081
  %v6114 = vadd.f32 %v5844, %v6077
  %v6115 = vadd.f32 %v5846, %v6081
  %v6116 = vadd.f32 %v5851, %v6077
  %v6117 = vadd.f32 %v5853, %v6081
  %v6118 = vadd.f32 %v5858, %v6077
  %v6119 = vadd.f32 %v5860, %v6081
  %v6120 = vadd.f32 %v5865, %v6077
  %v6121 = vadd.f32 %v5867, %v6081
  %v6122 = vadd.f32 %v5872, %v6077
  %v6123 = vadd.f32 %v5874, %v6081
  %v6124 = vadd.f32 %v5879, %v6077
  %v6125 = vadd.f32 %v5881, %v6081
  %v6126 = vadd.f32 %v5886, %v6077
  %v6127 = vadd.f32 %v5888, %v6081
  %v6128 = vadd.f32 %v5893, %v6077
  %v6129 = vadd.f32 %v5895, %v6081
  %v6130 = vadd.f32 %v5900, %v6077
  %v6131 = vadd.f32 %v5902, %v6081
  %v6132 = vadd.f32 %v5907, %v6077
  %v6133 = vadd.f32 %v5909, %v6081
  %v6134 = vadd.f32 %v5914, %v6077
  %v6135 = vadd.f32 %v5916, %v6081
  %v6136 = vadd.f32 %v5921, %v6077
  %v6137 = vadd.f32 %v5923, %v6081
  %v6138 = vadd.f32 %v5928, %v6077
  %v6139 = vadd.f32 %v5930, %v6081
  %v6140 = vadd.f32 %v5935, %v6077
  %v6141 = vadd.f32 %v5937, %v6081
  %v6142 = vadd.f32 %v5942, %v6077
  %v6143 = vadd.f32 %v5944, %v6081
  %v6144 = vadd.f32 %v5949, %v6077
  %v6145 = vadd.f32 %v5951, %v6081
  %v6146 = vadd.f32 %v5956, %v6077
  %v6147 = vadd.f32 %v5958, %v6081
  %v6148 = vadd.f32 %v5963, %v6077
  %v6149 = vadd.f32 %v5965, %v6081
  %v6150 = vadd.f32 %v5970, %v6077
  %v6151 = vadd.f32 %v5972, %v6081
  %v6152 = vadd.f32 %v5977, %v6077
  %v6153 = vadd.f32 %v5979, %v6081
  %v6154 = vadd.f32 %v5984, %v6077
  %v6155 = vadd.f32 %v5986, %v6081
  %v6156 = vadd.f32 %v5991, %v6077
  %v6157 = vadd.f32 %v5993, %v6081
  %v6158 = vadd.f32 %v5998, %v6077
  %v6159 = vadd.f32 %v6000, %v6081
  %v6160 = vadd.f32 %v6005, %v6077
  %v6161 = vadd.f32 %v6007, %v6081
  %v6162 = vadd.f32 %v6012, %v6077
  %v6163 = vadd.f32 %v6014, %v6081
  %v6164 = vadd.f32 %v6019, %v6077
  %v6165 = vadd.f32 %v6021, %v6081
  %v6166 = vadd.f32 %v6026, %v6077
  %v6167 = vadd.f32 %v6028, %v6081
  %v6168 = vadd.f32 %v6033, %v6077
  %v6169 = vadd.f32 %v6035, %v6081
  %v6170 = vadd.f32 %v6040, %v6077
  %v6171 = vadd.f32 %v6042, %v6081
  %v6172 = vadd.f32 %v6047, %v6077
  %v6173 = vadd.f32 %v6049, %v6081
  %v6174 = vadd.f32 %v6054, %v6077
  %v6175 = vadd.f32 %v6056, %v6081
  %v6176 = vadd.f32 %v6061, %v6077
  %v6177 = vadd.f32 %v6063, %v6081
  %v6178 = vadd.f32 %v6068, %v6077
  %v6179 = vadd.f32 %v6070, %v6081
  %v6180 = vmax.f32 %v6084, 0.0
  %v6181 = vmax.f32 %v6085, 0.0
  %v6182 = vmax.f32 %v6086, 0.0
  %v6183 = vmax.f32 %v6087, 0.0
  %v6184 = vmax.f32 %v6088, 0.0
  %v6185 = vmax.f32 %v6089, 0.0
  %v6186 = vmax.f32 %v6090, 0.0
  %v6187 = vmax.f32 %v6091, 0.0
  %v6188 = vmax.f32 %v6092, 0.0
  %v6189 = vmax.f32 %v6093, 0.0
  %v6190 = vmax.f32 %v6094, 0.0
  %v6191 = vmax.f32 %v6095, 0.0
  %v6192 = vmax.f32 %v6096, 0.0
  %v6193 = vmax.f32 %v6097, 0.0
  %v6194 = vmax.f32 %v6098, 0.0
  %v6195 = vmax.f32 %v6099, 0.0
  %v6196 = vmax.f32 %v6100, 0.0
  %v6197 = vmax.f32 %v6101, 0.0
  %v6198 = vmax.f32 %v6102, 0.0
  %v6199 = vmax.f32 %v6103, 0.0
  %v6200 = vmax.f32 %v6104, 0.0
  %v6201 = vmax.f32 %v6105, 0.0
  %v6202 = vmax.f32 %v6106, 0.0
  %v6203 = vmax.f32 %v6107, 0.0
  %v6204 = vmax.f32 %v6108, 0.0
  %v6205 = vmax.f32 %v6109, 0.0
  %v6206 = vmax.f32 %v6110, 0.0
  %v6207 = vmax.f32 %v6111, 0.0
  %v6208 = vmax.f32 %v6112, 0.0
  %v6209 = vmax.f32 %v6113, 0.0
  %v6210 = vmax.f32 %v6114, 0.0
  %v6211 = vmax.f32 %v6115, 0.0
  %v6212 = vmax.f32 %v6116, 0.0
  %v6213 = vmax.f32 %v6117, 0.0
  %v6214 = vmax.f32 %v6118, 0.0
  %v6215 = vmax.f32 %v6119, 0.0
  %v6216 = vmax.f32 %v6120, 0.0
  %v6217 = vmax.f32 %v6121, 0.0
  %v6218 = vmax.f32 %v6122, 0.0
  %v6219 = vmax.f32 %v6123, 0.0
  %v6220 = vmax.f32 %v6124, 0.0
  %v6221 = vmax.f32 %v6125, 0.0
  %v6222 = vmax.f32 %v6126, 0.0
  %v6223 = vmax.f32 %v6127, 0.0
  %v6224 = vmax.f32 %v6128, 0.0
  %v6225 = vmax.f32 %v6129, 0.0
  %v6226 = vmax.f32 %v6130, 0.0
  %v6227 = vmax.f32 %v6131, 0.0
  %v6228 = vmax.f32 %v6132, 0.0
  %v6229 = vmax.f32 %v6133, 0.0
  %v6230 = vmax.f32 %v6134, 0.0
  %v6231 = vmax.f32 %v6135, 0.0
  %v6232 = vmax.f32 %v6136, 0.0
  %v6233 = vmax.f32 %v6137, 0.0
  %v6234 = vmax.f32 %v6138, 0.0
  %v6235 = vmax.f32 %v6139, 0.0
  %v6236 = vmax.f32 %v6140, 0.0
  %v6237 = vmax.f32 %v6141, 0.0
  %v6238 = vmax.f32 %v6142, 0.0
  %v6239 = vmax.f32 %v6143, 0.0
  %v6240 = vmax.f32 %v6144, 0.0
  %v6241 = vmax.f32 %v6145, 0.0
  %v6242 = vmax.f32 %v6146, 0.0
  %v6243 = vmax.f32 %v6147, 0.0
  %v6244 = vmax.f32 %v6148, 0.0
  %v6245 = vmax.f32 %v6149, 0.0
  %v6246 = vmax.f32 %v6150, 0.0
  %v6247 = vmax.f32 %v6151, 0.0
  %v6248 = vmax.f32 %v6152, 0.0
  %v6249 = vmax.f32 %v6153, 0.0
  %v6250 = vmax.f32 %v6154, 0.0
  %v6251 = vmax.f32 %v6155, 0.0
  %v6252 = vmax.f32 %v6156, 0.0
  %v6253 = vmax.f32 %v6157, 0.0
  %v6254 = vmax.f32 %v6158, 0.0
  %v6255 = vmax.f32 %v6159, 0.0
  %v6256 = vmax.f32 %v6160, 0.0
  %v6257 = vmax.f32 %v6161, 0.0
  %v6258 = vmax.f32 %v6162, 0.0
  %v6259 = vmax.f32 %v6163, 0.0
  %v6260 = vmax.f32 %v6164, 0.0
  %v6261 = vmax.f32 %v6165, 0.0
  %v6262 = vmax.f32 %v6166, 0.0
  %v6263 = vmax.f32 %v6167, 0.0
  %v6264 = vmax.f32 %v6168, 0.0
  %v6265 = vmax.f32 %v6169, 0.0
  %v6266 = vmax.f32 %v6170, 0.0
  %v6267 = vmax.f32 %v6171, 0.0
  %v6268 = vmax.f32 %v6172, 0.0
  %v6269 = vmax.f32 %v6173, 0.0
  %v6270 = vmax.f32 %v6174, 0.0
  %v6271 = vmax.f32 %v6175, 0.0
  %v6272 = vmax.f32 %v6176, 0.0
  %v6273 = vmax.f32 %v6177, 0.0
  %v6274 = vmax.f32 %v6178, 0.0
  %v6275 = vmax.f32 %v6179, 0.0
  %v6276 = vld [vmem:[%s5] sm:$0xff]
  %v6277 = vld [vmem:[%s5 + $0x8] sm:$0xff]
  %v6278 = vld [vmem:[%s5 + $0x10] sm:$0xff]
  %v6279 = vld [vmem:[%s5 + $0x18] sm:$0xff]
  %v6280 = vld [vmem:[%s5 + $0x20] sm:$0xff]
  %v6281 = vld [vmem:[%s5 + $0x28] sm:$0xff]
  %v6282 = vld [vmem:[%s5 + $0x30] sm:$0xff]
  %v6283 = vld [vmem:[%s5 + $0x38] sm:$0xff]
  %v6284 = vld [vmem:[%s5 + $0x40] sm:$0xff]
  %v6285 = vld [vmem:[%s5 + $0x48] sm:$0xff]
  %v6286 = vld [vmem:[%s5 + $0x50] sm:$0xff]
  %v6287 = vld [vmem:[%s5 + $0x58] sm:$0xff]
  %v6288 = vld [vmem:[%s5 + $0x60] sm:$0xff]
  %v6289 = vld [vmem:[%s5 + $0x68] sm:$0xff]
  %v6290 = vld [vmem:[%s5 + $0x70] sm:$0xff]
  %v6291 = vld [vmem:[%s5 + $0x78] sm:$0xff]
  %v6292 = vld [vmem:[%s5 + $0x80] sm:$0xff]
  %v6293 = vld [vmem:[%s5 + $0x88] sm:$0xff]
  %v6294 = vld [vmem:[%s5 + $0x90] sm:$0xff]
  %v6295 = vld [vmem:[%s5 + $0x98] sm:$0xff]
  %v6296 = vld [vmem:[%s5 + $0xa0] sm:$0xff]
  %v6297 = vld [vmem:[%s5 + $0xa8] sm:$0xff]
  %v6298 = vld [vmem:[%s5 + $0xb0] sm:$0xff]
  %v6299 = vld [vmem:[%s5 + $0xb8] sm:$0xff]
  %v6300 = vld [vmem:[%s5 + $0xc0] sm:$0xff]
  %v6301 = vld [vmem:[%s5 + $0xc8] sm:$0xff]
  %v6302 = vld [vmem:[%s5 + $0xd0] sm:$0xff]
  %v6303 = vld [vmem:[%s5 + $0xd8] sm:$0xff]
  %v6304 = vld [vmem:[%s5 + $0xe0] sm:$0xff]
  %v6305 = vld [vmem:[%s5 + $0xe8] sm:$0xff]
  %v6306 = vld [vmem:[%s5 + $0xf0] sm:$0xff]
  %v6307 = vld [vmem:[%s5 + $0xf8] sm:$0xff]
  %v6308 = vld [vmem:[%s5 + $0x100] sm:$0xff]
  %v6309 = vld [vmem:[%s5 + $0x108] sm:$0xff]
  %v6310 = vld [vmem:[%s5 + $0x110] sm:$0xff]
  %v6311 = vld [vmem:[%s5 + $0x118] sm:$0xff]
  %v6312 = vld [vmem:[%s5 + $0x120] sm:$0xff]
  %v6313 = vld [vmem:[%s5 + $0x128] sm:$0xff]
  %v6314 = vld [vmem:[%s5 + $0x130] sm:$0xff]
  %v6315 = vld [vmem:[%s5 + $0x138] sm:$0xff]
  %v6316 = vld [vmem:[%s5 + $0x140] sm:$0xff]
  %v6317 = vld [vmem:[%s5 + $0x148] sm:$0xff]
  %v6318 = vld [vmem:[%s5 + $0x150] sm:$0xff]
  %v6319 = vld [vmem:[%s5 + $0x158] sm:$0xff]
  %v6320 = vld [vmem:[%s5 + $0x160] sm:$0xff]
  %v6321 = vld [vmem:[%s5 + $0x168] sm:$0xff]
  %v6322 = vld [vmem:[%s5 + $0x170] sm:$0xff]
  %v6323 = vld [vmem:[%s5 + $0x178] sm:$0xff]
  %v6324 = vld [vmem:[%s5 + $0x180] sm:$0xff]
  %v6325 = vld [vmem:[%s5 + $0x188] sm:$0xff]
  %v6326 = vld [vmem:[%s5 + $0x190] sm:$0xff]
  %v6327 = vld [vmem:[%s5 + $0x198] sm:$0xff]
  %v6328 = vld [vmem:[%s5 + $0x1a0] sm:$0xff]
  %v6329 = vld [vmem:[%s5 + $0x1a8] sm:$0xff]
  %v6330 = vld [vmem:[%s5 + $0x1b0] sm:$0xff]
  %v6331 = vld [vmem:[%s5 + $0x1b8] sm:$0xff]
  %v6332 = vld [vmem:[%s5 + $0x1c0] sm:$0xff]
  %v6333 = vld [vmem:[%s5 + $0x1c8] sm:$0xff]
  %v6334 = vld [vmem:[%s5 + $0x1d0] sm:$0xff]
  %v6335 = vld [vmem:[%s5 + $0x1d8] sm:$0xff]
  %v6336 = vld [vmem:[%s5 + $0x1e0] sm:$0xff]
  %v6337 = vld [vmem:[%s5 + $0x1e8] sm:$0xff]
  %v6338 = vld [vmem:[%s5 + $0x1f0] sm:$0xff]
  %v6339 = vld [vmem:[%s5 + $0x1f8] sm:$0xff]
  %v6340 = vld [vmem:[%s6] sm:$0x3]
  %v6342 = vlaneseq
  %v6343 = vshrl.u32 %v6342, 7
  %v6344 = vsub.s32 0, %v6343
  %v6345 = vrot.slane %v6340, %v6344
  %v6346 = vlaneseq
  %v6347 = vshrl.u32 %v6346, 7
  %v6348 = vsub.s32 1, %v6347
  %v6349 = vrot.slane %v6340, %v6348
  %v6352 = vand.u32 %v6277, 4294901760
  %6353 = vmatprep.subr.mxu0 %v6352
  %v6354 = vand.u32 %v6276, 4294901760
  %6355 = vmatpush1.msra.mxu0 %v6354
  %v6356 = vand.u32 %v6279, 4294901760
  %6357 = vmatprep.subr.mxu0 %v6356
  %v6358 = vand.u32 %v6278, 4294901760
  %6359 = vmatpush1.msra.mxu0 %v6358
  %v6360 = vand.u32 %v6281, 4294901760
  %6361 = vmatprep.subr.mxu0 %v6360
  %v6362 = vand.u32 %v6280, 4294901760
  %6363 = vmatpush1.msra.mxu0 %v6362
  %v6364 = vand.u32 %v6283, 4294901760
  %6365 = vmatprep.subr.mxu0 %v6364
  %v6366 = vand.u32 %v6282, 4294901760
  %6367 = vmatpush1.msra.mxu0 %v6366
  %v6368 = vand.u32 %v6285, 4294901760
  %6369 = vmatprep.subr.mxu0 %v6368
  %v6370 = vand.u32 %v6284, 4294901760
  %6371 = vmatpush1.msra.mxu0 %v6370
  %v6372 = vand.u32 %v6287, 4294901760
  %6373 = vmatprep.subr.mxu0 %v6372
  %v6374 = vand.u32 %v6286, 4294901760
  %6375 = vmatpush1.msra.mxu0 %v6374
  %v6376 = vand.u32 %v6289, 4294901760
  %6377 = vmatprep.subr.mxu0 %v6376
  %v6378 = vand.u32 %v6288, 4294901760
  %6379 = vmatpush1.msra.mxu0 %v6378
  %v6380 = vand.u32 %v6291, 4294901760
  %6381 = vmatprep.subr.mxu0 %v6380
  %v6382 = vand.u32 %v6290, 4294901760
  %6383 = vmatpush1.msra.mxu0 %v6382
  %v6384 = vand.u32 %v6293, 4294901760
  %6385 = vmatprep.subr.mxu0 %v6384
  %v6386 = vand.u32 %v6292, 4294901760
  %6387 = vmatpush1.msra.mxu0 %v6386
  %v6388 = vand.u32 %v6295, 4294901760
  %6389 = vmatprep.subr.mxu0 %v6388
  %v6390 = vand.u32 %v6294, 4294901760
  %6391 = vmatpush1.msra.mxu0 %v6390
  %v6392 = vand.u32 %v6297, 4294901760
  %6393 = vmatprep.subr.mxu0 %v6392
  %v6394 = vand.u32 %v6296, 4294901760
  %6395 = vmatpush1.msra.mxu0 %v6394
  %v6396 = vand.u32 %v6299, 4294901760
  %6397 = vmatprep.subr.mxu0 %v6396
  %v6398 = vand.u32 %v6298, 4294901760
  %6399 = vmatpush1.msra.mxu0 %v6398
  %v6400 = vand.u32 %v6301, 4294901760
  %6401 = vmatprep.subr.mxu0 %v6400
  %v6402 = vand.u32 %v6300, 4294901760
  %6403 = vmatpush1.msra.mxu0 %v6402
  %v6404 = vand.u32 %v6303, 4294901760
  %6405 = vmatprep.subr.mxu0 %v6404
  %v6406 = vand.u32 %v6302, 4294901760
  %6407 = vmatpush1.msra.mxu0 %v6406
  %v6408 = vand.u32 %v6305, 4294901760
  %6409 = vmatprep.subr.mxu0 %v6408
  %v6410 = vand.u32 %v6304, 4294901760
  %6411 = vmatpush1.msra.mxu0 %v6410
  %v6412 = vand.u32 %v6307, 4294901760
  %6413 = vmatprep.subr.mxu0 %v6412
  %v6414 = vand.u32 %v6306, 4294901760
  %6415 = vmatpush1.msra.mxu0 %v6414
  %v6416 = vand.u32 %v6309, 4294901760
  %6417 = vmatprep.subr.mxu0 %v6416
  %v6418 = vand.u32 %v6308, 4294901760
  %6419 = vmatpush1.msra.mxu0 %v6418
  %v6420 = vand.u32 %v6311, 4294901760
  %6421 = vmatprep.subr.mxu0 %v6420
  %v6422 = vand.u32 %v6310, 4294901760
  %6423 = vmatpush1.msra.mxu0 %v6422
  %v6424 = vand.u32 %v6313, 4294901760
  %6425 = vmatprep.subr.mxu0 %v6424
  %v6426 = vand.u32 %v6312, 4294901760
  %6427 = vmatpush1.msra.mxu0 %v6426
  %v6428 = vand.u32 %v6315, 4294901760
  %6429 = vmatprep.subr.mxu0 %v6428
  %v6430 = vand.u32 %v6314, 4294901760
  %6431 = vmatpush1.msra.mxu0 %v6430
  %v6432 = vand.u32 %v6317, 4294901760
  %6433 = vmatprep.subr.mxu0 %v6432
  %v6434 = vand.u32 %v6316, 4294901760
  %6435 = vmatpush1.msra.mxu0 %v6434
  %v6436 = vand.u32 %v6319, 4294901760
  %6437 = vmatprep.subr.mxu0 %v6436
  %v6438 = vand.u32 %v6318, 4294901760
  %6439 = vmatpush1.msra.mxu0 %v6438
  %v6440 = vand.u32 %v6321, 4294901760
  %6441 = vmatprep.subr.mxu0 %v6440
  %v6442 = vand.u32 %v6320, 4294901760
  %6443 = vmatpush1.msra.mxu0 %v6442
  %v6444 = vand.u32 %v6323, 4294901760
  %6445 = vmatprep.subr.mxu0 %v6444
  %v6446 = vand.u32 %v6322, 4294901760
  %6447 = vmatpush1.msra.mxu0 %v6446
  %v6448 = vand.u32 %v6325, 4294901760
  %6449 = vmatprep.subr.mxu0 %v6448
  %v6450 = vand.u32 %v6324, 4294901760
  %6451 = vmatpush1.msra.mxu0 %v6450
  %v6452 = vand.u32 %v6327, 4294901760
  %6453 = vmatprep.subr.mxu0 %v6452
  %v6454 = vand.u32 %v6326, 4294901760
  %6455 = vmatpush1.msra.mxu0 %v6454
  %v6456 = vand.u32 %v6329, 4294901760
  %6457 = vmatprep.subr.mxu0 %v6456
  %v6458 = vand.u32 %v6328, 4294901760
  %6459 = vmatpush1.msra.mxu0 %v6458
  %v6460 = vand.u32 %v6331, 4294901760
  %6461 = vmatprep.subr.mxu0 %v6460
  %v6462 = vand.u32 %v6330, 4294901760
  %6463 = vmatpush1.msra.mxu0 %v6462
  %v6464 = vand.u32 %v6333, 4294901760
  %6465 = vmatprep.subr.mxu0 %v6464
  %v6466 = vand.u32 %v6332, 4294901760
  %6467 = vmatpush1.msra.mxu0 %v6466
  %v6468 = vand.u32 %v6335, 4294901760
  %6469 = vmatprep.subr.mxu0 %v6468
  %v6470 = vand.u32 %v6334, 4294901760
  %6471 = vmatpush1.msra.mxu0 %v6470
  %v6472 = vand.u32 %v6337, 4294901760
  %6473 = vmatprep.subr.mxu0 %v6472
  %v6474 = vand.u32 %v6336, 4294901760
  %6475 = vmatpush1.msra.mxu0 %v6474
  %v6476 = vand.u32 %v6339, 4294901760
  %6477 = vmatprep.subr.mxu0 %v6476
  %v6478 = vand.u32 %v6338, 4294901760
  %6479 = vmatpush1.msra.mxu0 %v6478
  %v6480 = vand.u32 %v6181, 4294901760
  %v6481 = vsub.f32 %v6181, %v6480
  %v6482 = vand.u32 %v6481, 4294901760
  %v6483 = vsub.f32 %v6481, %v6482
  %v6484 = vand.u32 %v6483, 4294901760
  %6485 = vmatprep.mubr.f32.mxu0 %v6484
  %v6486 = vand.u32 %v6180, 4294901760
  %v6487 = vsub.f32 %v6180, %v6486
  %v6488 = vand.u32 %v6487, 4294901760
  %v6489 = vsub.f32 %v6487, %v6488
  %v6490 = vand.u32 %v6489, 4294901760
  %6491 = vmatmul.mubr.f32.gmra.mrb[0].mxu0 %v6490
  %v6492 = vpop.f32.mrb[0].mxu0
  %v6493 = vadd.f32 %v6345, %v6492
  %v6494 = vpop.f32.mrb[0].mxu0
  %v6495 = vadd.f32 %v6349, %v6494
  %v6496 = vand.u32 %v6183, 4294901760
  %v6497 = vsub.f32 %v6183, %v6496
  %v6498 = vand.u32 %v6497, 4294901760
  %v6499 = vsub.f32 %v6497, %v6498
  %v6500 = vand.u32 %v6499, 4294901760
  %6501 = vmatprep.mubr.f32.mxu0 %v6500
  %v6502 = vand.u32 %v6182, 4294901760
  %v6503 = vsub.f32 %v6182, %v6502
  %v6504 = vand.u32 %v6503, 4294901760
  %v6505 = vsub.f32 %v6503, %v6504
  %v6506 = vand.u32 %v6505, 4294901760
  %6507 = vmatmul.mubr.f32.gmra.mrb[0].mxu0 %v6506
  %v6508 = vpop.f32.mrb[0].mxu0
  %v6509 = vadd.f32 %v6345, %v6508
  %v6510 = vpop.f32.mrb[0].mxu0
  %v6511 = vadd.f32 %v6349, %v6510
  %v6512 = vand.u32 %v6185, 4294901760
  %v6513 = vsub.f32 %v6185, %v6512
  %v6514 = vand.u32 %v6513, 4294901760
  %v6515 = vsub.f32 %v6513, %v6514
  %v6516 = vand.u32 %v6515, 4294901760
  %6517 = vmatprep.mubr.f32.mxu0 %v6516
  %v6518 = vand.u32 %v6184, 4294901760
  %v6519 = vsub.f32 %v6184, %v6518
  %v6520 = vand.u32 %v6519, 4294901760
  %v6521 = vsub.f32 %v6519, %v6520
  %v6522 = vand.u32 %v6521, 4294901760
  %6523 = vmatmul.mubr.f32.gmra.mrb[0].mxu0 %v6522
  %v6524 = vpop.f32.mrb[0].mxu0
  %v6525 = vadd.f32 %v6345, %v6524
  %v6526 = vpop.f32.mrb[0].mxu0
  %v6527 = vadd.f32 %v6349, %v6526
  %v6528 = vand.u32 %v6187, 4294901760
  %v6529 = vsub.f32 %v6187, %v6528
  %v6530 = vand.u32 %v6529, 4294901760
  %v6531 = vsub.f32 %v6529, %v6530
  %v6532 = vand.u32 %v6531, 4294901760
  %6533 = vmatprep.mubr.f32.mxu0 %v6532
  %v6534 = vand.u32 %v6186, 4294901760
  %v6535 = vsub.f32 %v6186, %v6534
  %v6536 = vand.u32 %v6535, 4294901760
  %v6537 = vsub.f32 %v6535, %v6536
  %v6538 = vand.u32 %v6537, 4294901760
  %6539 = vmatmul.mubr.f32.gmra.mrb[0].mxu0 %v6538
  %v6540 = vpop.f32.mrb[0].mxu0
  %v6541 = vadd.f32 %v6345, %v6540
  %v6542 = vpop.f32.mrb[0].mxu0
  %v6543 = vadd.f32 %v6349, %v6542
  %v6544 = vand.u32 %v6189, 4294901760
  %v6545 = vsub.f32 %v6189, %v6544
  %v6546 = vand.u32 %v6545, 4294901760
  %v6547 = vsub.f32 %v6545, %v6546
  %v6548 = vand.u32 %v6547, 4294901760
  %6549 = vmatprep.mubr.f32.mxu0 %v6548
  %v6550 = vand.u32 %v6188, 4294901760
  %v6551 = vsub.f32 %v6188, %v6550
  %v6552 = vand.u32 %v6551, 4294901760
  %v6553 = vsub.f32 %v6551, %v6552
  %v6554 = vand.u32 %v6553, 4294901760
  %6555 = vmatmul.mubr.f32.gmra.mrb[0].mxu0 %v6554
  %v6556 = vpop.f32.mrb[0].mxu0
  %v6557 = vadd.f32 %v6345, %v6556
  %v6558 = vpop.f32.mrb[0].mxu0
  %v6559 = vadd.f32 %v6349, %v6558
  %v6560 = vand.u32 %v6191, 4294901760
  %v6561 = vsub.f32 %v6191, %v6560
  %v6562 = vand.u32 %v6561, 4294901760
  %v6563 = vsub.f32 %v6561, %v6562
  %v6564 = vand.u32 %v6563, 4294901760
  %6565 = vmatprep.mubr.f32.mxu0 %v6564
  %v6566 = vand.u32 %v6190, 4294901760
  %v6567 = vsub.f32 %v6190, %v6566
  %v6568 = vand.u32 %v6567, 4294901760
  %v6569 = vsub.f32 %v6567, %v6568
  %v6570 = vand.u32 %v6569, 4294901760
  %6571 = vmatmul.mubr.f32.gmra.mrb[0].mxu0 %v6570
  %v6572 = vpop.f32.mrb[0].mxu0
  %v6573 = vadd.f32 %v6345, %v6572
  %v6574 = vpop.f32.mrb[0].mxu0
  %v6575 = vadd.f32 %v6349, %v6574
  %v6576 = vand.u32 %v6193, 4294901760
  %v6577 = vsub.f32 %v6193, %v6576
  %v6578 = vand.u32 %v6577, 4294901760
  %v6579 = vsub.f32 %v6577, %v6578
  %v6580 = vand.u32 %v6579, 4294901760
  %6581 = vmatprep.mubr.f32.mxu0 %v6580
  %v6582 = vand.u32 %v6192, 4294901760
  %v6583 = vsub.f32 %v6192, %v6582
  %v6584 = vand.u32 %v6583, 4294901760
  %v6585 = vsub.f32 %v6583, %v6584
  %v6586 = vand.u32 %v6585, 4294901760
  %6587 = vmatmul.mubr.f32.gmra.mrb[0].mxu0 %v6586
  %v6588 = vpop.f32.mrb[0].mxu0
  %v6589 = vadd.f32 %v6345, %v6588
  %v6590 = vpop.f32.mrb[0].mxu0
  %v6591 = vadd.f32 %v6349, %v6590
  %v6592 = vand.u32 %v6195, 4294901760
  %v6593 = vsub.f32 %v6195, %v6592
  %v6594 = vand.u32 %v6593, 4294901760
  %v6595 = vsub.f32 %v6593, %v6594
  %v6596 = vand.u32 %v6595, 4294901760
  %6597 = vmatprep.mubr.f32.mxu0 %v6596
  %v6598 = vand.u32 %v6194, 4294901760
  %v6599 = vsub.f32 %v6194, %v6598
  %v6600 = vand.u32 %v6599, 4294901760
  %v6601 = vsub.f32 %v6599, %v6600
  %v6602 = vand.u32 %v6601, 4294901760
  %6603 = vmatmul.mubr.f32.gmra.mrb[0].mxu0 %v6602
  %v6604 = vpop.f32.mrb[0].mxu0
  %v6605 = vadd.f32 %v6345, %v6604
  %v6606 = vpop.f32.mrb[0].mxu0
  %v6607 = vadd.f32 %v6349, %v6606
  %v6608 = vand.u32 %v6197, 4294901760
  %v6609 = vsub.f32 %v6197, %v6608
  %v6610 = vand.u32 %v6609, 4294901760
  %v6611 = vsub.f32 %v6609, %v6610
  %v6612 = vand.u32 %v6611, 4294901760
  %6613 = vmatprep.mubr.f32.mxu0 %v6612
  %v6614 = vand.u32 %v6196, 4294901760
  %v6615 = vsub.f32 %v6196, %v6614
  %v6616 = vand.u32 %v6615, 4294901760
  %v6617 = vsub.f32 %v6615, %v6616
  %v6618 = vand.u32 %v6617, 4294901760
  %6619 = vmatmul.mubr.f32.gmra.mrb[0].mxu0 %v6618
  %v6620 = vpop.f32.mrb[0].mxu0
  %v6621 = vadd.f32 %v6345, %v6620
  %v6622 = vpop.f32.mrb[0].mxu0
  %v6623 = vadd.f32 %v6349, %v6622
  %v6624 = vand.u32 %v6199, 4294901760
  %v6625 = vsub.f32 %v6199, %v6624
  %v6626 = vand.u32 %v6625, 4294901760
  %v6627 = vsub.f32 %v6625, %v6626
  %v6628 = vand.u32 %v6627, 4294901760
  %6629 = vmatprep.mubr.f32.mxu0 %v6628
  %v6630 = vand.u32 %v6198, 4294901760
  %v6631 = vsub.f32 %v6198, %v6630
  %v6632 = vand.u32 %v6631, 4294901760
  %v6633 = vsub.f32 %v6631, %v6632
  %v6634 = vand.u32 %v6633, 4294901760
  %6635 = vmatmul.mubr.f32.gmra.mrb[0].mxu0 %v6634
  %v6636 = vpop.f32.mrb[0].mxu0
  %v6637 = vadd.f32 %v6345, %v6636
  %v6638 = vpop.f32.mrb[0].mxu0
  %v6639 = vadd.f32 %v6349, %v6638
  %v6640 = vand.u32 %v6201, 4294901760
  %v6641 = vsub.f32 %v6201, %v6640
  %v6642 = vand.u32 %v6641, 4294901760
  %v6643 = vsub.f32 %v6641, %v6642
  %v6644 = vand.u32 %v6643, 4294901760
  %6645 = vmatprep.mubr.f32.mxu0 %v6644
  %v6646 = vand.u32 %v6200, 4294901760
  %v6647 = vsub.f32 %v6200, %v6646
  %v6648 = vand.u32 %v6647, 4294901760
  %v6649 = vsub.f32 %v6647, %v6648
  %v6650 = vand.u32 %v6649, 4294901760
  %6651 = vmatmul.mubr.f32.gmra.mrb[0].mxu0 %v6650
  %v6652 = vpop.f32.mrb[0].mxu0
  %v6653 = vadd.f32 %v6345, %v6652
  %v6654 = vpop.f32.mrb[0].mxu0
  %v6655 = vadd.f32 %v6349, %v6654
  %v6656 = vand.u32 %v6203, 4294901760
  %v6657 = vsub.f32 %v6203, %v6656
  %v6658 = vand.u32 %v6657, 4294901760
  %v6659 = vsub.f32 %v6657, %v6658
  %v6660 = vand.u32 %v6659, 4294901760
  %6661 = vmatprep.mubr.f32.mxu0 %v6660
  %v6662 = vand.u32 %v6202, 4294901760
  %v6663 = vsub.f32 %v6202, %v6662
  %v6664 = vand.u32 %v6663, 4294901760
  %v6665 = vsub.f32 %v6663, %v6664
  %v6666 = vand.u32 %v6665, 4294901760
  %6667 = vmatmul.mubr.f32.gmra.mrb[0].mxu0 %v6666
  %v6668 = vpop.f32.mrb[0].mxu0
  %v6669 = vadd.f32 %v6345, %v6668
  %v6670 = vpop.f32.mrb[0].mxu0
  %v6671 = vadd.f32 %v6349, %v6670
  %v6672 = vand.u32 %v6205, 4294901760
  %v6673 = vsub.f32 %v6205, %v6672
  %v6674 = vand.u32 %v6673, 4294901760
  %v6675 = vsub.f32 %v6673, %v6674
  %v6676 = vand.u32 %v6675, 4294901760
  %6677 = vmatprep.mubr.f32.mxu0 %v6676
  %v6678 = vand.u32 %v6204, 4294901760
  %v6679 = vsub.f32 %v6204, %v6678
  %v6680 = vand.u32 %v6679, 4294901760
  %v6681 = vsub.f32 %v6679, %v6680
  %v6682 = vand.u32 %v6681, 4294901760
  %6683 = vmatmul.mubr.f32.gmra.mrb[0].mxu0 %v6682
  %v6684 = vpop.f32.mrb[0].mxu0
  %v6685 = vadd.f32 %v6345, %v6684
  %v6686 = vpop.f32.mrb[0].mxu0
  %v6687 = vadd.f32 %v6349, %v6686
  %v6688 = vand.u32 %v6207, 4294901760
  %v6689 = vsub.f32 %v6207, %v6688
  %v6690 = vand.u32 %v6689, 4294901760
  %v6691 = vsub.f32 %v6689, %v6690
  %v6692 = vand.u32 %v6691, 4294901760
  %6693 = vmatprep.mubr.f32.mxu0 %v6692
  %v6694 = vand.u32 %v6206, 4294901760
  %v6695 = vsub.f32 %v6206, %v6694
  %v6696 = vand.u32 %v6695, 4294901760
  %v6697 = vsub.f32 %v6695, %v6696
  %v6698 = vand.u32 %v6697, 4294901760
  %6699 = vmatmul.mubr.f32.gmra.mrb[0].mxu0 %v6698
  %v6700 = vpop.f32.mrb[0].mxu0
  %v6701 = vadd.f32 %v6345, %v6700
  %v6702 = vpop.f32.mrb[0].mxu0
  %v6703 = vadd.f32 %v6349, %v6702
  %v6704 = vand.u32 %v6209, 4294901760
  %v6705 = vsub.f32 %v6209, %v6704
  %v6706 = vand.u32 %v6705, 4294901760
  %v6707 = vsub.f32 %v6705, %v6706
  %v6708 = vand.u32 %v6707, 4294901760
  %6709 = vmatprep.mubr.f32.mxu0 %v6708
  %v6710 = vand.u32 %v6208, 4294901760
  %v6711 = vsub.f32 %v6208, %v6710
  %v6712 = vand.u32 %v6711, 4294901760
  %v6713 = vsub.f32 %v6711, %v6712
  %v6714 = vand.u32 %v6713, 4294901760
  %6715 = vmatmul.mubr.f32.gmra.mrb[0].mxu0 %v6714
  %v6716 = vpop.f32.mrb[0].mxu0
  %v6717 = vadd.f32 %v6345, %v6716
  %v6718 = vpop.f32.mrb[0].mxu0
  %v6719 = vadd.f32 %v6349, %v6718
  %v6720 = vand.u32 %v6211, 4294901760
  %v6721 = vsub.f32 %v6211, %v6720
  %v6722 = vand.u32 %v6721, 4294901760
  %v6723 = vsub.f32 %v6721, %v6722
  %v6724 = vand.u32 %v6723, 4294901760
  %6725 = vmatprep.mubr.f32.mxu0 %v6724
  %v6726 = vand.u32 %v6210, 4294901760
  %v6727 = vsub.f32 %v6210, %v6726
  %v6728 = vand.u32 %v6727, 4294901760
  %v6729 = vsub.f32 %v6727, %v6728
  %v6730 = vand.u32 %v6729, 4294901760
  %6731 = vmatmul.mubr.f32.gmra.mrb[0].mxu0 %v6730
  %v6732 = vpop.f32.mrb[0].mxu0
  %v6733 = vadd.f32 %v6345, %v6732
  %v6734 = vpop.f32.mrb[0].mxu0
  %v6735 = vadd.f32 %v6349, %v6734
  %v6736 = vand.u32 %v6213, 4294901760
  %v6737 = vsub.f32 %v6213, %v6736
  %v6738 = vand.u32 %v6737, 4294901760
  %v6739 = vsub.f32 %v6737, %v6738
  %v6740 = vand.u32 %v6739, 4294901760
  %6741 = vmatprep.mubr.f32.mxu0 %v6740
  %v6742 = vand.u32 %v6212, 4294901760
  %v6743 = vsub.f32 %v6212, %v6742
  %v6744 = vand.u32 %v6743, 4294901760
  %v6745 = vsub.f32 %v6743, %v6744
  %v6746 = vand.u32 %v6745, 4294901760
  %6747 = vmatmul.mubr.f32.gmra.mrb[0].mxu0 %v6746
  %v6748 = vpop.f32.mrb[0].mxu0
  %v6749 = vadd.f32 %v6345, %v6748
  %v6750 = vpop.f32.mrb[0].mxu0
  %v6751 = vadd.f32 %v6349, %v6750
  %v6752 = vand.u32 %v6215, 4294901760
  %v6753 = vsub.f32 %v6215, %v6752
  %v6754 = vand.u32 %v6753, 4294901760
  %v6755 = vsub.f32 %v6753, %v6754
  %v6756 = vand.u32 %v6755, 4294901760
  %6757 = vmatprep.mubr.f32.mxu0 %v6756
  %v6758 = vand.u32 %v6214, 4294901760
  %v6759 = vsub.f32 %v6214, %v6758
  %v6760 = vand.u32 %v6759, 4294901760
  %v6761 = vsub.f32 %v6759, %v6760
  %v6762 = vand.u32 %v6761, 4294901760
  %6763 = vmatmul.mubr.f32.gmra.mrb[0].mxu0 %v6762
  %v6764 = vpop.f32.mrb[0].mxu0
  %v6765 = vadd.f32 %v6345, %v6764
  %v6766 = vpop.f32.mrb[0].mxu0
  %v6767 = vadd.f32 %v6349, %v6766
  %v6768 = vand.u32 %v6217, 4294901760
  %v6769 = vsub.f32 %v6217, %v6768
  %v6770 = vand.u32 %v6769, 4294901760
  %v6771 = vsub.f32 %v6769, %v6770
  %v6772 = vand.u32 %v6771, 4294901760
  %6773 = vmatprep.mubr.f32.mxu0 %v6772
  %v6774 = vand.u32 %v6216, 4294901760
  %v6775 = vsub.f32 %v6216, %v6774
  %v6776 = vand.u32 %v6775, 4294901760
  %v6777 = vsub.f32 %v6775, %v6776
  %v6778 = vand.u32 %v6777, 4294901760
  %6779 = vmatmul.mubr.f32.gmra.mrb[0].mxu0 %v6778
  %v6780 = vpop.f32.mrb[0].mxu0
  %v6781 = vadd.f32 %v6345, %v6780
  %v6782 = vpop.f32.mrb[0].mxu0
  %v6783 = vadd.f32 %v6349, %v6782
  %v6784 = vand.u32 %v6219, 4294901760
  %v6785 = vsub.f32 %v6219, %v6784
  %v6786 = vand.u32 %v6785, 4294901760
  %v6787 = vsub.f32 %v6785, %v6786
  %v6788 = vand.u32 %v6787, 4294901760
  %6789 = vmatprep.mubr.f32.mxu0 %v6788
  %v6790 = vand.u32 %v6218, 4294901760
  %v6791 = vsub.f32 %v6218, %v6790
  %v6792 = vand.u32 %v6791, 4294901760
  %v6793 = vsub.f32 %v6791, %v6792
  %v6794 = vand.u32 %v6793, 4294901760
  %6795 = vmatmul.mubr.f32.gmra.mrb[0].mxu0 %v6794
  %v6796 = vpop.f32.mrb[0].mxu0
  %v6797 = vadd.f32 %v6345, %v6796
  %v6798 = vpop.f32.mrb[0].mxu0
  %v6799 = vadd.f32 %v6349, %v6798
  %v6800 = vand.u32 %v6221, 4294901760
  %v6801 = vsub.f32 %v6221, %v6800
  %v6802 = vand.u32 %v6801, 4294901760
  %v6803 = vsub.f32 %v6801, %v6802
  %v6804 = vand.u32 %v6803, 4294901760
  %6805 = vmatprep.mubr.f32.mxu0 %v6804
  %v6806 = vand.u32 %v6220, 4294901760
  %v6807 = vsub.f32 %v6220, %v6806
  %v6808 = vand.u32 %v6807, 4294901760
  %v6809 = vsub.f32 %v6807, %v6808
  %v6810 = vand.u32 %v6809, 4294901760
  %6811 = vmatmul.mubr.f32.gmra.mrb[0].mxu0 %v6810
  %v6812 = vpop.f32.mrb[0].mxu0
  %v6813 = vadd.f32 %v6345, %v6812
  %v6814 = vpop.f32.mrb[0].mxu0
  %v6815 = vadd.f32 %v6349, %v6814
  %v6816 = vand.u32 %v6223, 4294901760
  %v6817 = vsub.f32 %v6223, %v6816
  %v6818 = vand.u32 %v6817, 4294901760
  %v6819 = vsub.f32 %v6817, %v6818
  %v6820 = vand.u32 %v6819, 4294901760
  %6821 = vmatprep.mubr.f32.mxu0 %v6820
  %v6822 = vand.u32 %v6222, 4294901760
  %v6823 = vsub.f32 %v6222, %v6822
  %v6824 = vand.u32 %v6823, 4294901760
  %v6825 = vsub.f32 %v6823, %v6824
  %v6826 = vand.u32 %v6825, 4294901760
  %6827 = vmatmul.mubr.f32.gmra.mrb[0].mxu0 %v6826
  %v6828 = vpop.f32.mrb[0].mxu0
  %v6829 = vadd.f32 %v6345, %v6828
  %v6830 = vpop.f32.mrb[0].mxu0
  %v6831 = vadd.f32 %v6349, %v6830
  %v6832 = vand.u32 %v6225, 4294901760
  %v6833 = vsub.f32 %v6225, %v6832
  %v6834 = vand.u32 %v6833, 4294901760
  %v6835 = vsub.f32 %v6833, %v6834
  %v6836 = vand.u32 %v6835, 4294901760
  %6837 = vmatprep.mubr.f32.mxu0 %v6836
  %v6838 = vand.u32 %v6224, 4294901760
  %v6839 = vsub.f32 %v6224, %v6838
  %v6840 = vand.u32 %v6839, 4294901760
  %v6841 = vsub.f32 %v6839, %v6840
  %v6842 = vand.u32 %v6841, 4294901760
  %6843 = vmatmul.mubr.f32.gmra.mrb[0].mxu0 %v6842
  %v6844 = vpop.f32.mrb[0].mxu0
  %v6845 = vadd.f32 %v6345, %v6844
  %v6846 = vpop.f32.mrb[0].mxu0
  %v6847 = vadd.f32 %v6349, %v6846
  %v6848 = vand.u32 %v6227, 4294901760
  %v6849 = vsub.f32 %v6227, %v6848
  %v6850 = vand.u32 %v6849, 4294901760
  %v6851 = vsub.f32 %v6849, %v6850
  %v6852 = vand.u32 %v6851, 4294901760
  %6853 = vmatprep.mubr.f32.mxu0 %v6852
  %v6854 = vand.u32 %v6226, 4294901760
  %v6855 = vsub.f32 %v6226, %v6854
  %v6856 = vand.u32 %v6855, 4294901760
  %v6857 = vsub.f32 %v6855, %v6856
  %v6858 = vand.u32 %v6857, 4294901760
  %6859 = vmatmul.mubr.f32.gmra.mrb[0].mxu0 %v6858
  %v6860 = vpop.f32.mrb[0].mxu0
  %v6861 = vadd.f32 %v6345, %v6860
  %v6862 = vpop.f32.mrb[0].mxu0
  %v6863 = vadd.f32 %v6349, %v6862
  %v6864 = vand.u32 %v6229, 4294901760
  %v6865 = vsub.f32 %v6229, %v6864
  %v6866 = vand.u32 %v6865, 4294901760
  %v6867 = vsub.f32 %v6865, %v6866
  %v6868 = vand.u32 %v6867, 4294901760
  %6869 = vmatprep.mubr.f32.mxu0 %v6868
  %v6870 = vand.u32 %v6228, 4294901760
  %v6871 = vsub.f32 %v6228, %v6870
  %v6872 = vand.u32 %v6871, 4294901760
  %v6873 = vsub.f32 %v6871, %v6872
  %v6874 = vand.u32 %v6873, 4294901760
  %6875 = vmatmul.mubr.f32.gmra.mrb[0].mxu0 %v6874
  %v6876 = vpop.f32.mrb[0].mxu0
  %v6877 = vadd.f32 %v6345, %v6876
  %v6878 = vpop.f32.mrb[0].mxu0
  %v6879 = vadd.f32 %v6349, %v6878
  %v6880 = vand.u32 %v6231, 4294901760
  %v6881 = vsub.f32 %v6231, %v6880
  %v6882 = vand.u32 %v6881, 4294901760
  %v6883 = vsub.f32 %v6881, %v6882
  %v6884 = vand.u32 %v6883, 4294901760
  %6885 = vmatprep.mubr.f32.mxu0 %v6884
  %v6886 = vand.u32 %v6230, 4294901760
  %v6887 = vsub.f32 %v6230, %v6886
  %v6888 = vand.u32 %v6887, 4294901760
  %v6889 = vsub.f32 %v6887, %v6888
  %v6890 = vand.u32 %v6889, 4294901760
  %6891 = vmatmul.mubr.f32.gmra.mrb[0].mxu0 %v6890
  %v6892 = vpop.f32.mrb[0].mxu0
  %v6893 = vadd.f32 %v6345, %v6892
  %v6894 = vpop.f32.mrb[0].mxu0
  %v6895 = vadd.f32 %v6349, %v6894
  %v6896 = vand.u32 %v6233, 4294901760
  %v6897 = vsub.f32 %v6233, %v6896
  %v6898 = vand.u32 %v6897, 4294901760
  %v6899 = vsub.f32 %v6897, %v6898
  %v6900 = vand.u32 %v6899, 4294901760
  %6901 = vmatprep.mubr.f32.mxu0 %v6900
  %v6902 = vand.u32 %v6232, 4294901760
  %v6903 = vsub.f32 %v6232, %v6902
  %v6904 = vand.u32 %v6903, 4294901760
  %v6905 = vsub.f32 %v6903, %v6904
  %v6906 = vand.u32 %v6905, 4294901760
  %6907 = vmatmul.mubr.f32.gmra.mrb[0].mxu0 %v6906
  %v6908 = vpop.f32.mrb[0].mxu0
  %v6909 = vadd.f32 %v6345, %v6908
  %v6910 = vpop.f32.mrb[0].mxu0
  %v6911 = vadd.f32 %v6349, %v6910
  %v6912 = vand.u32 %v6235, 4294901760
  %v6913 = vsub.f32 %v6235, %v6912
  %v6914 = vand.u32 %v6913, 4294901760
  %v6915 = vsub.f32 %v6913, %v6914
  %v6916 = vand.u32 %v6915, 4294901760
  %6917 = vmatprep.mubr.f32.mxu0 %v6916
  %v6918 = vand.u32 %v6234, 4294901760
  %v6919 = vsub.f32 %v6234, %v6918
  %v6920 = vand.u32 %v6919, 4294901760
  %v6921 = vsub.f32 %v6919, %v6920
  %v6922 = vand.u32 %v6921, 4294901760
  %6923 = vmatmul.mubr.f32.gmra.mrb[0].mxu0 %v6922
  %v6924 = vpop.f32.mrb[0].mxu0
  %v6925 = vadd.f32 %v6345, %v6924
  %v6926 = vpop.f32.mrb[0].mxu0
  %v6927 = vadd.f32 %v6349, %v6926
  %v6928 = vand.u32 %v6237, 4294901760
  %v6929 = vsub.f32 %v6237, %v6928
  %v6930 = vand.u32 %v6929, 4294901760
  %v6931 = vsub.f32 %v6929, %v6930
  %v6932 = vand.u32 %v6931, 4294901760
  %6933 = vmatprep.mubr.f32.mxu0 %v6932
  %v6934 = vand.u32 %v6236, 4294901760
  %v6935 = vsub.f32 %v6236, %v6934
  %v6936 = vand.u32 %v6935, 4294901760
  %v6937 = vsub.f32 %v6935, %v6936
  %v6938 = vand.u32 %v6937, 4294901760
  %6939 = vmatmul.mubr.f32.gmra.mrb[0].mxu0 %v6938
  %v6940 = vpop.f32.mrb[0].mxu0
  %v6941 = vadd.f32 %v6345, %v6940
  %v6942 = vpop.f32.mrb[0].mxu0
  %v6943 = vadd.f32 %v6349, %v6942
  %v6944 = vand.u32 %v6239, 4294901760
  %v6945 = vsub.f32 %v6239, %v6944
  %v6946 = vand.u32 %v6945, 4294901760
  %v6947 = vsub.f32 %v6945, %v6946
  %v6948 = vand.u32 %v6947, 4294901760
  %6949 = vmatprep.mubr.f32.mxu0 %v6948
  %v6950 = vand.u32 %v6238, 4294901760
  %v6951 = vsub.f32 %v6238, %v6950
  %v6952 = vand.u32 %v6951, 4294901760
  %v6953 = vsub.f32 %v6951, %v6952
  %v6954 = vand.u32 %v6953, 4294901760
  %6955 = vmatmul.mubr.f32.gmra.mrb[0].mxu0 %v6954
  %v6956 = vpop.f32.mrb[0].mxu0
  %v6957 = vadd.f32 %v6345, %v6956
  %v6958 = vpop.f32.mrb[0].mxu0
  %v6959 = vadd.f32 %v6349, %v6958
  %v6960 = vand.u32 %v6241, 4294901760
  %v6961 = vsub.f32 %v6241, %v6960
  %v6962 = vand.u32 %v6961, 4294901760
  %v6963 = vsub.f32 %v6961, %v6962
  %v6964 = vand.u32 %v6963, 4294901760
  %6965 = vmatprep.mubr.f32.mxu0 %v6964
  %v6966 = vand.u32 %v6240, 4294901760
  %v6967 = vsub.f32 %v6240, %v6966
  %v6968 = vand.u32 %v6967, 4294901760
  %v6969 = vsub.f32 %v6967, %v6968
  %v6970 = vand.u32 %v6969, 4294901760
  %6971 = vmatmul.mubr.f32.gmra.mrb[0].mxu0 %v6970
  %v6972 = vpop.f32.mrb[0].mxu0
  %v6973 = vadd.f32 %v6345, %v6972
  %v6974 = vpop.f32.mrb[0].mxu0
  %v6975 = vadd.f32 %v6349, %v6974
  %v6976 = vand.u32 %v6243, 4294901760
  %v6977 = vsub.f32 %v6243, %v6976
  %v6978 = vand.u32 %v6977, 4294901760
  %v6979 = vsub.f32 %v6977, %v6978
  %v6980 = vand.u32 %v6979, 4294901760
  %6981 = vmatprep.mubr.f32.mxu0 %v6980
  %v6982 = vand.u32 %v6242, 4294901760
  %v6983 = vsub.f32 %v6242, %v6982
  %v6984 = vand.u32 %v6983, 4294901760
  %v6985 = vsub.f32 %v6983, %v6984
  %v6986 = vand.u32 %v6985, 4294901760
  %6987 = vmatmul.mubr.f32.gmra.mrb[0].mxu0 %v6986
  %v6988 = vpop.f32.mrb[0].mxu0
  %v6989 = vadd.f32 %v6345, %v6988
  %v6990 = vpop.f32.mrb[0].mxu0
  %v6991 = vadd.f32 %v6349, %v6990
  %v6992 = vand.u32 %v6245, 4294901760
  %v6993 = vsub.f32 %v6245, %v6992
  %v6994 = vand.u32 %v6993, 4294901760
  %v6995 = vsub.f32 %v6993, %v6994
  %v6996 = vand.u32 %v6995, 4294901760
  %6997 = vmatprep.mubr.f32.mxu0 %v6996
  %v6998 = vand.u32 %v6244, 4294901760
  %v6999 = vsub.f32 %v6244, %v6998
  %v7000 = vand.u32 %v6999, 4294901760
  %v7001 = vsub.f32 %v6999, %v7000
  %v7002 = vand.u32 %v7001, 4294901760
  %7003 = vmatmul.mubr.f32.gmra.mrb[0].mxu0 %v7002
  %v7004 = vpop.f32.mrb[0].mxu0
  %v7005 = vadd.f32 %v6345, %v7004
  %v7006 = vpop.f32.mrb[0].mxu0
  %v7007 = vadd.f32 %v6349, %v7006
  %v7008 = vand.u32 %v6247, 4294901760
  %v7009 = vsub.f32 %v6247, %v7008
  %v7010 = vand.u32 %v7009, 4294901760
  %v7011 = vsub.f32 %v7009, %v7010
  %v7012 = vand.u32 %v7011, 4294901760
  %7013 = vmatprep.mubr.f32.mxu0 %v7012
  %v7014 = vand.u32 %v6246, 4294901760
  %v7015 = vsub.f32 %v6246, %v7014
  %v7016 = vand.u32 %v7015, 4294901760
  %v7017 = vsub.f32 %v7015, %v7016
  %v7018 = vand.u32 %v7017, 4294901760
  %7019 = vmatmul.mubr.f32.gmra.mrb[0].mxu0 %v7018
  %v7020 = vpop.f32.mrb[0].mxu0
  %v7021 = vadd.f32 %v6345, %v7020
  %v7022 = vpop.f32.mrb[0].mxu0
  %v7023 = vadd.f32 %v6349, %v7022
  %v7024 = vand.u32 %v6249, 4294901760
  %v7025 = vsub.f32 %v6249, %v7024
  %v7026 = vand.u32 %v7025, 4294901760
  %v7027 = vsub.f32 %v7025, %v7026
  %v7028 = vand.u32 %v7027, 4294901760
  %7029 = vmatprep.mubr.f32.mxu0 %v7028
  %v7030 = vand.u32 %v6248, 4294901760
  %v7031 = vsub.f32 %v6248, %v7030
  %v7032 = vand.u32 %v7031, 4294901760
  %v7033 = vsub.f32 %v7031, %v7032
  %v7034 = vand.u32 %v7033, 4294901760
  %7035 = vmatmul.mubr.f32.gmra.mrb[0].mxu0 %v7034
  %v7036 = vpop.f32.mrb[0].mxu0
  %v7037 = vadd.f32 %v6345, %v7036
  %v7038 = vpop.f32.mrb[0].mxu0
  %v7039 = vadd.f32 %v6349, %v7038
  %v7040 = vand.u32 %v6251, 4294901760
  %v7041 = vsub.f32 %v6251, %v7040
  %v7042 = vand.u32 %v7041, 4294901760
  %v7043 = vsub.f32 %v7041, %v7042
  %v7044 = vand.u32 %v7043, 4294901760
  %7045 = vmatprep.mubr.f32.mxu0 %v7044
  %v7046 = vand.u32 %v6250, 4294901760
  %v7047 = vsub.f32 %v6250, %v7046
  %v7048 = vand.u32 %v7047, 4294901760
  %v7049 = vsub.f32 %v7047, %v7048
  %v7050 = vand.u32 %v7049, 4294901760
  %7051 = vmatmul.mubr.f32.gmra.mrb[0].mxu0 %v7050
  %v7052 = vpop.f32.mrb[0].mxu0
  %v7053 = vadd.f32 %v6345, %v7052
  %v7054 = vpop.f32.mrb[0].mxu0
  %v7055 = vadd.f32 %v6349, %v7054
  %v7056 = vand.u32 %v6253, 4294901760
  %v7057 = vsub.f32 %v6253, %v7056
  %v7058 = vand.u32 %v7057, 4294901760
  %v7059 = vsub.f32 %v7057, %v7058
  %v7060 = vand.u32 %v7059, 4294901760
  %7061 = vmatprep.mubr.f32.mxu0 %v7060
  %v7062 = vand.u32 %v6252, 4294901760
  %v7063 = vsub.f32 %v6252, %v7062
  %v7064 = vand.u32 %v7063, 4294901760
  %v7065 = vsub.f32 %v7063, %v7064
  %v7066 = vand.u32 %v7065, 4294901760
  %7067 = vmatmul.mubr.f32.gmra.mrb[0].mxu0 %v7066
  %v7068 = vpop.f32.mrb[0].mxu0
  %v7069 = vadd.f32 %v6345, %v7068
  %v7070 = vpop.f32.mrb[0].mxu0
  %v7071 = vadd.f32 %v6349, %v7070
  %v7072 = vand.u32 %v6255, 4294901760
  %v7073 = vsub.f32 %v6255, %v7072
  %v7074 = vand.u32 %v7073, 4294901760
  %v7075 = vsub.f32 %v7073, %v7074
  %v7076 = vand.u32 %v7075, 4294901760
  %7077 = vmatprep.mubr.f32.mxu0 %v7076
  %v7078 = vand.u32 %v6254, 4294901760
  %v7079 = vsub.f32 %v6254, %v7078
  %v7080 = vand.u32 %v7079, 4294901760
  %v7081 = vsub.f32 %v7079, %v7080
  %v7082 = vand.u32 %v7081, 4294901760
  %7083 = vmatmul.mubr.f32.gmra.mrb[0].mxu0 %v7082
  %v7084 = vpop.f32.mrb[0].mxu0
  %v7085 = vadd.f32 %v6345, %v7084
  %v7086 = vpop.f32.mrb[0].mxu0
  %v7087 = vadd.f32 %v6349, %v7086
  %v7088 = vand.u32 %v6257, 4294901760
  %v7089 = vsub.f32 %v6257, %v7088
  %v7090 = vand.u32 %v7089, 4294901760
  %v7091 = vsub.f32 %v7089, %v7090
  %v7092 = vand.u32 %v7091, 4294901760
  %7093 = vmatprep.mubr.f32.mxu0 %v7092
  %v7094 = vand.u32 %v6256, 4294901760
  %v7095 = vsub.f32 %v6256, %v7094
  %v7096 = vand.u32 %v7095, 4294901760
  %v7097 = vsub.f32 %v7095, %v7096
  %v7098 = vand.u32 %v7097, 4294901760
  %7099 = vmatmul.mubr.f32.gmra.mrb[0].mxu0 %v7098
  %v7100 = vpop.f32.mrb[0].mxu0
  %v7101 = vadd.f32 %v6345, %v7100
  %v7102 = vpop.f32.mrb[0].mxu0
  %v7103 = vadd.f32 %v6349, %v7102
  %v7104 = vand.u32 %v6259, 4294901760
  %v7105 = vsub.f32 %v6259, %v7104
  %v7106 = vand.u32 %v7105, 4294901760
  %v7107 = vsub.f32 %v7105, %v7106
  %v7108 = vand.u32 %v7107, 4294901760
  %7109 = vmatprep.mubr.f32.mxu0 %v7108
  %v7110 = vand.u32 %v6258, 4294901760
  %v7111 = vsub.f32 %v6258, %v7110
  %v7112 = vand.u32 %v7111, 4294901760
  %v7113 = vsub.f32 %v7111, %v7112
  %v7114 = vand.u32 %v7113, 4294901760
  %7115 = vmatmul.mubr.f32.gmra.mrb[0].mxu0 %v7114
  %v7116 = vpop.f32.mrb[0].mxu0
  %v7117 = vadd.f32 %v6345, %v7116
  %v7118 = vpop.f32.mrb[0].mxu0
  %v7119 = vadd.f32 %v6349, %v7118
  %v7120 = vand.u32 %v6261, 4294901760
  %v7121 = vsub.f32 %v6261, %v7120
  %v7122 = vand.u32 %v7121, 4294901760
  %v7123 = vsub.f32 %v7121, %v7122
  %v7124 = vand.u32 %v7123, 4294901760
  %7125 = vmatprep.mubr.f32.mxu0 %v7124
  %v7126 = vand.u32 %v6260, 4294901760
  %v7127 = vsub.f32 %v6260, %v7126
  %v7128 = vand.u32 %v7127, 4294901760
  %v7129 = vsub.f32 %v7127, %v7128
  %v7130 = vand.u32 %v7129, 4294901760
  %7131 = vmatmul.mubr.f32.gmra.mrb[0].mxu0 %v7130
  %v7132 = vpop.f32.mrb[0].mxu0
  %v7133 = vadd.f32 %v6345, %v7132
  %v7134 = vpop.f32.mrb[0].mxu0
  %v7135 = vadd.f32 %v6349, %v7134
  %v7136 = vand.u32 %v6263, 4294901760
  %v7137 = vsub.f32 %v6263, %v7136
  %v7138 = vand.u32 %v7137, 4294901760
  %v7139 = vsub.f32 %v7137, %v7138
  %v7140 = vand.u32 %v7139, 4294901760
  %7141 = vmatprep.mubr.f32.mxu0 %v7140
  %v7142 = vand.u32 %v6262, 4294901760
  %v7143 = vsub.f32 %v6262, %v7142
  %v7144 = vand.u32 %v7143, 4294901760
  %v7145 = vsub.f32 %v7143, %v7144
  %v7146 = vand.u32 %v7145, 4294901760
  %7147 = vmatmul.mubr.f32.gmra.mrb[0].mxu0 %v7146
  %v7148 = vpop.f32.mrb[0].mxu0
  %v7149 = vadd.f32 %v6345, %v7148
  %v7150 = vpop.f32.mrb[0].mxu0
  %v7151 = vadd.f32 %v6349, %v7150
  %v7152 = vand.u32 %v6265, 4294901760
  %v7153 = vsub.f32 %v6265, %v7152
  %v7154 = vand.u32 %v7153, 4294901760
  %v7155 = vsub.f32 %v7153, %v7154
  %v7156 = vand.u32 %v7155, 4294901760
  %7157 = vmatprep.mubr.f32.mxu0 %v7156
  %v7158 = vand.u32 %v6264, 4294901760
  %v7159 = vsub.f32 %v6264, %v7158
  %v7160 = vand.u32 %v7159, 4294901760
  %v7161 = vsub.f32 %v7159, %v7160
  %v7162 = vand.u32 %v7161, 4294901760
  %7163 = vmatmul.mubr.f32.gmra.mrb[0].mxu0 %v7162
  %v7164 = vpop.f32.mrb[0].mxu0
  %v7165 = vadd.f32 %v6345, %v7164
  %v7166 = vpop.f32.mrb[0].mxu0
  %v7167 = vadd.f32 %v6349, %v7166
  %v7168 = vand.u32 %v6267, 4294901760
  %v7169 = vsub.f32 %v6267, %v7168
  %v7170 = vand.u32 %v7169, 4294901760
  %v7171 = vsub.f32 %v7169, %v7170
  %v7172 = vand.u32 %v7171, 4294901760
  %7173 = vmatprep.mubr.f32.mxu0 %v7172
  %v7174 = vand.u32 %v6266, 4294901760
  %v7175 = vsub.f32 %v6266, %v7174
  %v7176 = vand.u32 %v7175, 4294901760
  %v7177 = vsub.f32 %v7175, %v7176
  %v7178 = vand.u32 %v7177, 4294901760
  %7179 = vmatmul.mubr.f32.gmra.mrb[0].mxu0 %v7178
  %v7180 = vpop.f32.mrb[0].mxu0
  %v7181 = vadd.f32 %v6345, %v7180
  %v7182 = vpop.f32.mrb[0].mxu0
  %v7183 = vadd.f32 %v6349, %v7182
  %v7184 = vand.u32 %v6269, 4294901760
  %v7185 = vsub.f32 %v6269, %v7184
  %v7186 = vand.u32 %v7185, 4294901760
  %v7187 = vsub.f32 %v7185, %v7186
  %v7188 = vand.u32 %v7187, 4294901760
  %7189 = vmatprep.mubr.f32.mxu0 %v7188
  %v7190 = vand.u32 %v6268, 4294901760
  %v7191 = vsub.f32 %v6268, %v7190
  %v7192 = vand.u32 %v7191, 4294901760
  %v7193 = vsub.f32 %v7191, %v7192
  %v7194 = vand.u32 %v7193, 4294901760
  %7195 = vmatmul.mubr.f32.gmra.mrb[0].mxu0 %v7194
  %v7196 = vpop.f32.mrb[0].mxu0
  %v7197 = vadd.f32 %v6345, %v7196
  %v7198 = vpop.f32.mrb[0].mxu0
  %v7199 = vadd.f32 %v6349, %v7198
  %v7200 = vand.u32 %v6271, 4294901760
  %v7201 = vsub.f32 %v6271, %v7200
  %v7202 = vand.u32 %v7201, 4294901760
  %v7203 = vsub.f32 %v7201, %v7202
  %v7204 = vand.u32 %v7203, 4294901760
  %7205 = vmatprep.mubr.f32.mxu0 %v7204
  %v7206 = vand.u32 %v6270, 4294901760
  %v7207 = vsub.f32 %v6270, %v7206
  %v7208 = vand.u32 %v7207, 4294901760
  %v7209 = vsub.f32 %v7207, %v7208
  %v7210 = vand.u32 %v7209, 4294901760
  %7211 = vmatmul.mubr.f32.gmra.mrb[0].mxu0 %v7210
  %v7212 = vpop.f32.mrb[0].mxu0
  %v7213 = vadd.f32 %v6345, %v7212
  %v7214 = vpop.f32.mrb[0].mxu0
  %v7215 = vadd.f32 %v6349, %v7214
  %v7216 = vand.u32 %v6273, 4294901760
  %v7217 = vsub.f32 %v6273, %v7216
  %v7218 = vand.u32 %v7217, 4294901760
  %v7219 = vsub.f32 %v7217, %v7218
  %v7220 = vand.u32 %v7219, 4294901760
  %7221 = vmatprep.mubr.f32.mxu0 %v7220
  %v7222 = vand.u32 %v6272, 4294901760
  %v7223 = vsub.f32 %v6272, %v7222
  %v7224 = vand.u32 %v7223, 4294901760
  %v7225 = vsub.f32 %v7223, %v7224
  %v7226 = vand.u32 %v7225, 4294901760
  %7227 = vmatmul.mubr.f32.gmra.mrb[0].mxu0 %v7226
  %v7228 = vpop.f32.mrb[0].mxu0
  %v7229 = vadd.f32 %v6345, %v7228
  %v7230 = vpop.f32.mrb[0].mxu0
  %v7231 = vadd.f32 %v6349, %v7230
  %v7232 = vand.u32 %v6275, 4294901760
  %v7233 = vsub.f32 %v6275, %v7232
  %v7234 = vand.u32 %v7233, 4294901760
  %v7235 = vsub.f32 %v7233, %v7234
  %v7236 = vand.u32 %v7235, 4294901760
  %7237 = vmatprep.mubr.f32.mxu0 %v7236
  %v7238 = vand.u32 %v6274, 4294901760
  %v7239 = vsub.f32 %v6274, %v7238
  %v7240 = vand.u32 %v7239, 4294901760
  %v7241 = vsub.f32 %v7239, %v7240
  %v7242 = vand.u32 %v7241, 4294901760
  %7243 = vmatmul.mubr.f32.gmra.mrb[0].mxu0 %v7242
  %v7244 = vpop.f32.mrb[0].mxu0
  %v7245 = vadd.f32 %v6345, %v7244
  %v7246 = vpop.f32.mrb[0].mxu0
  %v7247 = vadd.f32 %v6349, %v7246
  %7248 = vdwg.mxu0
  %v7249 = vand.u32 %v6277, 4294901760
  %v7250 = vsub.f32 %v6277, %v7249
  %v7251 = vand.u32 %v7250, 4294901760
  %v7252 = vsub.f32 %v7250, %v7251
  %v7253 = vand.u32 %v7252, 4294901760
  %7254 = vmatprep.subr.mxu0 %v7253
  %v7255 = vand.u32 %v6276, 4294901760
  %v7256 = vsub.f32 %v6276, %v7255
  %v7257 = vand.u32 %v7256, 4294901760
  %v7258 = vsub.f32 %v7256, %v7257
  %v7259 = vand.u32 %v7258, 4294901760
  %7260 = vmatpush1.msra.mxu0 %v7259
  %v7261 = vand.u32 %v6279, 4294901760
  %v7262 = vsub.f32 %v6279, %v7261
  %v7263 = vand.u32 %v7262, 4294901760
  %v7264 = vsub.f32 %v7262, %v7263
  %v7265 = vand.u32 %v7264, 4294901760
  %7266 = vmatprep.subr.mxu0 %v7265
  %v7267 = vand.u32 %v6278, 4294901760
  %v7268 = vsub.f32 %v6278, %v7267
  %v7269 = vand.u32 %v7268, 4294901760
  %v7270 = vsub.f32 %v7268, %v7269
  %v7271 = vand.u32 %v7270, 4294901760
  %7272 = vmatpush1.msra.mxu0 %v7271
  %v7273 = vand.u32 %v6281, 4294901760
  %v7274 = vsub.f32 %v6281, %v7273
  %v7275 = vand.u32 %v7274, 4294901760
  %v7276 = vsub.f32 %v7274, %v7275
  %v7277 = vand.u32 %v7276, 4294901760
  %7278 = vmatprep.subr.mxu0 %v7277
  %v7279 = vand.u32 %v6280, 4294901760
  %v7280 = vsub.f32 %v6280, %v7279
  %v7281 = vand.u32 %v7280, 4294901760
  %v7282 = vsub.f32 %v7280, %v7281
  %v7283 = vand.u32 %v7282, 4294901760
  %7284 = vmatpush1.msra.mxu0 %v7283
  %v7285 = vand.u32 %v6283, 4294901760
  %v7286 = vsub.f32 %v6283, %v7285
  %v7287 = vand.u32 %v7286, 4294901760
  %v7288 = vsub.f32 %v7286, %v7287
  %v7289 = vand.u32 %v7288, 4294901760
  %7290 = vmatprep.subr.mxu0 %v7289
  %v7291 = vand.u32 %v6282, 4294901760
  %v7292 = vsub.f32 %v6282, %v7291
  %v7293 = vand.u32 %v7292, 4294901760
  %v7294 = vsub.f32 %v7292, %v7293
  %v7295 = vand.u32 %v7294, 4294901760
  %7296 = vmatpush1.msra.mxu0 %v7295
  %v7297 = vand.u32 %v6285, 4294901760
  %v7298 = vsub.f32 %v6285, %v7297
  %v7299 = vand.u32 %v7298, 4294901760
  %v7300 = vsub.f32 %v7298, %v7299
  %v7301 = vand.u32 %v7300, 4294901760
  %7302 = vmatprep.subr.mxu0 %v7301
  %v7303 = vand.u32 %v6284, 4294901760
  %v7304 = vsub.f32 %v6284, %v7303
  %v7305 = vand.u32 %v7304, 4294901760
  %v7306 = vsub.f32 %v7304, %v7305
  %v7307 = vand.u32 %v7306, 4294901760
  %7308 = vmatpush1.msra.mxu0 %v7307
  %v7309 = vand.u32 %v6287, 4294901760
  %v7310 = vsub.f32 %v6287, %v7309
  %v7311 = vand.u32 %v7310, 4294901760
  %v7312 = vsub.f32 %v7310, %v7311
  %v7313 = vand.u32 %v7312, 4294901760
  %7314 = vmatprep.subr.mxu0 %v7313
  %v7315 = vand.u32 %v6286, 4294901760
  %v7316 = vsub.f32 %v6286, %v7315
  %v7317 = vand.u32 %v7316, 4294901760
  %v7318 = vsub.f32 %v7316, %v7317
  %v7319 = vand.u32 %v7318, 4294901760
  %7320 = vmatpush1.msra.mxu0 %v7319
  %v7321 = vand.u32 %v6289, 4294901760
  %v7322 = vsub.f32 %v6289, %v7321
  %v7323 = vand.u32 %v7322, 4294901760
  %v7324 = vsub.f32 %v7322, %v7323
  %v7325 = vand.u32 %v7324, 4294901760
  %7326 = vmatprep.subr.mxu0 %v7325
  %v7327 = vand.u32 %v6288, 4294901760
  %v7328 = vsub.f32 %v6288, %v7327
  %v7329 = vand.u32 %v7328, 4294901760
  %v7330 = vsub.f32 %v7328, %v7329
  %v7331 = vand.u32 %v7330, 4294901760
  %7332 = vmatpush1.msra.mxu0 %v7331
  %v7333 = vand.u32 %v6291, 4294901760
  %v7334 = vsub.f32 %v6291, %v7333
  %v7335 = vand.u32 %v7334, 4294901760
  %v7336 = vsub.f32 %v7334, %v7335
  %v7337 = vand.u32 %v7336, 4294901760
  %7338 = vmatprep.subr.mxu0 %v7337
  %v7339 = vand.u32 %v6290, 4294901760
  %v7340 = vsub.f32 %v6290, %v7339
  %v7341 = vand.u32 %v7340, 4294901760
  %v7342 = vsub.f32 %v7340, %v7341
  %v7343 = vand.u32 %v7342, 4294901760
  %7344 = vmatpush1.msra.mxu0 %v7343
  %v7345 = vand.u32 %v6293, 4294901760
  %v7346 = vsub.f32 %v6293, %v7345
  %v7347 = vand.u32 %v7346, 4294901760
  %v7348 = vsub.f32 %v7346, %v7347
  %v7349 = vand.u32 %v7348, 4294901760
  %7350 = vmatprep.subr.mxu0 %v7349
  %v7351 = vand.u32 %v6292, 4294901760
  %v7352 = vsub.f32 %v6292, %v7351
  %v7353 = vand.u32 %v7352, 4294901760
  %v7354 = vsub.f32 %v7352, %v7353
  %v7355 = vand.u32 %v7354, 4294901760
  %7356 = vmatpush1.msra.mxu0 %v7355
  %v7357 = vand.u32 %v6295, 4294901760
  %v7358 = vsub.f32 %v6295, %v7357
  %v7359 = vand.u32 %v7358, 4294901760
  %v7360 = vsub.f32 %v7358, %v7359
  %v7361 = vand.u32 %v7360, 4294901760
  %7362 = vmatprep.subr.mxu0 %v7361
  %v7363 = vand.u32 %v6294, 4294901760
  %v7364 = vsub.f32 %v6294, %v7363
  %v7365 = vand.u32 %v7364, 4294901760
  %v7366 = vsub.f32 %v7364, %v7365
  %v7367 = vand.u32 %v7366, 4294901760
  %7368 = vmatpush1.msra.mxu0 %v7367
  %v7369 = vand.u32 %v6297, 4294901760
  %v7370 = vsub.f32 %v6297, %v7369
  %v7371 = vand.u32 %v7370, 4294901760
  %v7372 = vsub.f32 %v7370, %v7371
  %v7373 = vand.u32 %v7372, 4294901760
  %7374 = vmatprep.subr.mxu0 %v7373
  %v7375 = vand.u32 %v6296, 4294901760
  %v7376 = vsub.f32 %v6296, %v7375
  %v7377 = vand.u32 %v7376, 4294901760
  %v7378 = vsub.f32 %v7376, %v7377
  %v7379 = vand.u32 %v7378, 4294901760
  %7380 = vmatpush1.msra.mxu0 %v7379
  %v7381 = vand.u32 %v6299, 4294901760
  %v7382 = vsub.f32 %v6299, %v7381
  %v7383 = vand.u32 %v7382, 4294901760
  %v7384 = vsub.f32 %v7382, %v7383
  %v7385 = vand.u32 %v7384, 4294901760
  %7386 = vmatprep.subr.mxu0 %v7385
  %v7387 = vand.u32 %v6298, 4294901760
  %v7388 = vsub.f32 %v6298, %v7387
  %v7389 = vand.u32 %v7388, 4294901760
  %v7390 = vsub.f32 %v7388, %v7389
  %v7391 = vand.u32 %v7390, 4294901760
  %7392 = vmatpush1.msra.mxu0 %v7391
  %v7393 = vand.u32 %v6301, 4294901760
  %v7394 = vsub.f32 %v6301, %v7393
  %v7395 = vand.u32 %v7394, 4294901760
  %v7396 = vsub.f32 %v7394, %v7395
  %v7397 = vand.u32 %v7396, 4294901760
  %7398 = vmatprep.subr.mxu0 %v7397
  %v7399 = vand.u32 %v6300, 4294901760
  %v7400 = vsub.f32 %v6300, %v7399
  %v7401 = vand.u32 %v7400, 4294901760
  %v7402 = vsub.f32 %v7400, %v7401
  %v7403 = vand.u32 %v7402, 4294901760
  %7404 = vmatpush1.msra.mxu0 %v7403
  %v7405 = vand.u32 %v6303, 4294901760
  %v7406 = vsub.f32 %v6303, %v7405
  %v7407 = vand.u32 %v7406, 4294901760
  %v7408 = vsub.f32 %v7406, %v7407
  %v7409 = vand.u32 %v7408, 4294901760
  %7410 = vmatprep.subr.mxu0 %v7409
  %v7411 = vand.u32 %v6302, 4294901760
  %v7412 = vsub.f32 %v6302, %v7411
  %v7413 = vand.u32 %v7412, 4294901760
  %v7414 = vsub.f32 %v7412, %v7413
  %v7415 = vand.u32 %v7414, 4294901760
  %7416 = vmatpush1.msra.mxu0 %v7415
  %v7417 = vand.u32 %v6305, 4294901760
  %v7418 = vsub.f32 %v6305, %v7417
  %v7419 = vand.u32 %v7418, 4294901760
  %v7420 = vsub.f32 %v7418, %v7419
  %v7421 = vand.u32 %v7420, 4294901760
  %7422 = vmatprep.subr.mxu0 %v7421
  %v7423 = vand.u32 %v6304, 4294901760
  %v7424 = vsub.f32 %v6304, %v7423
  %v7425 = vand.u32 %v7424, 4294901760
  %v7426 = vsub.f32 %v7424, %v7425
  %v7427 = vand.u32 %v7426, 4294901760
  %7428 = vmatpush1.msra.mxu0 %v7427
  %v7429 = vand.u32 %v6307, 4294901760
  %v7430 = vsub.f32 %v6307, %v7429
  %v7431 = vand.u32 %v7430, 4294901760
  %v7432 = vsub.f32 %v7430, %v7431
  %v7433 = vand.u32 %v7432, 4294901760
  %7434 = vmatprep.subr.mxu0 %v7433
  %v7435 = vand.u32 %v6306, 4294901760
  %v7436 = vsub.f32 %v6306, %v7435
  %v7437 = vand.u32 %v7436, 4294901760
  %v7438 = vsub.f32 %v7436, %v7437
  %v7439 = vand.u32 %v7438, 4294901760
  %7440 = vmatpush1.msra.mxu0 %v7439
  %v7441 = vand.u32 %v6309, 4294901760
  %v7442 = vsub.f32 %v6309, %v7441
  %v7443 = vand.u32 %v7442, 4294901760
  %v7444 = vsub.f32 %v7442, %v7443
  %v7445 = vand.u32 %v7444, 4294901760
  %7446 = vmatprep.subr.mxu0 %v7445
  %v7447 = vand.u32 %v6308, 4294901760
  %v7448 = vsub.f32 %v6308, %v7447
  %v7449 = vand.u32 %v7448, 4294901760
  %v7450 = vsub.f32 %v7448, %v7449
  %v7451 = vand.u32 %v7450, 4294901760
  %7452 = vmatpush1.msra.mxu0 %v7451
  %v7453 = vand.u32 %v6311, 4294901760
  %v7454 = vsub.f32 %v6311, %v7453
  %v7455 = vand.u32 %v7454, 4294901760
  %v7456 = vsub.f32 %v7454, %v7455
  %v7457 = vand.u32 %v7456, 4294901760
  %7458 = vmatprep.subr.mxu0 %v7457
  %v7459 = vand.u32 %v6310, 4294901760
  %v7460 = vsub.f32 %v6310, %v7459
  %v7461 = vand.u32 %v7460, 4294901760
  %v7462 = vsub.f32 %v7460, %v7461
  %v7463 = vand.u32 %v7462, 4294901760
  %7464 = vmatpush1.msra.mxu0 %v7463
  %v7465 = vand.u32 %v6313, 4294901760
  %v7466 = vsub.f32 %v6313, %v7465
  %v7467 = vand.u32 %v7466, 4294901760
  %v7468 = vsub.f32 %v7466, %v7467
  %v7469 = vand.u32 %v7468, 4294901760
  %7470 = vmatprep.subr.mxu0 %v7469
  %v7471 = vand.u32 %v6312, 4294901760
  %v7472 = vsub.f32 %v6312, %v7471
  %v7473 = vand.u32 %v7472, 4294901760
  %v7474 = vsub.f32 %v7472, %v7473
  %v7475 = vand.u32 %v7474, 4294901760
  %7476 = vmatpush1.msra.mxu0 %v7475
  %v7477 = vand.u32 %v6315, 4294901760
  %v7478 = vsub.f32 %v6315, %v7477
  %v7479 = vand.u32 %v7478, 4294901760
  %v7480 = vsub.f32 %v7478, %v7479
  %v7481 = vand.u32 %v7480, 4294901760
  %7482 = vmatprep.subr.mxu0 %v7481
  %v7483 = vand.u32 %v6314, 4294901760
  %v7484 = vsub.f32 %v6314, %v7483
  %v7485 = vand.u32 %v7484, 4294901760
  %v7486 = vsub.f32 %v7484, %v7485
  %v7487 = vand.u32 %v7486, 4294901760
  %7488 = vmatpush1.msra.mxu0 %v7487
  %v7489 = vand.u32 %v6317, 4294901760
  %v7490 = vsub.f32 %v6317, %v7489
  %v7491 = vand.u32 %v7490, 4294901760
  %v7492 = vsub.f32 %v7490, %v7491
  %v7493 = vand.u32 %v7492, 4294901760
  %7494 = vmatprep.subr.mxu0 %v7493
  %v7495 = vand.u32 %v6316, 4294901760
  %v7496 = vsub.f32 %v6316, %v7495
  %v7497 = vand.u32 %v7496, 4294901760
  %v7498 = vsub.f32 %v7496, %v7497
  %v7499 = vand.u32 %v7498, 4294901760
  %7500 = vmatpush1.msra.mxu0 %v7499
  %v7501 = vand.u32 %v6319, 4294901760
  %v7502 = vsub.f32 %v6319, %v7501
  %v7503 = vand.u32 %v7502, 4294901760
  %v7504 = vsub.f32 %v7502, %v7503
  %v7505 = vand.u32 %v7504, 4294901760
  %7506 = vmatprep.subr.mxu0 %v7505
  %v7507 = vand.u32 %v6318, 4294901760
  %v7508 = vsub.f32 %v6318, %v7507
  %v7509 = vand.u32 %v7508, 4294901760
  %v7510 = vsub.f32 %v7508, %v7509
  %v7511 = vand.u32 %v7510, 4294901760
  %7512 = vmatpush1.msra.mxu0 %v7511
  %v7513 = vand.u32 %v6321, 4294901760
  %v7514 = vsub.f32 %v6321, %v7513
  %v7515 = vand.u32 %v7514, 4294901760
  %v7516 = vsub.f32 %v7514, %v7515
  %v7517 = vand.u32 %v7516, 4294901760
  %7518 = vmatprep.subr.mxu0 %v7517
  %v7519 = vand.u32 %v6320, 4294901760
  %v7520 = vsub.f32 %v6320, %v7519
  %v7521 = vand.u32 %v7520, 4294901760
  %v7522 = vsub.f32 %v7520, %v7521
  %v7523 = vand.u32 %v7522, 4294901760
  %7524 = vmatpush1.msra.mxu0 %v7523
  %v7525 = vand.u32 %v6323, 4294901760
  %v7526 = vsub.f32 %v6323, %v7525
  %v7527 = vand.u32 %v7526, 4294901760
  %v7528 = vsub.f32 %v7526, %v7527
  %v7529 = vand.u32 %v7528, 4294901760
  %7530 = vmatprep.subr.mxu0 %v7529
  %v7531 = vand.u32 %v6322, 4294901760
  %v7532 = vsub.f32 %v6322, %v7531
  %v7533 = vand.u32 %v7532, 4294901760
  %v7534 = vsub.f32 %v7532, %v7533
  %v7535 = vand.u32 %v7534, 4294901760
  %7536 = vmatpush1.msra.mxu0 %v7535
  %v7537 = vand.u32 %v6325, 4294901760
  %v7538 = vsub.f32 %v6325, %v7537
  %v7539 = vand.u32 %v7538, 4294901760
  %v7540 = vsub.f32 %v7538, %v7539
  %v7541 = vand.u32 %v7540, 4294901760
  %7542 = vmatprep.subr.mxu0 %v7541
  %v7543 = vand.u32 %v6324, 4294901760
  %v7544 = vsub.f32 %v6324, %v7543
  %v7545 = vand.u32 %v7544, 4294901760
  %v7546 = vsub.f32 %v7544, %v7545
  %v7547 = vand.u32 %v7546, 4294901760
  %7548 = vmatpush1.msra.mxu0 %v7547
  %v7549 = vand.u32 %v6327, 4294901760
  %v7550 = vsub.f32 %v6327, %v7549
  %v7551 = vand.u32 %v7550, 4294901760
  %v7552 = vsub.f32 %v7550, %v7551
  %v7553 = vand.u32 %v7552, 4294901760
  %7554 = vmatprep.subr.mxu0 %v7553
  %v7555 = vand.u32 %v6326, 4294901760
  %v7556 = vsub.f32 %v6326, %v7555
  %v7557 = vand.u32 %v7556, 4294901760
  %v7558 = vsub.f32 %v7556, %v7557
  %v7559 = vand.u32 %v7558, 4294901760
  %7560 = vmatpush1.msra.mxu0 %v7559
  %v7561 = vand.u32 %v6329, 4294901760
  %v7562 = vsub.f32 %v6329, %v7561
  %v7563 = vand.u32 %v7562, 4294901760
  %v7564 = vsub.f32 %v7562, %v7563
  %v7565 = vand.u32 %v7564, 4294901760
  %7566 = vmatprep.subr.mxu0 %v7565
  %v7567 = vand.u32 %v6328, 4294901760
  %v7568 = vsub.f32 %v6328, %v7567
  %v7569 = vand.u32 %v7568, 4294901760
  %v7570 = vsub.f32 %v7568, %v7569
  %v7571 = vand.u32 %v7570, 4294901760
  %7572 = vmatpush1.msra.mxu0 %v7571
  %v7573 = vand.u32 %v6331, 4294901760
  %v7574 = vsub.f32 %v6331, %v7573
  %v7575 = vand.u32 %v7574, 4294901760
  %v7576 = vsub.f32 %v7574, %v7575
  %v7577 = vand.u32 %v7576, 4294901760
  %7578 = vmatprep.subr.mxu0 %v7577
  %v7579 = vand.u32 %v6330, 4294901760
  %v7580 = vsub.f32 %v6330, %v7579
  %v7581 = vand.u32 %v7580, 4294901760
  %v7582 = vsub.f32 %v7580, %v7581
  %v7583 = vand.u32 %v7582, 4294901760
  %7584 = vmatpush1.msra.mxu0 %v7583
  %v7585 = vand.u32 %v6333, 4294901760
  %v7586 = vsub.f32 %v6333, %v7585
  %v7587 = vand.u32 %v7586, 4294901760
  %v7588 = vsub.f32 %v7586, %v7587
  %v7589 = vand.u32 %v7588, 4294901760
  %7590 = vmatprep.subr.mxu0 %v7589
  %v7591 = vand.u32 %v6332, 4294901760
  %v7592 = vsub.f32 %v6332, %v7591
  %v7593 = vand.u32 %v7592, 4294901760
  %v7594 = vsub.f32 %v7592, %v7593
  %v7595 = vand.u32 %v7594, 4294901760
  %7596 = vmatpush1.msra.mxu0 %v7595
  %v7597 = vand.u32 %v6335, 4294901760
  %v7598 = vsub.f32 %v6335, %v7597
  %v7599 = vand.u32 %v7598, 4294901760
  %v7600 = vsub.f32 %v7598, %v7599
  %v7601 = vand.u32 %v7600, 4294901760
  %7602 = vmatprep.subr.mxu0 %v7601
  %v7603 = vand.u32 %v6334, 4294901760
  %v7604 = vsub.f32 %v6334, %v7603
  %v7605 = vand.u32 %v7604, 4294901760
  %v7606 = vsub.f32 %v7604, %v7605
  %v7607 = vand.u32 %v7606, 4294901760
  %7608 = vmatpush1.msra.mxu0 %v7607
  %v7609 = vand.u32 %v6337, 4294901760
  %v7610 = vsub.f32 %v6337, %v7609
  %v7611 = vand.u32 %v7610, 4294901760
  %v7612 = vsub.f32 %v7610, %v7611
  %v7613 = vand.u32 %v7612, 4294901760
  %7614 = vmatprep.subr.mxu0 %v7613
  %v7615 = vand.u32 %v6336, 4294901760
  %v7616 = vsub.f32 %v6336, %v7615
  %v7617 = vand.u32 %v7616, 4294901760
  %v7618 = vsub.f32 %v7616, %v7617
  %v7619 = vand.u32 %v7618, 4294901760
  %7620 = vmatpush1.msra.mxu0 %v7619
  %v7621 = vand.u32 %v6339, 4294901760
  %v7622 = vsub.f32 %v6339, %v7621
  %v7623 = vand.u32 %v7622, 4294901760
  %v7624 = vsub.f32 %v7622, %v7623
  %v7625 = vand.u32 %v7624, 4294901760
  %7626 = vmatprep.subr.mxu0 %v7625
  %v7627 = vand.u32 %v6338, 4294901760
  %v7628 = vsub.f32 %v6338, %v7627
  %v7629 = vand.u32 %v7628, 4294901760
  %v7630 = vsub.f32 %v7628, %v7629
  %v7631 = vand.u32 %v7630, 4294901760
  %7632 = vmatpush1.msra.mxu0 %v7631
  %v7633 = vand.u32 %v6181, 4294901760
  %7634 = vmatprep.mubr.f32.mxu0 %v7633
  %v7635 = vand.u32 %v6180, 4294901760
  %7636 = vmatmul.mubr.f32.gmra.mrb[0].mxu0 %v7635
  %v7637 = vpop.f32.mrb[0].mxu0
  %v7638 = vadd.f32 %v6493, %v7637
  %v7639 = vpop.f32.mrb[0].mxu0
  %v7640 = vadd.f32 %v6495, %v7639
  %v7641 = vand.u32 %v6183, 4294901760
  %7642 = vmatprep.mubr.f32.mxu0 %v7641
  %v7643 = vand.u32 %v6182, 4294901760
  %7644 = vmatmul.mubr.f32.gmra.mrb[0].mxu0 %v7643
  %v7645 = vpop.f32.mrb[0].mxu0
  %v7646 = vadd.f32 %v6509, %v7645
  %v7647 = vpop.f32.mrb[0].mxu0
  %v7648 = vadd.f32 %v6511, %v7647
  %v7649 = vand.u32 %v6185, 4294901760
  %7650 = vmatprep.mubr.f32.mxu0 %v7649
  %v7651 = vand.u32 %v6184, 4294901760
  %7652 = vmatmul.mubr.f32.gmra.mrb[0].mxu0 %v7651
  %v7653 = vpop.f32.mrb[0].mxu0
  %v7654 = vadd.f32 %v6525, %v7653
  %v7655 = vpop.f32.mrb[0].mxu0
  %v7656 = vadd.f32 %v6527, %v7655
  %v7657 = vand.u32 %v6187, 4294901760
  %7658 = vmatprep.mubr.f32.mxu0 %v7657
  %v7659 = vand.u32 %v6186, 4294901760
  %7660 = vmatmul.mubr.f32.gmra.mrb[0].mxu0 %v7659
  %v7661 = vpop.f32.mrb[0].mxu0
  %v7662 = vadd.f32 %v6541, %v7661
  %v7663 = vpop.f32.mrb[0].mxu0
  %v7664 = vadd.f32 %v6543, %v7663
  %v7665 = vand.u32 %v6189, 4294901760
  %7666 = vmatprep.mubr.f32.mxu0 %v7665
  %v7667 = vand.u32 %v6188, 4294901760
  %7668 = vmatmul.mubr.f32.gmra.mrb[0].mxu0 %v7667
  %v7669 = vpop.f32.mrb[0].mxu0
  %v7670 = vadd.f32 %v6557, %v7669
  %v7671 = vpop.f32.mrb[0].mxu0
  %v7672 = vadd.f32 %v6559, %v7671
  %v7673 = vand.u32 %v6191, 4294901760
  %7674 = vmatprep.mubr.f32.mxu0 %v7673
  %v7675 = vand.u32 %v6190, 4294901760
  %7676 = vmatmul.mubr.f32.gmra.mrb[0].mxu0 %v7675
  %v7677 = vpop.f32.mrb[0].mxu0
  %v7678 = vadd.f32 %v6573, %v7677
  %v7679 = vpop.f32.mrb[0].mxu0
  %v7680 = vadd.f32 %v6575, %v7679
  %v7681 = vand.u32 %v6193, 4294901760
  %7682 = vmatprep.mubr.f32.mxu0 %v7681
  %v7683 = vand.u32 %v6192, 4294901760
  %7684 = vmatmul.mubr.f32.gmra.mrb[0].mxu0 %v7683
  %v7685 = vpop.f32.mrb[0].mxu0
  %v7686 = vadd.f32 %v6589, %v7685
  %v7687 = vpop.f32.mrb[0].mxu0
  %v7688 = vadd.f32 %v6591, %v7687
  %v7689 = vand.u32 %v6195, 4294901760
  %7690 = vmatprep.mubr.f32.mxu0 %v7689
  %v7691 = vand.u32 %v6194, 4294901760
  %7692 = vmatmul.mubr.f32.gmra.mrb[0].mxu0 %v7691
  %v7693 = vpop.f32.mrb[0].mxu0
  %v7694 = vadd.f32 %v6605, %v7693
  %v7695 = vpop.f32.mrb[0].mxu0
  %v7696 = vadd.f32 %v6607, %v7695
  %v7697 = vand.u32 %v6197, 4294901760
  %7698 = vmatprep.mubr.f32.mxu0 %v7697
  %v7699 = vand.u32 %v6196, 4294901760
  %7700 = vmatmul.mubr.f32.gmra.mrb[0].mxu0 %v7699
  %v7701 = vpop.f32.mrb[0].mxu0
  %v7702 = vadd.f32 %v6621, %v7701
  %v7703 = vpop.f32.mrb[0].mxu0
  %v7704 = vadd.f32 %v6623, %v7703
  %v7705 = vand.u32 %v6199, 4294901760
  %7706 = vmatprep.mubr.f32.mxu0 %v7705
  %v7707 = vand.u32 %v6198, 4294901760
  %7708 = vmatmul.mubr.f32.gmra.mrb[0].mxu0 %v7707
  %v7709 = vpop.f32.mrb[0].mxu0
  %v7710 = vadd.f32 %v6637, %v7709
  %v7711 = vpop.f32.mrb[0].mxu0
  %v7712 = vadd.f32 %v6639, %v7711
  %v7713 = vand.u32 %v6201, 4294901760
  %7714 = vmatprep.mubr.f32.mxu0 %v7713
  %v7715 = vand.u32 %v6200, 4294901760
  %7716 = vmatmul.mubr.f32.gmra.mrb[0].mxu0 %v7715
  %v7717 = vpop.f32.mrb[0].mxu0
  %v7718 = vadd.f32 %v6653, %v7717
  %v7719 = vpop.f32.mrb[0].mxu0
  %v7720 = vadd.f32 %v6655, %v7719
  %v7721 = vand.u32 %v6203, 4294901760
  %7722 = vmatprep.mubr.f32.mxu0 %v7721
  %v7723 = vand.u32 %v6202, 4294901760
  %7724 = vmatmul.mubr.f32.gmra.mrb[0].mxu0 %v7723
  %v7725 = vpop.f32.mrb[0].mxu0
  %v7726 = vadd.f32 %v6669, %v7725
  %v7727 = vpop.f32.mrb[0].mxu0
  %v7728 = vadd.f32 %v6671, %v7727
  %v7729 = vand.u32 %v6205, 4294901760
  %7730 = vmatprep.mubr.f32.mxu0 %v7729
  %v7731 = vand.u32 %v6204, 4294901760
  %7732 = vmatmul.mubr.f32.gmra.mrb[0].mxu0 %v7731
  %v7733 = vpop.f32.mrb[0].mxu0
  %v7734 = vadd.f32 %v6685, %v7733
  %v7735 = vpop.f32.mrb[0].mxu0
  %v7736 = vadd.f32 %v6687, %v7735
  %v7737 = vand.u32 %v6207, 4294901760
  %7738 = vmatprep.mubr.f32.mxu0 %v7737
  %v7739 = vand.u32 %v6206, 4294901760
  %7740 = vmatmul.mubr.f32.gmra.mrb[0].mxu0 %v7739
  %v7741 = vpop.f32.mrb[0].mxu0
  %v7742 = vadd.f32 %v6701, %v7741
  %v7743 = vpop.f32.mrb[0].mxu0
  %v7744 = vadd.f32 %v6703, %v7743
  %v7745 = vand.u32 %v6209, 4294901760
  %7746 = vmatprep.mubr.f32.mxu0 %v7745
  %v7747 = vand.u32 %v6208, 4294901760
  %7748 = vmatmul.mubr.f32.gmra.mrb[0].mxu0 %v7747
  %v7749 = vpop.f32.mrb[0].mxu0
  %v7750 = vadd.f32 %v6717, %v7749
  %v7751 = vpop.f32.mrb[0].mxu0
  %v7752 = vadd.f32 %v6719, %v7751
  %v7753 = vand.u32 %v6211, 4294901760
  %7754 = vmatprep.mubr.f32.mxu0 %v7753
  %v7755 = vand.u32 %v6210, 4294901760
  %7756 = vmatmul.mubr.f32.gmra.mrb[0].mxu0 %v7755
  %v7757 = vpop.f32.mrb[0].mxu0
  %v7758 = vadd.f32 %v6733, %v7757
  %v7759 = vpop.f32.mrb[0].mxu0
  %v7760 = vadd.f32 %v6735, %v7759
  %v7761 = vand.u32 %v6213, 4294901760
  %7762 = vmatprep.mubr.f32.mxu0 %v7761
  %v7763 = vand.u32 %v6212, 4294901760
  %7764 = vmatmul.mubr.f32.gmra.mrb[0].mxu0 %v7763
  %v7765 = vpop.f32.mrb[0].mxu0
  %v7766 = vadd.f32 %v6749, %v7765
  %v7767 = vpop.f32.mrb[0].mxu0
  %v7768 = vadd.f32 %v6751, %v7767
  %v7769 = vand.u32 %v6215, 4294901760
  %7770 = vmatprep.mubr.f32.mxu0 %v7769
  %v7771 = vand.u32 %v6214, 4294901760
  %7772 = vmatmul.mubr.f32.gmra.mrb[0].mxu0 %v7771
  %v7773 = vpop.f32.mrb[0].mxu0
  %v7774 = vadd.f32 %v6765, %v7773
  %v7775 = vpop.f32.mrb[0].mxu0
  %v7776 = vadd.f32 %v6767, %v7775
  %v7777 = vand.u32 %v6217, 4294901760
  %7778 = vmatprep.mubr.f32.mxu0 %v7777
  %v7779 = vand.u32 %v6216, 4294901760
  %7780 = vmatmul.mubr.f32.gmra.mrb[0].mxu0 %v7779
  %v7781 = vpop.f32.mrb[0].mxu0
  %v7782 = vadd.f32 %v6781, %v7781
  %v7783 = vpop.f32.mrb[0].mxu0
  %v7784 = vadd.f32 %v6783, %v7783
  %v7785 = vand.u32 %v6219, 4294901760
  %7786 = vmatprep.mubr.f32.mxu0 %v7785
  %v7787 = vand.u32 %v6218, 4294901760
  %7788 = vmatmul.mubr.f32.gmra.mrb[0].mxu0 %v7787
  %v7789 = vpop.f32.mrb[0].mxu0
  %v7790 = vadd.f32 %v6797, %v7789
  %v7791 = vpop.f32.mrb[0].mxu0
  %v7792 = vadd.f32 %v6799, %v7791
  %v7793 = vand.u32 %v6221, 4294901760
  %7794 = vmatprep.mubr.f32.mxu0 %v7793
  %v7795 = vand.u32 %v6220, 4294901760
  %7796 = vmatmul.mubr.f32.gmra.mrb[0].mxu0 %v7795
  %v7797 = vpop.f32.mrb[0].mxu0
  %v7798 = vadd.f32 %v6813, %v7797
  %v7799 = vpop.f32.mrb[0].mxu0
  %v7800 = vadd.f32 %v6815, %v7799
  %v7801 = vand.u32 %v6223, 4294901760
  %7802 = vmatprep.mubr.f32.mxu0 %v7801
  %v7803 = vand.u32 %v6222, 4294901760
  %7804 = vmatmul.mubr.f32.gmra.mrb[0].mxu0 %v7803
  %v7805 = vpop.f32.mrb[0].mxu0
  %v7806 = vadd.f32 %v6829, %v7805
  %v7807 = vpop.f32.mrb[0].mxu0
  %v7808 = vadd.f32 %v6831, %v7807
  %v7809 = vand.u32 %v6225, 4294901760
  %7810 = vmatprep.mubr.f32.mxu0 %v7809
  %v7811 = vand.u32 %v6224, 4294901760
  %7812 = vmatmul.mubr.f32.gmra.mrb[0].mxu0 %v7811
  %v7813 = vpop.f32.mrb[0].mxu0
  %v7814 = vadd.f32 %v6845, %v7813
  %v7815 = vpop.f32.mrb[0].mxu0
  %v7816 = vadd.f32 %v6847, %v7815
  %v7817 = vand.u32 %v6227, 4294901760
  %7818 = vmatprep.mubr.f32.mxu0 %v7817
  %v7819 = vand.u32 %v6226, 4294901760
  %7820 = vmatmul.mubr.f32.gmra.mrb[0].mxu0 %v7819
  %v7821 = vpop.f32.mrb[0].mxu0
  %v7822 = vadd.f32 %v6861, %v7821
  %v7823 = vpop.f32.mrb[0].mxu0
  %v7824 = vadd.f32 %v6863, %v7823
  %v7825 = vand.u32 %v6229, 4294901760
  %7826 = vmatprep.mubr.f32.mxu0 %v7825
  %v7827 = vand.u32 %v6228, 4294901760
  %7828 = vmatmul.mubr.f32.gmra.mrb[0].mxu0 %v7827
  %v7829 = vpop.f32.mrb[0].mxu0
  %v7830 = vadd.f32 %v6877, %v7829
  %v7831 = vpop.f32.mrb[0].mxu0
  %v7832 = vadd.f32 %v6879, %v7831
  %v7833 = vand.u32 %v6231, 4294901760
  %7834 = vmatprep.mubr.f32.mxu0 %v7833
  %v7835 = vand.u32 %v6230, 4294901760
  %7836 = vmatmul.mubr.f32.gmra.mrb[0].mxu0 %v7835
  %v7837 = vpop.f32.mrb[0].mxu0
  %v7838 = vadd.f32 %v6893, %v7837
  %v7839 = vpop.f32.mrb[0].mxu0
  %v7840 = vadd.f32 %v6895, %v7839
  %v7841 = vand.u32 %v6233, 4294901760
  %7842 = vmatprep.mubr.f32.mxu0 %v7841
  %v7843 = vand.u32 %v6232, 4294901760
  %7844 = vmatmul.mubr.f32.gmra.mrb[0].mxu0 %v7843
  %v7845 = vpop.f32.mrb[0].mxu0
  %v7846 = vadd.f32 %v6909, %v7845
  %v7847 = vpop.f32.mrb[0].mxu0
  %v7848 = vadd.f32 %v6911, %v7847
  %v7849 = vand.u32 %v6235, 4294901760
  %7850 = vmatprep.mubr.f32.mxu0 %v7849
  %v7851 = vand.u32 %v6234, 4294901760
  %7852 = vmatmul.mubr.f32.gmra.mrb[0].mxu0 %v7851
  %v7853 = vpop.f32.mrb[0].mxu0
  %v7854 = vadd.f32 %v6925, %v7853
  %v7855 = vpop.f32.mrb[0].mxu0
  %v7856 = vadd.f32 %v6927, %v7855
  %v7857 = vand.u32 %v6237, 4294901760
  %7858 = vmatprep.mubr.f32.mxu0 %v7857
  %v7859 = vand.u32 %v6236, 4294901760
  %7860 = vmatmul.mubr.f32.gmra.mrb[0].mxu0 %v7859
  %v7861 = vpop.f32.mrb[0].mxu0
  %v7862 = vadd.f32 %v6941, %v7861
  %v7863 = vpop.f32.mrb[0].mxu0
  %v7864 = vadd.f32 %v6943, %v7863
  %v7865 = vand.u32 %v6239, 4294901760
  %7866 = vmatprep.mubr.f32.mxu0 %v7865
  %v7867 = vand.u32 %v6238, 4294901760
  %7868 = vmatmul.mubr.f32.gmra.mrb[0].mxu0 %v7867
  %v7869 = vpop.f32.mrb[0].mxu0
  %v7870 = vadd.f32 %v6957, %v7869
  %v7871 = vpop.f32.mrb[0].mxu0
  %v7872 = vadd.f32 %v6959, %v7871
  %v7873 = vand.u32 %v6241, 4294901760
  %7874 = vmatprep.mubr.f32.mxu0 %v7873
  %v7875 = vand.u32 %v6240, 4294901760
  %7876 = vmatmul.mubr.f32.gmra.mrb[0].mxu0 %v7875
  %v7877 = vpop.f32.mrb[0].mxu0
  %v7878 = vadd.f32 %v6973, %v7877
  %v7879 = vpop.f32.mrb[0].mxu0
  %v7880 = vadd.f32 %v6975, %v7879
  %v7881 = vand.u32 %v6243, 4294901760
  %7882 = vmatprep.mubr.f32.mxu0 %v7881
  %v7883 = vand.u32 %v6242, 4294901760
  %7884 = vmatmul.mubr.f32.gmra.mrb[0].mxu0 %v7883
  %v7885 = vpop.f32.mrb[0].mxu0
  %v7886 = vadd.f32 %v6989, %v7885
  %v7887 = vpop.f32.mrb[0].mxu0
  %v7888 = vadd.f32 %v6991, %v7887
  %v7889 = vand.u32 %v6245, 4294901760
  %7890 = vmatprep.mubr.f32.mxu0 %v7889
  %v7891 = vand.u32 %v6244, 4294901760
  %7892 = vmatmul.mubr.f32.gmra.mrb[0].mxu0 %v7891
  %v7893 = vpop.f32.mrb[0].mxu0
  %v7894 = vadd.f32 %v7005, %v7893
  %v7895 = vpop.f32.mrb[0].mxu0
  %v7896 = vadd.f32 %v7007, %v7895
  %v7897 = vand.u32 %v6247, 4294901760
  %7898 = vmatprep.mubr.f32.mxu0 %v7897
  %v7899 = vand.u32 %v6246, 4294901760
  %7900 = vmatmul.mubr.f32.gmra.mrb[0].mxu0 %v7899
  %v7901 = vpop.f32.mrb[0].mxu0
  %v7902 = vadd.f32 %v7021, %v7901
  %v7903 = vpop.f32.mrb[0].mxu0
  %v7904 = vadd.f32 %v7023, %v7903
  %v7905 = vand.u32 %v6249, 4294901760
  %7906 = vmatprep.mubr.f32.mxu0 %v7905
  %v7907 = vand.u32 %v6248, 4294901760
  %7908 = vmatmul.mubr.f32.gmra.mrb[0].mxu0 %v7907
  %v7909 = vpop.f32.mrb[0].mxu0
  %v7910 = vadd.f32 %v7037, %v7909
  %v7911 = vpop.f32.mrb[0].mxu0
  %v7912 = vadd.f32 %v7039, %v7911
  %v7913 = vand.u32 %v6251, 4294901760
  %7914 = vmatprep.mubr.f32.mxu0 %v7913
  %v7915 = vand.u32 %v6250, 4294901760
  %7916 = vmatmul.mubr.f32.gmra.mrb[0].mxu0 %v7915
  %v7917 = vpop.f32.mrb[0].mxu0
  %v7918 = vadd.f32 %v7053, %v7917
  %v7919 = vpop.f32.mrb[0].mxu0
  %v7920 = vadd.f32 %v7055, %v7919
  %v7921 = vand.u32 %v6253, 4294901760
  %7922 = vmatprep.mubr.f32.mxu0 %v7921
  %v7923 = vand.u32 %v6252, 4294901760
  %7924 = vmatmul.mubr.f32.gmra.mrb[0].mxu0 %v7923
  %v7925 = vpop.f32.mrb[0].mxu0
  %v7926 = vadd.f32 %v7069, %v7925
  %v7927 = vpop.f32.mrb[0].mxu0
  %v7928 = vadd.f32 %v7071, %v7927
  %v7929 = vand.u32 %v6255, 4294901760
  %7930 = vmatprep.mubr.f32.mxu0 %v7929
  %v7931 = vand.u32 %v6254, 4294901760
  %7932 = vmatmul.mubr.f32.gmra.mrb[0].mxu0 %v7931
  %v7933 = vpop.f32.mrb[0].mxu0
  %v7934 = vadd.f32 %v7085, %v7933
  %v7935 = vpop.f32.mrb[0].mxu0
  %v7936 = vadd.f32 %v7087, %v7935
  %v7937 = vand.u32 %v6257, 4294901760
  %7938 = vmatprep.mubr.f32.mxu0 %v7937
  %v7939 = vand.u32 %v6256, 4294901760
  %7940 = vmatmul.mubr.f32.gmra.mrb[0].mxu0 %v7939
  %v7941 = vpop.f32.mrb[0].mxu0
  %v7942 = vadd.f32 %v7101, %v7941
  %v7943 = vpop.f32.mrb[0].mxu0
  %v7944 = vadd.f32 %v7103, %v7943
  %v7945 = vand.u32 %v6259, 4294901760
  %7946 = vmatprep.mubr.f32.mxu0 %v7945
  %v7947 = vand.u32 %v6258, 4294901760
  %7948 = vmatmul.mubr.f32.gmra.mrb[0].mxu0 %v7947
  %v7949 = vpop.f32.mrb[0].mxu0
  %v7950 = vadd.f32 %v7117, %v7949
  %v7951 = vpop.f32.mrb[0].mxu0
  %v7952 = vadd.f32 %v7119, %v7951
  %v7953 = vand.u32 %v6261, 4294901760
  %7954 = vmatprep.mubr.f32.mxu0 %v7953
  %v7955 = vand.u32 %v6260, 4294901760
  %7956 = vmatmul.mubr.f32.gmra.mrb[0].mxu0 %v7955
  %v7957 = vpop.f32.mrb[0].mxu0
  %v7958 = vadd.f32 %v7133, %v7957
  %v7959 = vpop.f32.mrb[0].mxu0
  %v7960 = vadd.f32 %v7135, %v7959
  %v7961 = vand.u32 %v6263, 4294901760
  %7962 = vmatprep.mubr.f32.mxu0 %v7961
  %v7963 = vand.u32 %v6262, 4294901760
  %7964 = vmatmul.mubr.f32.gmra.mrb[0].mxu0 %v7963
  %v7965 = vpop.f32.mrb[0].mxu0
  %v7966 = vadd.f32 %v7149, %v7965
  %v7967 = vpop.f32.mrb[0].mxu0
  %v7968 = vadd.f32 %v7151, %v7967
  %v7969 = vand.u32 %v6265, 4294901760
  %7970 = vmatprep.mubr.f32.mxu0 %v7969
  %v7971 = vand.u32 %v6264, 4294901760
  %7972 = vmatmul.mubr.f32.gmra.mrb[0].mxu0 %v7971
  %v7973 = vpop.f32.mrb[0].mxu0
  %v7974 = vadd.f32 %v7165, %v7973
  %v7975 = vpop.f32.mrb[0].mxu0
  %v7976 = vadd.f32 %v7167, %v7975
  %v7977 = vand.u32 %v6267, 4294901760
  %7978 = vmatprep.mubr.f32.mxu0 %v7977
  %v7979 = vand.u32 %v6266, 4294901760
  %7980 = vmatmul.mubr.f32.gmra.mrb[0].mxu0 %v7979
  %v7981 = vpop.f32.mrb[0].mxu0
  %v7982 = vadd.f32 %v7181, %v7981
  %v7983 = vpop.f32.mrb[0].mxu0
  %v7984 = vadd.f32 %v7183, %v7983
  %v7985 = vand.u32 %v6269, 4294901760
  %7986 = vmatprep.mubr.f32.mxu0 %v7985
  %v7987 = vand.u32 %v6268, 4294901760
  %7988 = vmatmul.mubr.f32.gmra.mrb[0].mxu0 %v7987
  %v7989 = vpop.f32.mrb[0].mxu0
  %v7990 = vadd.f32 %v7197, %v7989
  %v7991 = vpop.f32.mrb[0].mxu0
  %v7992 = vadd.f32 %v7199, %v7991
  %v7993 = vand.u32 %v6271, 4294901760
  %7994 = vmatprep.mubr.f32.mxu0 %v7993
  %v7995 = vand.u32 %v6270, 4294901760
  %7996 = vmatmul.mubr.f32.gmra.mrb[0].mxu0 %v7995
  %v7997 = vpop.f32.mrb[0].mxu0
  %v7998 = vadd.f32 %v7213, %v7997
  %v7999 = vpop.f32.mrb[0].mxu0
  %v8000 = vadd.f32 %v7215, %v7999
  %v8001 = vand.u32 %v6273, 4294901760
  %8002 = vmatprep.mubr.f32.mxu0 %v8001
  %v8003 = vand.u32 %v6272, 4294901760
  %8004 = vmatmul.mubr.f32.gmra.mrb[0].mxu0 %v8003
  %v8005 = vpop.f32.mrb[0].mxu0
  %v8006 = vadd.f32 %v7229, %v8005
  %v8007 = vpop.f32.mrb[0].mxu0
  %v8008 = vadd.f32 %v7231, %v8007
  %v8009 = vand.u32 %v6275, 4294901760
  %8010 = vmatprep.mubr.f32.mxu0 %v8009
  %v8011 = vand.u32 %v6274, 4294901760
  %8012 = vmatmul.mubr.f32.gmra.mrb[0].mxu0 %v8011
  %v8013 = vpop.f32.mrb[0].mxu0
  %v8014 = vadd.f32 %v7245, %v8013
  %v8015 = vpop.f32.mrb[0].mxu0
  %v8016 = vadd.f32 %v7247, %v8015
  %8017 = vdwg.mxu0
  %v8018 = vand.u32 %v6277, 4294901760
  %v8019 = vsub.f32 %v6277, %v8018
  %8020 = vmatprep.subr.mxu0 %v8019
  %v8021 = vand.u32 %v6276, 4294901760
  %v8022 = vsub.f32 %v6276, %v8021
  %8023 = vmatpush1.msra.mxu0 %v8022
  %v8024 = vand.u32 %v6279, 4294901760
  %v8025 = vsub.f32 %v6279, %v8024
  %8026 = vmatprep.subr.mxu0 %v8025
  %v8027 = vand.u32 %v6278, 4294901760
  %v8028 = vsub.f32 %v6278, %v8027
  %8029 = vmatpush1.msra.mxu0 %v8028
  %v8030 = vand.u32 %v6281, 4294901760
  %v8031 = vsub.f32 %v6281, %v8030
  %8032 = vmatprep.subr.mxu0 %v8031
  %v8033 = vand.u32 %v6280, 4294901760
  %v8034 = vsub.f32 %v6280, %v8033
  %8035 = vmatpush1.msra.mxu0 %v8034
  %v8036 = vand.u32 %v6283, 4294901760
  %v8037 = vsub.f32 %v6283, %v8036
  %8038 = vmatprep.subr.mxu0 %v8037
  %v8039 = vand.u32 %v6282, 4294901760
  %v8040 = vsub.f32 %v6282, %v8039
  %8041 = vmatpush1.msra.mxu0 %v8040
  %v8042 = vand.u32 %v6285, 4294901760
  %v8043 = vsub.f32 %v6285, %v8042
  %8044 = vmatprep.subr.mxu0 %v8043
  %v8045 = vand.u32 %v6284, 4294901760
  %v8046 = vsub.f32 %v6284, %v8045
  %8047 = vmatpush1.msra.mxu0 %v8046
  %v8048 = vand.u32 %v6287, 4294901760
  %v8049 = vsub.f32 %v6287, %v8048
  %8050 = vmatprep.subr.mxu0 %v8049
  %v8051 = vand.u32 %v6286, 4294901760
  %v8052 = vsub.f32 %v6286, %v8051
  %8053 = vmatpush1.msra.mxu0 %v8052
  %v8054 = vand.u32 %v6289, 4294901760
  %v8055 = vsub.f32 %v6289, %v8054
  %8056 = vmatprep.subr.mxu0 %v8055
  %v8057 = vand.u32 %v6288, 4294901760
  %v8058 = vsub.f32 %v6288, %v8057
  %8059 = vmatpush1.msra.mxu0 %v8058
  %v8060 = vand.u32 %v6291, 4294901760
  %v8061 = vsub.f32 %v6291, %v8060
  %8062 = vmatprep.subr.mxu0 %v8061
  %v8063 = vand.u32 %v6290, 4294901760
  %v8064 = vsub.f32 %v6290, %v8063
  %8065 = vmatpush1.msra.mxu0 %v8064
  %v8066 = vand.u32 %v6293, 4294901760
  %v8067 = vsub.f32 %v6293, %v8066
  %8068 = vmatprep.subr.mxu0 %v8067
  %v8069 = vand.u32 %v6292, 4294901760
  %v8070 = vsub.f32 %v6292, %v8069
  %8071 = vmatpush1.msra.mxu0 %v8070
  %v8072 = vand.u32 %v6295, 4294901760
  %v8073 = vsub.f32 %v6295, %v8072
  %8074 = vmatprep.subr.mxu0 %v8073
  %v8075 = vand.u32 %v6294, 4294901760
  %v8076 = vsub.f32 %v6294, %v8075
  %8077 = vmatpush1.msra.mxu0 %v8076
  %v8078 = vand.u32 %v6297, 4294901760
  %v8079 = vsub.f32 %v6297, %v8078
  %8080 = vmatprep.subr.mxu0 %v8079
  %v8081 = vand.u32 %v6296, 4294901760
  %v8082 = vsub.f32 %v6296, %v8081
  %8083 = vmatpush1.msra.mxu0 %v8082
  %v8084 = vand.u32 %v6299, 4294901760
  %v8085 = vsub.f32 %v6299, %v8084
  %8086 = vmatprep.subr.mxu0 %v8085
  %v8087 = vand.u32 %v6298, 4294901760
  %v8088 = vsub.f32 %v6298, %v8087
  %8089 = vmatpush1.msra.mxu0 %v8088
  %v8090 = vand.u32 %v6301, 4294901760
  %v8091 = vsub.f32 %v6301, %v8090
  %8092 = vmatprep.subr.mxu0 %v8091
  %v8093 = vand.u32 %v6300, 4294901760
  %v8094 = vsub.f32 %v6300, %v8093
  %8095 = vmatpush1.msra.mxu0 %v8094
  %v8096 = vand.u32 %v6303, 4294901760
  %v8097 = vsub.f32 %v6303, %v8096
  %8098 = vmatprep.subr.mxu0 %v8097
  %v8099 = vand.u32 %v6302, 4294901760
  %v8100 = vsub.f32 %v6302, %v8099
  %8101 = vmatpush1.msra.mxu0 %v8100
  %v8102 = vand.u32 %v6305, 4294901760
  %v8103 = vsub.f32 %v6305, %v8102
  %8104 = vmatprep.subr.mxu0 %v8103
  %v8105 = vand.u32 %v6304, 4294901760
  %v8106 = vsub.f32 %v6304, %v8105
  %8107 = vmatpush1.msra.mxu0 %v8106
  %v8108 = vand.u32 %v6307, 4294901760
  %v8109 = vsub.f32 %v6307, %v8108
  %8110 = vmatprep.subr.mxu0 %v8109
  %v8111 = vand.u32 %v6306, 4294901760
  %v8112 = vsub.f32 %v6306, %v8111
  %8113 = vmatpush1.msra.mxu0 %v8112
  %v8114 = vand.u32 %v6309, 4294901760
  %v8115 = vsub.f32 %v6309, %v8114
  %8116 = vmatprep.subr.mxu0 %v8115
  %v8117 = vand.u32 %v6308, 4294901760
  %v8118 = vsub.f32 %v6308, %v8117
  %8119 = vmatpush1.msra.mxu0 %v8118
  %v8120 = vand.u32 %v6311, 4294901760
  %v8121 = vsub.f32 %v6311, %v8120
  %8122 = vmatprep.subr.mxu0 %v8121
  %v8123 = vand.u32 %v6310, 4294901760
  %v8124 = vsub.f32 %v6310, %v8123
  %8125 = vmatpush1.msra.mxu0 %v8124
  %v8126 = vand.u32 %v6313, 4294901760
  %v8127 = vsub.f32 %v6313, %v8126
  %8128 = vmatprep.subr.mxu0 %v8127
  %v8129 = vand.u32 %v6312, 4294901760
  %v8130 = vsub.f32 %v6312, %v8129
  %8131 = vmatpush1.msra.mxu0 %v8130
  %v8132 = vand.u32 %v6315, 4294901760
  %v8133 = vsub.f32 %v6315, %v8132
  %8134 = vmatprep.subr.mxu0 %v8133
  %v8135 = vand.u32 %v6314, 4294901760
  %v8136 = vsub.f32 %v6314, %v8135
  %8137 = vmatpush1.msra.mxu0 %v8136
  %v8138 = vand.u32 %v6317, 4294901760
  %v8139 = vsub.f32 %v6317, %v8138
  %8140 = vmatprep.subr.mxu0 %v8139
  %v8141 = vand.u32 %v6316, 4294901760
  %v8142 = vsub.f32 %v6316, %v8141
  %8143 = vmatpush1.msra.mxu0 %v8142
  %v8144 = vand.u32 %v6319, 4294901760
  %v8145 = vsub.f32 %v6319, %v8144
  %8146 = vmatprep.subr.mxu0 %v8145
  %v8147 = vand.u32 %v6318, 4294901760
  %v8148 = vsub.f32 %v6318, %v8147
  %8149 = vmatpush1.msra.mxu0 %v8148
  %v8150 = vand.u32 %v6321, 4294901760
  %v8151 = vsub.f32 %v6321, %v8150
  %8152 = vmatprep.subr.mxu0 %v8151
  %v8153 = vand.u32 %v6320, 4294901760
  %v8154 = vsub.f32 %v6320, %v8153
  %8155 = vmatpush1.msra.mxu0 %v8154
  %v8156 = vand.u32 %v6323, 4294901760
  %v8157 = vsub.f32 %v6323, %v8156
  %8158 = vmatprep.subr.mxu0 %v8157
  %v8159 = vand.u32 %v6322, 4294901760
  %v8160 = vsub.f32 %v6322, %v8159
  %8161 = vmatpush1.msra.mxu0 %v8160
  %v8162 = vand.u32 %v6325, 4294901760
  %v8163 = vsub.f32 %v6325, %v8162
  %8164 = vmatprep.subr.mxu0 %v8163
  %v8165 = vand.u32 %v6324, 4294901760
  %v8166 = vsub.f32 %v6324, %v8165
  %8167 = vmatpush1.msra.mxu0 %v8166
  %v8168 = vand.u32 %v6327, 4294901760
  %v8169 = vsub.f32 %v6327, %v8168
  %8170 = vmatprep.subr.mxu0 %v8169
  %v8171 = vand.u32 %v6326, 4294901760
  %v8172 = vsub.f32 %v6326, %v8171
  %8173 = vmatpush1.msra.mxu0 %v8172
  %v8174 = vand.u32 %v6329, 4294901760
  %v8175 = vsub.f32 %v6329, %v8174
  %8176 = vmatprep.subr.mxu0 %v8175
  %v8177 = vand.u32 %v6328, 4294901760
  %v8178 = vsub.f32 %v6328, %v8177
  %8179 = vmatpush1.msra.mxu0 %v8178
  %v8180 = vand.u32 %v6331, 4294901760
  %v8181 = vsub.f32 %v6331, %v8180
  %8182 = vmatprep.subr.mxu0 %v8181
  %v8183 = vand.u32 %v6330, 4294901760
  %v8184 = vsub.f32 %v6330, %v8183
  %8185 = vmatpush1.msra.mxu0 %v8184
  %v8186 = vand.u32 %v6333, 4294901760
  %v8187 = vsub.f32 %v6333, %v8186
  %8188 = vmatprep.subr.mxu0 %v8187
  %v8189 = vand.u32 %v6332, 4294901760
  %v8190 = vsub.f32 %v6332, %v8189
  %8191 = vmatpush1.msra.mxu0 %v8190
  %v8192 = vand.u32 %v6335, 4294901760
  %v8193 = vsub.f32 %v6335, %v8192
  %8194 = vmatprep.subr.mxu0 %v8193
  %v8195 = vand.u32 %v6334, 4294901760
  %v8196 = vsub.f32 %v6334, %v8195
  %8197 = vmatpush1.msra.mxu0 %v8196
  %v8198 = vand.u32 %v6337, 4294901760
  %v8199 = vsub.f32 %v6337, %v8198
  %8200 = vmatprep.subr.mxu0 %v8199
  %v8201 = vand.u32 %v6336, 4294901760
  %v8202 = vsub.f32 %v6336, %v8201
  %8203 = vmatpush1.msra.mxu0 %v8202
  %v8204 = vand.u32 %v6339, 4294901760
  %v8205 = vsub.f32 %v6339, %v8204
  %8206 = vmatprep.subr.mxu0 %v8205
  %v8207 = vand.u32 %v6338, 4294901760
  %v8208 = vsub.f32 %v6338, %v8207
  %8209 = vmatpush1.msra.mxu0 %v8208
  %v8210 = vand.u32 %v6181, 4294901760
  %v8211 = vsub.f32 %v6181, %v8210
  %8212 = vmatprep.mubr.f32.mxu0 %v8211
  %v8213 = vand.u32 %v6180, 4294901760
  %v8214 = vsub.f32 %v6180, %v8213
  %8215 = vmatmul.mubr.f32.gmra.mrb[0].mxu0 %v8214
  %v8216 = vpop.f32.mrb[0].mxu0
  %v8217 = vadd.f32 %v7638, %v8216
  %v8218 = vpop.f32.mrb[0].mxu0
  %v8219 = vadd.f32 %v7640, %v8218
  %v8220 = vand.u32 %v6183, 4294901760
  %v8221 = vsub.f32 %v6183, %v8220
  %8222 = vmatprep.mubr.f32.mxu0 %v8221
  %v8223 = vand.u32 %v6182, 4294901760
  %v8224 = vsub.f32 %v6182, %v8223
  %8225 = vmatmul.mubr.f32.gmra.mrb[0].mxu0 %v8224
  %v8226 = vpop.f32.mrb[0].mxu0
  %v8227 = vadd.f32 %v7646, %v8226
  %v8228 = vpop.f32.mrb[0].mxu0
  %v8229 = vadd.f32 %v7648, %v8228
  %v8230 = vand.u32 %v6185, 4294901760
  %v8231 = vsub.f32 %v6185, %v8230
  %8232 = vmatprep.mubr.f32.mxu0 %v8231
  %v8233 = vand.u32 %v6184, 4294901760
  %v8234 = vsub.f32 %v6184, %v8233
  %8235 = vmatmul.mubr.f32.gmra.mrb[0].mxu0 %v8234
  %v8236 = vpop.f32.mrb[0].mxu0
  %v8237 = vadd.f32 %v7654, %v8236
  %v8238 = vpop.f32.mrb[0].mxu0
  %v8239 = vadd.f32 %v7656, %v8238
  %v8240 = vand.u32 %v6187, 4294901760
  %v8241 = vsub.f32 %v6187, %v8240
  %8242 = vmatprep.mubr.f32.mxu0 %v8241
  %v8243 = vand.u32 %v6186, 4294901760
  %v8244 = vsub.f32 %v6186, %v8243
  %8245 = vmatmul.mubr.f32.gmra.mrb[0].mxu0 %v8244
  %v8246 = vpop.f32.mrb[0].mxu0
  %v8247 = vadd.f32 %v7662, %v8246
  %v8248 = vpop.f32.mrb[0].mxu0
  %v8249 = vadd.f32 %v7664, %v8248
  %v8250 = vand.u32 %v6189, 4294901760
  %v8251 = vsub.f32 %v6189, %v8250
  %8252 = vmatprep.mubr.f32.mxu0 %v8251
  %v8253 = vand.u32 %v6188, 4294901760
  %v8254 = vsub.f32 %v6188, %v8253
  %8255 = vmatmul.mubr.f32.gmra.mrb[0].mxu0 %v8254
  %v8256 = vpop.f32.mrb[0].mxu0
  %v8257 = vadd.f32 %v7670, %v8256
  %v8258 = vpop.f32.mrb[0].mxu0
  %v8259 = vadd.f32 %v7672, %v8258
  %v8260 = vand.u32 %v6191, 4294901760
  %v8261 = vsub.f32 %v6191, %v8260
  %8262 = vmatprep.mubr.f32.mxu0 %v8261
  %v8263 = vand.u32 %v6190, 4294901760
  %v8264 = vsub.f32 %v6190, %v8263
  %8265 = vmatmul.mubr.f32.gmra.mrb[0].mxu0 %v8264
  %v8266 = vpop.f32.mrb[0].mxu0
  %v8267 = vadd.f32 %v7678, %v8266
  %v8268 = vpop.f32.mrb[0].mxu0
  %v8269 = vadd.f32 %v7680, %v8268
  %v8270 = vand.u32 %v6193, 4294901760
  %v8271 = vsub.f32 %v6193, %v8270
  %8272 = vmatprep.mubr.f32.mxu0 %v8271
  %v8273 = vand.u32 %v6192, 4294901760
  %v8274 = vsub.f32 %v6192, %v8273
  %8275 = vmatmul.mubr.f32.gmra.mrb[0].mxu0 %v8274
  %v8276 = vpop.f32.mrb[0].mxu0
  %v8277 = vadd.f32 %v7686, %v8276
  %v8278 = vpop.f32.mrb[0].mxu0
  %v8279 = vadd.f32 %v7688, %v8278
  %v8280 = vand.u32 %v6195, 4294901760
  %v8281 = vsub.f32 %v6195, %v8280
  %8282 = vmatprep.mubr.f32.mxu0 %v8281
  %v8283 = vand.u32 %v6194, 4294901760
  %v8284 = vsub.f32 %v6194, %v8283
  %8285 = vmatmul.mubr.f32.gmra.mrb[0].mxu0 %v8284
  %v8286 = vpop.f32.mrb[0].mxu0
  %v8287 = vadd.f32 %v7694, %v8286
  %v8288 = vpop.f32.mrb[0].mxu0
  %v8289 = vadd.f32 %v7696, %v8288
  %v8290 = vand.u32 %v6197, 4294901760
  %v8291 = vsub.f32 %v6197, %v8290
  %8292 = vmatprep.mubr.f32.mxu0 %v8291
  %v8293 = vand.u32 %v6196, 4294901760
  %v8294 = vsub.f32 %v6196, %v8293
  %8295 = vmatmul.mubr.f32.gmra.mrb[0].mxu0 %v8294
  %v8296 = vpop.f32.mrb[0].mxu0
  %v8297 = vadd.f32 %v7702, %v8296
  %v8298 = vpop.f32.mrb[0].mxu0
  %v8299 = vadd.f32 %v7704, %v8298
  %v8300 = vand.u32 %v6199, 4294901760
  %v8301 = vsub.f32 %v6199, %v8300
  %8302 = vmatprep.mubr.f32.mxu0 %v8301
  %v8303 = vand.u32 %v6198, 4294901760
  %v8304 = vsub.f32 %v6198, %v8303
  %8305 = vmatmul.mubr.f32.gmra.mrb[0].mxu0 %v8304
  %v8306 = vpop.f32.mrb[0].mxu0
  %v8307 = vadd.f32 %v7710, %v8306
  %v8308 = vpop.f32.mrb[0].mxu0
  %v8309 = vadd.f32 %v7712, %v8308
  %v8310 = vand.u32 %v6201, 4294901760
  %v8311 = vsub.f32 %v6201, %v8310
  %8312 = vmatprep.mubr.f32.mxu0 %v8311
  %v8313 = vand.u32 %v6200, 4294901760
  %v8314 = vsub.f32 %v6200, %v8313
  %8315 = vmatmul.mubr.f32.gmra.mrb[0].mxu0 %v8314
  %v8316 = vpop.f32.mrb[0].mxu0
  %v8317 = vadd.f32 %v7718, %v8316
  %v8318 = vpop.f32.mrb[0].mxu0
  %v8319 = vadd.f32 %v7720, %v8318
  %v8320 = vand.u32 %v6203, 4294901760
  %v8321 = vsub.f32 %v6203, %v8320
  %8322 = vmatprep.mubr.f32.mxu0 %v8321
  %v8323 = vand.u32 %v6202, 4294901760
  %v8324 = vsub.f32 %v6202, %v8323
  %8325 = vmatmul.mubr.f32.gmra.mrb[0].mxu0 %v8324
  %v8326 = vpop.f32.mrb[0].mxu0
  %v8327 = vadd.f32 %v7726, %v8326
  %v8328 = vpop.f32.mrb[0].mxu0
  %v8329 = vadd.f32 %v7728, %v8328
  %v8330 = vand.u32 %v6205, 4294901760
  %v8331 = vsub.f32 %v6205, %v8330
  %8332 = vmatprep.mubr.f32.mxu0 %v8331
  %v8333 = vand.u32 %v6204, 4294901760
  %v8334 = vsub.f32 %v6204, %v8333
  %8335 = vmatmul.mubr.f32.gmra.mrb[0].mxu0 %v8334
  %v8336 = vpop.f32.mrb[0].mxu0
  %v8337 = vadd.f32 %v7734, %v8336
  %v8338 = vpop.f32.mrb[0].mxu0
  %v8339 = vadd.f32 %v7736, %v8338
  %v8340 = vand.u32 %v6207, 4294901760
  %v8341 = vsub.f32 %v6207, %v8340
  %8342 = vmatprep.mubr.f32.mxu0 %v8341
  %v8343 = vand.u32 %v6206, 4294901760
  %v8344 = vsub.f32 %v6206, %v8343
  %8345 = vmatmul.mubr.f32.gmra.mrb[0].mxu0 %v8344
  %v8346 = vpop.f32.mrb[0].mxu0
  %v8347 = vadd.f32 %v7742, %v8346
  %v8348 = vpop.f32.mrb[0].mxu0
  %v8349 = vadd.f32 %v7744, %v8348
  %v8350 = vand.u32 %v6209, 4294901760
  %v8351 = vsub.f32 %v6209, %v8350
  %8352 = vmatprep.mubr.f32.mxu0 %v8351
  %v8353 = vand.u32 %v6208, 4294901760
  %v8354 = vsub.f32 %v6208, %v8353
  %8355 = vmatmul.mubr.f32.gmra.mrb[0].mxu0 %v8354
  %v8356 = vpop.f32.mrb[0].mxu0
  %v8357 = vadd.f32 %v7750, %v8356
  %v8358 = vpop.f32.mrb[0].mxu0
  %v8359 = vadd.f32 %v7752, %v8358
  %v8360 = vand.u32 %v6211, 4294901760
  %v8361 = vsub.f32 %v6211, %v8360
  %8362 = vmatprep.mubr.f32.mxu0 %v8361
  %v8363 = vand.u32 %v6210, 4294901760
  %v8364 = vsub.f32 %v6210, %v8363
  %8365 = vmatmul.mubr.f32.gmra.mrb[0].mxu0 %v8364
  %v8366 = vpop.f32.mrb[0].mxu0
  %v8367 = vadd.f32 %v7758, %v8366
  %v8368 = vpop.f32.mrb[0].mxu0
  %v8369 = vadd.f32 %v7760, %v8368
  %v8370 = vand.u32 %v6213, 4294901760
  %v8371 = vsub.f32 %v6213, %v8370
  %8372 = vmatprep.mubr.f32.mxu0 %v8371
  %v8373 = vand.u32 %v6212, 4294901760
  %v8374 = vsub.f32 %v6212, %v8373
  %8375 = vmatmul.mubr.f32.gmra.mrb[0].mxu0 %v8374
  %v8376 = vpop.f32.mrb[0].mxu0
  %v8377 = vadd.f32 %v7766, %v8376
  %v8378 = vpop.f32.mrb[0].mxu0
  %v8379 = vadd.f32 %v7768, %v8378
  %v8380 = vand.u32 %v6215, 4294901760
  %v8381 = vsub.f32 %v6215, %v8380
  %8382 = vmatprep.mubr.f32.mxu0 %v8381
  %v8383 = vand.u32 %v6214, 4294901760
  %v8384 = vsub.f32 %v6214, %v8383
  %8385 = vmatmul.mubr.f32.gmra.mrb[0].mxu0 %v8384
  %v8386 = vpop.f32.mrb[0].mxu0
  %v8387 = vadd.f32 %v7774, %v8386
  %v8388 = vpop.f32.mrb[0].mxu0
  %v8389 = vadd.f32 %v7776, %v8388
  %v8390 = vand.u32 %v6217, 4294901760
  %v8391 = vsub.f32 %v6217, %v8390
  %8392 = vmatprep.mubr.f32.mxu0 %v8391
  %v8393 = vand.u32 %v6216, 4294901760
  %v8394 = vsub.f32 %v6216, %v8393
  %8395 = vmatmul.mubr.f32.gmra.mrb[0].mxu0 %v8394
  %v8396 = vpop.f32.mrb[0].mxu0
  %v8397 = vadd.f32 %v7782, %v8396
  %v8398 = vpop.f32.mrb[0].mxu0
  %v8399 = vadd.f32 %v7784, %v8398
  %v8400 = vand.u32 %v6219, 4294901760
  %v8401 = vsub.f32 %v6219, %v8400
  %8402 = vmatprep.mubr.f32.mxu0 %v8401
  %v8403 = vand.u32 %v6218, 4294901760
  %v8404 = vsub.f32 %v6218, %v8403
  %8405 = vmatmul.mubr.f32.gmra.mrb[0].mxu0 %v8404
  %v8406 = vpop.f32.mrb[0].mxu0
  %v8407 = vadd.f32 %v7790, %v8406
  %v8408 = vpop.f32.mrb[0].mxu0
  %v8409 = vadd.f32 %v7792, %v8408
  %v8410 = vand.u32 %v6221, 4294901760
  %v8411 = vsub.f32 %v6221, %v8410
  %8412 = vmatprep.mubr.f32.mxu0 %v8411
  %v8413 = vand.u32 %v6220, 4294901760
  %v8414 = vsub.f32 %v6220, %v8413
  %8415 = vmatmul.mubr.f32.gmra.mrb[0].mxu0 %v8414
  %v8416 = vpop.f32.mrb[0].mxu0
  %v8417 = vadd.f32 %v7798, %v8416
  %v8418 = vpop.f32.mrb[0].mxu0
  %v8419 = vadd.f32 %v7800, %v8418
  %v8420 = vand.u32 %v6223, 4294901760
  %v8421 = vsub.f32 %v6223, %v8420
  %8422 = vmatprep.mubr.f32.mxu0 %v8421
  %v8423 = vand.u32 %v6222, 4294901760
  %v8424 = vsub.f32 %v6222, %v8423
  %8425 = vmatmul.mubr.f32.gmra.mrb[0].mxu0 %v8424
  %v8426 = vpop.f32.mrb[0].mxu0
  %v8427 = vadd.f32 %v7806, %v8426
  %v8428 = vpop.f32.mrb[0].mxu0
  %v8429 = vadd.f32 %v7808, %v8428
  %v8430 = vand.u32 %v6225, 4294901760
  %v8431 = vsub.f32 %v6225, %v8430
  %8432 = vmatprep.mubr.f32.mxu0 %v8431
  %v8433 = vand.u32 %v6224, 4294901760
  %v8434 = vsub.f32 %v6224, %v8433
  %8435 = vmatmul.mubr.f32.gmra.mrb[0].mxu0 %v8434
  %v8436 = vpop.f32.mrb[0].mxu0
  %v8437 = vadd.f32 %v7814, %v8436
  %v8438 = vpop.f32.mrb[0].mxu0
  %v8439 = vadd.f32 %v7816, %v8438
  %v8440 = vand.u32 %v6227, 4294901760
  %v8441 = vsub.f32 %v6227, %v8440
  %8442 = vmatprep.mubr.f32.mxu0 %v8441
  %v8443 = vand.u32 %v6226, 4294901760
  %v8444 = vsub.f32 %v6226, %v8443
  %8445 = vmatmul.mubr.f32.gmra.mrb[0].mxu0 %v8444
  %v8446 = vpop.f32.mrb[0].mxu0
  %v8447 = vadd.f32 %v7822, %v8446
  %v8448 = vpop.f32.mrb[0].mxu0
  %v8449 = vadd.f32 %v7824, %v8448
  %v8450 = vand.u32 %v6229, 4294901760
  %v8451 = vsub.f32 %v6229, %v8450
  %8452 = vmatprep.mubr.f32.mxu0 %v8451
  %v8453 = vand.u32 %v6228, 4294901760
  %v8454 = vsub.f32 %v6228, %v8453
  %8455 = vmatmul.mubr.f32.gmra.mrb[0].mxu0 %v8454
  %v8456 = vpop.f32.mrb[0].mxu0
  %v8457 = vadd.f32 %v7830, %v8456
  %v8458 = vpop.f32.mrb[0].mxu0
  %v8459 = vadd.f32 %v7832, %v8458
  %v8460 = vand.u32 %v6231, 4294901760
  %v8461 = vsub.f32 %v6231, %v8460
  %8462 = vmatprep.mubr.f32.mxu0 %v8461
  %v8463 = vand.u32 %v6230, 4294901760
  %v8464 = vsub.f32 %v6230, %v8463
  %8465 = vmatmul.mubr.f32.gmra.mrb[0].mxu0 %v8464
  %v8466 = vpop.f32.mrb[0].mxu0
  %v8467 = vadd.f32 %v7838, %v8466
  %v8468 = vpop.f32.mrb[0].mxu0
  %v8469 = vadd.f32 %v7840, %v8468
  %v8470 = vand.u32 %v6233, 4294901760
  %v8471 = vsub.f32 %v6233, %v8470
  %8472 = vmatprep.mubr.f32.mxu0 %v8471
  %v8473 = vand.u32 %v6232, 4294901760
  %v8474 = vsub.f32 %v6232, %v8473
  %8475 = vmatmul.mubr.f32.gmra.mrb[0].mxu0 %v8474
  %v8476 = vpop.f32.mrb[0].mxu0
  %v8477 = vadd.f32 %v7846, %v8476
  %v8478 = vpop.f32.mrb[0].mxu0
  %v8479 = vadd.f32 %v7848, %v8478
  %v8480 = vand.u32 %v6235, 4294901760
  %v8481 = vsub.f32 %v6235, %v8480
  %8482 = vmatprep.mubr.f32.mxu0 %v8481
  %v8483 = vand.u32 %v6234, 4294901760
  %v8484 = vsub.f32 %v6234, %v8483
  %8485 = vmatmul.mubr.f32.gmra.mrb[0].mxu0 %v8484
  %v8486 = vpop.f32.mrb[0].mxu0
  %v8487 = vadd.f32 %v7854, %v8486
  %v8488 = vpop.f32.mrb[0].mxu0
  %v8489 = vadd.f32 %v7856, %v8488
  %v8490 = vand.u32 %v6237, 4294901760
  %v8491 = vsub.f32 %v6237, %v8490
  %8492 = vmatprep.mubr.f32.mxu0 %v8491
  %v8493 = vand.u32 %v6236, 4294901760
  %v8494 = vsub.f32 %v6236, %v8493
  %8495 = vmatmul.mubr.f32.gmra.mrb[0].mxu0 %v8494
  %v8496 = vpop.f32.mrb[0].mxu0
  %v8497 = vadd.f32 %v7862, %v8496
  %v8498 = vpop.f32.mrb[0].mxu0
  %v8499 = vadd.f32 %v7864, %v8498
  %v8500 = vand.u32 %v6239, 4294901760
  %v8501 = vsub.f32 %v6239, %v8500
  %8502 = vmatprep.mubr.f32.mxu0 %v8501
  %v8503 = vand.u32 %v6238, 4294901760
  %v8504 = vsub.f32 %v6238, %v8503
  %8505 = vmatmul.mubr.f32.gmra.mrb[0].mxu0 %v8504
  %v8506 = vpop.f32.mrb[0].mxu0
  %v8507 = vadd.f32 %v7870, %v8506
  %v8508 = vpop.f32.mrb[0].mxu0
  %v8509 = vadd.f32 %v7872, %v8508
  %v8510 = vand.u32 %v6241, 4294901760
  %v8511 = vsub.f32 %v6241, %v8510
  %8512 = vmatprep.mubr.f32.mxu0 %v8511
  %v8513 = vand.u32 %v6240, 4294901760
  %v8514 = vsub.f32 %v6240, %v8513
  %8515 = vmatmul.mubr.f32.gmra.mrb[0].mxu0 %v8514
  %v8516 = vpop.f32.mrb[0].mxu0
  %v8517 = vadd.f32 %v7878, %v8516
  %v8518 = vpop.f32.mrb[0].mxu0
  %v8519 = vadd.f32 %v7880, %v8518
  %v8520 = vand.u32 %v6243, 4294901760
  %v8521 = vsub.f32 %v6243, %v8520
  %8522 = vmatprep.mubr.f32.mxu0 %v8521
  %v8523 = vand.u32 %v6242, 4294901760
  %v8524 = vsub.f32 %v6242, %v8523
  %8525 = vmatmul.mubr.f32.gmra.mrb[0].mxu0 %v8524
  %v8526 = vpop.f32.mrb[0].mxu0
  %v8527 = vadd.f32 %v7886, %v8526
  %v8528 = vpop.f32.mrb[0].mxu0
  %v8529 = vadd.f32 %v7888, %v8528
  %v8530 = vand.u32 %v6245, 4294901760
  %v8531 = vsub.f32 %v6245, %v8530
  %8532 = vmatprep.mubr.f32.mxu0 %v8531
  %v8533 = vand.u32 %v6244, 4294901760
  %v8534 = vsub.f32 %v6244, %v8533
  %8535 = vmatmul.mubr.f32.gmra.mrb[0].mxu0 %v8534
  %v8536 = vpop.f32.mrb[0].mxu0
  %v8537 = vadd.f32 %v7894, %v8536
  %v8538 = vpop.f32.mrb[0].mxu0
  %v8539 = vadd.f32 %v7896, %v8538
  %v8540 = vand.u32 %v6247, 4294901760
  %v8541 = vsub.f32 %v6247, %v8540
  %8542 = vmatprep.mubr.f32.mxu0 %v8541
  %v8543 = vand.u32 %v6246, 4294901760
  %v8544 = vsub.f32 %v6246, %v8543
  %8545 = vmatmul.mubr.f32.gmra.mrb[0].mxu0 %v8544
  %v8546 = vpop.f32.mrb[0].mxu0
  %v8547 = vadd.f32 %v7902, %v8546
  %v8548 = vpop.f32.mrb[0].mxu0
  %v8549 = vadd.f32 %v7904, %v8548
  %v8550 = vand.u32 %v6249, 4294901760
  %v8551 = vsub.f32 %v6249, %v8550
  %8552 = vmatprep.mubr.f32.mxu0 %v8551
  %v8553 = vand.u32 %v6248, 4294901760
  %v8554 = vsub.f32 %v6248, %v8553
  %8555 = vmatmul.mubr.f32.gmra.mrb[0].mxu0 %v8554
  %v8556 = vpop.f32.mrb[0].mxu0
  %v8557 = vadd.f32 %v7910, %v8556
  %v8558 = vpop.f32.mrb[0].mxu0
  %v8559 = vadd.f32 %v7912, %v8558
  %v8560 = vand.u32 %v6251, 4294901760
  %v8561 = vsub.f32 %v6251, %v8560
  %8562 = vmatprep.mubr.f32.mxu0 %v8561
  %v8563 = vand.u32 %v6250, 4294901760
  %v8564 = vsub.f32 %v6250, %v8563
  %8565 = vmatmul.mubr.f32.gmra.mrb[0].mxu0 %v8564
  %v8566 = vpop.f32.mrb[0].mxu0
  %v8567 = vadd.f32 %v7918, %v8566
  %v8568 = vpop.f32.mrb[0].mxu0
  %v8569 = vadd.f32 %v7920, %v8568
  %v8570 = vand.u32 %v6253, 4294901760
  %v8571 = vsub.f32 %v6253, %v8570
  %8572 = vmatprep.mubr.f32.mxu0 %v8571
  %v8573 = vand.u32 %v6252, 4294901760
  %v8574 = vsub.f32 %v6252, %v8573
  %8575 = vmatmul.mubr.f32.gmra.mrb[0].mxu0 %v8574
  %v8576 = vpop.f32.mrb[0].mxu0
  %v8577 = vadd.f32 %v7926, %v8576
  %v8578 = vpop.f32.mrb[0].mxu0
  %v8579 = vadd.f32 %v7928, %v8578
  %v8580 = vand.u32 %v6255, 4294901760
  %v8581 = vsub.f32 %v6255, %v8580
  %8582 = vmatprep.mubr.f32.mxu0 %v8581
  %v8583 = vand.u32 %v6254, 4294901760
  %v8584 = vsub.f32 %v6254, %v8583
  %8585 = vmatmul.mubr.f32.gmra.mrb[0].mxu0 %v8584
  %v8586 = vpop.f32.mrb[0].mxu0
  %v8587 = vadd.f32 %v7934, %v8586
  %v8588 = vpop.f32.mrb[0].mxu0
  %v8589 = vadd.f32 %v7936, %v8588
  %v8590 = vand.u32 %v6257, 4294901760
  %v8591 = vsub.f32 %v6257, %v8590
  %8592 = vmatprep.mubr.f32.mxu0 %v8591
  %v8593 = vand.u32 %v6256, 4294901760
  %v8594 = vsub.f32 %v6256, %v8593
  %8595 = vmatmul.mubr.f32.gmra.mrb[0].mxu0 %v8594
  %v8596 = vpop.f32.mrb[0].mxu0
  %v8597 = vadd.f32 %v7942, %v8596
  %v8598 = vpop.f32.mrb[0].mxu0
  %v8599 = vadd.f32 %v7944, %v8598
  %v8600 = vand.u32 %v6259, 4294901760
  %v8601 = vsub.f32 %v6259, %v8600
  %8602 = vmatprep.mubr.f32.mxu0 %v8601
  %v8603 = vand.u32 %v6258, 4294901760
  %v8604 = vsub.f32 %v6258, %v8603
  %8605 = vmatmul.mubr.f32.gmra.mrb[0].mxu0 %v8604
  %v8606 = vpop.f32.mrb[0].mxu0
  %v8607 = vadd.f32 %v7950, %v8606
  %v8608 = vpop.f32.mrb[0].mxu0
  %v8609 = vadd.f32 %v7952, %v8608
  %v8610 = vand.u32 %v6261, 4294901760
  %v8611 = vsub.f32 %v6261, %v8610
  %8612 = vmatprep.mubr.f32.mxu0 %v8611
  %v8613 = vand.u32 %v6260, 4294901760
  %v8614 = vsub.f32 %v6260, %v8613
  %8615 = vmatmul.mubr.f32.gmra.mrb[0].mxu0 %v8614
  %v8616 = vpop.f32.mrb[0].mxu0
  %v8617 = vadd.f32 %v7958, %v8616
  %v8618 = vpop.f32.mrb[0].mxu0
  %v8619 = vadd.f32 %v7960, %v8618
  %v8620 = vand.u32 %v6263, 4294901760
  %v8621 = vsub.f32 %v6263, %v8620
  %8622 = vmatprep.mubr.f32.mxu0 %v8621
  %v8623 = vand.u32 %v6262, 4294901760
  %v8624 = vsub.f32 %v6262, %v8623
  %8625 = vmatmul.mubr.f32.gmra.mrb[0].mxu0 %v8624
  %v8626 = vpop.f32.mrb[0].mxu0
  %v8627 = vadd.f32 %v7966, %v8626
  %v8628 = vpop.f32.mrb[0].mxu0
  %v8629 = vadd.f32 %v7968, %v8628
  %v8630 = vand.u32 %v6265, 4294901760
  %v8631 = vsub.f32 %v6265, %v8630
  %8632 = vmatprep.mubr.f32.mxu0 %v8631
  %v8633 = vand.u32 %v6264, 4294901760
  %v8634 = vsub.f32 %v6264, %v8633
  %8635 = vmatmul.mubr.f32.gmra.mrb[0].mxu0 %v8634
  %v8636 = vpop.f32.mrb[0].mxu0
  %v8637 = vadd.f32 %v7974, %v8636
  %v8638 = vpop.f32.mrb[0].mxu0
  %v8639 = vadd.f32 %v7976, %v8638
  %v8640 = vand.u32 %v6267, 4294901760
  %v8641 = vsub.f32 %v6267, %v8640
  %8642 = vmatprep.mubr.f32.mxu0 %v8641
  %v8643 = vand.u32 %v6266, 4294901760
  %v8644 = vsub.f32 %v6266, %v8643
  %8645 = vmatmul.mubr.f32.gmra.mrb[0].mxu0 %v8644
  %v8646 = vpop.f32.mrb[0].mxu0
  %v8647 = vadd.f32 %v7982, %v8646
  %v8648 = vpop.f32.mrb[0].mxu0
  %v8649 = vadd.f32 %v7984, %v8648
  %v8650 = vand.u32 %v6269, 4294901760
  %v8651 = vsub.f32 %v6269, %v8650
  %8652 = vmatprep.mubr.f32.mxu0 %v8651
  %v8653 = vand.u32 %v6268, 4294901760
  %v8654 = vsub.f32 %v6268, %v8653
  %8655 = vmatmul.mubr.f32.gmra.mrb[0].mxu0 %v8654
  %v8656 = vpop.f32.mrb[0].mxu0
  %v8657 = vadd.f32 %v7990, %v8656
  %v8658 = vpop.f32.mrb[0].mxu0
  %v8659 = vadd.f32 %v7992, %v8658
  %v8660 = vand.u32 %v6271, 4294901760
  %v8661 = vsub.f32 %v6271, %v8660
  %8662 = vmatprep.mubr.f32.mxu0 %v8661
  %v8663 = vand.u32 %v6270, 4294901760
  %v8664 = vsub.f32 %v6270, %v8663
  %8665 = vmatmul.mubr.f32.gmra.mrb[0].mxu0 %v8664
  %v8666 = vpop.f32.mrb[0].mxu0
  %v8667 = vadd.f32 %v7998, %v8666
  %v8668 = vpop.f32.mrb[0].mxu0
  %v8669 = vadd.f32 %v8000, %v8668
  %v8670 = vand.u32 %v6273, 4294901760
  %v8671 = vsub.f32 %v6273, %v8670
  %8672 = vmatprep.mubr.f32.mxu0 %v8671
  %v8673 = vand.u32 %v6272, 4294901760
  %v8674 = vsub.f32 %v6272, %v8673
  %8675 = vmatmul.mubr.f32.gmra.mrb[0].mxu0 %v8674
  %v8676 = vpop.f32.mrb[0].mxu0
  %v8677 = vadd.f32 %v8006, %v8676
  %v8678 = vpop.f32.mrb[0].mxu0
  %v8679 = vadd.f32 %v8008, %v8678
  %v8680 = vand.u32 %v6275, 4294901760
  %v8681 = vsub.f32 %v6275, %v8680
  %8682 = vmatprep.mubr.f32.mxu0 %v8681
  %v8683 = vand.u32 %v6274, 4294901760
  %v8684 = vsub.f32 %v6274, %v8683
  %8685 = vmatmul.mubr.f32.gmra.mrb[0].mxu0 %v8684
  %v8686 = vpop.f32.mrb[0].mxu0
  %v8687 = vadd.f32 %v8014, %v8686
  %v8688 = vpop.f32.mrb[0].mxu0
  %v8689 = vadd.f32 %v8016, %v8688
  %8690 = vdwg.mxu0
  %v8691 = vand.u32 %v6277, 4294901760
  %8692 = vmatprep.subr.mxu0 %v8691
  %v8693 = vand.u32 %v6276, 4294901760
  %8694 = vmatpush1.msra.mxu0 %v8693
  %v8695 = vand.u32 %v6279, 4294901760
  %8696 = vmatprep.subr.mxu0 %v8695
  %v8697 = vand.u32 %v6278, 4294901760
  %8698 = vmatpush1.msra.mxu0 %v8697
  %v8699 = vand.u32 %v6281, 4294901760
  %8700 = vmatprep.subr.mxu0 %v8699
  %v8701 = vand.u32 %v6280, 4294901760
  %8702 = vmatpush1.msra.mxu0 %v8701
  %v8703 = vand.u32 %v6283, 4294901760
  %8704 = vmatprep.subr.mxu0 %v8703
  %v8705 = vand.u32 %v6282, 4294901760
  %8706 = vmatpush1.msra.mxu0 %v8705
  %v8707 = vand.u32 %v6285, 4294901760
  %8708 = vmatprep.subr.mxu0 %v8707
  %v8709 = vand.u32 %v6284, 4294901760
  %8710 = vmatpush1.msra.mxu0 %v8709
  %v8711 = vand.u32 %v6287, 4294901760
  %8712 = vmatprep.subr.mxu0 %v8711
  %v8713 = vand.u32 %v6286, 4294901760
  %8714 = vmatpush1.msra.mxu0 %v8713
  %v8715 = vand.u32 %v6289, 4294901760
  %8716 = vmatprep.subr.mxu0 %v8715
  %v8717 = vand.u32 %v6288, 4294901760
  %8718 = vmatpush1.msra.mxu0 %v8717
  %v8719 = vand.u32 %v6291, 4294901760
  %8720 = vmatprep.subr.mxu0 %v8719
  %v8721 = vand.u32 %v6290, 4294901760
  %8722 = vmatpush1.msra.mxu0 %v8721
  %v8723 = vand.u32 %v6293, 4294901760
  %8724 = vmatprep.subr.mxu0 %v8723
  %v8725 = vand.u32 %v6292, 4294901760
  %8726 = vmatpush1.msra.mxu0 %v8725
  %v8727 = vand.u32 %v6295, 4294901760
  %8728 = vmatprep.subr.mxu0 %v8727
  %v8729 = vand.u32 %v6294, 4294901760
  %8730 = vmatpush1.msra.mxu0 %v8729
  %v8731 = vand.u32 %v6297, 4294901760
  %8732 = vmatprep.subr.mxu0 %v8731
  %v8733 = vand.u32 %v6296, 4294901760
  %8734 = vmatpush1.msra.mxu0 %v8733
  %v8735 = vand.u32 %v6299, 4294901760
  %8736 = vmatprep.subr.mxu0 %v8735
  %v8737 = vand.u32 %v6298, 4294901760
  %8738 = vmatpush1.msra.mxu0 %v8737
  %v8739 = vand.u32 %v6301, 4294901760
  %8740 = vmatprep.subr.mxu0 %v8739
  %v8741 = vand.u32 %v6300, 4294901760
  %8742 = vmatpush1.msra.mxu0 %v8741
  %v8743 = vand.u32 %v6303, 4294901760
  %8744 = vmatprep.subr.mxu0 %v8743
  %v8745 = vand.u32 %v6302, 4294901760
  %8746 = vmatpush1.msra.mxu0 %v8745
  %v8747 = vand.u32 %v6305, 4294901760
  %8748 = vmatprep.subr.mxu0 %v8747
  %v8749 = vand.u32 %v6304, 4294901760
  %8750 = vmatpush1.msra.mxu0 %v8749
  %v8751 = vand.u32 %v6307, 4294901760
  %8752 = vmatprep.subr.mxu0 %v8751
  %v8753 = vand.u32 %v6306, 4294901760
  %8754 = vmatpush1.msra.mxu0 %v8753
  %v8755 = vand.u32 %v6309, 4294901760
  %8756 = vmatprep.subr.mxu0 %v8755
  %v8757 = vand.u32 %v6308, 4294901760
  %8758 = vmatpush1.msra.mxu0 %v8757
  %v8759 = vand.u32 %v6311, 4294901760
  %8760 = vmatprep.subr.mxu0 %v8759
  %v8761 = vand.u32 %v6310, 4294901760
  %8762 = vmatpush1.msra.mxu0 %v8761
  %v8763 = vand.u32 %v6313, 4294901760
  %8764 = vmatprep.subr.mxu0 %v8763
  %v8765 = vand.u32 %v6312, 4294901760
  %8766 = vmatpush1.msra.mxu0 %v8765
  %v8767 = vand.u32 %v6315, 4294901760
  %8768 = vmatprep.subr.mxu0 %v8767
  %v8769 = vand.u32 %v6314, 4294901760
  %8770 = vmatpush1.msra.mxu0 %v8769
  %v8771 = vand.u32 %v6317, 4294901760
  %8772 = vmatprep.subr.mxu0 %v8771
  %v8773 = vand.u32 %v6316, 4294901760
  %8774 = vmatpush1.msra.mxu0 %v8773
  %v8775 = vand.u32 %v6319, 4294901760
  %8776 = vmatprep.subr.mxu0 %v8775
  %v8777 = vand.u32 %v6318, 4294901760
  %8778 = vmatpush1.msra.mxu0 %v8777
  %v8779 = vand.u32 %v6321, 4294901760
  %8780 = vmatprep.subr.mxu0 %v8779
  %v8781 = vand.u32 %v6320, 4294901760
  %8782 = vmatpush1.msra.mxu0 %v8781
  %v8783 = vand.u32 %v6323, 4294901760
  %8784 = vmatprep.subr.mxu0 %v8783
  %v8785 = vand.u32 %v6322, 4294901760
  %8786 = vmatpush1.msra.mxu0 %v8785
  %v8787 = vand.u32 %v6325, 4294901760
  %8788 = vmatprep.subr.mxu0 %v8787
  %v8789 = vand.u32 %v6324, 4294901760
  %8790 = vmatpush1.msra.mxu0 %v8789
  %v8791 = vand.u32 %v6327, 4294901760
  %8792 = vmatprep.subr.mxu0 %v8791
  %v8793 = vand.u32 %v6326, 4294901760
  %8794 = vmatpush1.msra.mxu0 %v8793
  %v8795 = vand.u32 %v6329, 4294901760
  %8796 = vmatprep.subr.mxu0 %v8795
  %v8797 = vand.u32 %v6328, 4294901760
  %8798 = vmatpush1.msra.mxu0 %v8797
  %v8799 = vand.u32 %v6331, 4294901760
  %8800 = vmatprep.subr.mxu0 %v8799
  %v8801 = vand.u32 %v6330, 4294901760
  %8802 = vmatpush1.msra.mxu0 %v8801
  %v8803 = vand.u32 %v6333, 4294901760
  %8804 = vmatprep.subr.mxu0 %v8803
  %v8805 = vand.u32 %v6332, 4294901760
  %8806 = vmatpush1.msra.mxu0 %v8805
  %v8807 = vand.u32 %v6335, 4294901760
  %8808 = vmatprep.subr.mxu0 %v8807
  %v8809 = vand.u32 %v6334, 4294901760
  %8810 = vmatpush1.msra.mxu0 %v8809
  %v8811 = vand.u32 %v6337, 4294901760
  %8812 = vmatprep.subr.mxu0 %v8811
  %v8813 = vand.u32 %v6336, 4294901760
  %8814 = vmatpush1.msra.mxu0 %v8813
  %v8815 = vand.u32 %v6339, 4294901760
  %8816 = vmatprep.subr.mxu0 %v8815
  %v8817 = vand.u32 %v6338, 4294901760
  %8818 = vmatpush1.msra.mxu0 %v8817
  %v8819 = vand.u32 %v6181, 4294901760
  %v8820 = vsub.f32 %v6181, %v8819
  %v8821 = vand.u32 %v8820, 4294901760
  %8822 = vmatprep.mubr.f32.mxu0 %v8821
  %v8823 = vand.u32 %v6180, 4294901760
  %v8824 = vsub.f32 %v6180, %v8823
  %v8825 = vand.u32 %v8824, 4294901760
  %8826 = vmatmul.mubr.f32.gmra.mrb[0].mxu0 %v8825
  %v8827 = vpop.f32.mrb[0].mxu0
  %v8828 = vadd.f32 %v8217, %v8827
  %v8829 = vpop.f32.mrb[0].mxu0
  %v8830 = vadd.f32 %v8219, %v8829
  %v8831 = vand.u32 %v6183, 4294901760
  %v8832 = vsub.f32 %v6183, %v8831
  %v8833 = vand.u32 %v8832, 4294901760
  %8834 = vmatprep.mubr.f32.mxu0 %v8833
  %v8835 = vand.u32 %v6182, 4294901760
  %v8836 = vsub.f32 %v6182, %v8835
  %v8837 = vand.u32 %v8836, 4294901760
  %8838 = vmatmul.mubr.f32.gmra.mrb[0].mxu0 %v8837
  %v8839 = vpop.f32.mrb[0].mxu0
  %v8840 = vadd.f32 %v8227, %v8839
  %v8841 = vpop.f32.mrb[0].mxu0
  %v8842 = vadd.f32 %v8229, %v8841
  %v8843 = vand.u32 %v6185, 4294901760
  %v8844 = vsub.f32 %v6185, %v8843
  %v8845 = vand.u32 %v8844, 4294901760
  %8846 = vmatprep.mubr.f32.mxu0 %v8845
  %v8847 = vand.u32 %v6184, 4294901760
  %v8848 = vsub.f32 %v6184, %v8847
  %v8849 = vand.u32 %v8848, 4294901760
  %8850 = vmatmul.mubr.f32.gmra.mrb[0].mxu0 %v8849
  %v8851 = vpop.f32.mrb[0].mxu0
  %v8852 = vadd.f32 %v8237, %v8851
  %v8853 = vpop.f32.mrb[0].mxu0
  %v8854 = vadd.f32 %v8239, %v8853
  %v8855 = vand.u32 %v6187, 4294901760
  %v8856 = vsub.f32 %v6187, %v8855
  %v8857 = vand.u32 %v8856, 4294901760
  %8858 = vmatprep.mubr.f32.mxu0 %v8857
  %v8859 = vand.u32 %v6186, 4294901760
  %v8860 = vsub.f32 %v6186, %v8859
  %v8861 = vand.u32 %v8860, 4294901760
  %8862 = vmatmul.mubr.f32.gmra.mrb[0].mxu0 %v8861
  %v8863 = vpop.f32.mrb[0].mxu0
  %v8864 = vadd.f32 %v8247, %v8863
  %v8865 = vpop.f32.mrb[0].mxu0
  %v8866 = vadd.f32 %v8249, %v8865
  %v8867 = vand.u32 %v6189, 4294901760
  %v8868 = vsub.f32 %v6189, %v8867
  %v8869 = vand.u32 %v8868, 4294901760
  %8870 = vmatprep.mubr.f32.mxu0 %v8869
  %v8871 = vand.u32 %v6188, 4294901760
  %v8872 = vsub.f32 %v6188, %v8871
  %v8873 = vand.u32 %v8872, 4294901760
  %8874 = vmatmul.mubr.f32.gmra.mrb[0].mxu0 %v8873
  %v8875 = vpop.f32.mrb[0].mxu0
  %v8876 = vadd.f32 %v8257, %v8875
  %v8877 = vpop.f32.mrb[0].mxu0
  %v8878 = vadd.f32 %v8259, %v8877
  %v8879 = vand.u32 %v6191, 4294901760
  %v8880 = vsub.f32 %v6191, %v8879
  %v8881 = vand.u32 %v8880, 4294901760
  %8882 = vmatprep.mubr.f32.mxu0 %v8881
  %v8883 = vand.u32 %v6190, 4294901760
  %v8884 = vsub.f32 %v6190, %v8883
  %v8885 = vand.u32 %v8884, 4294901760
  %8886 = vmatmul.mubr.f32.gmra.mrb[0].mxu0 %v8885
  %v8887 = vpop.f32.mrb[0].mxu0
  %v8888 = vadd.f32 %v8267, %v8887
  %v8889 = vpop.f32.mrb[0].mxu0
  %v8890 = vadd.f32 %v8269, %v8889
  %v8891 = vand.u32 %v6193, 4294901760
  %v8892 = vsub.f32 %v6193, %v8891
  %v8893 = vand.u32 %v8892, 4294901760
  %8894 = vmatprep.mubr.f32.mxu0 %v8893
  %v8895 = vand.u32 %v6192, 4294901760
  %v8896 = vsub.f32 %v6192, %v8895
  %v8897 = vand.u32 %v8896, 4294901760
  %8898 = vmatmul.mubr.f32.gmra.mrb[0].mxu0 %v8897
  %v8899 = vpop.f32.mrb[0].mxu0
  %v8900 = vadd.f32 %v8277, %v8899
  %v8901 = vpop.f32.mrb[0].mxu0
  %v8902 = vadd.f32 %v8279, %v8901
  %v8903 = vand.u32 %v6195, 4294901760
  %v8904 = vsub.f32 %v6195, %v8903
  %v8905 = vand.u32 %v8904, 4294901760
  %8906 = vmatprep.mubr.f32.mxu0 %v8905
  %v8907 = vand.u32 %v6194, 4294901760
  %v8908 = vsub.f32 %v6194, %v8907
  %v8909 = vand.u32 %v8908, 4294901760
  %8910 = vmatmul.mubr.f32.gmra.mrb[0].mxu0 %v8909
  %v8911 = vpop.f32.mrb[0].mxu0
  %v8912 = vadd.f32 %v8287, %v8911
  %v8913 = vpop.f32.mrb[0].mxu0
  %v8914 = vadd.f32 %v8289, %v8913
  %v8915 = vand.u32 %v6197, 4294901760
  %v8916 = vsub.f32 %v6197, %v8915
  %v8917 = vand.u32 %v8916, 4294901760
  %8918 = vmatprep.mubr.f32.mxu0 %v8917
  %v8919 = vand.u32 %v6196, 4294901760
  %v8920 = vsub.f32 %v6196, %v8919
  %v8921 = vand.u32 %v8920, 4294901760
  %8922 = vmatmul.mubr.f32.gmra.mrb[0].mxu0 %v8921
  %v8923 = vpop.f32.mrb[0].mxu0
  %v8924 = vadd.f32 %v8297, %v8923
  %v8925 = vpop.f32.mrb[0].mxu0
  %v8926 = vadd.f32 %v8299, %v8925
  %v8927 = vand.u32 %v6199, 4294901760
  %v8928 = vsub.f32 %v6199, %v8927
  %v8929 = vand.u32 %v8928, 4294901760
  %8930 = vmatprep.mubr.f32.mxu0 %v8929
  %v8931 = vand.u32 %v6198, 4294901760
  %v8932 = vsub.f32 %v6198, %v8931
  %v8933 = vand.u32 %v8932, 4294901760
  %8934 = vmatmul.mubr.f32.gmra.mrb[0].mxu0 %v8933
  %v8935 = vpop.f32.mrb[0].mxu0
  %v8936 = vadd.f32 %v8307, %v8935
  %v8937 = vpop.f32.mrb[0].mxu0
  %v8938 = vadd.f32 %v8309, %v8937
  %v8939 = vand.u32 %v6201, 4294901760
  %v8940 = vsub.f32 %v6201, %v8939
  %v8941 = vand.u32 %v8940, 4294901760
  %8942 = vmatprep.mubr.f32.mxu0 %v8941
  %v8943 = vand.u32 %v6200, 4294901760
  %v8944 = vsub.f32 %v6200, %v8943
  %v8945 = vand.u32 %v8944, 4294901760
  %8946 = vmatmul.mubr.f32.gmra.mrb[0].mxu0 %v8945
  %v8947 = vpop.f32.mrb[0].mxu0
  %v8948 = vadd.f32 %v8317, %v8947
  %v8949 = vpop.f32.mrb[0].mxu0
  %v8950 = vadd.f32 %v8319, %v8949
  %v8951 = vand.u32 %v6203, 4294901760
  %v8952 = vsub.f32 %v6203, %v8951
  %v8953 = vand.u32 %v8952, 4294901760
  %8954 = vmatprep.mubr.f32.mxu0 %v8953
  %v8955 = vand.u32 %v6202, 4294901760
  %v8956 = vsub.f32 %v6202, %v8955
  %v8957 = vand.u32 %v8956, 4294901760
  %8958 = vmatmul.mubr.f32.gmra.mrb[0].mxu0 %v8957
  %v8959 = vpop.f32.mrb[0].mxu0
  %v8960 = vadd.f32 %v8327, %v8959
  %v8961 = vpop.f32.mrb[0].mxu0
  %v8962 = vadd.f32 %v8329, %v8961
  %v8963 = vand.u32 %v6205, 4294901760
  %v8964 = vsub.f32 %v6205, %v8963
  %v8965 = vand.u32 %v8964, 4294901760
  %8966 = vmatprep.mubr.f32.mxu0 %v8965
  %v8967 = vand.u32 %v6204, 4294901760
  %v8968 = vsub.f32 %v6204, %v8967
  %v8969 = vand.u32 %v8968, 4294901760
  %8970 = vmatmul.mubr.f32.gmra.mrb[0].mxu0 %v8969
  %v8971 = vpop.f32.mrb[0].mxu0
  %v8972 = vadd.f32 %v8337, %v8971
  %v8973 = vpop.f32.mrb[0].mxu0
  %v8974 = vadd.f32 %v8339, %v8973
  %v8975 = vand.u32 %v6207, 4294901760
  %v8976 = vsub.f32 %v6207, %v8975
  %v8977 = vand.u32 %v8976, 4294901760
  %8978 = vmatprep.mubr.f32.mxu0 %v8977
  %v8979 = vand.u32 %v6206, 4294901760
  %v8980 = vsub.f32 %v6206, %v8979
  %v8981 = vand.u32 %v8980, 4294901760
  %8982 = vmatmul.mubr.f32.gmra.mrb[0].mxu0 %v8981
  %v8983 = vpop.f32.mrb[0].mxu0
  %v8984 = vadd.f32 %v8347, %v8983
  %v8985 = vpop.f32.mrb[0].mxu0
  %v8986 = vadd.f32 %v8349, %v8985
  %v8987 = vand.u32 %v6209, 4294901760
  %v8988 = vsub.f32 %v6209, %v8987
  %v8989 = vand.u32 %v8988, 4294901760
  %8990 = vmatprep.mubr.f32.mxu0 %v8989
  %v8991 = vand.u32 %v6208, 4294901760
  %v8992 = vsub.f32 %v6208, %v8991
  %v8993 = vand.u32 %v8992, 4294901760
  %8994 = vmatmul.mubr.f32.gmra.mrb[0].mxu0 %v8993
  %v8995 = vpop.f32.mrb[0].mxu0
  %v8996 = vadd.f32 %v8357, %v8995
  %v8997 = vpop.f32.mrb[0].mxu0
  %v8998 = vadd.f32 %v8359, %v8997
  %v8999 = vand.u32 %v6211, 4294901760
  %v9000 = vsub.f32 %v6211, %v8999
  %v9001 = vand.u32 %v9000, 4294901760
  %9002 = vmatprep.mubr.f32.mxu0 %v9001
  %v9003 = vand.u32 %v6210, 4294901760
  %v9004 = vsub.f32 %v6210, %v9003
  %v9005 = vand.u32 %v9004, 4294901760
  %9006 = vmatmul.mubr.f32.gmra.mrb[0].mxu0 %v9005
  %v9007 = vpop.f32.mrb[0].mxu0
  %v9008 = vadd.f32 %v8367, %v9007
  %v9009 = vpop.f32.mrb[0].mxu0
  %v9010 = vadd.f32 %v8369, %v9009
  %v9011 = vand.u32 %v6213, 4294901760
  %v9012 = vsub.f32 %v6213, %v9011
  %v9013 = vand.u32 %v9012, 4294901760
  %9014 = vmatprep.mubr.f32.mxu0 %v9013
  %v9015 = vand.u32 %v6212, 4294901760
  %v9016 = vsub.f32 %v6212, %v9015
  %v9017 = vand.u32 %v9016, 4294901760
  %9018 = vmatmul.mubr.f32.gmra.mrb[0].mxu0 %v9017
  %v9019 = vpop.f32.mrb[0].mxu0
  %v9020 = vadd.f32 %v8377, %v9019
  %v9021 = vpop.f32.mrb[0].mxu0
  %v9022 = vadd.f32 %v8379, %v9021
  %v9023 = vand.u32 %v6215, 4294901760
  %v9024 = vsub.f32 %v6215, %v9023
  %v9025 = vand.u32 %v9024, 4294901760
  %9026 = vmatprep.mubr.f32.mxu0 %v9025
  %v9027 = vand.u32 %v6214, 4294901760
  %v9028 = vsub.f32 %v6214, %v9027
  %v9029 = vand.u32 %v9028, 4294901760
  %9030 = vmatmul.mubr.f32.gmra.mrb[0].mxu0 %v9029
  %v9031 = vpop.f32.mrb[0].mxu0
  %v9032 = vadd.f32 %v8387, %v9031
  %v9033 = vpop.f32.mrb[0].mxu0
  %v9034 = vadd.f32 %v8389, %v9033
  %v9035 = vand.u32 %v6217, 4294901760
  %v9036 = vsub.f32 %v6217, %v9035
  %v9037 = vand.u32 %v9036, 4294901760
  %9038 = vmatprep.mubr.f32.mxu0 %v9037
  %v9039 = vand.u32 %v6216, 4294901760
  %v9040 = vsub.f32 %v6216, %v9039
  %v9041 = vand.u32 %v9040, 4294901760
  %9042 = vmatmul.mubr.f32.gmra.mrb[0].mxu0 %v9041
  %v9043 = vpop.f32.mrb[0].mxu0
  %v9044 = vadd.f32 %v8397, %v9043
  %v9045 = vpop.f32.mrb[0].mxu0
  %v9046 = vadd.f32 %v8399, %v9045
  %v9047 = vand.u32 %v6219, 4294901760
  %v9048 = vsub.f32 %v6219, %v9047
  %v9049 = vand.u32 %v9048, 4294901760
  %9050 = vmatprep.mubr.f32.mxu0 %v9049
  %v9051 = vand.u32 %v6218, 4294901760
  %v9052 = vsub.f32 %v6218, %v9051
  %v9053 = vand.u32 %v9052, 4294901760
  %9054 = vmatmul.mubr.f32.gmra.mrb[0].mxu0 %v9053
  %v9055 = vpop.f32.mrb[0].mxu0
  %v9056 = vadd.f32 %v8407, %v9055
  %v9057 = vpop.f32.mrb[0].mxu0
  %v9058 = vadd.f32 %v8409, %v9057
  %v9059 = vand.u32 %v6221, 4294901760
  %v9060 = vsub.f32 %v6221, %v9059
  %v9061 = vand.u32 %v9060, 4294901760
  %9062 = vmatprep.mubr.f32.mxu0 %v9061
  %v9063 = vand.u32 %v6220, 4294901760
  %v9064 = vsub.f32 %v6220, %v9063
  %v9065 = vand.u32 %v9064, 4294901760
  %9066 = vmatmul.mubr.f32.gmra.mrb[0].mxu0 %v9065
  %v9067 = vpop.f32.mrb[0].mxu0
  %v9068 = vadd.f32 %v8417, %v9067
  %v9069 = vpop.f32.mrb[0].mxu0
  %v9070 = vadd.f32 %v8419, %v9069
  %v9071 = vand.u32 %v6223, 4294901760
  %v9072 = vsub.f32 %v6223, %v9071
  %v9073 = vand.u32 %v9072, 4294901760
  %9074 = vmatprep.mubr.f32.mxu0 %v9073
  %v9075 = vand.u32 %v6222, 4294901760
  %v9076 = vsub.f32 %v6222, %v9075
  %v9077 = vand.u32 %v9076, 4294901760
  %9078 = vmatmul.mubr.f32.gmra.mrb[0].mxu0 %v9077
  %v9079 = vpop.f32.mrb[0].mxu0
  %v9080 = vadd.f32 %v8427, %v9079
  %v9081 = vpop.f32.mrb[0].mxu0
  %v9082 = vadd.f32 %v8429, %v9081
  %v9083 = vand.u32 %v6225, 4294901760
  %v9084 = vsub.f32 %v6225, %v9083
  %v9085 = vand.u32 %v9084, 4294901760
  %9086 = vmatprep.mubr.f32.mxu0 %v9085
  %v9087 = vand.u32 %v6224, 4294901760
  %v9088 = vsub.f32 %v6224, %v9087
  %v9089 = vand.u32 %v9088, 4294901760
  %9090 = vmatmul.mubr.f32.gmra.mrb[0].mxu0 %v9089
  %v9091 = vpop.f32.mrb[0].mxu0
  %v9092 = vadd.f32 %v8437, %v9091
  %v9093 = vpop.f32.mrb[0].mxu0
  %v9094 = vadd.f32 %v8439, %v9093
  %v9095 = vand.u32 %v6227, 4294901760
  %v9096 = vsub.f32 %v6227, %v9095
  %v9097 = vand.u32 %v9096, 4294901760
  %9098 = vmatprep.mubr.f32.mxu0 %v9097
  %v9099 = vand.u32 %v6226, 4294901760
  %v9100 = vsub.f32 %v6226, %v9099
  %v9101 = vand.u32 %v9100, 4294901760
  %9102 = vmatmul.mubr.f32.gmra.mrb[0].mxu0 %v9101
  %v9103 = vpop.f32.mrb[0].mxu0
  %v9104 = vadd.f32 %v8447, %v9103
  %v9105 = vpop.f32.mrb[0].mxu0
  %v9106 = vadd.f32 %v8449, %v9105
  %v9107 = vand.u32 %v6229, 4294901760
  %v9108 = vsub.f32 %v6229, %v9107
  %v9109 = vand.u32 %v9108, 4294901760
  %9110 = vmatprep.mubr.f32.mxu0 %v9109
  %v9111 = vand.u32 %v6228, 4294901760
  %v9112 = vsub.f32 %v6228, %v9111
  %v9113 = vand.u32 %v9112, 4294901760
  %9114 = vmatmul.mubr.f32.gmra.mrb[0].mxu0 %v9113
  %v9115 = vpop.f32.mrb[0].mxu0
  %v9116 = vadd.f32 %v8457, %v9115
  %v9117 = vpop.f32.mrb[0].mxu0
  %v9118 = vadd.f32 %v8459, %v9117
  %v9119 = vand.u32 %v6231, 4294901760
  %v9120 = vsub.f32 %v6231, %v9119
  %v9121 = vand.u32 %v9120, 4294901760
  %9122 = vmatprep.mubr.f32.mxu0 %v9121
  %v9123 = vand.u32 %v6230, 4294901760
  %v9124 = vsub.f32 %v6230, %v9123
  %v9125 = vand.u32 %v9124, 4294901760
  %9126 = vmatmul.mubr.f32.gmra.mrb[0].mxu0 %v9125
  %v9127 = vpop.f32.mrb[0].mxu0
  %v9128 = vadd.f32 %v8467, %v9127
  %v9129 = vpop.f32.mrb[0].mxu0
  %v9130 = vadd.f32 %v8469, %v9129
  %v9131 = vand.u32 %v6233, 4294901760
  %v9132 = vsub.f32 %v6233, %v9131
  %v9133 = vand.u32 %v9132, 4294901760
  %9134 = vmatprep.mubr.f32.mxu0 %v9133
  %v9135 = vand.u32 %v6232, 4294901760
  %v9136 = vsub.f32 %v6232, %v9135
  %v9137 = vand.u32 %v9136, 4294901760
  %9138 = vmatmul.mubr.f32.gmra.mrb[0].mxu0 %v9137
  %v9139 = vpop.f32.mrb[0].mxu0
  %v9140 = vadd.f32 %v8477, %v9139
  %v9141 = vpop.f32.mrb[0].mxu0
  %v9142 = vadd.f32 %v8479, %v9141
  %v9143 = vand.u32 %v6235, 4294901760
  %v9144 = vsub.f32 %v6235, %v9143
  %v9145 = vand.u32 %v9144, 4294901760
  %9146 = vmatprep.mubr.f32.mxu0 %v9145
  %v9147 = vand.u32 %v6234, 4294901760
  %v9148 = vsub.f32 %v6234, %v9147
  %v9149 = vand.u32 %v9148, 4294901760
  %9150 = vmatmul.mubr.f32.gmra.mrb[0].mxu0 %v9149
  %v9151 = vpop.f32.mrb[0].mxu0
  %v9152 = vadd.f32 %v8487, %v9151
  %v9153 = vpop.f32.mrb[0].mxu0
  %v9154 = vadd.f32 %v8489, %v9153
  %v9155 = vand.u32 %v6237, 4294901760
  %v9156 = vsub.f32 %v6237, %v9155
  %v9157 = vand.u32 %v9156, 4294901760
  %9158 = vmatprep.mubr.f32.mxu0 %v9157
  %v9159 = vand.u32 %v6236, 4294901760
  %v9160 = vsub.f32 %v6236, %v9159
  %v9161 = vand.u32 %v9160, 4294901760
  %9162 = vmatmul.mubr.f32.gmra.mrb[0].mxu0 %v9161
  %v9163 = vpop.f32.mrb[0].mxu0
  %v9164 = vadd.f32 %v8497, %v9163
  %v9165 = vpop.f32.mrb[0].mxu0
  %v9166 = vadd.f32 %v8499, %v9165
  %v9167 = vand.u32 %v6239, 4294901760
  %v9168 = vsub.f32 %v6239, %v9167
  %v9169 = vand.u32 %v9168, 4294901760
  %9170 = vmatprep.mubr.f32.mxu0 %v9169
  %v9171 = vand.u32 %v6238, 4294901760
  %v9172 = vsub.f32 %v6238, %v9171
  %v9173 = vand.u32 %v9172, 4294901760
  %9174 = vmatmul.mubr.f32.gmra.mrb[0].mxu0 %v9173
  %v9175 = vpop.f32.mrb[0].mxu0
  %v9176 = vadd.f32 %v8507, %v9175
  %v9177 = vpop.f32.mrb[0].mxu0
  %v9178 = vadd.f32 %v8509, %v9177
  %v9179 = vand.u32 %v6241, 4294901760
  %v9180 = vsub.f32 %v6241, %v9179
  %v9181 = vand.u32 %v9180, 4294901760
  %9182 = vmatprep.mubr.f32.mxu0 %v9181
  %v9183 = vand.u32 %v6240, 4294901760
  %v9184 = vsub.f32 %v6240, %v9183
  %v9185 = vand.u32 %v9184, 4294901760
  %9186 = vmatmul.mubr.f32.gmra.mrb[0].mxu0 %v9185
  %v9187 = vpop.f32.mrb[0].mxu0
  %v9188 = vadd.f32 %v8517, %v9187
  %v9189 = vpop.f32.mrb[0].mxu0
  %v9190 = vadd.f32 %v8519, %v9189
  %v9191 = vand.u32 %v6243, 4294901760
  %v9192 = vsub.f32 %v6243, %v9191
  %v9193 = vand.u32 %v9192, 4294901760
  %9194 = vmatprep.mubr.f32.mxu0 %v9193
  %v9195 = vand.u32 %v6242, 4294901760
  %v9196 = vsub.f32 %v6242, %v9195
  %v9197 = vand.u32 %v9196, 4294901760
  %9198 = vmatmul.mubr.f32.gmra.mrb[0].mxu0 %v9197
  %v9199 = vpop.f32.mrb[0].mxu0
  %v9200 = vadd.f32 %v8527, %v9199
  %v9201 = vpop.f32.mrb[0].mxu0
  %v9202 = vadd.f32 %v8529, %v9201
  %v9203 = vand.u32 %v6245, 4294901760
  %v9204 = vsub.f32 %v6245, %v9203
  %v9205 = vand.u32 %v9204, 4294901760
  %9206 = vmatprep.mubr.f32.mxu0 %v9205
  %v9207 = vand.u32 %v6244, 4294901760
  %v9208 = vsub.f32 %v6244, %v9207
  %v9209 = vand.u32 %v9208, 4294901760
  %9210 = vmatmul.mubr.f32.gmra.mrb[0].mxu0 %v9209
  %v9211 = vpop.f32.mrb[0].mxu0
  %v9212 = vadd.f32 %v8537, %v9211
  %v9213 = vpop.f32.mrb[0].mxu0
  %v9214 = vadd.f32 %v8539, %v9213
  %v9215 = vand.u32 %v6247, 4294901760
  %v9216 = vsub.f32 %v6247, %v9215
  %v9217 = vand.u32 %v9216, 4294901760
  %9218 = vmatprep.mubr.f32.mxu0 %v9217
  %v9219 = vand.u32 %v6246, 4294901760
  %v9220 = vsub.f32 %v6246, %v9219
  %v9221 = vand.u32 %v9220, 4294901760
  %9222 = vmatmul.mubr.f32.gmra.mrb[0].mxu0 %v9221
  %v9223 = vpop.f32.mrb[0].mxu0
  %v9224 = vadd.f32 %v8547, %v9223
  %v9225 = vpop.f32.mrb[0].mxu0
  %v9226 = vadd.f32 %v8549, %v9225
  %v9227 = vand.u32 %v6249, 4294901760
  %v9228 = vsub.f32 %v6249, %v9227
  %v9229 = vand.u32 %v9228, 4294901760
  %9230 = vmatprep.mubr.f32.mxu0 %v9229
  %v9231 = vand.u32 %v6248, 4294901760
  %v9232 = vsub.f32 %v6248, %v9231
  %v9233 = vand.u32 %v9232, 4294901760
  %9234 = vmatmul.mubr.f32.gmra.mrb[0].mxu0 %v9233
  %v9235 = vpop.f32.mrb[0].mxu0
  %v9236 = vadd.f32 %v8557, %v9235
  %v9237 = vpop.f32.mrb[0].mxu0
  %v9238 = vadd.f32 %v8559, %v9237
  %v9239 = vand.u32 %v6251, 4294901760
  %v9240 = vsub.f32 %v6251, %v9239
  %v9241 = vand.u32 %v9240, 4294901760
  %9242 = vmatprep.mubr.f32.mxu0 %v9241
  %v9243 = vand.u32 %v6250, 4294901760
  %v9244 = vsub.f32 %v6250, %v9243
  %v9245 = vand.u32 %v9244, 4294901760
  %9246 = vmatmul.mubr.f32.gmra.mrb[0].mxu0 %v9245
  %v9247 = vpop.f32.mrb[0].mxu0
  %v9248 = vadd.f32 %v8567, %v9247
  %v9249 = vpop.f32.mrb[0].mxu0
  %v9250 = vadd.f32 %v8569, %v9249
  %v9251 = vand.u32 %v6253, 4294901760
  %v9252 = vsub.f32 %v6253, %v9251
  %v9253 = vand.u32 %v9252, 4294901760
  %9254 = vmatprep.mubr.f32.mxu0 %v9253
  %v9255 = vand.u32 %v6252, 4294901760
  %v9256 = vsub.f32 %v6252, %v9255
  %v9257 = vand.u32 %v9256, 4294901760
  %9258 = vmatmul.mubr.f32.gmra.mrb[0].mxu0 %v9257
  %v9259 = vpop.f32.mrb[0].mxu0
  %v9260 = vadd.f32 %v8577, %v9259
  %v9261 = vpop.f32.mrb[0].mxu0
  %v9262 = vadd.f32 %v8579, %v9261
  %v9263 = vand.u32 %v6255, 4294901760
  %v9264 = vsub.f32 %v6255, %v9263
  %v9265 = vand.u32 %v9264, 4294901760
  %9266 = vmatprep.mubr.f32.mxu0 %v9265
  %v9267 = vand.u32 %v6254, 4294901760
  %v9268 = vsub.f32 %v6254, %v9267
  %v9269 = vand.u32 %v9268, 4294901760
  %9270 = vmatmul.mubr.f32.gmra.mrb[0].mxu0 %v9269
  %v9271 = vpop.f32.mrb[0].mxu0
  %v9272 = vadd.f32 %v8587, %v9271
  %v9273 = vpop.f32.mrb[0].mxu0
  %v9274 = vadd.f32 %v8589, %v9273
  %v9275 = vand.u32 %v6257, 4294901760
  %v9276 = vsub.f32 %v6257, %v9275
  %v9277 = vand.u32 %v9276, 4294901760
  %9278 = vmatprep.mubr.f32.mxu0 %v9277
  %v9279 = vand.u32 %v6256, 4294901760
  %v9280 = vsub.f32 %v6256, %v9279
  %v9281 = vand.u32 %v9280, 4294901760
  %9282 = vmatmul.mubr.f32.gmra.mrb[0].mxu0 %v9281
  %v9283 = vpop.f32.mrb[0].mxu0
  %v9284 = vadd.f32 %v8597, %v9283
  %v9285 = vpop.f32.mrb[0].mxu0
  %v9286 = vadd.f32 %v8599, %v9285
  %v9287 = vand.u32 %v6259, 4294901760
  %v9288 = vsub.f32 %v6259, %v9287
  %v9289 = vand.u32 %v9288, 4294901760
  %9290 = vmatprep.mubr.f32.mxu0 %v9289
  %v9291 = vand.u32 %v6258, 4294901760
  %v9292 = vsub.f32 %v6258, %v9291
  %v9293 = vand.u32 %v9292, 4294901760
  %9294 = vmatmul.mubr.f32.gmra.mrb[0].mxu0 %v9293
  %v9295 = vpop.f32.mrb[0].mxu0
  %v9296 = vadd.f32 %v8607, %v9295
  %v9297 = vpop.f32.mrb[0].mxu0
  %v9298 = vadd.f32 %v8609, %v9297
  %v9299 = vand.u32 %v6261, 4294901760
  %v9300 = vsub.f32 %v6261, %v9299
  %v9301 = vand.u32 %v9300, 4294901760
  %9302 = vmatprep.mubr.f32.mxu0 %v9301
  %v9303 = vand.u32 %v6260, 4294901760
  %v9304 = vsub.f32 %v6260, %v9303
  %v9305 = vand.u32 %v9304, 4294901760
  %9306 = vmatmul.mubr.f32.gmra.mrb[0].mxu0 %v9305
  %v9307 = vpop.f32.mrb[0].mxu0
  %v9308 = vadd.f32 %v8617, %v9307
  %v9309 = vpop.f32.mrb[0].mxu0
  %v9310 = vadd.f32 %v8619, %v9309
  %v9311 = vand.u32 %v6263, 4294901760
  %v9312 = vsub.f32 %v6263, %v9311
  %v9313 = vand.u32 %v9312, 4294901760
  %9314 = vmatprep.mubr.f32.mxu0 %v9313
  %v9315 = vand.u32 %v6262, 4294901760
  %v9316 = vsub.f32 %v6262, %v9315
  %v9317 = vand.u32 %v9316, 4294901760
  %9318 = vmatmul.mubr.f32.gmra.mrb[0].mxu0 %v9317
  %v9319 = vpop.f32.mrb[0].mxu0
  %v9320 = vadd.f32 %v8627, %v9319
  %v9321 = vpop.f32.mrb[0].mxu0
  %v9322 = vadd.f32 %v8629, %v9321
  %v9323 = vand.u32 %v6265, 4294901760
  %v9324 = vsub.f32 %v6265, %v9323
  %v9325 = vand.u32 %v9324, 4294901760
  %9326 = vmatprep.mubr.f32.mxu0 %v9325
  %v9327 = vand.u32 %v6264, 4294901760
  %v9328 = vsub.f32 %v6264, %v9327
  %v9329 = vand.u32 %v9328, 4294901760
  %9330 = vmatmul.mubr.f32.gmra.mrb[0].mxu0 %v9329
  %v9331 = vpop.f32.mrb[0].mxu0
  %v9332 = vadd.f32 %v8637, %v9331
  %v9333 = vpop.f32.mrb[0].mxu0
  %v9334 = vadd.f32 %v8639, %v9333
  %v9335 = vand.u32 %v6267, 4294901760
  %v9336 = vsub.f32 %v6267, %v9335
  %v9337 = vand.u32 %v9336, 4294901760
  %9338 = vmatprep.mubr.f32.mxu0 %v9337
  %v9339 = vand.u32 %v6266, 4294901760
  %v9340 = vsub.f32 %v6266, %v9339
  %v9341 = vand.u32 %v9340, 4294901760
  %9342 = vmatmul.mubr.f32.gmra.mrb[0].mxu0 %v9341
  %v9343 = vpop.f32.mrb[0].mxu0
  %v9344 = vadd.f32 %v8647, %v9343
  %v9345 = vpop.f32.mrb[0].mxu0
  %v9346 = vadd.f32 %v8649, %v9345
  %v9347 = vand.u32 %v6269, 4294901760
  %v9348 = vsub.f32 %v6269, %v9347
  %v9349 = vand.u32 %v9348, 4294901760
  %9350 = vmatprep.mubr.f32.mxu0 %v9349
  %v9351 = vand.u32 %v6268, 4294901760
  %v9352 = vsub.f32 %v6268, %v9351
  %v9353 = vand.u32 %v9352, 4294901760
  %9354 = vmatmul.mubr.f32.gmra.mrb[0].mxu0 %v9353
  %v9355 = vpop.f32.mrb[0].mxu0
  %v9356 = vadd.f32 %v8657, %v9355
  %v9357 = vpop.f32.mrb[0].mxu0
  %v9358 = vadd.f32 %v8659, %v9357
  %v9359 = vand.u32 %v6271, 4294901760
  %v9360 = vsub.f32 %v6271, %v9359
  %v9361 = vand.u32 %v9360, 4294901760
  %9362 = vmatprep.mubr.f32.mxu0 %v9361
  %v9363 = vand.u32 %v6270, 4294901760
  %v9364 = vsub.f32 %v6270, %v9363
  %v9365 = vand.u32 %v9364, 4294901760
  %9366 = vmatmul.mubr.f32.gmra.mrb[0].mxu0 %v9365
  %v9367 = vpop.f32.mrb[0].mxu0
  %v9368 = vadd.f32 %v8667, %v9367
  %v9369 = vpop.f32.mrb[0].mxu0
  %v9370 = vadd.f32 %v8669, %v9369
  %v9371 = vand.u32 %v6273, 4294901760
  %v9372 = vsub.f32 %v6273, %v9371
  %v9373 = vand.u32 %v9372, 4294901760
  %9374 = vmatprep.mubr.f32.mxu0 %v9373
  %v9375 = vand.u32 %v6272, 4294901760
  %v9376 = vsub.f32 %v6272, %v9375
  %v9377 = vand.u32 %v9376, 4294901760
  %9378 = vmatmul.mubr.f32.gmra.mrb[0].mxu0 %v9377
  %v9379 = vpop.f32.mrb[0].mxu0
  %v9380 = vadd.f32 %v8677, %v9379
  %v9381 = vpop.f32.mrb[0].mxu0
  %v9382 = vadd.f32 %v8679, %v9381
  %v9383 = vand.u32 %v6275, 4294901760
  %v9384 = vsub.f32 %v6275, %v9383
  %v9385 = vand.u32 %v9384, 4294901760
  %9386 = vmatprep.mubr.f32.mxu0 %v9385
  %v9387 = vand.u32 %v6274, 4294901760
  %v9388 = vsub.f32 %v6274, %v9387
  %v9389 = vand.u32 %v9388, 4294901760
  %9390 = vmatmul.mubr.f32.gmra.mrb[0].mxu0 %v9389
  %v9391 = vpop.f32.mrb[0].mxu0
  %v9392 = vadd.f32 %v8687, %v9391
  %v9393 = vpop.f32.mrb[0].mxu0
  %v9394 = vadd.f32 %v8689, %v9393
  %9395 = vdwg.mxu0
  %v9396 = vand.u32 %v6277, 4294901760
  %v9397 = vsub.f32 %v6277, %v9396
  %v9398 = vand.u32 %v9397, 4294901760
  %9399 = vmatprep.subr.mxu0 %v9398
  %v9400 = vand.u32 %v6276, 4294901760
  %v9401 = vsub.f32 %v6276, %v9400
  %v9402 = vand.u32 %v9401, 4294901760
  %9403 = vmatpush1.msra.mxu0 %v9402
  %v9404 = vand.u32 %v6279, 4294901760
  %v9405 = vsub.f32 %v6279, %v9404
  %v9406 = vand.u32 %v9405, 4294901760
  %9407 = vmatprep.subr.mxu0 %v9406
  %v9408 = vand.u32 %v6278, 4294901760
  %v9409 = vsub.f32 %v6278, %v9408
  %v9410 = vand.u32 %v9409, 4294901760
  %9411 = vmatpush1.msra.mxu0 %v9410
  %v9412 = vand.u32 %v6281, 4294901760
  %v9413 = vsub.f32 %v6281, %v9412
  %v9414 = vand.u32 %v9413, 4294901760
  %9415 = vmatprep.subr.mxu0 %v9414
  %v9416 = vand.u32 %v6280, 4294901760
  %v9417 = vsub.f32 %v6280, %v9416
  %v9418 = vand.u32 %v9417, 4294901760
  %9419 = vmatpush1.msra.mxu0 %v9418
  %v9420 = vand.u32 %v6283, 4294901760
  %v9421 = vsub.f32 %v6283, %v9420
  %v9422 = vand.u32 %v9421, 4294901760
  %9423 = vmatprep.subr.mxu0 %v9422
  %v9424 = vand.u32 %v6282, 4294901760
  %v9425 = vsub.f32 %v6282, %v9424
  %v9426 = vand.u32 %v9425, 4294901760
  %9427 = vmatpush1.msra.mxu0 %v9426
  %v9428 = vand.u32 %v6285, 4294901760
  %v9429 = vsub.f32 %v6285, %v9428
  %v9430 = vand.u32 %v9429, 4294901760
  %9431 = vmatprep.subr.mxu0 %v9430
  %v9432 = vand.u32 %v6284, 4294901760
  %v9433 = vsub.f32 %v6284, %v9432
  %v9434 = vand.u32 %v9433, 4294901760
  %9435 = vmatpush1.msra.mxu0 %v9434
  %v9436 = vand.u32 %v6287, 4294901760
  %v9437 = vsub.f32 %v6287, %v9436
  %v9438 = vand.u32 %v9437, 4294901760
  %9439 = vmatprep.subr.mxu0 %v9438
  %v9440 = vand.u32 %v6286, 4294901760
  %v9441 = vsub.f32 %v6286, %v9440
  %v9442 = vand.u32 %v9441, 4294901760
  %9443 = vmatpush1.msra.mxu0 %v9442
  %v9444 = vand.u32 %v6289, 4294901760
  %v9445 = vsub.f32 %v6289, %v9444
  %v9446 = vand.u32 %v9445, 4294901760
  %9447 = vmatprep.subr.mxu0 %v9446
  %v9448 = vand.u32 %v6288, 4294901760
  %v9449 = vsub.f32 %v6288, %v9448
  %v9450 = vand.u32 %v9449, 4294901760
  %9451 = vmatpush1.msra.mxu0 %v9450
  %v9452 = vand.u32 %v6291, 4294901760
  %v9453 = vsub.f32 %v6291, %v9452
  %v9454 = vand.u32 %v9453, 4294901760
  %9455 = vmatprep.subr.mxu0 %v9454
  %v9456 = vand.u32 %v6290, 4294901760
  %v9457 = vsub.f32 %v6290, %v9456
  %v9458 = vand.u32 %v9457, 4294901760
  %9459 = vmatpush1.msra.mxu0 %v9458
  %v9460 = vand.u32 %v6293, 4294901760
  %v9461 = vsub.f32 %v6293, %v9460
  %v9462 = vand.u32 %v9461, 4294901760
  %9463 = vmatprep.subr.mxu0 %v9462
  %v9464 = vand.u32 %v6292, 4294901760
  %v9465 = vsub.f32 %v6292, %v9464
  %v9466 = vand.u32 %v9465, 4294901760
  %9467 = vmatpush1.msra.mxu0 %v9466
  %v9468 = vand.u32 %v6295, 4294901760
  %v9469 = vsub.f32 %v6295, %v9468
  %v9470 = vand.u32 %v9469, 4294901760
  %9471 = vmatprep.subr.mxu0 %v9470
  %v9472 = vand.u32 %v6294, 4294901760
  %v9473 = vsub.f32 %v6294, %v9472
  %v9474 = vand.u32 %v9473, 4294901760
  %9475 = vmatpush1.msra.mxu0 %v9474
  %v9476 = vand.u32 %v6297, 4294901760
  %v9477 = vsub.f32 %v6297, %v9476
  %v9478 = vand.u32 %v9477, 4294901760
  %9479 = vmatprep.subr.mxu0 %v9478
  %v9480 = vand.u32 %v6296, 4294901760
  %v9481 = vsub.f32 %v6296, %v9480
  %v9482 = vand.u32 %v9481, 4294901760
  %9483 = vmatpush1.msra.mxu0 %v9482
  %v9484 = vand.u32 %v6299, 4294901760
  %v9485 = vsub.f32 %v6299, %v9484
  %v9486 = vand.u32 %v9485, 4294901760
  %9487 = vmatprep.subr.mxu0 %v9486
  %v9488 = vand.u32 %v6298, 4294901760
  %v9489 = vsub.f32 %v6298, %v9488
  %v9490 = vand.u32 %v9489, 4294901760
  %9491 = vmatpush1.msra.mxu0 %v9490
  %v9492 = vand.u32 %v6301, 4294901760
  %v9493 = vsub.f32 %v6301, %v9492
  %v9494 = vand.u32 %v9493, 4294901760
  %9495 = vmatprep.subr.mxu0 %v9494
  %v9496 = vand.u32 %v6300, 4294901760
  %v9497 = vsub.f32 %v6300, %v9496
  %v9498 = vand.u32 %v9497, 4294901760
  %9499 = vmatpush1.msra.mxu0 %v9498
  %v9500 = vand.u32 %v6303, 4294901760
  %v9501 = vsub.f32 %v6303, %v9500
  %v9502 = vand.u32 %v9501, 4294901760
  %9503 = vmatprep.subr.mxu0 %v9502
  %v9504 = vand.u32 %v6302, 4294901760
  %v9505 = vsub.f32 %v6302, %v9504
  %v9506 = vand.u32 %v9505, 4294901760
  %9507 = vmatpush1.msra.mxu0 %v9506
  %v9508 = vand.u32 %v6305, 4294901760
  %v9509 = vsub.f32 %v6305, %v9508
  %v9510 = vand.u32 %v9509, 4294901760
  %9511 = vmatprep.subr.mxu0 %v9510
  %v9512 = vand.u32 %v6304, 4294901760
  %v9513 = vsub.f32 %v6304, %v9512
  %v9514 = vand.u32 %v9513, 4294901760
  %9515 = vmatpush1.msra.mxu0 %v9514
  %v9516 = vand.u32 %v6307, 4294901760
  %v9517 = vsub.f32 %v6307, %v9516
  %v9518 = vand.u32 %v9517, 4294901760
  %9519 = vmatprep.subr.mxu0 %v9518
  %v9520 = vand.u32 %v6306, 4294901760
  %v9521 = vsub.f32 %v6306, %v9520
  %v9522 = vand.u32 %v9521, 4294901760
  %9523 = vmatpush1.msra.mxu0 %v9522
  %v9524 = vand.u32 %v6309, 4294901760
  %v9525 = vsub.f32 %v6309, %v9524
  %v9526 = vand.u32 %v9525, 4294901760
  %9527 = vmatprep.subr.mxu0 %v9526
  %v9528 = vand.u32 %v6308, 4294901760
  %v9529 = vsub.f32 %v6308, %v9528
  %v9530 = vand.u32 %v9529, 4294901760
  %9531 = vmatpush1.msra.mxu0 %v9530
  %v9532 = vand.u32 %v6311, 4294901760
  %v9533 = vsub.f32 %v6311, %v9532
  %v9534 = vand.u32 %v9533, 4294901760
  %9535 = vmatprep.subr.mxu0 %v9534
  %v9536 = vand.u32 %v6310, 4294901760
  %v9537 = vsub.f32 %v6310, %v9536
  %v9538 = vand.u32 %v9537, 4294901760
  %9539 = vmatpush1.msra.mxu0 %v9538
  %v9540 = vand.u32 %v6313, 4294901760
  %v9541 = vsub.f32 %v6313, %v9540
  %v9542 = vand.u32 %v9541, 4294901760
  %9543 = vmatprep.subr.mxu0 %v9542
  %v9544 = vand.u32 %v6312, 4294901760
  %v9545 = vsub.f32 %v6312, %v9544
  %v9546 = vand.u32 %v9545, 4294901760
  %9547 = vmatpush1.msra.mxu0 %v9546
  %v9548 = vand.u32 %v6315, 4294901760
  %v9549 = vsub.f32 %v6315, %v9548
  %v9550 = vand.u32 %v9549, 4294901760
  %9551 = vmatprep.subr.mxu0 %v9550
  %v9552 = vand.u32 %v6314, 4294901760
  %v9553 = vsub.f32 %v6314, %v9552
  %v9554 = vand.u32 %v9553, 4294901760
  %9555 = vmatpush1.msra.mxu0 %v9554
  %v9556 = vand.u32 %v6317, 4294901760
  %v9557 = vsub.f32 %v6317, %v9556
  %v9558 = vand.u32 %v9557, 4294901760
  %9559 = vmatprep.subr.mxu0 %v9558
  %v9560 = vand.u32 %v6316, 4294901760
  %v9561 = vsub.f32 %v6316, %v9560
  %v9562 = vand.u32 %v9561, 4294901760
  %9563 = vmatpush1.msra.mxu0 %v9562
  %v9564 = vand.u32 %v6319, 4294901760
  %v9565 = vsub.f32 %v6319, %v9564
  %v9566 = vand.u32 %v9565, 4294901760
  %9567 = vmatprep.subr.mxu0 %v9566
  %v9568 = vand.u32 %v6318, 4294901760
  %v9569 = vsub.f32 %v6318, %v9568
  %v9570 = vand.u32 %v9569, 4294901760
  %9571 = vmatpush1.msra.mxu0 %v9570
  %v9572 = vand.u32 %v6321, 4294901760
  %v9573 = vsub.f32 %v6321, %v9572
  %v9574 = vand.u32 %v9573, 4294901760
  %9575 = vmatprep.subr.mxu0 %v9574
  %v9576 = vand.u32 %v6320, 4294901760
  %v9577 = vsub.f32 %v6320, %v9576
  %v9578 = vand.u32 %v9577, 4294901760
  %9579 = vmatpush1.msra.mxu0 %v9578
  %v9580 = vand.u32 %v6323, 4294901760
  %v9581 = vsub.f32 %v6323, %v9580
  %v9582 = vand.u32 %v9581, 4294901760
  %9583 = vmatprep.subr.mxu0 %v9582
  %v9584 = vand.u32 %v6322, 4294901760
  %v9585 = vsub.f32 %v6322, %v9584
  %v9586 = vand.u32 %v9585, 4294901760
  %9587 = vmatpush1.msra.mxu0 %v9586
  %v9588 = vand.u32 %v6325, 4294901760
  %v9589 = vsub.f32 %v6325, %v9588
  %v9590 = vand.u32 %v9589, 4294901760
  %9591 = vmatprep.subr.mxu0 %v9590
  %v9592 = vand.u32 %v6324, 4294901760
  %v9593 = vsub.f32 %v6324, %v9592
  %v9594 = vand.u32 %v9593, 4294901760
  %9595 = vmatpush1.msra.mxu0 %v9594
  %v9596 = vand.u32 %v6327, 4294901760
  %v9597 = vsub.f32 %v6327, %v9596
  %v9598 = vand.u32 %v9597, 4294901760
  %9599 = vmatprep.subr.mxu0 %v9598
  %v9600 = vand.u32 %v6326, 4294901760
  %v9601 = vsub.f32 %v6326, %v9600
  %v9602 = vand.u32 %v9601, 4294901760
  %9603 = vmatpush1.msra.mxu0 %v9602
  %v9604 = vand.u32 %v6329, 4294901760
  %v9605 = vsub.f32 %v6329, %v9604
  %v9606 = vand.u32 %v9605, 4294901760
  %9607 = vmatprep.subr.mxu0 %v9606
  %v9608 = vand.u32 %v6328, 4294901760
  %v9609 = vsub.f32 %v6328, %v9608
  %v9610 = vand.u32 %v9609, 4294901760
  %9611 = vmatpush1.msra.mxu0 %v9610
  %v9612 = vand.u32 %v6331, 4294901760
  %v9613 = vsub.f32 %v6331, %v9612
  %v9614 = vand.u32 %v9613, 4294901760
  %9615 = vmatprep.subr.mxu0 %v9614
  %v9616 = vand.u32 %v6330, 4294901760
  %v9617 = vsub.f32 %v6330, %v9616
  %v9618 = vand.u32 %v9617, 4294901760
  %9619 = vmatpush1.msra.mxu0 %v9618
  %v9620 = vand.u32 %v6333, 4294901760
  %v9621 = vsub.f32 %v6333, %v9620
  %v9622 = vand.u32 %v9621, 4294901760
  %9623 = vmatprep.subr.mxu0 %v9622
  %v9624 = vand.u32 %v6332, 4294901760
  %v9625 = vsub.f32 %v6332, %v9624
  %v9626 = vand.u32 %v9625, 4294901760
  %9627 = vmatpush1.msra.mxu0 %v9626
  %v9628 = vand.u32 %v6335, 4294901760
  %v9629 = vsub.f32 %v6335, %v9628
  %v9630 = vand.u32 %v9629, 4294901760
  %9631 = vmatprep.subr.mxu0 %v9630
  %v9632 = vand.u32 %v6334, 4294901760
  %v9633 = vsub.f32 %v6334, %v9632
  %v9634 = vand.u32 %v9633, 4294901760
  %9635 = vmatpush1.msra.mxu0 %v9634
  %v9636 = vand.u32 %v6337, 4294901760
  %v9637 = vsub.f32 %v6337, %v9636
  %v9638 = vand.u32 %v9637, 4294901760
  %9639 = vmatprep.subr.mxu0 %v9638
  %v9640 = vand.u32 %v6336, 4294901760
  %v9641 = vsub.f32 %v6336, %v9640
  %v9642 = vand.u32 %v9641, 4294901760
  %9643 = vmatpush1.msra.mxu0 %v9642
  %v9644 = vand.u32 %v6339, 4294901760
  %v9645 = vsub.f32 %v6339, %v9644
  %v9646 = vand.u32 %v9645, 4294901760
  %9647 = vmatprep.subr.mxu0 %v9646
  %v9648 = vand.u32 %v6338, 4294901760
  %v9649 = vsub.f32 %v6338, %v9648
  %v9650 = vand.u32 %v9649, 4294901760
  %9651 = vmatpush1.msra.mxu0 %v9650
  %v9652 = vand.u32 %v6181, 4294901760
  %9653 = vmatprep.mubr.f32.mxu0 %v9652
  %v9654 = vand.u32 %v6180, 4294901760
  %9655 = vmatmul.mubr.f32.gmra.mrb[0].mxu0 %v9654
  %v9656 = vpop.f32.mrb[0].mxu0
  %v9657 = vadd.f32 %v8828, %v9656
  %v9658 = vpop.f32.mrb[0].mxu0
  %v9659 = vadd.f32 %v8830, %v9658
  %v9660 = vand.u32 %v6183, 4294901760
  %9661 = vmatprep.mubr.f32.mxu0 %v9660
  %v9662 = vand.u32 %v6182, 4294901760
  %9663 = vmatmul.mubr.f32.gmra.mrb[0].mxu0 %v9662
  %v9664 = vpop.f32.mrb[0].mxu0
  %v9665 = vadd.f32 %v8840, %v9664
  %v9666 = vpop.f32.mrb[0].mxu0
  %v9667 = vadd.f32 %v8842, %v9666
  %v9668 = vand.u32 %v6185, 4294901760
  %9669 = vmatprep.mubr.f32.mxu0 %v9668
  %v9670 = vand.u32 %v6184, 4294901760
  %9671 = vmatmul.mubr.f32.gmra.mrb[0].mxu0 %v9670
  %v9672 = vpop.f32.mrb[0].mxu0
  %v9673 = vadd.f32 %v8852, %v9672
  %v9674 = vpop.f32.mrb[0].mxu0
  %v9675 = vadd.f32 %v8854, %v9674
  %v9676 = vand.u32 %v6187, 4294901760
  %9677 = vmatprep.mubr.f32.mxu0 %v9676
  %v9678 = vand.u32 %v6186, 4294901760
  %9679 = vmatmul.mubr.f32.gmra.mrb[0].mxu0 %v9678
  %v9680 = vpop.f32.mrb[0].mxu0
  %v9681 = vadd.f32 %v8864, %v9680
  %v9682 = vpop.f32.mrb[0].mxu0
  %v9683 = vadd.f32 %v8866, %v9682
  %v9684 = vand.u32 %v6189, 4294901760
  %9685 = vmatprep.mubr.f32.mxu0 %v9684
  %v9686 = vand.u32 %v6188, 4294901760
  %9687 = vmatmul.mubr.f32.gmra.mrb[0].mxu0 %v9686
  %v9688 = vpop.f32.mrb[0].mxu0
  %v9689 = vadd.f32 %v8876, %v9688
  %v9690 = vpop.f32.mrb[0].mxu0
  %v9691 = vadd.f32 %v8878, %v9690
  %v9692 = vand.u32 %v6191, 4294901760
  %9693 = vmatprep.mubr.f32.mxu0 %v9692
  %v9694 = vand.u32 %v6190, 4294901760
  %9695 = vmatmul.mubr.f32.gmra.mrb[0].mxu0 %v9694
  %v9696 = vpop.f32.mrb[0].mxu0
  %v9697 = vadd.f32 %v8888, %v9696
  %v9698 = vpop.f32.mrb[0].mxu0
  %v9699 = vadd.f32 %v8890, %v9698
  %v9700 = vand.u32 %v6193, 4294901760
  %9701 = vmatprep.mubr.f32.mxu0 %v9700
  %v9702 = vand.u32 %v6192, 4294901760
  %9703 = vmatmul.mubr.f32.gmra.mrb[0].mxu0 %v9702
  %v9704 = vpop.f32.mrb[0].mxu0
  %v9705 = vadd.f32 %v8900, %v9704
  %v9706 = vpop.f32.mrb[0].mxu0
  %v9707 = vadd.f32 %v8902, %v9706
  %v9708 = vand.u32 %v6195, 4294901760
  %9709 = vmatprep.mubr.f32.mxu0 %v9708
  %v9710 = vand.u32 %v6194, 4294901760
  %9711 = vmatmul.mubr.f32.gmra.mrb[0].mxu0 %v9710
  %v9712 = vpop.f32.mrb[0].mxu0
  %v9713 = vadd.f32 %v8912, %v9712
  %v9714 = vpop.f32.mrb[0].mxu0
  %v9715 = vadd.f32 %v8914, %v9714
  %v9716 = vand.u32 %v6197, 4294901760
  %9717 = vmatprep.mubr.f32.mxu0 %v9716
  %v9718 = vand.u32 %v6196, 4294901760
  %9719 = vmatmul.mubr.f32.gmra.mrb[0].mxu0 %v9718
  %v9720 = vpop.f32.mrb[0].mxu0
  %v9721 = vadd.f32 %v8924, %v9720
  %v9722 = vpop.f32.mrb[0].mxu0
  %v9723 = vadd.f32 %v8926, %v9722
  %v9724 = vand.u32 %v6199, 4294901760
  %9725 = vmatprep.mubr.f32.mxu0 %v9724
  %v9726 = vand.u32 %v6198, 4294901760
  %9727 = vmatmul.mubr.f32.gmra.mrb[0].mxu0 %v9726
  %v9728 = vpop.f32.mrb[0].mxu0
  %v9729 = vadd.f32 %v8936, %v9728
  %v9730 = vpop.f32.mrb[0].mxu0
  %v9731 = vadd.f32 %v8938, %v9730
  %v9732 = vand.u32 %v6201, 4294901760
  %9733 = vmatprep.mubr.f32.mxu0 %v9732
  %v9734 = vand.u32 %v6200, 4294901760
  %9735 = vmatmul.mubr.f32.gmra.mrb[0].mxu0 %v9734
  %v9736 = vpop.f32.mrb[0].mxu0
  %v9737 = vadd.f32 %v8948, %v9736
  %v9738 = vpop.f32.mrb[0].mxu0
  %v9739 = vadd.f32 %v8950, %v9738
  %v9740 = vand.u32 %v6203, 4294901760
  %9741 = vmatprep.mubr.f32.mxu0 %v9740
  %v9742 = vand.u32 %v6202, 4294901760
  %9743 = vmatmul.mubr.f32.gmra.mrb[0].mxu0 %v9742
  %v9744 = vpop.f32.mrb[0].mxu0
  %v9745 = vadd.f32 %v8960, %v9744
  %v9746 = vpop.f32.mrb[0].mxu0
  %v9747 = vadd.f32 %v8962, %v9746
  %v9748 = vand.u32 %v6205, 4294901760
  %9749 = vmatprep.mubr.f32.mxu0 %v9748
  %v9750 = vand.u32 %v6204, 4294901760
  %9751 = vmatmul.mubr.f32.gmra.mrb[0].mxu0 %v9750
  %v9752 = vpop.f32.mrb[0].mxu0
  %v9753 = vadd.f32 %v8972, %v9752
  %v9754 = vpop.f32.mrb[0].mxu0
  %v9755 = vadd.f32 %v8974, %v9754
  %v9756 = vand.u32 %v6207, 4294901760
  %9757 = vmatprep.mubr.f32.mxu0 %v9756
  %v9758 = vand.u32 %v6206, 4294901760
  %9759 = vmatmul.mubr.f32.gmra.mrb[0].mxu0 %v9758
  %v9760 = vpop.f32.mrb[0].mxu0
  %v9761 = vadd.f32 %v8984, %v9760
  %v9762 = vpop.f32.mrb[0].mxu0
  %v9763 = vadd.f32 %v8986, %v9762
  %v9764 = vand.u32 %v6209, 4294901760
  %9765 = vmatprep.mubr.f32.mxu0 %v9764
  %v9766 = vand.u32 %v6208, 4294901760
  %9767 = vmatmul.mubr.f32.gmra.mrb[0].mxu0 %v9766
  %v9768 = vpop.f32.mrb[0].mxu0
  %v9769 = vadd.f32 %v8996, %v9768
  %v9770 = vpop.f32.mrb[0].mxu0
  %v9771 = vadd.f32 %v8998, %v9770
  %v9772 = vand.u32 %v6211, 4294901760
  %9773 = vmatprep.mubr.f32.mxu0 %v9772
  %v9774 = vand.u32 %v6210, 4294901760
  %9775 = vmatmul.mubr.f32.gmra.mrb[0].mxu0 %v9774
  %v9776 = vpop.f32.mrb[0].mxu0
  %v9777 = vadd.f32 %v9008, %v9776
  %v9778 = vpop.f32.mrb[0].mxu0
  %v9779 = vadd.f32 %v9010, %v9778
  %v9780 = vand.u32 %v6213, 4294901760
  %9781 = vmatprep.mubr.f32.mxu0 %v9780
  %v9782 = vand.u32 %v6212, 4294901760
  %9783 = vmatmul.mubr.f32.gmra.mrb[0].mxu0 %v9782
  %v9784 = vpop.f32.mrb[0].mxu0
  %v9785 = vadd.f32 %v9020, %v9784
  %v9786 = vpop.f32.mrb[0].mxu0
  %v9787 = vadd.f32 %v9022, %v9786
  %v9788 = vand.u32 %v6215, 4294901760
  %9789 = vmatprep.mubr.f32.mxu0 %v9788
  %v9790 = vand.u32 %v6214, 4294901760
  %9791 = vmatmul.mubr.f32.gmra.mrb[0].mxu0 %v9790
  %v9792 = vpop.f32.mrb[0].mxu0
  %v9793 = vadd.f32 %v9032, %v9792
  %v9794 = vpop.f32.mrb[0].mxu0
  %v9795 = vadd.f32 %v9034, %v9794
  %v9796 = vand.u32 %v6217, 4294901760
  %9797 = vmatprep.mubr.f32.mxu0 %v9796
  %v9798 = vand.u32 %v6216, 4294901760
  %9799 = vmatmul.mubr.f32.gmra.mrb[0].mxu0 %v9798
  %v9800 = vpop.f32.mrb[0].mxu0
  %v9801 = vadd.f32 %v9044, %v9800
  %v9802 = vpop.f32.mrb[0].mxu0
  %v9803 = vadd.f32 %v9046, %v9802
  %v9804 = vand.u32 %v6219, 4294901760
  %9805 = vmatprep.mubr.f32.mxu0 %v9804
  %v9806 = vand.u32 %v6218, 4294901760
  %9807 = vmatmul.mubr.f32.gmra.mrb[0].mxu0 %v9806
  %v9808 = vpop.f32.mrb[0].mxu0
  %v9809 = vadd.f32 %v9056, %v9808
  %v9810 = vpop.f32.mrb[0].mxu0
  %v9811 = vadd.f32 %v9058, %v9810
  %v9812 = vand.u32 %v6221, 4294901760
  %9813 = vmatprep.mubr.f32.mxu0 %v9812
  %v9814 = vand.u32 %v6220, 4294901760
  %9815 = vmatmul.mubr.f32.gmra.mrb[0].mxu0 %v9814
  %v9816 = vpop.f32.mrb[0].mxu0
  %v9817 = vadd.f32 %v9068, %v9816
  %v9818 = vpop.f32.mrb[0].mxu0
  %v9819 = vadd.f32 %v9070, %v9818
  %v9820 = vand.u32 %v6223, 4294901760
  %9821 = vmatprep.mubr.f32.mxu0 %v9820
  %v9822 = vand.u32 %v6222, 4294901760
  %9823 = vmatmul.mubr.f32.gmra.mrb[0].mxu0 %v9822
  %v9824 = vpop.f32.mrb[0].mxu0
  %v9825 = vadd.f32 %v9080, %v9824
  %v9826 = vpop.f32.mrb[0].mxu0
  %v9827 = vadd.f32 %v9082, %v9826
  %v9828 = vand.u32 %v6225, 4294901760
  %9829 = vmatprep.mubr.f32.mxu0 %v9828
  %v9830 = vand.u32 %v6224, 4294901760
  %9831 = vmatmul.mubr.f32.gmra.mrb[0].mxu0 %v9830
  %v9832 = vpop.f32.mrb[0].mxu0
  %v9833 = vadd.f32 %v9092, %v9832
  %v9834 = vpop.f32.mrb[0].mxu0
  %v9835 = vadd.f32 %v9094, %v9834
  %v9836 = vand.u32 %v6227, 4294901760
  %9837 = vmatprep.mubr.f32.mxu0 %v9836
  %v9838 = vand.u32 %v6226, 4294901760
  %9839 = vmatmul.mubr.f32.gmra.mrb[0].mxu0 %v9838
  %v9840 = vpop.f32.mrb[0].mxu0
  %v9841 = vadd.f32 %v9104, %v9840
  %v9842 = vpop.f32.mrb[0].mxu0
  %v9843 = vadd.f32 %v9106, %v9842
  %v9844 = vand.u32 %v6229, 4294901760
  %9845 = vmatprep.mubr.f32.mxu0 %v9844
  %v9846 = vand.u32 %v6228, 4294901760
  %9847 = vmatmul.mubr.f32.gmra.mrb[0].mxu0 %v9846
  %v9848 = vpop.f32.mrb[0].mxu0
  %v9849 = vadd.f32 %v9116, %v9848
  %v9850 = vpop.f32.mrb[0].mxu0
  %v9851 = vadd.f32 %v9118, %v9850
  %v9852 = vand.u32 %v6231, 4294901760
  %9853 = vmatprep.mubr.f32.mxu0 %v9852
  %v9854 = vand.u32 %v6230, 4294901760
  %9855 = vmatmul.mubr.f32.gmra.mrb[0].mxu0 %v9854
  %v9856 = vpop.f32.mrb[0].mxu0
  %v9857 = vadd.f32 %v9128, %v9856
  %v9858 = vpop.f32.mrb[0].mxu0
  %v9859 = vadd.f32 %v9130, %v9858
  %v9860 = vand.u32 %v6233, 4294901760
  %9861 = vmatprep.mubr.f32.mxu0 %v9860
  %v9862 = vand.u32 %v6232, 4294901760
  %9863 = vmatmul.mubr.f32.gmra.mrb[0].mxu0 %v9862
  %v9864 = vpop.f32.mrb[0].mxu0
  %v9865 = vadd.f32 %v9140, %v9864
  %v9866 = vpop.f32.mrb[0].mxu0
  %v9867 = vadd.f32 %v9142, %v9866
  %v9868 = vand.u32 %v6235, 4294901760
  %9869 = vmatprep.mubr.f32.mxu0 %v9868
  %v9870 = vand.u32 %v6234, 4294901760
  %9871 = vmatmul.mubr.f32.gmra.mrb[0].mxu0 %v9870
  %v9872 = vpop.f32.mrb[0].mxu0
  %v9873 = vadd.f32 %v9152, %v9872
  %v9874 = vpop.f32.mrb[0].mxu0
  %v9875 = vadd.f32 %v9154, %v9874
  %v9876 = vand.u32 %v6237, 4294901760
  %9877 = vmatprep.mubr.f32.mxu0 %v9876
  %v9878 = vand.u32 %v6236, 4294901760
  %9879 = vmatmul.mubr.f32.gmra.mrb[0].mxu0 %v9878
  %v9880 = vpop.f32.mrb[0].mxu0
  %v9881 = vadd.f32 %v9164, %v9880
  %v9882 = vpop.f32.mrb[0].mxu0
  %v9883 = vadd.f32 %v9166, %v9882
  %v9884 = vand.u32 %v6239, 4294901760
  %9885 = vmatprep.mubr.f32.mxu0 %v9884
  %v9886 = vand.u32 %v6238, 4294901760
  %9887 = vmatmul.mubr.f32.gmra.mrb[0].mxu0 %v9886
  %v9888 = vpop.f32.mrb[0].mxu0
  %v9889 = vadd.f32 %v9176, %v9888
  %v9890 = vpop.f32.mrb[0].mxu0
  %v9891 = vadd.f32 %v9178, %v9890
  %v9892 = vand.u32 %v6241, 4294901760
  %9893 = vmatprep.mubr.f32.mxu0 %v9892
  %v9894 = vand.u32 %v6240, 4294901760
  %9895 = vmatmul.mubr.f32.gmra.mrb[0].mxu0 %v9894
  %v9896 = vpop.f32.mrb[0].mxu0
  %v9897 = vadd.f32 %v9188, %v9896
  %v9898 = vpop.f32.mrb[0].mxu0
  %v9899 = vadd.f32 %v9190, %v9898
  %v9900 = vand.u32 %v6243, 4294901760
  %9901 = vmatprep.mubr.f32.mxu0 %v9900
  %v9902 = vand.u32 %v6242, 4294901760
  %9903 = vmatmul.mubr.f32.gmra.mrb[0].mxu0 %v9902
  %v9904 = vpop.f32.mrb[0].mxu0
  %v9905 = vadd.f32 %v9200, %v9904
  %v9906 = vpop.f32.mrb[0].mxu0
  %v9907 = vadd.f32 %v9202, %v9906
  %v9908 = vand.u32 %v6245, 4294901760
  %9909 = vmatprep.mubr.f32.mxu0 %v9908
  %v9910 = vand.u32 %v6244, 4294901760
  %9911 = vmatmul.mubr.f32.gmra.mrb[0].mxu0 %v9910
  %v9912 = vpop.f32.mrb[0].mxu0
  %v9913 = vadd.f32 %v9212, %v9912
  %v9914 = vpop.f32.mrb[0].mxu0
  %v9915 = vadd.f32 %v9214, %v9914
  %v9916 = vand.u32 %v6247, 4294901760
  %9917 = vmatprep.mubr.f32.mxu0 %v9916
  %v9918 = vand.u32 %v6246, 4294901760
  %9919 = vmatmul.mubr.f32.gmra.mrb[0].mxu0 %v9918
  %v9920 = vpop.f32.mrb[0].mxu0
  %v9921 = vadd.f32 %v9224, %v9920
  %v9922 = vpop.f32.mrb[0].mxu0
  %v9923 = vadd.f32 %v9226, %v9922
  %v9924 = vand.u32 %v6249, 4294901760
  %9925 = vmatprep.mubr.f32.mxu0 %v9924
  %v9926 = vand.u32 %v6248, 4294901760
  %9927 = vmatmul.mubr.f32.gmra.mrb[0].mxu0 %v9926
  %v9928 = vpop.f32.mrb[0].mxu0
  %v9929 = vadd.f32 %v9236, %v9928
  %v9930 = vpop.f32.mrb[0].mxu0
  %v9931 = vadd.f32 %v9238, %v9930
  %v9932 = vand.u32 %v6251, 4294901760
  %9933 = vmatprep.mubr.f32.mxu0 %v9932
  %v9934 = vand.u32 %v6250, 4294901760
  %9935 = vmatmul.mubr.f32.gmra.mrb[0].mxu0 %v9934
  %v9936 = vpop.f32.mrb[0].mxu0
  %v9937 = vadd.f32 %v9248, %v9936
  %v9938 = vpop.f32.mrb[0].mxu0
  %v9939 = vadd.f32 %v9250, %v9938
  %v9940 = vand.u32 %v6253, 4294901760
  %9941 = vmatprep.mubr.f32.mxu0 %v9940
  %v9942 = vand.u32 %v6252, 4294901760
  %9943 = vmatmul.mubr.f32.gmra.mrb[0].mxu0 %v9942
  %v9944 = vpop.f32.mrb[0].mxu0
  %v9945 = vadd.f32 %v9260, %v9944
  %v9946 = vpop.f32.mrb[0].mxu0
  %v9947 = vadd.f32 %v9262, %v9946
  %v9948 = vand.u32 %v6255, 4294901760
  %9949 = vmatprep.mubr.f32.mxu0 %v9948
  %v9950 = vand.u32 %v6254, 4294901760
  %9951 = vmatmul.mubr.f32.gmra.mrb[0].mxu0 %v9950
  %v9952 = vpop.f32.mrb[0].mxu0
  %v9953 = vadd.f32 %v9272, %v9952
  %v9954 = vpop.f32.mrb[0].mxu0
  %v9955 = vadd.f32 %v9274, %v9954
  %v9956 = vand.u32 %v6257, 4294901760
  %9957 = vmatprep.mubr.f32.mxu0 %v9956
  %v9958 = vand.u32 %v6256, 4294901760
  %9959 = vmatmul.mubr.f32.gmra.mrb[0].mxu0 %v9958
  %v9960 = vpop.f32.mrb[0].mxu0
  %v9961 = vadd.f32 %v9284, %v9960
  %v9962 = vpop.f32.mrb[0].mxu0
  %v9963 = vadd.f32 %v9286, %v9962
  %v9964 = vand.u32 %v6259, 4294901760
  %9965 = vmatprep.mubr.f32.mxu0 %v9964
  %v9966 = vand.u32 %v6258, 4294901760
  %9967 = vmatmul.mubr.f32.gmra.mrb[0].mxu0 %v9966
  %v9968 = vpop.f32.mrb[0].mxu0
  %v9969 = vadd.f32 %v9296, %v9968
  %v9970 = vpop.f32.mrb[0].mxu0
  %v9971 = vadd.f32 %v9298, %v9970
  %v9972 = vand.u32 %v6261, 4294901760
  %9973 = vmatprep.mubr.f32.mxu0 %v9972
  %v9974 = vand.u32 %v6260, 4294901760
  %9975 = vmatmul.mubr.f32.gmra.mrb[0].mxu0 %v9974
  %v9976 = vpop.f32.mrb[0].mxu0
  %v9977 = vadd.f32 %v9308, %v9976
  %v9978 = vpop.f32.mrb[0].mxu0
  %v9979 = vadd.f32 %v9310, %v9978
  %v9980 = vand.u32 %v6263, 4294901760
  %9981 = vmatprep.mubr.f32.mxu0 %v9980
  %v9982 = vand.u32 %v6262, 4294901760
  %9983 = vmatmul.mubr.f32.gmra.mrb[0].mxu0 %v9982
  %v9984 = vpop.f32.mrb[0].mxu0
  %v9985 = vadd.f32 %v9320, %v9984
  %v9986 = vpop.f32.mrb[0].mxu0
  %v9987 = vadd.f32 %v9322, %v9986
  %v9988 = vand.u32 %v6265, 4294901760
  %9989 = vmatprep.mubr.f32.mxu0 %v9988
  %v9990 = vand.u32 %v6264, 4294901760
  %9991 = vmatmul.mubr.f32.gmra.mrb[0].mxu0 %v9990
  %v9992 = vpop.f32.mrb[0].mxu0
  %v9993 = vadd.f32 %v9332, %v9992
  %v9994 = vpop.f32.mrb[0].mxu0
  %v9995 = vadd.f32 %v9334, %v9994
  %v9996 = vand.u32 %v6267, 4294901760
  %9997 = vmatprep.mubr.f32.mxu0 %v9996
  %v9998 = vand.u32 %v6266, 4294901760
  %9999 = vmatmul.mubr.f32.gmra.mrb[0].mxu0 %v9998
  %v10000 = vpop.f32.mrb[0].mxu0
  %v10001 = vadd.f32 %v9344, %v10000
  %v10002 = vpop.f32.mrb[0].mxu0
  %v10003 = vadd.f32 %v9346, %v10002
  %v10004 = vand.u32 %v6269, 4294901760
  %10005 = vmatprep.mubr.f32.mxu0 %v10004
  %v10006 = vand.u32 %v6268, 4294901760
  %10007 = vmatmul.mubr.f32.gmra.mrb[0].mxu0 %v10006
  %v10008 = vpop.f32.mrb[0].mxu0
  %v10009 = vadd.f32 %v9356, %v10008
  %v10010 = vpop.f32.mrb[0].mxu0
  %v10011 = vadd.f32 %v9358, %v10010
  %v10012 = vand.u32 %v6271, 4294901760
  %10013 = vmatprep.mubr.f32.mxu0 %v10012
  %v10014 = vand.u32 %v6270, 4294901760
  %10015 = vmatmul.mubr.f32.gmra.mrb[0].mxu0 %v10014
  %v10016 = vpop.f32.mrb[0].mxu0
  %v10017 = vadd.f32 %v9368, %v10016
  %v10018 = vpop.f32.mrb[0].mxu0
  %v10019 = vadd.f32 %v9370, %v10018
  %v10020 = vand.u32 %v6273, 4294901760
  %10021 = vmatprep.mubr.f32.mxu0 %v10020
  %v10022 = vand.u32 %v6272, 4294901760
  %10023 = vmatmul.mubr.f32.gmra.mrb[0].mxu0 %v10022
  %v10024 = vpop.f32.mrb[0].mxu0
  %v10025 = vadd.f32 %v9380, %v10024
  %v10026 = vpop.f32.mrb[0].mxu0
  %v10027 = vadd.f32 %v9382, %v10026
  %v10028 = vand.u32 %v6275, 4294901760
  %10029 = vmatprep.mubr.f32.mxu0 %v10028
  %v10030 = vand.u32 %v6274, 4294901760
  %10031 = vmatmul.mubr.f32.gmra.mrb[0].mxu0 %v10030
  %v10032 = vpop.f32.mrb[0].mxu0
  %v10033 = vadd.f32 %v9392, %v10032
  %v10034 = vpop.f32.mrb[0].mxu0
  %v10035 = vadd.f32 %v9394, %v10034
  %10036 = vdwg.mxu0
  %v10037 = vand.u32 %v6277, 4294901760
  %10038 = vmatprep.subr.mxu0 %v10037
  %v10039 = vand.u32 %v6276, 4294901760
  %10040 = vmatpush1.msra.mxu0 %v10039
  %v10041 = vand.u32 %v6279, 4294901760
  %10042 = vmatprep.subr.mxu0 %v10041
  %v10043 = vand.u32 %v6278, 4294901760
  %10044 = vmatpush1.msra.mxu0 %v10043
  %v10045 = vand.u32 %v6281, 4294901760
  %10046 = vmatprep.subr.mxu0 %v10045
  %v10047 = vand.u32 %v6280, 4294901760
  %10048 = vmatpush1.msra.mxu0 %v10047
  %v10049 = vand.u32 %v6283, 4294901760
  %10050 = vmatprep.subr.mxu0 %v10049
  %v10051 = vand.u32 %v6282, 4294901760
  %10052 = vmatpush1.msra.mxu0 %v10051
  %v10053 = vand.u32 %v6285, 4294901760
  %10054 = vmatprep.subr.mxu0 %v10053
  %v10055 = vand.u32 %v6284, 4294901760
  %10056 = vmatpush1.msra.mxu0 %v10055
  %v10057 = vand.u32 %v6287, 4294901760
  %10058 = vmatprep.subr.mxu0 %v10057
  %v10059 = vand.u32 %v6286, 4294901760
  %10060 = vmatpush1.msra.mxu0 %v10059
  %v10061 = vand.u32 %v6289, 4294901760
  %10062 = vmatprep.subr.mxu0 %v10061
  %v10063 = vand.u32 %v6288, 4294901760
  %10064 = vmatpush1.msra.mxu0 %v10063
  %v10065 = vand.u32 %v6291, 4294901760
  %10066 = vmatprep.subr.mxu0 %v10065
  %v10067 = vand.u32 %v6290, 4294901760
  %10068 = vmatpush1.msra.mxu0 %v10067
  %v10069 = vand.u32 %v6293, 4294901760
  %10070 = vmatprep.subr.mxu0 %v10069
  %v10071 = vand.u32 %v6292, 4294901760
  %10072 = vmatpush1.msra.mxu0 %v10071
  %v10073 = vand.u32 %v6295, 4294901760
  %10074 = vmatprep.subr.mxu0 %v10073
  %v10075 = vand.u32 %v6294, 4294901760
  %10076 = vmatpush1.msra.mxu0 %v10075
  %v10077 = vand.u32 %v6297, 4294901760
  %10078 = vmatprep.subr.mxu0 %v10077
  %v10079 = vand.u32 %v6296, 4294901760
  %10080 = vmatpush1.msra.mxu0 %v10079
  %v10081 = vand.u32 %v6299, 4294901760
  %10082 = vmatprep.subr.mxu0 %v10081
  %v10083 = vand.u32 %v6298, 4294901760
  %10084 = vmatpush1.msra.mxu0 %v10083
  %v10085 = vand.u32 %v6301, 4294901760
  %10086 = vmatprep.subr.mxu0 %v10085
  %v10087 = vand.u32 %v6300, 4294901760
  %10088 = vmatpush1.msra.mxu0 %v10087
  %v10089 = vand.u32 %v6303, 4294901760
  %10090 = vmatprep.subr.mxu0 %v10089
  %v10091 = vand.u32 %v6302, 4294901760
  %10092 = vmatpush1.msra.mxu0 %v10091
  %v10093 = vand.u32 %v6305, 4294901760
  %10094 = vmatprep.subr.mxu0 %v10093
  %v10095 = vand.u32 %v6304, 4294901760
  %10096 = vmatpush1.msra.mxu0 %v10095
  %v10097 = vand.u32 %v6307, 4294901760
  %10098 = vmatprep.subr.mxu0 %v10097
  %v10099 = vand.u32 %v6306, 4294901760
  %10100 = vmatpush1.msra.mxu0 %v10099
  %v10101 = vand.u32 %v6309, 4294901760
  %10102 = vmatprep.subr.mxu0 %v10101
  %v10103 = vand.u32 %v6308, 4294901760
  %10104 = vmatpush1.msra.mxu0 %v10103
  %v10105 = vand.u32 %v6311, 4294901760
  %10106 = vmatprep.subr.mxu0 %v10105
  %v10107 = vand.u32 %v6310, 4294901760
  %10108 = vmatpush1.msra.mxu0 %v10107
  %v10109 = vand.u32 %v6313, 4294901760
  %10110 = vmatprep.subr.mxu0 %v10109
  %v10111 = vand.u32 %v6312, 4294901760
  %10112 = vmatpush1.msra.mxu0 %v10111
  %v10113 = vand.u32 %v6315, 4294901760
  %10114 = vmatprep.subr.mxu0 %v10113
  %v10115 = vand.u32 %v6314, 4294901760
  %10116 = vmatpush1.msra.mxu0 %v10115
  %v10117 = vand.u32 %v6317, 4294901760
  %10118 = vmatprep.subr.mxu0 %v10117
  %v10119 = vand.u32 %v6316, 4294901760
  %10120 = vmatpush1.msra.mxu0 %v10119
  %v10121 = vand.u32 %v6319, 4294901760
  %10122 = vmatprep.subr.mxu0 %v10121
  %v10123 = vand.u32 %v6318, 4294901760
  %10124 = vmatpush1.msra.mxu0 %v10123
  %v10125 = vand.u32 %v6321, 4294901760
  %10126 = vmatprep.subr.mxu0 %v10125
  %v10127 = vand.u32 %v6320, 4294901760
  %10128 = vmatpush1.msra.mxu0 %v10127
  %v10129 = vand.u32 %v6323, 4294901760
  %10130 = vmatprep.subr.mxu0 %v10129
  %v10131 = vand.u32 %v6322, 4294901760
  %10132 = vmatpush1.msra.mxu0 %v10131
  %v10133 = vand.u32 %v6325, 4294901760
  %10134 = vmatprep.subr.mxu0 %v10133
  %v10135 = vand.u32 %v6324, 4294901760
  %10136 = vmatpush1.msra.mxu0 %v10135
  %v10137 = vand.u32 %v6327, 4294901760
  %10138 = vmatprep.subr.mxu0 %v10137
  %v10139 = vand.u32 %v6326, 4294901760
  %10140 = vmatpush1.msra.mxu0 %v10139
  %v10141 = vand.u32 %v6329, 4294901760
  %10142 = vmatprep.subr.mxu0 %v10141
  %v10143 = vand.u32 %v6328, 4294901760
  %10144 = vmatpush1.msra.mxu0 %v10143
  %v10145 = vand.u32 %v6331, 4294901760
  %10146 = vmatprep.subr.mxu0 %v10145
  %v10147 = vand.u32 %v6330, 4294901760
  %10148 = vmatpush1.msra.mxu0 %v10147
  %v10149 = vand.u32 %v6333, 4294901760
  %10150 = vmatprep.subr.mxu0 %v10149
  %v10151 = vand.u32 %v6332, 4294901760
  %10152 = vmatpush1.msra.mxu0 %v10151
  %v10153 = vand.u32 %v6335, 4294901760
  %10154 = vmatprep.subr.mxu0 %v10153
  %v10155 = vand.u32 %v6334, 4294901760
  %10156 = vmatpush1.msra.mxu0 %v10155
  %v10157 = vand.u32 %v6337, 4294901760
  %10158 = vmatprep.subr.mxu0 %v10157
  %v10159 = vand.u32 %v6336, 4294901760
  %10160 = vmatpush1.msra.mxu0 %v10159
  %v10161 = vand.u32 %v6339, 4294901760
  %10162 = vmatprep.subr.mxu0 %v10161
  %v10163 = vand.u32 %v6338, 4294901760
  %10164 = vmatpush1.msra.mxu0 %v10163
  %v10165 = vand.u32 %v6181, 4294901760
  %10166 = vmatprep.mubr.f32.mxu0 %v10165
  %v10167 = vand.u32 %v6180, 4294901760
  %10168 = vmatmul.mubr.f32.gmra.mrb[0].mxu0 %v10167
  %v10169 = vpop.f32.mrb[0].mxu0
  %v10170 = vadd.f32 %v9657, %v10169
  %v10171 = vpop.f32.mrb[0].mxu0
  %v10172 = vadd.f32 %v9659, %v10171
  %v10173 = vand.u32 %v6183, 4294901760
  %10174 = vmatprep.mubr.f32.mxu0 %v10173
  %v10175 = vand.u32 %v6182, 4294901760
  %10176 = vmatmul.mubr.f32.gmra.mrb[0].mxu0 %v10175
  %v10177 = vpop.f32.mrb[0].mxu0
  %v10178 = vadd.f32 %v9665, %v10177
  %v10179 = vpop.f32.mrb[0].mxu0
  %v10180 = vadd.f32 %v9667, %v10179
  %v10181 = vand.u32 %v6185, 4294901760
  %10182 = vmatprep.mubr.f32.mxu0 %v10181
  %v10183 = vand.u32 %v6184, 4294901760
  %10184 = vmatmul.mubr.f32.gmra.mrb[0].mxu0 %v10183
  %v10185 = vpop.f32.mrb[0].mxu0
  %v10186 = vadd.f32 %v9673, %v10185
  %v10187 = vpop.f32.mrb[0].mxu0
  %v10188 = vadd.f32 %v9675, %v10187
  %v10189 = vand.u32 %v6187, 4294901760
  %10190 = vmatprep.mubr.f32.mxu0 %v10189
  %v10191 = vand.u32 %v6186, 4294901760
  %10192 = vmatmul.mubr.f32.gmra.mrb[0].mxu0 %v10191
  %v10193 = vpop.f32.mrb[0].mxu0
  %v10194 = vadd.f32 %v9681, %v10193
  %v10195 = vpop.f32.mrb[0].mxu0
  %v10196 = vadd.f32 %v9683, %v10195
  %v10197 = vand.u32 %v6189, 4294901760
  %10198 = vmatprep.mubr.f32.mxu0 %v10197
  %v10199 = vand.u32 %v6188, 4294901760
  %10200 = vmatmul.mubr.f32.gmra.mrb[0].mxu0 %v10199
  %v10201 = vpop.f32.mrb[0].mxu0
  %v10202 = vadd.f32 %v9689, %v10201
  %v10203 = vpop.f32.mrb[0].mxu0
  %v10204 = vadd.f32 %v9691, %v10203
  %v10205 = vand.u32 %v6191, 4294901760
  %10206 = vmatprep.mubr.f32.mxu0 %v10205
  %v10207 = vand.u32 %v6190, 4294901760
  %10208 = vmatmul.mubr.f32.gmra.mrb[0].mxu0 %v10207
  %v10209 = vpop.f32.mrb[0].mxu0
  %v10210 = vadd.f32 %v9697, %v10209
  %v10211 = vpop.f32.mrb[0].mxu0
  %v10212 = vadd.f32 %v9699, %v10211
  %v10213 = vand.u32 %v6193, 4294901760
  %10214 = vmatprep.mubr.f32.mxu0 %v10213
  %v10215 = vand.u32 %v6192, 4294901760
  %10216 = vmatmul.mubr.f32.gmra.mrb[0].mxu0 %v10215
  %v10217 = vpop.f32.mrb[0].mxu0
  %v10218 = vadd.f32 %v9705, %v10217
  %v10219 = vpop.f32.mrb[0].mxu0
  %v10220 = vadd.f32 %v9707, %v10219
  %v10221 = vand.u32 %v6195, 4294901760
  %10222 = vmatprep.mubr.f32.mxu0 %v10221
  %v10223 = vand.u32 %v6194, 4294901760
  %10224 = vmatmul.mubr.f32.gmra.mrb[0].mxu0 %v10223
  %v10225 = vpop.f32.mrb[0].mxu0
  %v10226 = vadd.f32 %v9713, %v10225
  %v10227 = vpop.f32.mrb[0].mxu0
  %v10228 = vadd.f32 %v9715, %v10227
  %v10229 = vand.u32 %v6197, 4294901760
  %10230 = vmatprep.mubr.f32.mxu0 %v10229
  %v10231 = vand.u32 %v6196, 4294901760
  %10232 = vmatmul.mubr.f32.gmra.mrb[0].mxu0 %v10231
  %v10233 = vpop.f32.mrb[0].mxu0
  %v10234 = vadd.f32 %v9721, %v10233
  %v10235 = vpop.f32.mrb[0].mxu0
  %v10236 = vadd.f32 %v9723, %v10235
  %v10237 = vand.u32 %v6199, 4294901760
  %10238 = vmatprep.mubr.f32.mxu0 %v10237
  %v10239 = vand.u32 %v6198, 4294901760
  %10240 = vmatmul.mubr.f32.gmra.mrb[0].mxu0 %v10239
  %v10241 = vpop.f32.mrb[0].mxu0
  %v10242 = vadd.f32 %v9729, %v10241
  %v10243 = vpop.f32.mrb[0].mxu0
  %v10244 = vadd.f32 %v9731, %v10243
  %v10245 = vand.u32 %v6201, 4294901760
  %10246 = vmatprep.mubr.f32.mxu0 %v10245
  %v10247 = vand.u32 %v6200, 4294901760
  %10248 = vmatmul.mubr.f32.gmra.mrb[0].mxu0 %v10247
  %v10249 = vpop.f32.mrb[0].mxu0
  %v10250 = vadd.f32 %v9737, %v10249
  %v10251 = vpop.f32.mrb[0].mxu0
  %v10252 = vadd.f32 %v9739, %v10251
  %v10253 = vand.u32 %v6203, 4294901760
  %10254 = vmatprep.mubr.f32.mxu0 %v10253
  %v10255 = vand.u32 %v6202, 4294901760
  %10256 = vmatmul.mubr.f32.gmra.mrb[0].mxu0 %v10255
  %v10257 = vpop.f32.mrb[0].mxu0
  %v10258 = vadd.f32 %v9745, %v10257
  %v10259 = vpop.f32.mrb[0].mxu0
  %v10260 = vadd.f32 %v9747, %v10259
  %v10261 = vand.u32 %v6205, 4294901760
  %10262 = vmatprep.mubr.f32.mxu0 %v10261
  %v10263 = vand.u32 %v6204, 4294901760
  %10264 = vmatmul.mubr.f32.gmra.mrb[0].mxu0 %v10263
  %v10265 = vpop.f32.mrb[0].mxu0
  %v10266 = vadd.f32 %v9753, %v10265
  %v10267 = vpop.f32.mrb[0].mxu0
  %v10268 = vadd.f32 %v9755, %v10267
  %v10269 = vand.u32 %v6207, 4294901760
  %10270 = vmatprep.mubr.f32.mxu0 %v10269
  %v10271 = vand.u32 %v6206, 4294901760
  %10272 = vmatmul.mubr.f32.gmra.mrb[0].mxu0 %v10271
  %v10273 = vpop.f32.mrb[0].mxu0
  %v10274 = vadd.f32 %v9761, %v10273
  %v10275 = vpop.f32.mrb[0].mxu0
  %v10276 = vadd.f32 %v9763, %v10275
  %v10277 = vand.u32 %v6209, 4294901760
  %10278 = vmatprep.mubr.f32.mxu0 %v10277
  %v10279 = vand.u32 %v6208, 4294901760
  %10280 = vmatmul.mubr.f32.gmra.mrb[0].mxu0 %v10279
  %v10281 = vpop.f32.mrb[0].mxu0
  %v10282 = vadd.f32 %v9769, %v10281
  %v10283 = vpop.f32.mrb[0].mxu0
  %v10284 = vadd.f32 %v9771, %v10283
  %v10285 = vand.u32 %v6211, 4294901760
  %10286 = vmatprep.mubr.f32.mxu0 %v10285
  %v10287 = vand.u32 %v6210, 4294901760
  %10288 = vmatmul.mubr.f32.gmra.mrb[0].mxu0 %v10287
  %v10289 = vpop.f32.mrb[0].mxu0
  %v10290 = vadd.f32 %v9777, %v10289
  %v10291 = vpop.f32.mrb[0].mxu0
  %v10292 = vadd.f32 %v9779, %v10291
  %v10293 = vand.u32 %v6213, 4294901760
  %10294 = vmatprep.mubr.f32.mxu0 %v10293
  %v10295 = vand.u32 %v6212, 4294901760
  %10296 = vmatmul.mubr.f32.gmra.mrb[0].mxu0 %v10295
  %v10297 = vpop.f32.mrb[0].mxu0
  %v10298 = vadd.f32 %v9785, %v10297
  %v10299 = vpop.f32.mrb[0].mxu0
  %v10300 = vadd.f32 %v9787, %v10299
  %v10301 = vand.u32 %v6215, 4294901760
  %10302 = vmatprep.mubr.f32.mxu0 %v10301
  %v10303 = vand.u32 %v6214, 4294901760
  %10304 = vmatmul.mubr.f32.gmra.mrb[0].mxu0 %v10303
  %v10305 = vpop.f32.mrb[0].mxu0
  %v10306 = vadd.f32 %v9793, %v10305
  %v10307 = vpop.f32.mrb[0].mxu0
  %v10308 = vadd.f32 %v9795, %v10307
  %v10309 = vand.u32 %v6217, 4294901760
  %10310 = vmatprep.mubr.f32.mxu0 %v10309
  %v10311 = vand.u32 %v6216, 4294901760
  %10312 = vmatmul.mubr.f32.gmra.mrb[0].mxu0 %v10311
  %v10313 = vpop.f32.mrb[0].mxu0
  %v10314 = vadd.f32 %v9801, %v10313
  %v10315 = vpop.f32.mrb[0].mxu0
  %v10316 = vadd.f32 %v9803, %v10315
  %v10317 = vand.u32 %v6219, 4294901760
  %10318 = vmatprep.mubr.f32.mxu0 %v10317
  %v10319 = vand.u32 %v6218, 4294901760
  %10320 = vmatmul.mubr.f32.gmra.mrb[0].mxu0 %v10319
  %v10321 = vpop.f32.mrb[0].mxu0
  %v10322 = vadd.f32 %v9809, %v10321
  %v10323 = vpop.f32.mrb[0].mxu0
  %v10324 = vadd.f32 %v9811, %v10323
  %v10325 = vand.u32 %v6221, 4294901760
  %10326 = vmatprep.mubr.f32.mxu0 %v10325
  %v10327 = vand.u32 %v6220, 4294901760
  %10328 = vmatmul.mubr.f32.gmra.mrb[0].mxu0 %v10327
  %v10329 = vpop.f32.mrb[0].mxu0
  %v10330 = vadd.f32 %v9817, %v10329
  %v10331 = vpop.f32.mrb[0].mxu0
  %v10332 = vadd.f32 %v9819, %v10331
  %v10333 = vand.u32 %v6223, 4294901760
  %10334 = vmatprep.mubr.f32.mxu0 %v10333
  %v10335 = vand.u32 %v6222, 4294901760
  %10336 = vmatmul.mubr.f32.gmra.mrb[0].mxu0 %v10335
  %v10337 = vpop.f32.mrb[0].mxu0
  %v10338 = vadd.f32 %v9825, %v10337
  %v10339 = vpop.f32.mrb[0].mxu0
  %v10340 = vadd.f32 %v9827, %v10339
  %v10341 = vand.u32 %v6225, 4294901760
  %10342 = vmatprep.mubr.f32.mxu0 %v10341
  %v10343 = vand.u32 %v6224, 4294901760
  %10344 = vmatmul.mubr.f32.gmra.mrb[0].mxu0 %v10343
  %v10345 = vpop.f32.mrb[0].mxu0
  %v10346 = vadd.f32 %v9833, %v10345
  %v10347 = vpop.f32.mrb[0].mxu0
  %v10348 = vadd.f32 %v9835, %v10347
  %v10349 = vand.u32 %v6227, 4294901760
  %10350 = vmatprep.mubr.f32.mxu0 %v10349
  %v10351 = vand.u32 %v6226, 4294901760
  %10352 = vmatmul.mubr.f32.gmra.mrb[0].mxu0 %v10351
  %v10353 = vpop.f32.mrb[0].mxu0
  %v10354 = vadd.f32 %v9841, %v10353
  %v10355 = vpop.f32.mrb[0].mxu0
  %v10356 = vadd.f32 %v9843, %v10355
  %v10357 = vand.u32 %v6229, 4294901760
  %10358 = vmatprep.mubr.f32.mxu0 %v10357
  %v10359 = vand.u32 %v6228, 4294901760
  %10360 = vmatmul.mubr.f32.gmra.mrb[0].mxu0 %v10359
  %v10361 = vpop.f32.mrb[0].mxu0
  %v10362 = vadd.f32 %v9849, %v10361
  %v10363 = vpop.f32.mrb[0].mxu0
  %v10364 = vadd.f32 %v9851, %v10363
  %v10365 = vand.u32 %v6231, 4294901760
  %10366 = vmatprep.mubr.f32.mxu0 %v10365
  %v10367 = vand.u32 %v6230, 4294901760
  %10368 = vmatmul.mubr.f32.gmra.mrb[0].mxu0 %v10367
  %v10369 = vpop.f32.mrb[0].mxu0
  %v10370 = vadd.f32 %v9857, %v10369
  %v10371 = vpop.f32.mrb[0].mxu0
  %v10372 = vadd.f32 %v9859, %v10371
  %v10373 = vand.u32 %v6233, 4294901760
  %10374 = vmatprep.mubr.f32.mxu0 %v10373
  %v10375 = vand.u32 %v6232, 4294901760
  %10376 = vmatmul.mubr.f32.gmra.mrb[0].mxu0 %v10375
  %v10377 = vpop.f32.mrb[0].mxu0
  %v10378 = vadd.f32 %v9865, %v10377
  %v10379 = vpop.f32.mrb[0].mxu0
  %v10380 = vadd.f32 %v9867, %v10379
  %v10381 = vand.u32 %v6235, 4294901760
  %10382 = vmatprep.mubr.f32.mxu0 %v10381
  %v10383 = vand.u32 %v6234, 4294901760
  %10384 = vmatmul.mubr.f32.gmra.mrb[0].mxu0 %v10383
  %v10385 = vpop.f32.mrb[0].mxu0
  %v10386 = vadd.f32 %v9873, %v10385
  %v10387 = vpop.f32.mrb[0].mxu0
  %v10388 = vadd.f32 %v9875, %v10387
  %v10389 = vand.u32 %v6237, 4294901760
  %10390 = vmatprep.mubr.f32.mxu0 %v10389
  %v10391 = vand.u32 %v6236, 4294901760
  %10392 = vmatmul.mubr.f32.gmra.mrb[0].mxu0 %v10391
  %v10393 = vpop.f32.mrb[0].mxu0
  %v10394 = vadd.f32 %v9881, %v10393
  %v10395 = vpop.f32.mrb[0].mxu0
  %v10396 = vadd.f32 %v9883, %v10395
  %v10397 = vand.u32 %v6239, 4294901760
  %10398 = vmatprep.mubr.f32.mxu0 %v10397
  %v10399 = vand.u32 %v6238, 4294901760
  %10400 = vmatmul.mubr.f32.gmra.mrb[0].mxu0 %v10399
  %v10401 = vpop.f32.mrb[0].mxu0
  %v10402 = vadd.f32 %v9889, %v10401
  %v10403 = vpop.f32.mrb[0].mxu0
  %v10404 = vadd.f32 %v9891, %v10403
  %v10405 = vand.u32 %v6241, 4294901760
  %10406 = vmatprep.mubr.f32.mxu0 %v10405
  %v10407 = vand.u32 %v6240, 4294901760
  %10408 = vmatmul.mubr.f32.gmra.mrb[0].mxu0 %v10407
  %v10409 = vpop.f32.mrb[0].mxu0
  %v10410 = vadd.f32 %v9897, %v10409
  %v10411 = vpop.f32.mrb[0].mxu0
  %v10412 = vadd.f32 %v9899, %v10411
  %v10413 = vand.u32 %v6243, 4294901760
  %10414 = vmatprep.mubr.f32.mxu0 %v10413
  %v10415 = vand.u32 %v6242, 4294901760
  %10416 = vmatmul.mubr.f32.gmra.mrb[0].mxu0 %v10415
  %v10417 = vpop.f32.mrb[0].mxu0
  %v10418 = vadd.f32 %v9905, %v10417
  %v10419 = vpop.f32.mrb[0].mxu0
  %v10420 = vadd.f32 %v9907, %v10419
  %v10421 = vand.u32 %v6245, 4294901760
  %10422 = vmatprep.mubr.f32.mxu0 %v10421
  %v10423 = vand.u32 %v6244, 4294901760
  %10424 = vmatmul.mubr.f32.gmra.mrb[0].mxu0 %v10423
  %v10425 = vpop.f32.mrb[0].mxu0
  %v10426 = vadd.f32 %v9913, %v10425
  %v10427 = vpop.f32.mrb[0].mxu0
  %v10428 = vadd.f32 %v9915, %v10427
  %v10429 = vand.u32 %v6247, 4294901760
  %10430 = vmatprep.mubr.f32.mxu0 %v10429
  %v10431 = vand.u32 %v6246, 4294901760
  %10432 = vmatmul.mubr.f32.gmra.mrb[0].mxu0 %v10431
  %v10433 = vpop.f32.mrb[0].mxu0
  %v10434 = vadd.f32 %v9921, %v10433
  %v10435 = vpop.f32.mrb[0].mxu0
  %v10436 = vadd.f32 %v9923, %v10435
  %v10437 = vand.u32 %v6249, 4294901760
  %10438 = vmatprep.mubr.f32.mxu0 %v10437
  %v10439 = vand.u32 %v6248, 4294901760
  %10440 = vmatmul.mubr.f32.gmra.mrb[0].mxu0 %v10439
  %v10441 = vpop.f32.mrb[0].mxu0
  %v10442 = vadd.f32 %v9929, %v10441
  %v10443 = vpop.f32.mrb[0].mxu0
  %v10444 = vadd.f32 %v9931, %v10443
  %v10445 = vand.u32 %v6251, 4294901760
  %10446 = vmatprep.mubr.f32.mxu0 %v10445
  %v10447 = vand.u32 %v6250, 4294901760
  %10448 = vmatmul.mubr.f32.gmra.mrb[0].mxu0 %v10447
  %v10449 = vpop.f32.mrb[0].mxu0
  %v10450 = vadd.f32 %v9937, %v10449
  %v10451 = vpop.f32.mrb[0].mxu0
  %v10452 = vadd.f32 %v9939, %v10451
  %v10453 = vand.u32 %v6253, 4294901760
  %10454 = vmatprep.mubr.f32.mxu0 %v10453
  %v10455 = vand.u32 %v6252, 4294901760
  %10456 = vmatmul.mubr.f32.gmra.mrb[0].mxu0 %v10455
  %v10457 = vpop.f32.mrb[0].mxu0
  %v10458 = vadd.f32 %v9945, %v10457
  %v10459 = vpop.f32.mrb[0].mxu0
  %v10460 = vadd.f32 %v9947, %v10459
  %v10461 = vand.u32 %v6255, 4294901760
  %10462 = vmatprep.mubr.f32.mxu0 %v10461
  %v10463 = vand.u32 %v6254, 4294901760
  %10464 = vmatmul.mubr.f32.gmra.mrb[0].mxu0 %v10463
  %v10465 = vpop.f32.mrb[0].mxu0
  %v10466 = vadd.f32 %v9953, %v10465
  %v10467 = vpop.f32.mrb[0].mxu0
  %v10468 = vadd.f32 %v9955, %v10467
  %v10469 = vand.u32 %v6257, 4294901760
  %10470 = vmatprep.mubr.f32.mxu0 %v10469
  %v10471 = vand.u32 %v6256, 4294901760
  %10472 = vmatmul.mubr.f32.gmra.mrb[0].mxu0 %v10471
  %v10473 = vpop.f32.mrb[0].mxu0
  %v10474 = vadd.f32 %v9961, %v10473
  %v10475 = vpop.f32.mrb[0].mxu0
  %v10476 = vadd.f32 %v9963, %v10475
  %v10477 = vand.u32 %v6259, 4294901760
  %10478 = vmatprep.mubr.f32.mxu0 %v10477
  %v10479 = vand.u32 %v6258, 4294901760
  %10480 = vmatmul.mubr.f32.gmra.mrb[0].mxu0 %v10479
  %v10481 = vpop.f32.mrb[0].mxu0
  %v10482 = vadd.f32 %v9969, %v10481
  %v10483 = vpop.f32.mrb[0].mxu0
  %v10484 = vadd.f32 %v9971, %v10483
  %v10485 = vand.u32 %v6261, 4294901760
  %10486 = vmatprep.mubr.f32.mxu0 %v10485
  %v10487 = vand.u32 %v6260, 4294901760
  %10488 = vmatmul.mubr.f32.gmra.mrb[0].mxu0 %v10487
  %v10489 = vpop.f32.mrb[0].mxu0
  %v10490 = vadd.f32 %v9977, %v10489
  %v10491 = vpop.f32.mrb[0].mxu0
  %v10492 = vadd.f32 %v9979, %v10491
  %v10493 = vand.u32 %v6263, 4294901760
  %10494 = vmatprep.mubr.f32.mxu0 %v10493
  %v10495 = vand.u32 %v6262, 4294901760
  %10496 = vmatmul.mubr.f32.gmra.mrb[0].mxu0 %v10495
  %v10497 = vpop.f32.mrb[0].mxu0
  %v10498 = vadd.f32 %v9985, %v10497
  %v10499 = vpop.f32.mrb[0].mxu0
  %v10500 = vadd.f32 %v9987, %v10499
  %v10501 = vand.u32 %v6265, 4294901760
  %10502 = vmatprep.mubr.f32.mxu0 %v10501
  %v10503 = vand.u32 %v6264, 4294901760
  %10504 = vmatmul.mubr.f32.gmra.mrb[0].mxu0 %v10503
  %v10505 = vpop.f32.mrb[0].mxu0
  %v10506 = vadd.f32 %v9993, %v10505
  %v10507 = vpop.f32.mrb[0].mxu0
  %v10508 = vadd.f32 %v9995, %v10507
  %v10509 = vand.u32 %v6267, 4294901760
  %10510 = vmatprep.mubr.f32.mxu0 %v10509
  %v10511 = vand.u32 %v6266, 4294901760
  %10512 = vmatmul.mubr.f32.gmra.mrb[0].mxu0 %v10511
  %v10513 = vpop.f32.mrb[0].mxu0
  %v10514 = vadd.f32 %v10001, %v10513
  %v10515 = vpop.f32.mrb[0].mxu0
  %v10516 = vadd.f32 %v10003, %v10515
  %v10517 = vand.u32 %v6269, 4294901760
  %10518 = vmatprep.mubr.f32.mxu0 %v10517
  %v10519 = vand.u32 %v6268, 4294901760
  %10520 = vmatmul.mubr.f32.gmra.mrb[0].mxu0 %v10519
  %v10521 = vpop.f32.mrb[0].mxu0
  %v10522 = vadd.f32 %v10009, %v10521
  %v10523 = vpop.f32.mrb[0].mxu0
  %v10524 = vadd.f32 %v10011, %v10523
  %v10525 = vand.u32 %v6271, 4294901760
  %10526 = vmatprep.mubr.f32.mxu0 %v10525
  %v10527 = vand.u32 %v6270, 4294901760
  %10528 = vmatmul.mubr.f32.gmra.mrb[0].mxu0 %v10527
  %v10529 = vpop.f32.mrb[0].mxu0
  %v10530 = vadd.f32 %v10017, %v10529
  %v10531 = vpop.f32.mrb[0].mxu0
  %v10532 = vadd.f32 %v10019, %v10531
  %v10533 = vand.u32 %v6273, 4294901760
  %10534 = vmatprep.mubr.f32.mxu0 %v10533
  %v10535 = vand.u32 %v6272, 4294901760
  %10536 = vmatmul.mubr.f32.gmra.mrb[0].mxu0 %v10535
  %v10537 = vpop.f32.mrb[0].mxu0
  %v10538 = vadd.f32 %v10025, %v10537
  %v10539 = vpop.f32.mrb[0].mxu0
  %v10540 = vadd.f32 %v10027, %v10539
  %v10541 = vand.u32 %v6275, 4294901760
  %10542 = vmatprep.mubr.f32.mxu0 %v10541
  %v10543 = vand.u32 %v6274, 4294901760
  %10544 = vmatmul.mubr.f32.gmra.mrb[0].mxu0 %v10543
  %v10545 = vpop.f32.mrb[0].mxu0
  %v10546 = vadd.f32 %v10033, %v10545
  %v10547 = vpop.f32.mrb[0].mxu0
  %v10548 = vadd.f32 %v10035, %v10547
  %10549 = vdwg.mxu0
  %v10550 = vmax.f32 %v10170, 0.0
  %v10551 = vmax.f32 %v10172, 0.0
  %v10552 = vmax.f32 %v10178, 0.0
  %v10553 = vmax.f32 %v10180, 0.0
  %v10554 = vmax.f32 %v10186, 0.0
  %v10555 = vmax.f32 %v10188, 0.0
  %v10556 = vmax.f32 %v10194, 0.0
  %v10557 = vmax.f32 %v10196, 0.0
  %v10558 = vmax.f32 %v10202, 0.0
  %v10559 = vmax.f32 %v10204, 0.0
  %v10560 = vmax.f32 %v10210, 0.0
  %v10561 = vmax.f32 %v10212, 0.0
  %v10562 = vmax.f32 %v10218, 0.0
  %v10563 = vmax.f32 %v10220, 0.0
  %v10564 = vmax.f32 %v10226, 0.0
  %v10565 = vmax.f32 %v10228, 0.0
  %v10566 = vmax.f32 %v10234, 0.0
  %v10567 = vmax.f32 %v10236, 0.0
  %v10568 = vmax.f32 %v10242, 0.0
  %v10569 = vmax.f32 %v10244, 0.0
  %v10570 = vmax.f32 %v10250, 0.0
  %v10571 = vmax.f32 %v10252, 0.0
  %v10572 = vmax.f32 %v10258, 0.0
  %v10573 = vmax.f32 %v10260, 0.0
  %v10574 = vmax.f32 %v10266, 0.0
  %v10575 = vmax.f32 %v10268, 0.0
  %v10576 = vmax.f32 %v10274, 0.0
  %v10577 = vmax.f32 %v10276, 0.0
  %v10578 = vmax.f32 %v10282, 0.0
  %v10579 = vmax.f32 %v10284, 0.0
  %v10580 = vmax.f32 %v10290, 0.0
  %v10581 = vmax.f32 %v10292, 0.0
  %v10582 = vmax.f32 %v10298, 0.0
  %v10583 = vmax.f32 %v10300, 0.0
  %v10584 = vmax.f32 %v10306, 0.0
  %v10585 = vmax.f32 %v10308, 0.0
  %v10586 = vmax.f32 %v10314, 0.0
  %v10587 = vmax.f32 %v10316, 0.0
  %v10588 = vmax.f32 %v10322, 0.0
  %v10589 = vmax.f32 %v10324, 0.0
  %v10590 = vmax.f32 %v10330, 0.0
  %v10591 = vmax.f32 %v10332, 0.0
  %v10592 = vmax.f32 %v10338, 0.0
  %v10593 = vmax.f32 %v10340, 0.0
  %v10594 = vmax.f32 %v10346, 0.0
  %v10595 = vmax.f32 %v10348, 0.0
  %v10596 = vmax.f32 %v10354, 0.0
  %v10597 = vmax.f32 %v10356, 0.0
  %v10598 = vmax.f32 %v10362, 0.0
  %v10599 = vmax.f32 %v10364, 0.0
  %v10600 = vmax.f32 %v10370, 0.0
  %v10601 = vmax.f32 %v10372, 0.0
  %v10602 = vmax.f32 %v10378, 0.0
  %v10603 = vmax.f32 %v10380, 0.0
  %v10604 = vmax.f32 %v10386, 0.0
  %v10605 = vmax.f32 %v10388, 0.0
  %v10606 = vmax.f32 %v10394, 0.0
  %v10607 = vmax.f32 %v10396, 0.0
  %v10608 = vmax.f32 %v10402, 0.0
  %v10609 = vmax.f32 %v10404, 0.0
  %v10610 = vmax.f32 %v10410, 0.0
  %v10611 = vmax.f32 %v10412, 0.0
  %v10612 = vmax.f32 %v10418, 0.0
  %v10613 = vmax.f32 %v10420, 0.0
  %v10614 = vmax.f32 %v10426, 0.0
  %v10615 = vmax.f32 %v10428, 0.0
  %v10616 = vmax.f32 %v10434, 0.0
  %v10617 = vmax.f32 %v10436, 0.0
  %v10618 = vmax.f32 %v10442, 0.0
  %v10619 = vmax.f32 %v10444, 0.0
  %v10620 = vmax.f32 %v10450, 0.0
  %v10621 = vmax.f32 %v10452, 0.0
  %v10622 = vmax.f32 %v10458, 0.0
  %v10623 = vmax.f32 %v10460, 0.0
  %v10624 = vmax.f32 %v10466, 0.0
  %v10625 = vmax.f32 %v10468, 0.0
  %v10626 = vmax.f32 %v10474, 0.0
  %v10627 = vmax.f32 %v10476, 0.0
  %v10628 = vmax.f32 %v10482, 0.0
  %v10629 = vmax.f32 %v10484, 0.0
  %v10630 = vmax.f32 %v10490, 0.0
  %v10631 = vmax.f32 %v10492, 0.0
  %v10632 = vmax.f32 %v10498, 0.0
  %v10633 = vmax.f32 %v10500, 0.0
  %v10634 = vmax.f32 %v10506, 0.0
  %v10635 = vmax.f32 %v10508, 0.0
  %v10636 = vmax.f32 %v10514, 0.0
  %v10637 = vmax.f32 %v10516, 0.0
  %v10638 = vmax.f32 %v10522, 0.0
  %v10639 = vmax.f32 %v10524, 0.0
  %v10640 = vmax.f32 %v10530, 0.0
  %v10641 = vmax.f32 %v10532, 0.0
  %v10642 = vmax.f32 %v10538, 0.0
  %v10643 = vmax.f32 %v10540, 0.0
  %v10644 = vmax.f32 %v10546, 0.0
  %v10645 = vmax.f32 %v10548, 0.0
  %v10646 = vld [vmem:[%s7] sm:$0x3]
  %v10647 = vld [vmem:[#allocation2] sm:$0x1]
  %10649 = vset.pattern.permute.xlu0 0
  %10650 = vperm.xlu0 %10649, %v10647
  %v10651 = vpop.permute.xlu0 %10650
  %v10653 = vlaneseq
  %v10654 = vshrl.u32 %v10653, 7
  %v10655 = vsub.s32 0, %v10654
  %v10656 = vrot.slane %v10651, %v10655
  %v10658 = vlaneseq
  %v10659 = vshrl.u32 %v10658, 7
  %v10660 = vsub.s32 0, %v10659
  %v10661 = vrot.slane %v10646, %v10660
  %v10662 = vlaneseq
  %v10663 = vshrl.u32 %v10662, 7
  %v10664 = vsub.s32 1, %v10663
  %v10665 = vrot.slane %v10646, %v10664
  %v10668 = vand.u32 %v10551, 4294901760
  %10669 = vmatprep.subr.mxu0 %v10668
  %v10670 = vand.u32 %v10550, 4294901760
  %10671 = vmatpush1.xpose.msra.mxu0 %v10670
  %v10672 = vand.u32 %v10553, 4294901760
  %10673 = vmatprep.subr.mxu0 %v10672
  %v10674 = vand.u32 %v10552, 4294901760
  %10675 = vmatpush1.xpose.msra.mxu0 %v10674
  %v10676 = vand.u32 %v10555, 4294901760
  %10677 = vmatprep.subr.mxu0 %v10676
  %v10678 = vand.u32 %v10554, 4294901760
  %10679 = vmatpush1.xpose.msra.mxu0 %v10678
  %v10680 = vand.u32 %v10557, 4294901760
  %10681 = vmatprep.subr.mxu0 %v10680
  %v10682 = vand.u32 %v10556, 4294901760
  %10683 = vmatpush1.xpose.msra.mxu0 %v10682
  %v10684 = vand.u32 %v10559, 4294901760
  %10685 = vmatprep.subr.mxu0 %v10684
  %v10686 = vand.u32 %v10558, 4294901760
  %10687 = vmatpush1.xpose.msra.mxu0 %v10686
  %v10688 = vand.u32 %v10561, 4294901760
  %10689 = vmatprep.subr.mxu0 %v10688
  %v10690 = vand.u32 %v10560, 4294901760
  %10691 = vmatpush1.xpose.msra.mxu0 %v10690
  %v10692 = vand.u32 %v10563, 4294901760
  %10693 = vmatprep.subr.mxu0 %v10692
  %v10694 = vand.u32 %v10562, 4294901760
  %10695 = vmatpush1.xpose.msra.mxu0 %v10694
  %v10696 = vand.u32 %v10565, 4294901760
  %10697 = vmatprep.subr.mxu0 %v10696
  %v10698 = vand.u32 %v10564, 4294901760
  %10699 = vmatpush1.xpose.msra.mxu0 %v10698
  %v10700 = vand.u32 %v10567, 4294901760
  %10701 = vmatprep.subr.mxu0 %v10700
  %v10702 = vand.u32 %v10566, 4294901760
  %10703 = vmatpush1.xpose.msra.mxu0 %v10702
  %v10704 = vand.u32 %v10569, 4294901760
  %10705 = vmatprep.subr.mxu0 %v10704
  %v10706 = vand.u32 %v10568, 4294901760
  %10707 = vmatpush1.xpose.msra.mxu0 %v10706
  %v10708 = vand.u32 %v10571, 4294901760
  %10709 = vmatprep.subr.mxu0 %v10708
  %v10710 = vand.u32 %v10570, 4294901760
  %10711 = vmatpush1.xpose.msra.mxu0 %v10710
  %v10712 = vand.u32 %v10573, 4294901760
  %10713 = vmatprep.subr.mxu0 %v10712
  %v10714 = vand.u32 %v10572, 4294901760
  %10715 = vmatpush1.xpose.msra.mxu0 %v10714
  %v10716 = vand.u32 %v10575, 4294901760
  %10717 = vmatprep.subr.mxu0 %v10716
  %v10718 = vand.u32 %v10574, 4294901760
  %10719 = vmatpush1.xpose.msra.mxu0 %v10718
  %v10720 = vand.u32 %v10577, 4294901760
  %10721 = vmatprep.subr.mxu0 %v10720
  %v10722 = vand.u32 %v10576, 4294901760
  %10723 = vmatpush1.xpose.msra.mxu0 %v10722
  %v10724 = vand.u32 %v10579, 4294901760
  %10725 = vmatprep.subr.mxu0 %v10724
  %v10726 = vand.u32 %v10578, 4294901760
  %10727 = vmatpush1.xpose.msra.mxu0 %v10726
  %v10728 = vand.u32 %v10581, 4294901760
  %10729 = vmatprep.subr.mxu0 %v10728
  %v10730 = vand.u32 %v10580, 4294901760
  %10731 = vmatpush1.xpose.msra.mxu0 %v10730
  %v10732 = vand.u32 %v10583, 4294901760
  %10733 = vmatprep.subr.mxu0 %v10732
  %v10734 = vand.u32 %v10582, 4294901760
  %10735 = vmatpush1.xpose.msra.mxu0 %v10734
  %v10736 = vand.u32 %v10585, 4294901760
  %10737 = vmatprep.subr.mxu0 %v10736
  %v10738 = vand.u32 %v10584, 4294901760
  %10739 = vmatpush1.xpose.msra.mxu0 %v10738
  %v10740 = vand.u32 %v10587, 4294901760
  %10741 = vmatprep.subr.mxu0 %v10740
  %v10742 = vand.u32 %v10586, 4294901760
  %10743 = vmatpush1.xpose.msra.mxu0 %v10742
  %v10744 = vand.u32 %v10589, 4294901760
  %10745 = vmatprep.subr.mxu0 %v10744
  %v10746 = vand.u32 %v10588, 4294901760
  %10747 = vmatpush1.xpose.msra.mxu0 %v10746
  %v10748 = vand.u32 %v10591, 4294901760
  %10749 = vmatprep.subr.mxu0 %v10748
  %v10750 = vand.u32 %v10590, 4294901760
  %10751 = vmatpush1.xpose.msra.mxu0 %v10750
  %v10752 = vand.u32 %v10593, 4294901760
  %10753 = vmatprep.subr.mxu0 %v10752
  %v10754 = vand.u32 %v10592, 4294901760
  %10755 = vmatpush1.xpose.msra.mxu0 %v10754
  %v10756 = vand.u32 %v10595, 4294901760
  %10757 = vmatprep.subr.mxu0 %v10756
  %v10758 = vand.u32 %v10594, 4294901760
  %10759 = vmatpush1.xpose.msra.mxu0 %v10758
  %v10760 = vand.u32 %v10597, 4294901760
  %10761 = vmatprep.subr.mxu0 %v10760
  %v10762 = vand.u32 %v10596, 4294901760
  %10763 = vmatpush1.xpose.msra.mxu0 %v10762
  %v10764 = vand.u32 %v10599, 4294901760
  %10765 = vmatprep.subr.mxu0 %v10764
  %v10766 = vand.u32 %v10598, 4294901760
  %10767 = vmatpush1.xpose.msra.mxu0 %v10766
  %v10768 = vand.u32 %v10601, 4294901760
  %10769 = vmatprep.subr.mxu0 %v10768
  %v10770 = vand.u32 %v10600, 4294901760
  %10771 = vmatpush1.xpose.msra.mxu0 %v10770
  %v10772 = vand.u32 %v10603, 4294901760
  %10773 = vmatprep.subr.mxu0 %v10772
  %v10774 = vand.u32 %v10602, 4294901760
  %10775 = vmatpush1.xpose.msra.mxu0 %v10774
  %v10776 = vand.u32 %v10605, 4294901760
  %10777 = vmatprep.subr.mxu0 %v10776
  %v10778 = vand.u32 %v10604, 4294901760
  %10779 = vmatpush1.xpose.msra.mxu0 %v10778
  %v10780 = vand.u32 %v10607, 4294901760
  %10781 = vmatprep.subr.mxu0 %v10780
  %v10782 = vand.u32 %v10606, 4294901760
  %10783 = vmatpush1.xpose.msra.mxu0 %v10782
  %v10784 = vand.u32 %v10609, 4294901760
  %10785 = vmatprep.subr.mxu0 %v10784
  %v10786 = vand.u32 %v10608, 4294901760
  %10787 = vmatpush1.xpose.msra.mxu0 %v10786
  %v10788 = vand.u32 %v10611, 4294901760
  %10789 = vmatprep.subr.mxu0 %v10788
  %v10790 = vand.u32 %v10610, 4294901760
  %10791 = vmatpush1.xpose.msra.mxu0 %v10790
  %v10792 = vand.u32 %v10613, 4294901760
  %10793 = vmatprep.subr.mxu0 %v10792
  %v10794 = vand.u32 %v10612, 4294901760
  %10795 = vmatpush1.xpose.msra.mxu0 %v10794
  %v10796 = vand.u32 %v10665, 4294901760
  %v10797 = vsub.f32 %v10665, %v10796
  %v10798 = vand.u32 %v10797, 4294901760
  %v10799 = vsub.f32 %v10797, %v10798
  %v10800 = vand.u32 %v10799, 4294901760
  %10801 = vmatprep.mubr.f32.mxu0 %v10800
  %v10802 = vand.u32 %v10661, 4294901760
  %v10803 = vsub.f32 %v10661, %v10802
  %v10804 = vand.u32 %v10803, 4294901760
  %v10805 = vsub.f32 %v10803, %v10804
  %v10806 = vand.u32 %v10805, 4294901760
  %10807 = vmatmul.mubr.f32.gmra.mrb[0].mxu0 %v10806
  %v10808 = vpop.f32.mrb[0].mxu0
  %v10809 = vadd.f32 %v10656, %v10808
  %v10810 = vpop.f32.mrb[0].mxu0
  %v10811 = vadd.f32 %v10656, %v10810
  %10812 = vdwg.mxu0
  %v10813 = vand.u32 %v10551, 4294901760
  %v10814 = vsub.f32 %v10551, %v10813
  %v10815 = vand.u32 %v10814, 4294901760
  %v10816 = vsub.f32 %v10814, %v10815
  %v10817 = vand.u32 %v10816, 4294901760
  %10818 = vmatprep.subr.mxu0 %v10817
  %v10819 = vand.u32 %v10550, 4294901760
  %v10820 = vsub.f32 %v10550, %v10819
  %v10821 = vand.u32 %v10820, 4294901760
  %v10822 = vsub.f32 %v10820, %v10821
  %v10823 = vand.u32 %v10822, 4294901760
  %10824 = vmatpush1.xpose.msra.mxu0 %v10823
  %v10825 = vand.u32 %v10553, 4294901760
  %v10826 = vsub.f32 %v10553, %v10825
  %v10827 = vand.u32 %v10826, 4294901760
  %v10828 = vsub.f32 %v10826, %v10827
  %v10829 = vand.u32 %v10828, 4294901760
  %10830 = vmatprep.subr.mxu0 %v10829
  %v10831 = vand.u32 %v10552, 4294901760
  %v10832 = vsub.f32 %v10552, %v10831
  %v10833 = vand.u32 %v10832, 4294901760
  %v10834 = vsub.f32 %v10832, %v10833
  %v10835 = vand.u32 %v10834, 4294901760
  %10836 = vmatpush1.xpose.msra.mxu0 %v10835
  %v10837 = vand.u32 %v10555, 4294901760
  %v10838 = vsub.f32 %v10555, %v10837
  %v10839 = vand.u32 %v10838, 4294901760
  %v10840 = vsub.f32 %v10838, %v10839
  %v10841 = vand.u32 %v10840, 4294901760
  %10842 = vmatprep.subr.mxu0 %v10841
  %v10843 = vand.u32 %v10554, 4294901760
  %v10844 = vsub.f32 %v10554, %v10843
  %v10845 = vand.u32 %v10844, 4294901760
  %v10846 = vsub.f32 %v10844, %v10845
  %v10847 = vand.u32 %v10846, 4294901760
  %10848 = vmatpush1.xpose.msra.mxu0 %v10847
  %v10849 = vand.u32 %v10557, 4294901760
  %v10850 = vsub.f32 %v10557, %v10849
  %v10851 = vand.u32 %v10850, 4294901760
  %v10852 = vsub.f32 %v10850, %v10851
  %v10853 = vand.u32 %v10852, 4294901760
  %10854 = vmatprep.subr.mxu0 %v10853
  %v10855 = vand.u32 %v10556, 4294901760
  %v10856 = vsub.f32 %v10556, %v10855
  %v10857 = vand.u32 %v10856, 4294901760
  %v10858 = vsub.f32 %v10856, %v10857
  %v10859 = vand.u32 %v10858, 4294901760
  %10860 = vmatpush1.xpose.msra.mxu0 %v10859
  %v10861 = vand.u32 %v10559, 4294901760
  %v10862 = vsub.f32 %v10559, %v10861
  %v10863 = vand.u32 %v10862, 4294901760
  %v10864 = vsub.f32 %v10862, %v10863
  %v10865 = vand.u32 %v10864, 4294901760
  %10866 = vmatprep.subr.mxu0 %v10865
  %v10867 = vand.u32 %v10558, 4294901760
  %v10868 = vsub.f32 %v10558, %v10867
  %v10869 = vand.u32 %v10868, 4294901760
  %v10870 = vsub.f32 %v10868, %v10869
  %v10871 = vand.u32 %v10870, 4294901760
  %10872 = vmatpush1.xpose.msra.mxu0 %v10871
  %v10873 = vand.u32 %v10561, 4294901760
  %v10874 = vsub.f32 %v10561, %v10873
  %v10875 = vand.u32 %v10874, 4294901760
  %v10876 = vsub.f32 %v10874, %v10875
  %v10877 = vand.u32 %v10876, 4294901760
  %10878 = vmatprep.subr.mxu0 %v10877
  %v10879 = vand.u32 %v10560, 4294901760
  %v10880 = vsub.f32 %v10560, %v10879
  %v10881 = vand.u32 %v10880, 4294901760
  %v10882 = vsub.f32 %v10880, %v10881
  %v10883 = vand.u32 %v10882, 4294901760
  %10884 = vmatpush1.xpose.msra.mxu0 %v10883
  %v10885 = vand.u32 %v10563, 4294901760
  %v10886 = vsub.f32 %v10563, %v10885
  %v10887 = vand.u32 %v10886, 4294901760
  %v10888 = vsub.f32 %v10886, %v10887
  %v10889 = vand.u32 %v10888, 4294901760
  %10890 = vmatprep.subr.mxu0 %v10889
  %v10891 = vand.u32 %v10562, 4294901760
  %v10892 = vsub.f32 %v10562, %v10891
  %v10893 = vand.u32 %v10892, 4294901760
  %v10894 = vsub.f32 %v10892, %v10893
  %v10895 = vand.u32 %v10894, 4294901760
  %10896 = vmatpush1.xpose.msra.mxu0 %v10895
  %v10897 = vand.u32 %v10565, 4294901760
  %v10898 = vsub.f32 %v10565, %v10897
  %v10899 = vand.u32 %v10898, 4294901760
  %v10900 = vsub.f32 %v10898, %v10899
  %v10901 = vand.u32 %v10900, 4294901760
  %10902 = vmatprep.subr.mxu0 %v10901
  %v10903 = vand.u32 %v10564, 4294901760
  %v10904 = vsub.f32 %v10564, %v10903
  %v10905 = vand.u32 %v10904, 4294901760
  %v10906 = vsub.f32 %v10904, %v10905
  %v10907 = vand.u32 %v10906, 4294901760
  %10908 = vmatpush1.xpose.msra.mxu0 %v10907
  %v10909 = vand.u32 %v10567, 4294901760
  %v10910 = vsub.f32 %v10567, %v10909
  %v10911 = vand.u32 %v10910, 4294901760
  %v10912 = vsub.f32 %v10910, %v10911
  %v10913 = vand.u32 %v10912, 4294901760
  %10914 = vmatprep.subr.mxu0 %v10913
  %v10915 = vand.u32 %v10566, 4294901760
  %v10916 = vsub.f32 %v10566, %v10915
  %v10917 = vand.u32 %v10916, 4294901760
  %v10918 = vsub.f32 %v10916, %v10917
  %v10919 = vand.u32 %v10918, 4294901760
  %10920 = vmatpush1.xpose.msra.mxu0 %v10919
  %v10921 = vand.u32 %v10569, 4294901760
  %v10922 = vsub.f32 %v10569, %v10921
  %v10923 = vand.u32 %v10922, 4294901760
  %v10924 = vsub.f32 %v10922, %v10923
  %v10925 = vand.u32 %v10924, 4294901760
  %10926 = vmatprep.subr.mxu0 %v10925
  %v10927 = vand.u32 %v10568, 4294901760
  %v10928 = vsub.f32 %v10568, %v10927
  %v10929 = vand.u32 %v10928, 4294901760
  %v10930 = vsub.f32 %v10928, %v10929
  %v10931 = vand.u32 %v10930, 4294901760
  %10932 = vmatpush1.xpose.msra.mxu0 %v10931
  %v10933 = vand.u32 %v10571, 4294901760
  %v10934 = vsub.f32 %v10571, %v10933
  %v10935 = vand.u32 %v10934, 4294901760
  %v10936 = vsub.f32 %v10934, %v10935
  %v10937 = vand.u32 %v10936, 4294901760
  %10938 = vmatprep.subr.mxu0 %v10937
  %v10939 = vand.u32 %v10570, 4294901760
  %v10940 = vsub.f32 %v10570, %v10939
  %v10941 = vand.u32 %v10940, 4294901760
  %v10942 = vsub.f32 %v10940, %v10941
  %v10943 = vand.u32 %v10942, 4294901760
  %10944 = vmatpush1.xpose.msra.mxu0 %v10943
  %v10945 = vand.u32 %v10573, 4294901760
  %v10946 = vsub.f32 %v10573, %v10945
  %v10947 = vand.u32 %v10946, 4294901760
  %v10948 = vsub.f32 %v10946, %v10947
  %v10949 = vand.u32 %v10948, 4294901760
  %10950 = vmatprep.subr.mxu0 %v10949
  %v10951 = vand.u32 %v10572, 4294901760
  %v10952 = vsub.f32 %v10572, %v10951
  %v10953 = vand.u32 %v10952, 4294901760
  %v10954 = vsub.f32 %v10952, %v10953
  %v10955 = vand.u32 %v10954, 4294901760
  %10956 = vmatpush1.xpose.msra.mxu0 %v10955
  %v10957 = vand.u32 %v10575, 4294901760
  %v10958 = vsub.f32 %v10575, %v10957
  %v10959 = vand.u32 %v10958, 4294901760
  %v10960 = vsub.f32 %v10958, %v10959
  %v10961 = vand.u32 %v10960, 4294901760
  %10962 = vmatprep.subr.mxu0 %v10961
  %v10963 = vand.u32 %v10574, 4294901760
  %v10964 = vsub.f32 %v10574, %v10963
  %v10965 = vand.u32 %v10964, 4294901760
  %v10966 = vsub.f32 %v10964, %v10965
  %v10967 = vand.u32 %v10966, 4294901760
  %10968 = vmatpush1.xpose.msra.mxu0 %v10967
  %v10969 = vand.u32 %v10577, 4294901760
  %v10970 = vsub.f32 %v10577, %v10969
  %v10971 = vand.u32 %v10970, 4294901760
  %v10972 = vsub.f32 %v10970, %v10971
  %v10973 = vand.u32 %v10972, 4294901760
  %10974 = vmatprep.subr.mxu0 %v10973
  %v10975 = vand.u32 %v10576, 4294901760
  %v10976 = vsub.f32 %v10576, %v10975
  %v10977 = vand.u32 %v10976, 4294901760
  %v10978 = vsub.f32 %v10976, %v10977
  %v10979 = vand.u32 %v10978, 4294901760
  %10980 = vmatpush1.xpose.msra.mxu0 %v10979
  %v10981 = vand.u32 %v10579, 4294901760
  %v10982 = vsub.f32 %v10579, %v10981
  %v10983 = vand.u32 %v10982, 4294901760
  %v10984 = vsub.f32 %v10982, %v10983
  %v10985 = vand.u32 %v10984, 4294901760
  %10986 = vmatprep.subr.mxu0 %v10985
  %v10987 = vand.u32 %v10578, 4294901760
  %v10988 = vsub.f32 %v10578, %v10987
  %v10989 = vand.u32 %v10988, 4294901760
  %v10990 = vsub.f32 %v10988, %v10989
  %v10991 = vand.u32 %v10990, 4294901760
  %10992 = vmatpush1.xpose.msra.mxu0 %v10991
  %v10993 = vand.u32 %v10581, 4294901760
  %v10994 = vsub.f32 %v10581, %v10993
  %v10995 = vand.u32 %v10994, 4294901760
  %v10996 = vsub.f32 %v10994, %v10995
  %v10997 = vand.u32 %v10996, 4294901760
  %10998 = vmatprep.subr.mxu0 %v10997
  %v10999 = vand.u32 %v10580, 4294901760
  %v11000 = vsub.f32 %v10580, %v10999
  %v11001 = vand.u32 %v11000, 4294901760
  %v11002 = vsub.f32 %v11000, %v11001
  %v11003 = vand.u32 %v11002, 4294901760
  %11004 = vmatpush1.xpose.msra.mxu0 %v11003
  %v11005 = vand.u32 %v10583, 4294901760
  %v11006 = vsub.f32 %v10583, %v11005
  %v11007 = vand.u32 %v11006, 4294901760
  %v11008 = vsub.f32 %v11006, %v11007
  %v11009 = vand.u32 %v11008, 4294901760
  %11010 = vmatprep.subr.mxu0 %v11009
  %v11011 = vand.u32 %v10582, 4294901760
  %v11012 = vsub.f32 %v10582, %v11011
  %v11013 = vand.u32 %v11012, 4294901760
  %v11014 = vsub.f32 %v11012, %v11013
  %v11015 = vand.u32 %v11014, 4294901760
  %11016 = vmatpush1.xpose.msra.mxu0 %v11015
  %v11017 = vand.u32 %v10585, 4294901760
  %v11018 = vsub.f32 %v10585, %v11017
  %v11019 = vand.u32 %v11018, 4294901760
  %v11020 = vsub.f32 %v11018, %v11019
  %v11021 = vand.u32 %v11020, 4294901760
  %11022 = vmatprep.subr.mxu0 %v11021
  %v11023 = vand.u32 %v10584, 4294901760
  %v11024 = vsub.f32 %v10584, %v11023
  %v11025 = vand.u32 %v11024, 4294901760
  %v11026 = vsub.f32 %v11024, %v11025
  %v11027 = vand.u32 %v11026, 4294901760
  %11028 = vmatpush1.xpose.msra.mxu0 %v11027
  %v11029 = vand.u32 %v10587, 4294901760
  %v11030 = vsub.f32 %v10587, %v11029
  %v11031 = vand.u32 %v11030, 4294901760
  %v11032 = vsub.f32 %v11030, %v11031
  %v11033 = vand.u32 %v11032, 4294901760
  %11034 = vmatprep.subr.mxu0 %v11033
  %v11035 = vand.u32 %v10586, 4294901760
  %v11036 = vsub.f32 %v10586, %v11035
  %v11037 = vand.u32 %v11036, 4294901760
  %v11038 = vsub.f32 %v11036, %v11037
  %v11039 = vand.u32 %v11038, 4294901760
  %11040 = vmatpush1.xpose.msra.mxu0 %v11039
  %v11041 = vand.u32 %v10589, 4294901760
  %v11042 = vsub.f32 %v10589, %v11041
  %v11043 = vand.u32 %v11042, 4294901760
  %v11044 = vsub.f32 %v11042, %v11043
  %v11045 = vand.u32 %v11044, 4294901760
  %11046 = vmatprep.subr.mxu0 %v11045
  %v11047 = vand.u32 %v10588, 4294901760
  %v11048 = vsub.f32 %v10588, %v11047
  %v11049 = vand.u32 %v11048, 4294901760
  %v11050 = vsub.f32 %v11048, %v11049
  %v11051 = vand.u32 %v11050, 4294901760
  %11052 = vmatpush1.xpose.msra.mxu0 %v11051
  %v11053 = vand.u32 %v10591, 4294901760
  %v11054 = vsub.f32 %v10591, %v11053
  %v11055 = vand.u32 %v11054, 4294901760
  %v11056 = vsub.f32 %v11054, %v11055
  %v11057 = vand.u32 %v11056, 4294901760
  %11058 = vmatprep.subr.mxu0 %v11057
  %v11059 = vand.u32 %v10590, 4294901760
  %v11060 = vsub.f32 %v10590, %v11059
  %v11061 = vand.u32 %v11060, 4294901760
  %v11062 = vsub.f32 %v11060, %v11061
  %v11063 = vand.u32 %v11062, 4294901760
  %11064 = vmatpush1.xpose.msra.mxu0 %v11063
  %v11065 = vand.u32 %v10593, 4294901760
  %v11066 = vsub.f32 %v10593, %v11065
  %v11067 = vand.u32 %v11066, 4294901760
  %v11068 = vsub.f32 %v11066, %v11067
  %v11069 = vand.u32 %v11068, 4294901760
  %11070 = vmatprep.subr.mxu0 %v11069
  %v11071 = vand.u32 %v10592, 4294901760
  %v11072 = vsub.f32 %v10592, %v11071
  %v11073 = vand.u32 %v11072, 4294901760
  %v11074 = vsub.f32 %v11072, %v11073
  %v11075 = vand.u32 %v11074, 4294901760
  %11076 = vmatpush1.xpose.msra.mxu0 %v11075
  %v11077 = vand.u32 %v10595, 4294901760
  %v11078 = vsub.f32 %v10595, %v11077
  %v11079 = vand.u32 %v11078, 4294901760
  %v11080 = vsub.f32 %v11078, %v11079
  %v11081 = vand.u32 %v11080, 4294901760
  %11082 = vmatprep.subr.mxu0 %v11081
  %v11083 = vand.u32 %v10594, 4294901760
  %v11084 = vsub.f32 %v10594, %v11083
  %v11085 = vand.u32 %v11084, 4294901760
  %v11086 = vsub.f32 %v11084, %v11085
  %v11087 = vand.u32 %v11086, 4294901760
  %11088 = vmatpush1.xpose.msra.mxu0 %v11087
  %v11089 = vand.u32 %v10597, 4294901760
  %v11090 = vsub.f32 %v10597, %v11089
  %v11091 = vand.u32 %v11090, 4294901760
  %v11092 = vsub.f32 %v11090, %v11091
  %v11093 = vand.u32 %v11092, 4294901760
  %11094 = vmatprep.subr.mxu0 %v11093
  %v11095 = vand.u32 %v10596, 4294901760
  %v11096 = vsub.f32 %v10596, %v11095
  %v11097 = vand.u32 %v11096, 4294901760
  %v11098 = vsub.f32 %v11096, %v11097
  %v11099 = vand.u32 %v11098, 4294901760
  %11100 = vmatpush1.xpose.msra.mxu0 %v11099
  %v11101 = vand.u32 %v10599, 4294901760
  %v11102 = vsub.f32 %v10599, %v11101
  %v11103 = vand.u32 %v11102, 4294901760
  %v11104 = vsub.f32 %v11102, %v11103
  %v11105 = vand.u32 %v11104, 4294901760
  %11106 = vmatprep.subr.mxu0 %v11105
  %v11107 = vand.u32 %v10598, 4294901760
  %v11108 = vsub.f32 %v10598, %v11107
  %v11109 = vand.u32 %v11108, 4294901760
  %v11110 = vsub.f32 %v11108, %v11109
  %v11111 = vand.u32 %v11110, 4294901760
  %11112 = vmatpush1.xpose.msra.mxu0 %v11111
  %v11113 = vand.u32 %v10601, 4294901760
  %v11114 = vsub.f32 %v10601, %v11113
  %v11115 = vand.u32 %v11114, 4294901760
  %v11116 = vsub.f32 %v11114, %v11115
  %v11117 = vand.u32 %v11116, 4294901760
  %11118 = vmatprep.subr.mxu0 %v11117
  %v11119 = vand.u32 %v10600, 4294901760
  %v11120 = vsub.f32 %v10600, %v11119
  %v11121 = vand.u32 %v11120, 4294901760
  %v11122 = vsub.f32 %v11120, %v11121
  %v11123 = vand.u32 %v11122, 4294901760
  %11124 = vmatpush1.xpose.msra.mxu0 %v11123
  %v11125 = vand.u32 %v10603, 4294901760
  %v11126 = vsub.f32 %v10603, %v11125
  %v11127 = vand.u32 %v11126, 4294901760
  %v11128 = vsub.f32 %v11126, %v11127
  %v11129 = vand.u32 %v11128, 4294901760
  %11130 = vmatprep.subr.mxu0 %v11129
  %v11131 = vand.u32 %v10602, 4294901760
  %v11132 = vsub.f32 %v10602, %v11131
  %v11133 = vand.u32 %v11132, 4294901760
  %v11134 = vsub.f32 %v11132, %v11133
  %v11135 = vand.u32 %v11134, 4294901760
  %11136 = vmatpush1.xpose.msra.mxu0 %v11135
  %v11137 = vand.u32 %v10605, 4294901760
  %v11138 = vsub.f32 %v10605, %v11137
  %v11139 = vand.u32 %v11138, 4294901760
  %v11140 = vsub.f32 %v11138, %v11139
  %v11141 = vand.u32 %v11140, 4294901760
  %11142 = vmatprep.subr.mxu0 %v11141
  %v11143 = vand.u32 %v10604, 4294901760
  %v11144 = vsub.f32 %v10604, %v11143
  %v11145 = vand.u32 %v11144, 4294901760
  %v11146 = vsub.f32 %v11144, %v11145
  %v11147 = vand.u32 %v11146, 4294901760
  %11148 = vmatpush1.xpose.msra.mxu0 %v11147
  %v11149 = vand.u32 %v10607, 4294901760
  %v11150 = vsub.f32 %v10607, %v11149
  %v11151 = vand.u32 %v11150, 4294901760
  %v11152 = vsub.f32 %v11150, %v11151
  %v11153 = vand.u32 %v11152, 4294901760
  %11154 = vmatprep.subr.mxu0 %v11153
  %v11155 = vand.u32 %v10606, 4294901760
  %v11156 = vsub.f32 %v10606, %v11155
  %v11157 = vand.u32 %v11156, 4294901760
  %v11158 = vsub.f32 %v11156, %v11157
  %v11159 = vand.u32 %v11158, 4294901760
  %11160 = vmatpush1.xpose.msra.mxu0 %v11159
  %v11161 = vand.u32 %v10609, 4294901760
  %v11162 = vsub.f32 %v10609, %v11161
  %v11163 = vand.u32 %v11162, 4294901760
  %v11164 = vsub.f32 %v11162, %v11163
  %v11165 = vand.u32 %v11164, 4294901760
  %11166 = vmatprep.subr.mxu0 %v11165
  %v11167 = vand.u32 %v10608, 4294901760
  %v11168 = vsub.f32 %v10608, %v11167
  %v11169 = vand.u32 %v11168, 4294901760
  %v11170 = vsub.f32 %v11168, %v11169
  %v11171 = vand.u32 %v11170, 4294901760
  %11172 = vmatpush1.xpose.msra.mxu0 %v11171
  %v11173 = vand.u32 %v10611, 4294901760
  %v11174 = vsub.f32 %v10611, %v11173
  %v11175 = vand.u32 %v11174, 4294901760
  %v11176 = vsub.f32 %v11174, %v11175
  %v11177 = vand.u32 %v11176, 4294901760
  %11178 = vmatprep.subr.mxu0 %v11177
  %v11179 = vand.u32 %v10610, 4294901760
  %v11180 = vsub.f32 %v10610, %v11179
  %v11181 = vand.u32 %v11180, 4294901760
  %v11182 = vsub.f32 %v11180, %v11181
  %v11183 = vand.u32 %v11182, 4294901760
  %11184 = vmatpush1.xpose.msra.mxu0 %v11183
  %v11185 = vand.u32 %v10613, 4294901760
  %v11186 = vsub.f32 %v10613, %v11185
  %v11187 = vand.u32 %v11186, 4294901760
  %v11188 = vsub.f32 %v11186, %v11187
  %v11189 = vand.u32 %v11188, 4294901760
  %11190 = vmatprep.subr.mxu0 %v11189
  %v11191 = vand.u32 %v10612, 4294901760
  %v11192 = vsub.f32 %v10612, %v11191
  %v11193 = vand.u32 %v11192, 4294901760
  %v11194 = vsub.f32 %v11192, %v11193
  %v11195 = vand.u32 %v11194, 4294901760
  %11196 = vmatpush1.xpose.msra.mxu0 %v11195
  %v11197 = vand.u32 %v10665, 4294901760
  %11198 = vmatprep.mubr.f32.mxu0 %v11197
  %v11199 = vand.u32 %v10661, 4294901760
  %11200 = vmatmul.mubr.f32.gmra.mrb[0].mxu0 %v11199
  %v11201 = vpop.f32.mrb[0].mxu0
  %v11202 = vadd.f32 %v10809, %v11201
  %v11203 = vpop.f32.mrb[0].mxu0
  %v11204 = vadd.f32 %v10811, %v11203
  %11205 = vdwg.mxu0
  %v11206 = vand.u32 %v10551, 4294901760
  %v11207 = vsub.f32 %v10551, %v11206
  %11208 = vmatprep.subr.mxu0 %v11207
  %v11209 = vand.u32 %v10550, 4294901760
  %v11210 = vsub.f32 %v10550, %v11209
  %11211 = vmatpush1.xpose.msra.mxu0 %v11210
  %v11212 = vand.u32 %v10553, 4294901760
  %v11213 = vsub.f32 %v10553, %v11212
  %11214 = vmatprep.subr.mxu0 %v11213
  %v11215 = vand.u32 %v10552, 4294901760
  %v11216 = vsub.f32 %v10552, %v11215
  %11217 = vmatpush1.xpose.msra.mxu0 %v11216
  %v11218 = vand.u32 %v10555, 4294901760
  %v11219 = vsub.f32 %v10555, %v11218
  %11220 = vmatprep.subr.mxu0 %v11219
  %v11221 = vand.u32 %v10554, 4294901760
  %v11222 = vsub.f32 %v10554, %v11221
  %11223 = vmatpush1.xpose.msra.mxu0 %v11222
  %v11224 = vand.u32 %v10557, 4294901760
  %v11225 = vsub.f32 %v10557, %v11224
  %11226 = vmatprep.subr.mxu0 %v11225
  %v11227 = vand.u32 %v10556, 4294901760
  %v11228 = vsub.f32 %v10556, %v11227
  %11229 = vmatpush1.xpose.msra.mxu0 %v11228
  %v11230 = vand.u32 %v10559, 4294901760
  %v11231 = vsub.f32 %v10559, %v11230
  %11232 = vmatprep.subr.mxu0 %v11231
  %v11233 = vand.u32 %v10558, 4294901760
  %v11234 = vsub.f32 %v10558, %v11233
  %11235 = vmatpush1.xpose.msra.mxu0 %v11234
  %v11236 = vand.u32 %v10561, 4294901760
  %v11237 = vsub.f32 %v10561, %v11236
  %11238 = vmatprep.subr.mxu0 %v11237
  %v11239 = vand.u32 %v10560, 4294901760
  %v11240 = vsub.f32 %v10560, %v11239
  %11241 = vmatpush1.xpose.msra.mxu0 %v11240
  %v11242 = vand.u32 %v10563, 4294901760
  %v11243 = vsub.f32 %v10563, %v11242
  %11244 = vmatprep.subr.mxu0 %v11243
  %v11245 = vand.u32 %v10562, 4294901760
  %v11246 = vsub.f32 %v10562, %v11245
  %11247 = vmatpush1.xpose.msra.mxu0 %v11246
  %v11248 = vand.u32 %v10565, 4294901760
  %v11249 = vsub.f32 %v10565, %v11248
  %11250 = vmatprep.subr.mxu0 %v11249
  %v11251 = vand.u32 %v10564, 4294901760
  %v11252 = vsub.f32 %v10564, %v11251
  %11253 = vmatpush1.xpose.msra.mxu0 %v11252
  %v11254 = vand.u32 %v10567, 4294901760
  %v11255 = vsub.f32 %v10567, %v11254
  %11256 = vmatprep.subr.mxu0 %v11255
  %v11257 = vand.u32 %v10566, 4294901760
  %v11258 = vsub.f32 %v10566, %v11257
  %11259 = vmatpush1.xpose.msra.mxu0 %v11258
  %v11260 = vand.u32 %v10569, 4294901760
  %v11261 = vsub.f32 %v10569, %v11260
  %11262 = vmatprep.subr.mxu0 %v11261
  %v11263 = vand.u32 %v10568, 4294901760
  %v11264 = vsub.f32 %v10568, %v11263
  %11265 = vmatpush1.xpose.msra.mxu0 %v11264
  %v11266 = vand.u32 %v10571, 4294901760
  %v11267 = vsub.f32 %v10571, %v11266
  %11268 = vmatprep.subr.mxu0 %v11267
  %v11269 = vand.u32 %v10570, 4294901760
  %v11270 = vsub.f32 %v10570, %v11269
  %11271 = vmatpush1.xpose.msra.mxu0 %v11270
  %v11272 = vand.u32 %v10573, 4294901760
  %v11273 = vsub.f32 %v10573, %v11272
  %11274 = vmatprep.subr.mxu0 %v11273
  %v11275 = vand.u32 %v10572, 4294901760
  %v11276 = vsub.f32 %v10572, %v11275
  %11277 = vmatpush1.xpose.msra.mxu0 %v11276
  %v11278 = vand.u32 %v10575, 4294901760
  %v11279 = vsub.f32 %v10575, %v11278
  %11280 = vmatprep.subr.mxu0 %v11279
  %v11281 = vand.u32 %v10574, 4294901760
  %v11282 = vsub.f32 %v10574, %v11281
  %11283 = vmatpush1.xpose.msra.mxu0 %v11282
  %v11284 = vand.u32 %v10577, 4294901760
  %v11285 = vsub.f32 %v10577, %v11284
  %11286 = vmatprep.subr.mxu0 %v11285
  %v11287 = vand.u32 %v10576, 4294901760
  %v11288 = vsub.f32 %v10576, %v11287
  %11289 = vmatpush1.xpose.msra.mxu0 %v11288
  %v11290 = vand.u32 %v10579, 4294901760
  %v11291 = vsub.f32 %v10579, %v11290
  %11292 = vmatprep.subr.mxu0 %v11291
  %v11293 = vand.u32 %v10578, 4294901760
  %v11294 = vsub.f32 %v10578, %v11293
  %11295 = vmatpush1.xpose.msra.mxu0 %v11294
  %v11296 = vand.u32 %v10581, 4294901760
  %v11297 = vsub.f32 %v10581, %v11296
  %11298 = vmatprep.subr.mxu0 %v11297
  %v11299 = vand.u32 %v10580, 4294901760
  %v11300 = vsub.f32 %v10580, %v11299
  %11301 = vmatpush1.xpose.msra.mxu0 %v11300
  %v11302 = vand.u32 %v10583, 4294901760
  %v11303 = vsub.f32 %v10583, %v11302
  %11304 = vmatprep.subr.mxu0 %v11303
  %v11305 = vand.u32 %v10582, 4294901760
  %v11306 = vsub.f32 %v10582, %v11305
  %11307 = vmatpush1.xpose.msra.mxu0 %v11306
  %v11308 = vand.u32 %v10585, 4294901760
  %v11309 = vsub.f32 %v10585, %v11308
  %11310 = vmatprep.subr.mxu0 %v11309
  %v11311 = vand.u32 %v10584, 4294901760
  %v11312 = vsub.f32 %v10584, %v11311
  %11313 = vmatpush1.xpose.msra.mxu0 %v11312
  %v11314 = vand.u32 %v10587, 4294901760
  %v11315 = vsub.f32 %v10587, %v11314
  %11316 = vmatprep.subr.mxu0 %v11315
  %v11317 = vand.u32 %v10586, 4294901760
  %v11318 = vsub.f32 %v10586, %v11317
  %11319 = vmatpush1.xpose.msra.mxu0 %v11318
  %v11320 = vand.u32 %v10589, 4294901760
  %v11321 = vsub.f32 %v10589, %v11320
  %11322 = vmatprep.subr.mxu0 %v11321
  %v11323 = vand.u32 %v10588, 4294901760
  %v11324 = vsub.f32 %v10588, %v11323
  %11325 = vmatpush1.xpose.msra.mxu0 %v11324
  %v11326 = vand.u32 %v10591, 4294901760
  %v11327 = vsub.f32 %v10591, %v11326
  %11328 = vmatprep.subr.mxu0 %v11327
  %v11329 = vand.u32 %v10590, 4294901760
  %v11330 = vsub.f32 %v10590, %v11329
  %11331 = vmatpush1.xpose.msra.mxu0 %v11330
  %v11332 = vand.u32 %v10593, 4294901760
  %v11333 = vsub.f32 %v10593, %v11332
  %11334 = vmatprep.subr.mxu0 %v11333
  %v11335 = vand.u32 %v10592, 4294901760
  %v11336 = vsub.f32 %v10592, %v11335
  %11337 = vmatpush1.xpose.msra.mxu0 %v11336
  %v11338 = vand.u32 %v10595, 4294901760
  %v11339 = vsub.f32 %v10595, %v11338
  %11340 = vmatprep.subr.mxu0 %v11339
  %v11341 = vand.u32 %v10594, 4294901760
  %v11342 = vsub.f32 %v10594, %v11341
  %11343 = vmatpush1.xpose.msra.mxu0 %v11342
  %v11344 = vand.u32 %v10597, 4294901760
  %v11345 = vsub.f32 %v10597, %v11344
  %11346 = vmatprep.subr.mxu0 %v11345
  %v11347 = vand.u32 %v10596, 4294901760
  %v11348 = vsub.f32 %v10596, %v11347
  %11349 = vmatpush1.xpose.msra.mxu0 %v11348
  %v11350 = vand.u32 %v10599, 4294901760
  %v11351 = vsub.f32 %v10599, %v11350
  %11352 = vmatprep.subr.mxu0 %v11351
  %v11353 = vand.u32 %v10598, 4294901760
  %v11354 = vsub.f32 %v10598, %v11353
  %11355 = vmatpush1.xpose.msra.mxu0 %v11354
  %v11356 = vand.u32 %v10601, 4294901760
  %v11357 = vsub.f32 %v10601, %v11356
  %11358 = vmatprep.subr.mxu0 %v11357
  %v11359 = vand.u32 %v10600, 4294901760
  %v11360 = vsub.f32 %v10600, %v11359
  %11361 = vmatpush1.xpose.msra.mxu0 %v11360
  %v11362 = vand.u32 %v10603, 4294901760
  %v11363 = vsub.f32 %v10603, %v11362
  %11364 = vmatprep.subr.mxu0 %v11363
  %v11365 = vand.u32 %v10602, 4294901760
  %v11366 = vsub.f32 %v10602, %v11365
  %11367 = vmatpush1.xpose.msra.mxu0 %v11366
  %v11368 = vand.u32 %v10605, 4294901760
  %v11369 = vsub.f32 %v10605, %v11368
  %11370 = vmatprep.subr.mxu0 %v11369
  %v11371 = vand.u32 %v10604, 4294901760
  %v11372 = vsub.f32 %v10604, %v11371
  %11373 = vmatpush1.xpose.msra.mxu0 %v11372
  %v11374 = vand.u32 %v10607, 4294901760
  %v11375 = vsub.f32 %v10607, %v11374
  %11376 = vmatprep.subr.mxu0 %v11375
  %v11377 = vand.u32 %v10606, 4294901760
  %v11378 = vsub.f32 %v10606, %v11377
  %11379 = vmatpush1.xpose.msra.mxu0 %v11378
  %v11380 = vand.u32 %v10609, 4294901760
  %v11381 = vsub.f32 %v10609, %v11380
  %11382 = vmatprep.subr.mxu0 %v11381
  %v11383 = vand.u32 %v10608, 4294901760
  %v11384 = vsub.f32 %v10608, %v11383
  %11385 = vmatpush1.xpose.msra.mxu0 %v11384
  %v11386 = vand.u32 %v10611, 4294901760
  %v11387 = vsub.f32 %v10611, %v11386
  %11388 = vmatprep.subr.mxu0 %v11387
  %v11389 = vand.u32 %v10610, 4294901760
  %v11390 = vsub.f32 %v10610, %v11389
  %11391 = vmatpush1.xpose.msra.mxu0 %v11390
  %v11392 = vand.u32 %v10613, 4294901760
  %v11393 = vsub.f32 %v10613, %v11392
  %11394 = vmatprep.subr.mxu0 %v11393
  %v11395 = vand.u32 %v10612, 4294901760
  %v11396 = vsub.f32 %v10612, %v11395
  %11397 = vmatpush1.xpose.msra.mxu0 %v11396
  %v11398 = vand.u32 %v10665, 4294901760
  %v11399 = vsub.f32 %v10665, %v11398
  %11400 = vmatprep.mubr.f32.mxu0 %v11399
  %v11401 = vand.u32 %v10661, 4294901760
  %v11402 = vsub.f32 %v10661, %v11401
  %11403 = vmatmul.mubr.f32.gmra.mrb[0].mxu0 %v11402
  %v11404 = vpop.f32.mrb[0].mxu0
  %v11405 = vadd.f32 %v11202, %v11404
  %v11406 = vpop.f32.mrb[0].mxu0
  %v11407 = vadd.f32 %v11204, %v11406
  %11408 = vdwg.mxu0
  %v11409 = vand.u32 %v10551, 4294901760
  %11410 = vmatprep.subr.mxu0 %v11409
  %v11411 = vand.u32 %v10550, 4294901760
  %11412 = vmatpush1.xpose.msra.mxu0 %v11411
  %v11413 = vand.u32 %v10553, 4294901760
  %11414 = vmatprep.subr.mxu0 %v11413
  %v11415 = vand.u32 %v10552, 4294901760
  %11416 = vmatpush1.xpose.msra.mxu0 %v11415
  %v11417 = vand.u32 %v10555, 4294901760
  %11418 = vmatprep.subr.mxu0 %v11417
  %v11419 = vand.u32 %v10554, 4294901760
  %11420 = vmatpush1.xpose.msra.mxu0 %v11419
  %v11421 = vand.u32 %v10557, 4294901760
  %11422 = vmatprep.subr.mxu0 %v11421
  %v11423 = vand.u32 %v10556, 4294901760
  %11424 = vmatpush1.xpose.msra.mxu0 %v11423
  %v11425 = vand.u32 %v10559, 4294901760
  %11426 = vmatprep.subr.mxu0 %v11425
  %v11427 = vand.u32 %v10558, 4294901760
  %11428 = vmatpush1.xpose.msra.mxu0 %v11427
  %v11429 = vand.u32 %v10561, 4294901760
  %11430 = vmatprep.subr.mxu0 %v11429
  %v11431 = vand.u32 %v10560, 4294901760
  %11432 = vmatpush1.xpose.msra.mxu0 %v11431
  %v11433 = vand.u32 %v10563, 4294901760
  %11434 = vmatprep.subr.mxu0 %v11433
  %v11435 = vand.u32 %v10562, 4294901760
  %11436 = vmatpush1.xpose.msra.mxu0 %v11435
  %v11437 = vand.u32 %v10565, 4294901760
  %11438 = vmatprep.subr.mxu0 %v11437
  %v11439 = vand.u32 %v10564, 4294901760
  %11440 = vmatpush1.xpose.msra.mxu0 %v11439
  %v11441 = vand.u32 %v10567, 4294901760
  %11442 = vmatprep.subr.mxu0 %v11441
  %v11443 = vand.u32 %v10566, 4294901760
  %11444 = vmatpush1.xpose.msra.mxu0 %v11443
  %v11445 = vand.u32 %v10569, 4294901760
  %11446 = vmatprep.subr.mxu0 %v11445
  %v11447 = vand.u32 %v10568, 4294901760
  %11448 = vmatpush1.xpose.msra.mxu0 %v11447
  %v11449 = vand.u32 %v10571, 4294901760
  %11450 = vmatprep.subr.mxu0 %v11449
  %v11451 = vand.u32 %v10570, 4294901760
  %11452 = vmatpush1.xpose.msra.mxu0 %v11451
  %v11453 = vand.u32 %v10573, 4294901760
  %11454 = vmatprep.subr.mxu0 %v11453
  %v11455 = vand.u32 %v10572, 4294901760
  %11456 = vmatpush1.xpose.msra.mxu0 %v11455
  %v11457 = vand.u32 %v10575, 4294901760
  %11458 = vmatprep.subr.mxu0 %v11457
  %v11459 = vand.u32 %v10574, 4294901760
  %11460 = vmatpush1.xpose.msra.mxu0 %v11459
  %v11461 = vand.u32 %v10577, 4294901760
  %11462 = vmatprep.subr.mxu0 %v11461
  %v11463 = vand.u32 %v10576, 4294901760
  %11464 = vmatpush1.xpose.msra.mxu0 %v11463
  %v11465 = vand.u32 %v10579, 4294901760
  %11466 = vmatprep.subr.mxu0 %v11465
  %v11467 = vand.u32 %v10578, 4294901760
  %11468 = vmatpush1.xpose.msra.mxu0 %v11467
  %v11469 = vand.u32 %v10581, 4294901760
  %11470 = vmatprep.subr.mxu0 %v11469
  %v11471 = vand.u32 %v10580, 4294901760
  %11472 = vmatpush1.xpose.msra.mxu0 %v11471
  %v11473 = vand.u32 %v10583, 4294901760
  %11474 = vmatprep.subr.mxu0 %v11473
  %v11475 = vand.u32 %v10582, 4294901760
  %11476 = vmatpush1.xpose.msra.mxu0 %v11475
  %v11477 = vand.u32 %v10585, 4294901760
  %11478 = vmatprep.subr.mxu0 %v11477
  %v11479 = vand.u32 %v10584, 4294901760
  %11480 = vmatpush1.xpose.msra.mxu0 %v11479
  %v11481 = vand.u32 %v10587, 4294901760
  %11482 = vmatprep.subr.mxu0 %v11481
  %v11483 = vand.u32 %v10586, 4294901760
  %11484 = vmatpush1.xpose.msra.mxu0 %v11483
  %v11485 = vand.u32 %v10589, 4294901760
  %11486 = vmatprep.subr.mxu0 %v11485
  %v11487 = vand.u32 %v10588, 4294901760
  %11488 = vmatpush1.xpose.msra.mxu0 %v11487
  %v11489 = vand.u32 %v10591, 4294901760
  %11490 = vmatprep.subr.mxu0 %v11489
  %v11491 = vand.u32 %v10590, 4294901760
  %11492 = vmatpush1.xpose.msra.mxu0 %v11491
  %v11493 = vand.u32 %v10593, 4294901760
  %11494 = vmatprep.subr.mxu0 %v11493
  %v11495 = vand.u32 %v10592, 4294901760
  %11496 = vmatpush1.xpose.msra.mxu0 %v11495
  %v11497 = vand.u32 %v10595, 4294901760
  %11498 = vmatprep.subr.mxu0 %v11497
  %v11499 = vand.u32 %v10594, 4294901760
  %11500 = vmatpush1.xpose.msra.mxu0 %v11499
  %v11501 = vand.u32 %v10597, 4294901760
  %11502 = vmatprep.subr.mxu0 %v11501
  %v11503 = vand.u32 %v10596, 4294901760
  %11504 = vmatpush1.xpose.msra.mxu0 %v11503
  %v11505 = vand.u32 %v10599, 4294901760
  %11506 = vmatprep.subr.mxu0 %v11505
  %v11507 = vand.u32 %v10598, 4294901760
  %11508 = vmatpush1.xpose.msra.mxu0 %v11507
  %v11509 = vand.u32 %v10601, 4294901760
  %11510 = vmatprep.subr.mxu0 %v11509
  %v11511 = vand.u32 %v10600, 4294901760
  %11512 = vmatpush1.xpose.msra.mxu0 %v11511
  %v11513 = vand.u32 %v10603, 4294901760
  %11514 = vmatprep.subr.mxu0 %v11513
  %v11515 = vand.u32 %v10602, 4294901760
  %11516 = vmatpush1.xpose.msra.mxu0 %v11515
  %v11517 = vand.u32 %v10605, 4294901760
  %11518 = vmatprep.subr.mxu0 %v11517
  %v11519 = vand.u32 %v10604, 4294901760
  %11520 = vmatpush1.xpose.msra.mxu0 %v11519
  %v11521 = vand.u32 %v10607, 4294901760
  %11522 = vmatprep.subr.mxu0 %v11521
  %v11523 = vand.u32 %v10606, 4294901760
  %11524 = vmatpush1.xpose.msra.mxu0 %v11523
  %v11525 = vand.u32 %v10609, 4294901760
  %11526 = vmatprep.subr.mxu0 %v11525
  %v11527 = vand.u32 %v10608, 4294901760
  %11528 = vmatpush1.xpose.msra.mxu0 %v11527
  %v11529 = vand.u32 %v10611, 4294901760
  %11530 = vmatprep.subr.mxu0 %v11529
  %v11531 = vand.u32 %v10610, 4294901760
  %11532 = vmatpush1.xpose.msra.mxu0 %v11531
  %v11533 = vand.u32 %v10613, 4294901760
  %11534 = vmatprep.subr.mxu0 %v11533
  %v11535 = vand.u32 %v10612, 4294901760
  %11536 = vmatpush1.xpose.msra.mxu0 %v11535
  %v11537 = vand.u32 %v10665, 4294901760
  %v11538 = vsub.f32 %v10665, %v11537
  %v11539 = vand.u32 %v11538, 4294901760
  %11540 = vmatprep.mubr.f32.mxu0 %v11539
  %v11541 = vand.u32 %v10661, 4294901760
  %v11542 = vsub.f32 %v10661, %v11541
  %v11543 = vand.u32 %v11542, 4294901760
  %11544 = vmatmul.mubr.f32.gmra.mrb[0].mxu0 %v11543
  %v11545 = vpop.f32.mrb[0].mxu0
  %v11546 = vadd.f32 %v11405, %v11545
  %v11547 = vpop.f32.mrb[0].mxu0
  %v11548 = vadd.f32 %v11407, %v11547
  %11549 = vdwg.mxu0
  %v11550 = vand.u32 %v10551, 4294901760
  %v11551 = vsub.f32 %v10551, %v11550
  %v11552 = vand.u32 %v11551, 4294901760
  %11553 = vmatprep.subr.mxu0 %v11552
  %v11554 = vand.u32 %v10550, 4294901760
  %v11555 = vsub.f32 %v10550, %v11554
  %v11556 = vand.u32 %v11555, 4294901760
  %11557 = vmatpush1.xpose.msra.mxu0 %v11556
  %v11558 = vand.u32 %v10553, 4294901760
  %v11559 = vsub.f32 %v10553, %v11558
  %v11560 = vand.u32 %v11559, 4294901760
  %11561 = vmatprep.subr.mxu0 %v11560
  %v11562 = vand.u32 %v10552, 4294901760
  %v11563 = vsub.f32 %v10552, %v11562
  %v11564 = vand.u32 %v11563, 4294901760
  %11565 = vmatpush1.xpose.msra.mxu0 %v11564
  %v11566 = vand.u32 %v10555, 4294901760
  %v11567 = vsub.f32 %v10555, %v11566
  %v11568 = vand.u32 %v11567, 4294901760
  %11569 = vmatprep.subr.mxu0 %v11568
  %v11570 = vand.u32 %v10554, 4294901760
  %v11571 = vsub.f32 %v10554, %v11570
  %v11572 = vand.u32 %v11571, 4294901760
  %11573 = vmatpush1.xpose.msra.mxu0 %v11572
  %v11574 = vand.u32 %v10557, 4294901760
  %v11575 = vsub.f32 %v10557, %v11574
  %v11576 = vand.u32 %v11575, 4294901760
  %11577 = vmatprep.subr.mxu0 %v11576
  %v11578 = vand.u32 %v10556, 4294901760
  %v11579 = vsub.f32 %v10556, %v11578
  %v11580 = vand.u32 %v11579, 4294901760
  %11581 = vmatpush1.xpose.msra.mxu0 %v11580
  %v11582 = vand.u32 %v10559, 4294901760
  %v11583 = vsub.f32 %v10559, %v11582
  %v11584 = vand.u32 %v11583, 4294901760
  %11585 = vmatprep.subr.mxu0 %v11584
  %v11586 = vand.u32 %v10558, 4294901760
  %v11587 = vsub.f32 %v10558, %v11586
  %v11588 = vand.u32 %v11587, 4294901760
  %11589 = vmatpush1.xpose.msra.mxu0 %v11588
  %v11590 = vand.u32 %v10561, 4294901760
  %v11591 = vsub.f32 %v10561, %v11590
  %v11592 = vand.u32 %v11591, 4294901760
  %11593 = vmatprep.subr.mxu0 %v11592
  %v11594 = vand.u32 %v10560, 4294901760
  %v11595 = vsub.f32 %v10560, %v11594
  %v11596 = vand.u32 %v11595, 4294901760
  %11597 = vmatpush1.xpose.msra.mxu0 %v11596
  %v11598 = vand.u32 %v10563, 4294901760
  %v11599 = vsub.f32 %v10563, %v11598
  %v11600 = vand.u32 %v11599, 4294901760
  %11601 = vmatprep.subr.mxu0 %v11600
  %v11602 = vand.u32 %v10562, 4294901760
  %v11603 = vsub.f32 %v10562, %v11602
  %v11604 = vand.u32 %v11603, 4294901760
  %11605 = vmatpush1.xpose.msra.mxu0 %v11604
  %v11606 = vand.u32 %v10565, 4294901760
  %v11607 = vsub.f32 %v10565, %v11606
  %v11608 = vand.u32 %v11607, 4294901760
  %11609 = vmatprep.subr.mxu0 %v11608
  %v11610 = vand.u32 %v10564, 4294901760
  %v11611 = vsub.f32 %v10564, %v11610
  %v11612 = vand.u32 %v11611, 4294901760
  %11613 = vmatpush1.xpose.msra.mxu0 %v11612
  %v11614 = vand.u32 %v10567, 4294901760
  %v11615 = vsub.f32 %v10567, %v11614
  %v11616 = vand.u32 %v11615, 4294901760
  %11617 = vmatprep.subr.mxu0 %v11616
  %v11618 = vand.u32 %v10566, 4294901760
  %v11619 = vsub.f32 %v10566, %v11618
  %v11620 = vand.u32 %v11619, 4294901760
  %11621 = vmatpush1.xpose.msra.mxu0 %v11620
  %v11622 = vand.u32 %v10569, 4294901760
  %v11623 = vsub.f32 %v10569, %v11622
  %v11624 = vand.u32 %v11623, 4294901760
  %11625 = vmatprep.subr.mxu0 %v11624
  %v11626 = vand.u32 %v10568, 4294901760
  %v11627 = vsub.f32 %v10568, %v11626
  %v11628 = vand.u32 %v11627, 4294901760
  %11629 = vmatpush1.xpose.msra.mxu0 %v11628
  %v11630 = vand.u32 %v10571, 4294901760
  %v11631 = vsub.f32 %v10571, %v11630
  %v11632 = vand.u32 %v11631, 4294901760
  %11633 = vmatprep.subr.mxu0 %v11632
  %v11634 = vand.u32 %v10570, 4294901760
  %v11635 = vsub.f32 %v10570, %v11634
  %v11636 = vand.u32 %v11635, 4294901760
  %11637 = vmatpush1.xpose.msra.mxu0 %v11636
  %v11638 = vand.u32 %v10573, 4294901760
  %v11639 = vsub.f32 %v10573, %v11638
  %v11640 = vand.u32 %v11639, 4294901760
  %11641 = vmatprep.subr.mxu0 %v11640
  %v11642 = vand.u32 %v10572, 4294901760
  %v11643 = vsub.f32 %v10572, %v11642
  %v11644 = vand.u32 %v11643, 4294901760
  %11645 = vmatpush1.xpose.msra.mxu0 %v11644
  %v11646 = vand.u32 %v10575, 4294901760
  %v11647 = vsub.f32 %v10575, %v11646
  %v11648 = vand.u32 %v11647, 4294901760
  %11649 = vmatprep.subr.mxu0 %v11648
  %v11650 = vand.u32 %v10574, 4294901760
  %v11651 = vsub.f32 %v10574, %v11650
  %v11652 = vand.u32 %v11651, 4294901760
  %11653 = vmatpush1.xpose.msra.mxu0 %v11652
  %v11654 = vand.u32 %v10577, 4294901760
  %v11655 = vsub.f32 %v10577, %v11654
  %v11656 = vand.u32 %v11655, 4294901760
  %11657 = vmatprep.subr.mxu0 %v11656
  %v11658 = vand.u32 %v10576, 4294901760
  %v11659 = vsub.f32 %v10576, %v11658
  %v11660 = vand.u32 %v11659, 4294901760
  %11661 = vmatpush1.xpose.msra.mxu0 %v11660
  %v11662 = vand.u32 %v10579, 4294901760
  %v11663 = vsub.f32 %v10579, %v11662
  %v11664 = vand.u32 %v11663, 4294901760
  %11665 = vmatprep.subr.mxu0 %v11664
  %v11666 = vand.u32 %v10578, 4294901760
  %v11667 = vsub.f32 %v10578, %v11666
  %v11668 = vand.u32 %v11667, 4294901760
  %11669 = vmatpush1.xpose.msra.mxu0 %v11668
  %v11670 = vand.u32 %v10581, 4294901760
  %v11671 = vsub.f32 %v10581, %v11670
  %v11672 = vand.u32 %v11671, 4294901760
  %11673 = vmatprep.subr.mxu0 %v11672
  %v11674 = vand.u32 %v10580, 4294901760
  %v11675 = vsub.f32 %v10580, %v11674
  %v11676 = vand.u32 %v11675, 4294901760
  %11677 = vmatpush1.xpose.msra.mxu0 %v11676
  %v11678 = vand.u32 %v10583, 4294901760
  %v11679 = vsub.f32 %v10583, %v11678
  %v11680 = vand.u32 %v11679, 4294901760
  %11681 = vmatprep.subr.mxu0 %v11680
  %v11682 = vand.u32 %v10582, 4294901760
  %v11683 = vsub.f32 %v10582, %v11682
  %v11684 = vand.u32 %v11683, 4294901760
  %11685 = vmatpush1.xpose.msra.mxu0 %v11684
  %v11686 = vand.u32 %v10585, 4294901760
  %v11687 = vsub.f32 %v10585, %v11686
  %v11688 = vand.u32 %v11687, 4294901760
  %11689 = vmatprep.subr.mxu0 %v11688
  %v11690 = vand.u32 %v10584, 4294901760
  %v11691 = vsub.f32 %v10584, %v11690
  %v11692 = vand.u32 %v11691, 4294901760
  %11693 = vmatpush1.xpose.msra.mxu0 %v11692
  %v11694 = vand.u32 %v10587, 4294901760
  %v11695 = vsub.f32 %v10587, %v11694
  %v11696 = vand.u32 %v11695, 4294901760
  %11697 = vmatprep.subr.mxu0 %v11696
  %v11698 = vand.u32 %v10586, 4294901760
  %v11699 = vsub.f32 %v10586, %v11698
  %v11700 = vand.u32 %v11699, 4294901760
  %11701 = vmatpush1.xpose.msra.mxu0 %v11700
  %v11702 = vand.u32 %v10589, 4294901760
  %v11703 = vsub.f32 %v10589, %v11702
  %v11704 = vand.u32 %v11703, 4294901760
  %11705 = vmatprep.subr.mxu0 %v11704
  %v11706 = vand.u32 %v10588, 4294901760
  %v11707 = vsub.f32 %v10588, %v11706
  %v11708 = vand.u32 %v11707, 4294901760
  %11709 = vmatpush1.xpose.msra.mxu0 %v11708
  %v11710 = vand.u32 %v10591, 4294901760
  %v11711 = vsub.f32 %v10591, %v11710
  %v11712 = vand.u32 %v11711, 4294901760
  %11713 = vmatprep.subr.mxu0 %v11712
  %v11714 = vand.u32 %v10590, 4294901760
  %v11715 = vsub.f32 %v10590, %v11714
  %v11716 = vand.u32 %v11715, 4294901760
  %11717 = vmatpush1.xpose.msra.mxu0 %v11716
  %v11718 = vand.u32 %v10593, 4294901760
  %v11719 = vsub.f32 %v10593, %v11718
  %v11720 = vand.u32 %v11719, 4294901760
  %11721 = vmatprep.subr.mxu0 %v11720
  %v11722 = vand.u32 %v10592, 4294901760
  %v11723 = vsub.f32 %v10592, %v11722
  %v11724 = vand.u32 %v11723, 4294901760
  %11725 = vmatpush1.xpose.msra.mxu0 %v11724
  %v11726 = vand.u32 %v10595, 4294901760
  %v11727 = vsub.f32 %v10595, %v11726
  %v11728 = vand.u32 %v11727, 4294901760
  %11729 = vmatprep.subr.mxu0 %v11728
  %v11730 = vand.u32 %v10594, 4294901760
  %v11731 = vsub.f32 %v10594, %v11730
  %v11732 = vand.u32 %v11731, 4294901760
  %11733 = vmatpush1.xpose.msra.mxu0 %v11732
  %v11734 = vand.u32 %v10597, 4294901760
  %v11735 = vsub.f32 %v10597, %v11734
  %v11736 = vand.u32 %v11735, 4294901760
  %11737 = vmatprep.subr.mxu0 %v11736
  %v11738 = vand.u32 %v10596, 4294901760
  %v11739 = vsub.f32 %v10596, %v11738
  %v11740 = vand.u32 %v11739, 4294901760
  %11741 = vmatpush1.xpose.msra.mxu0 %v11740
  %v11742 = vand.u32 %v10599, 4294901760
  %v11743 = vsub.f32 %v10599, %v11742
  %v11744 = vand.u32 %v11743, 4294901760
  %11745 = vmatprep.subr.mxu0 %v11744
  %v11746 = vand.u32 %v10598, 4294901760
  %v11747 = vsub.f32 %v10598, %v11746
  %v11748 = vand.u32 %v11747, 4294901760
  %11749 = vmatpush1.xpose.msra.mxu0 %v11748
  %v11750 = vand.u32 %v10601, 4294901760
  %v11751 = vsub.f32 %v10601, %v11750
  %v11752 = vand.u32 %v11751, 4294901760
  %11753 = vmatprep.subr.mxu0 %v11752
  %v11754 = vand.u32 %v10600, 4294901760
  %v11755 = vsub.f32 %v10600, %v11754
  %v11756 = vand.u32 %v11755, 4294901760
  %11757 = vmatpush1.xpose.msra.mxu0 %v11756
  %v11758 = vand.u32 %v10603, 4294901760
  %v11759 = vsub.f32 %v10603, %v11758
  %v11760 = vand.u32 %v11759, 4294901760
  %11761 = vmatprep.subr.mxu0 %v11760
  %v11762 = vand.u32 %v10602, 4294901760
  %v11763 = vsub.f32 %v10602, %v11762
  %v11764 = vand.u32 %v11763, 4294901760
  %11765 = vmatpush1.xpose.msra.mxu0 %v11764
  %v11766 = vand.u32 %v10605, 4294901760
  %v11767 = vsub.f32 %v10605, %v11766
  %v11768 = vand.u32 %v11767, 4294901760
  %11769 = vmatprep.subr.mxu0 %v11768
  %v11770 = vand.u32 %v10604, 4294901760
  %v11771 = vsub.f32 %v10604, %v11770
  %v11772 = vand.u32 %v11771, 4294901760
  %11773 = vmatpush1.xpose.msra.mxu0 %v11772
  %v11774 = vand.u32 %v10607, 4294901760
  %v11775 = vsub.f32 %v10607, %v11774
  %v11776 = vand.u32 %v11775, 4294901760
  %11777 = vmatprep.subr.mxu0 %v11776
  %v11778 = vand.u32 %v10606, 4294901760
  %v11779 = vsub.f32 %v10606, %v11778
  %v11780 = vand.u32 %v11779, 4294901760
  %11781 = vmatpush1.xpose.msra.mxu0 %v11780
  %v11782 = vand.u32 %v10609, 4294901760
  %v11783 = vsub.f32 %v10609, %v11782
  %v11784 = vand.u32 %v11783, 4294901760
  %11785 = vmatprep.subr.mxu0 %v11784
  %v11786 = vand.u32 %v10608, 4294901760
  %v11787 = vsub.f32 %v10608, %v11786
  %v11788 = vand.u32 %v11787, 4294901760
  %11789 = vmatpush1.xpose.msra.mxu0 %v11788
  %v11790 = vand.u32 %v10611, 4294901760
  %v11791 = vsub.f32 %v10611, %v11790
  %v11792 = vand.u32 %v11791, 4294901760
  %11793 = vmatprep.subr.mxu0 %v11792
  %v11794 = vand.u32 %v10610, 4294901760
  %v11795 = vsub.f32 %v10610, %v11794
  %v11796 = vand.u32 %v11795, 4294901760
  %11797 = vmatpush1.xpose.msra.mxu0 %v11796
  %v11798 = vand.u32 %v10613, 4294901760
  %v11799 = vsub.f32 %v10613, %v11798
  %v11800 = vand.u32 %v11799, 4294901760
  %11801 = vmatprep.subr.mxu0 %v11800
  %v11802 = vand.u32 %v10612, 4294901760
  %v11803 = vsub.f32 %v10612, %v11802
  %v11804 = vand.u32 %v11803, 4294901760
  %11805 = vmatpush1.xpose.msra.mxu0 %v11804
  %v11806 = vand.u32 %v10665, 4294901760
  %11807 = vmatprep.mubr.f32.mxu0 %v11806
  %v11808 = vand.u32 %v10661, 4294901760
  %11809 = vmatmul.mubr.f32.gmra.mrb[0].mxu0 %v11808
  %v11810 = vpop.f32.mrb[0].mxu0
  %v11811 = vadd.f32 %v11546, %v11810
  %v11812 = vpop.f32.mrb[0].mxu0
  %v11813 = vadd.f32 %v11548, %v11812
  %11814 = vdwg.mxu0
  %v11815 = vand.u32 %v10551, 4294901760
  %11816 = vmatprep.subr.mxu0 %v11815
  %v11817 = vand.u32 %v10550, 4294901760
  %11818 = vmatpush1.xpose.msra.mxu0 %v11817
  %v11819 = vand.u32 %v10553, 4294901760
  %11820 = vmatprep.subr.mxu0 %v11819
  %v11821 = vand.u32 %v10552, 4294901760
  %11822 = vmatpush1.xpose.msra.mxu0 %v11821
  %v11823 = vand.u32 %v10555, 4294901760
  %11824 = vmatprep.subr.mxu0 %v11823
  %v11825 = vand.u32 %v10554, 4294901760
  %11826 = vmatpush1.xpose.msra.mxu0 %v11825
  %v11827 = vand.u32 %v10557, 4294901760
  %11828 = vmatprep.subr.mxu0 %v11827
  %v11829 = vand.u32 %v10556, 4294901760
  %11830 = vmatpush1.xpose.msra.mxu0 %v11829
  %v11831 = vand.u32 %v10559, 4294901760
  %11832 = vmatprep.subr.mxu0 %v11831
  %v11833 = vand.u32 %v10558, 4294901760
  %11834 = vmatpush1.xpose.msra.mxu0 %v11833
  %v11835 = vand.u32 %v10561, 4294901760
  %11836 = vmatprep.subr.mxu0 %v11835
  %v11837 = vand.u32 %v10560, 4294901760
  %11838 = vmatpush1.xpose.msra.mxu0 %v11837
  %v11839 = vand.u32 %v10563, 4294901760
  %11840 = vmatprep.subr.mxu0 %v11839
  %v11841 = vand.u32 %v10562, 4294901760
  %11842 = vmatpush1.xpose.msra.mxu0 %v11841
  %v11843 = vand.u32 %v10565, 4294901760
  %11844 = vmatprep.subr.mxu0 %v11843
  %v11845 = vand.u32 %v10564, 4294901760
  %11846 = vmatpush1.xpose.msra.mxu0 %v11845
  %v11847 = vand.u32 %v10567, 4294901760
  %11848 = vmatprep.subr.mxu0 %v11847
  %v11849 = vand.u32 %v10566, 4294901760
  %11850 = vmatpush1.xpose.msra.mxu0 %v11849
  %v11851 = vand.u32 %v10569, 4294901760
  %11852 = vmatprep.subr.mxu0 %v11851
  %v11853 = vand.u32 %v10568, 4294901760
  %11854 = vmatpush1.xpose.msra.mxu0 %v11853
  %v11855 = vand.u32 %v10571, 4294901760
  %11856 = vmatprep.subr.mxu0 %v11855
  %v11857 = vand.u32 %v10570, 4294901760
  %11858 = vmatpush1.xpose.msra.mxu0 %v11857
  %v11859 = vand.u32 %v10573, 4294901760
  %11860 = vmatprep.subr.mxu0 %v11859
  %v11861 = vand.u32 %v10572, 4294901760
  %11862 = vmatpush1.xpose.msra.mxu0 %v11861
  %v11863 = vand.u32 %v10575, 4294901760
  %11864 = vmatprep.subr.mxu0 %v11863
  %v11865 = vand.u32 %v10574, 4294901760
  %11866 = vmatpush1.xpose.msra.mxu0 %v11865
  %v11867 = vand.u32 %v10577, 4294901760
  %11868 = vmatprep.subr.mxu0 %v11867
  %v11869 = vand.u32 %v10576, 4294901760
  %11870 = vmatpush1.xpose.msra.mxu0 %v11869
  %v11871 = vand.u32 %v10579, 4294901760
  %11872 = vmatprep.subr.mxu0 %v11871
  %v11873 = vand.u32 %v10578, 4294901760
  %11874 = vmatpush1.xpose.msra.mxu0 %v11873
  %v11875 = vand.u32 %v10581, 4294901760
  %11876 = vmatprep.subr.mxu0 %v11875
  %v11877 = vand.u32 %v10580, 4294901760
  %11878 = vmatpush1.xpose.msra.mxu0 %v11877
  %v11879 = vand.u32 %v10583, 4294901760
  %11880 = vmatprep.subr.mxu0 %v11879
  %v11881 = vand.u32 %v10582, 4294901760
  %11882 = vmatpush1.xpose.msra.mxu0 %v11881
  %v11883 = vand.u32 %v10585, 4294901760
  %11884 = vmatprep.subr.mxu0 %v11883
  %v11885 = vand.u32 %v10584, 4294901760
  %11886 = vmatpush1.xpose.msra.mxu0 %v11885
  %v11887 = vand.u32 %v10587, 4294901760
  %11888 = vmatprep.subr.mxu0 %v11887
  %v11889 = vand.u32 %v10586, 4294901760
  %11890 = vmatpush1.xpose.msra.mxu0 %v11889
  %v11891 = vand.u32 %v10589, 4294901760
  %11892 = vmatprep.subr.mxu0 %v11891
  %v11893 = vand.u32 %v10588, 4294901760
  %11894 = vmatpush1.xpose.msra.mxu0 %v11893
  %v11895 = vand.u32 %v10591, 4294901760
  %11896 = vmatprep.subr.mxu0 %v11895
  %v11897 = vand.u32 %v10590, 4294901760
  %11898 = vmatpush1.xpose.msra.mxu0 %v11897
  %v11899 = vand.u32 %v10593, 4294901760
  %11900 = vmatprep.subr.mxu0 %v11899
  %v11901 = vand.u32 %v10592, 4294901760
  %11902 = vmatpush1.xpose.msra.mxu0 %v11901
  %v11903 = vand.u32 %v10595, 4294901760
  %11904 = vmatprep.subr.mxu0 %v11903
  %v11905 = vand.u32 %v10594, 4294901760
  %11906 = vmatpush1.xpose.msra.mxu0 %v11905
  %v11907 = vand.u32 %v10597, 4294901760
  %11908 = vmatprep.subr.mxu0 %v11907
  %v11909 = vand.u32 %v10596, 4294901760
  %11910 = vmatpush1.xpose.msra.mxu0 %v11909
  %v11911 = vand.u32 %v10599, 4294901760
  %11912 = vmatprep.subr.mxu0 %v11911
  %v11913 = vand.u32 %v10598, 4294901760
  %11914 = vmatpush1.xpose.msra.mxu0 %v11913
  %v11915 = vand.u32 %v10601, 4294901760
  %11916 = vmatprep.subr.mxu0 %v11915
  %v11917 = vand.u32 %v10600, 4294901760
  %11918 = vmatpush1.xpose.msra.mxu0 %v11917
  %v11919 = vand.u32 %v10603, 4294901760
  %11920 = vmatprep.subr.mxu0 %v11919
  %v11921 = vand.u32 %v10602, 4294901760
  %11922 = vmatpush1.xpose.msra.mxu0 %v11921
  %v11923 = vand.u32 %v10605, 4294901760
  %11924 = vmatprep.subr.mxu0 %v11923
  %v11925 = vand.u32 %v10604, 4294901760
  %11926 = vmatpush1.xpose.msra.mxu0 %v11925
  %v11927 = vand.u32 %v10607, 4294901760
  %11928 = vmatprep.subr.mxu0 %v11927
  %v11929 = vand.u32 %v10606, 4294901760
  %11930 = vmatpush1.xpose.msra.mxu0 %v11929
  %v11931 = vand.u32 %v10609, 4294901760
  %11932 = vmatprep.subr.mxu0 %v11931
  %v11933 = vand.u32 %v10608, 4294901760
  %11934 = vmatpush1.xpose.msra.mxu0 %v11933
  %v11935 = vand.u32 %v10611, 4294901760
  %11936 = vmatprep.subr.mxu0 %v11935
  %v11937 = vand.u32 %v10610, 4294901760
  %11938 = vmatpush1.xpose.msra.mxu0 %v11937
  %v11939 = vand.u32 %v10613, 4294901760
  %11940 = vmatprep.subr.mxu0 %v11939
  %v11941 = vand.u32 %v10612, 4294901760
  %11942 = vmatpush1.xpose.msra.mxu0 %v11941
  %v11943 = vand.u32 %v10665, 4294901760
  %11944 = vmatprep.mubr.f32.mxu0 %v11943
  %v11945 = vand.u32 %v10661, 4294901760
  %11946 = vmatmul.mubr.f32.gmra.mrb[0].mxu0 %v11945
  %v11947 = vpop.f32.mrb[0].mxu0
  %v11948 = vadd.f32 %v11811, %v11947
  %v11949 = vpop.f32.mrb[0].mxu0
  %v11950 = vadd.f32 %v11813, %v11949
  %11951 = vdwg.mxu0
  %v11952 = vand.u32 %v10615, 4294901760
  %11953 = vmatprep.subr.mxu0 %v11952
  %v11954 = vand.u32 %v10614, 4294901760
  %11955 = vmatpush1.xpose.msra.mxu0 %v11954
  %v11956 = vand.u32 %v10617, 4294901760
  %11957 = vmatprep.subr.mxu0 %v11956
  %v11958 = vand.u32 %v10616, 4294901760
  %11959 = vmatpush1.xpose.msra.mxu0 %v11958
  %v11960 = vand.u32 %v10619, 4294901760
  %11961 = vmatprep.subr.mxu0 %v11960
  %v11962 = vand.u32 %v10618, 4294901760
  %11963 = vmatpush1.xpose.msra.mxu0 %v11962
  %v11964 = vand.u32 %v10621, 4294901760
  %11965 = vmatprep.subr.mxu0 %v11964
  %v11966 = vand.u32 %v10620, 4294901760
  %11967 = vmatpush1.xpose.msra.mxu0 %v11966
  %v11968 = vand.u32 %v10623, 4294901760
  %11969 = vmatprep.subr.mxu0 %v11968
  %v11970 = vand.u32 %v10622, 4294901760
  %11971 = vmatpush1.xpose.msra.mxu0 %v11970
  %v11972 = vand.u32 %v10625, 4294901760
  %11973 = vmatprep.subr.mxu0 %v11972
  %v11974 = vand.u32 %v10624, 4294901760
  %11975 = vmatpush1.xpose.msra.mxu0 %v11974
  %v11976 = vand.u32 %v10627, 4294901760
  %11977 = vmatprep.subr.mxu0 %v11976
  %v11978 = vand.u32 %v10626, 4294901760
  %11979 = vmatpush1.xpose.msra.mxu0 %v11978
  %v11980 = vand.u32 %v10629, 4294901760
  %11981 = vmatprep.subr.mxu0 %v11980
  %v11982 = vand.u32 %v10628, 4294901760
  %11983 = vmatpush1.xpose.msra.mxu0 %v11982
  %v11984 = vand.u32 %v10631, 4294901760
  %11985 = vmatprep.subr.mxu0 %v11984
  %v11986 = vand.u32 %v10630, 4294901760
  %11987 = vmatpush1.xpose.msra.mxu0 %v11986
  %v11988 = vand.u32 %v10633, 4294901760
  %11989 = vmatprep.subr.mxu0 %v11988
  %v11990 = vand.u32 %v10632, 4294901760
  %11991 = vmatpush1.xpose.msra.mxu0 %v11990
  %v11992 = vand.u32 %v10635, 4294901760
  %11993 = vmatprep.subr.mxu0 %v11992
  %v11994 = vand.u32 %v10634, 4294901760
  %11995 = vmatpush1.xpose.msra.mxu0 %v11994
  %v11996 = vand.u32 %v10637, 4294901760
  %11997 = vmatprep.subr.mxu0 %v11996
  %v11998 = vand.u32 %v10636, 4294901760
  %11999 = vmatpush1.xpose.msra.mxu0 %v11998
  %v12000 = vand.u32 %v10639, 4294901760
  %12001 = vmatprep.subr.mxu0 %v12000
  %v12002 = vand.u32 %v10638, 4294901760
  %12003 = vmatpush1.xpose.msra.mxu0 %v12002
  %v12004 = vand.u32 %v10641, 4294901760
  %12005 = vmatprep.subr.mxu0 %v12004
  %v12006 = vand.u32 %v10640, 4294901760
  %12007 = vmatpush1.xpose.msra.mxu0 %v12006
  %v12008 = vand.u32 %v10643, 4294901760
  %12009 = vmatprep.subr.mxu0 %v12008
  %v12010 = vand.u32 %v10642, 4294901760
  %12011 = vmatpush1.xpose.msra.mxu0 %v12010
  %v12012 = vand.u32 %v10645, 4294901760
  %12013 = vmatprep.subr.mxu0 %v12012
  %v12014 = vand.u32 %v10644, 4294901760
  %12015 = vmatpush1.xpose.msra.mxu0 %v12014
  %12016 = vmatprep.subr.mxu0 0.0
  %12017 = vmatpush1.xpose.msra.mxu0 0.0
  %12018 = vmatprep.subr.mxu0 0.0
  %12019 = vmatpush1.xpose.msra.mxu0 0.0
  %12020 = vmatprep.subr.mxu0 0.0
  %12021 = vmatpush1.xpose.msra.mxu0 0.0
  %12022 = vmatprep.subr.mxu0 0.0
  %12023 = vmatpush1.xpose.msra.mxu0 0.0
  %12024 = vmatprep.subr.mxu0 0.0
  %12025 = vmatpush1.xpose.msra.mxu0 0.0
  %12026 = vmatprep.subr.mxu0 0.0
  %12027 = vmatpush1.xpose.msra.mxu0 0.0
  %12028 = vmatprep.subr.mxu0 0.0
  %12029 = vmatpush1.xpose.msra.mxu0 0.0
  %12030 = vmatprep.subr.mxu0 0.0
  %12031 = vmatpush1.xpose.msra.mxu0 0.0
  %12032 = vmatprep.subr.mxu0 0.0
  %12033 = vmatpush1.xpose.msra.mxu0 0.0
  %12034 = vmatprep.subr.mxu0 0.0
  %12035 = vmatpush1.xpose.msra.mxu0 0.0
  %12036 = vmatprep.subr.mxu0 0.0
  %12037 = vmatpush1.xpose.msra.mxu0 0.0
  %12038 = vmatprep.subr.mxu0 0.0
  %12039 = vmatpush1.xpose.msra.mxu0 0.0
  %12040 = vmatprep.subr.mxu0 0.0
  %12041 = vmatpush1.xpose.msra.mxu0 0.0
  %12042 = vmatprep.subr.mxu0 0.0
  %12043 = vmatpush1.xpose.msra.mxu0 0.0
  %12044 = vmatprep.subr.mxu0 0.0
  %12045 = vmatpush1.xpose.msra.mxu0 0.0
  %12046 = vmatprep.subr.mxu0 0.0
  %12047 = vmatpush1.xpose.msra.mxu0 0.0
  %v12048 = vand.u32 %v10665, 4294901760
  %v12049 = vsub.f32 %v10665, %v12048
  %v12050 = vand.u32 %v12049, 4294901760
  %v12051 = vsub.f32 %v12049, %v12050
  %v12052 = vand.u32 %v12051, 4294901760
  %12053 = vmatprep.mubr.f32.mxu0 %v12052
  %v12054 = vand.u32 %v10661, 4294901760
  %v12055 = vsub.f32 %v10661, %v12054
  %v12056 = vand.u32 %v12055, 4294901760
  %v12057 = vsub.f32 %v12055, %v12056
  %v12058 = vand.u32 %v12057, 4294901760
  %12059 = vmatmul.mubr.f32.gmra.mrb[0].mxu0 %v12058
  %v12060 = vpop.f32.mrb[0].mxu0
  %v12061 = vadd.f32 %v10656, %v12060
  %v12062 = vpop.f32.mrb[0].mxu0
  %12063 = vdwg.mxu0
  %v12064 = vand.u32 %v10615, 4294901760
  %v12065 = vsub.f32 %v10615, %v12064
  %v12066 = vand.u32 %v12065, 4294901760
  %v12067 = vsub.f32 %v12065, %v12066
  %v12068 = vand.u32 %v12067, 4294901760
  %12069 = vmatprep.subr.mxu0 %v12068
  %v12070 = vand.u32 %v10614, 4294901760
  %v12071 = vsub.f32 %v10614, %v12070
  %v12072 = vand.u32 %v12071, 4294901760
  %v12073 = vsub.f32 %v12071, %v12072
  %v12074 = vand.u32 %v12073, 4294901760
  %12075 = vmatpush1.xpose.msra.mxu0 %v12074
  %v12076 = vand.u32 %v10617, 4294901760
  %v12077 = vsub.f32 %v10617, %v12076
  %v12078 = vand.u32 %v12077, 4294901760
  %v12079 = vsub.f32 %v12077, %v12078
  %v12080 = vand.u32 %v12079, 4294901760
  %12081 = vmatprep.subr.mxu0 %v12080
  %v12082 = vand.u32 %v10616, 4294901760
  %v12083 = vsub.f32 %v10616, %v12082
  %v12084 = vand.u32 %v12083, 4294901760
  %v12085 = vsub.f32 %v12083, %v12084
  %v12086 = vand.u32 %v12085, 4294901760
  %12087 = vmatpush1.xpose.msra.mxu0 %v12086
  %v12088 = vand.u32 %v10619, 4294901760
  %v12089 = vsub.f32 %v10619, %v12088
  %v12090 = vand.u32 %v12089, 4294901760
  %v12091 = vsub.f32 %v12089, %v12090
  %v12092 = vand.u32 %v12091, 4294901760
  %12093 = vmatprep.subr.mxu0 %v12092
  %v12094 = vand.u32 %v10618, 4294901760
  %v12095 = vsub.f32 %v10618, %v12094
  %v12096 = vand.u32 %v12095, 4294901760
  %v12097 = vsub.f32 %v12095, %v12096
  %v12098 = vand.u32 %v12097, 4294901760
  %12099 = vmatpush1.xpose.msra.mxu0 %v12098
  %v12100 = vand.u32 %v10621, 4294901760
  %v12101 = vsub.f32 %v10621, %v12100
  %v12102 = vand.u32 %v12101, 4294901760
  %v12103 = vsub.f32 %v12101, %v12102
  %v12104 = vand.u32 %v12103, 4294901760
  %12105 = vmatprep.subr.mxu0 %v12104
  %v12106 = vand.u32 %v10620, 4294901760
  %v12107 = vsub.f32 %v10620, %v12106
  %v12108 = vand.u32 %v12107, 4294901760
  %v12109 = vsub.f32 %v12107, %v12108
  %v12110 = vand.u32 %v12109, 4294901760
  %12111 = vmatpush1.xpose.msra.mxu0 %v12110
  %v12112 = vand.u32 %v10623, 4294901760
  %v12113 = vsub.f32 %v10623, %v12112
  %v12114 = vand.u32 %v12113, 4294901760
  %v12115 = vsub.f32 %v12113, %v12114
  %v12116 = vand.u32 %v12115, 4294901760
  %12117 = vmatprep.subr.mxu0 %v12116
  %v12118 = vand.u32 %v10622, 4294901760
  %v12119 = vsub.f32 %v10622, %v12118
  %v12120 = vand.u32 %v12119, 4294901760
  %v12121 = vsub.f32 %v12119, %v12120
  %v12122 = vand.u32 %v12121, 4294901760
  %12123 = vmatpush1.xpose.msra.mxu0 %v12122
  %v12124 = vand.u32 %v10625, 4294901760
  %v12125 = vsub.f32 %v10625, %v12124
  %v12126 = vand.u32 %v12125, 4294901760
  %v12127 = vsub.f32 %v12125, %v12126
  %v12128 = vand.u32 %v12127, 4294901760
  %12129 = vmatprep.subr.mxu0 %v12128
  %v12130 = vand.u32 %v10624, 4294901760
  %v12131 = vsub.f32 %v10624, %v12130
  %v12132 = vand.u32 %v12131, 4294901760
  %v12133 = vsub.f32 %v12131, %v12132
  %v12134 = vand.u32 %v12133, 4294901760
  %12135 = vmatpush1.xpose.msra.mxu0 %v12134
  %v12136 = vand.u32 %v10627, 4294901760
  %v12137 = vsub.f32 %v10627, %v12136
  %v12138 = vand.u32 %v12137, 4294901760
  %v12139 = vsub.f32 %v12137, %v12138
  %v12140 = vand.u32 %v12139, 4294901760
  %12141 = vmatprep.subr.mxu0 %v12140
  %v12142 = vand.u32 %v10626, 4294901760
  %v12143 = vsub.f32 %v10626, %v12142
  %v12144 = vand.u32 %v12143, 4294901760
  %v12145 = vsub.f32 %v12143, %v12144
  %v12146 = vand.u32 %v12145, 4294901760
  %12147 = vmatpush1.xpose.msra.mxu0 %v12146
  %v12148 = vand.u32 %v10629, 4294901760
  %v12149 = vsub.f32 %v10629, %v12148
  %v12150 = vand.u32 %v12149, 4294901760
  %v12151 = vsub.f32 %v12149, %v12150
  %v12152 = vand.u32 %v12151, 4294901760
  %12153 = vmatprep.subr.mxu0 %v12152
  %v12154 = vand.u32 %v10628, 4294901760
  %v12155 = vsub.f32 %v10628, %v12154
  %v12156 = vand.u32 %v12155, 4294901760
  %v12157 = vsub.f32 %v12155, %v12156
  %v12158 = vand.u32 %v12157, 4294901760
  %12159 = vmatpush1.xpose.msra.mxu0 %v12158
  %v12160 = vand.u32 %v10631, 4294901760
  %v12161 = vsub.f32 %v10631, %v12160
  %v12162 = vand.u32 %v12161, 4294901760
  %v12163 = vsub.f32 %v12161, %v12162
  %v12164 = vand.u32 %v12163, 4294901760
  %12165 = vmatprep.subr.mxu0 %v12164
  %v12166 = vand.u32 %v10630, 4294901760
  %v12167 = vsub.f32 %v10630, %v12166
  %v12168 = vand.u32 %v12167, 4294901760
  %v12169 = vsub.f32 %v12167, %v12168
  %v12170 = vand.u32 %v12169, 4294901760
  %12171 = vmatpush1.xpose.msra.mxu0 %v12170
  %v12172 = vand.u32 %v10633, 4294901760
  %v12173 = vsub.f32 %v10633, %v12172
  %v12174 = vand.u32 %v12173, 4294901760
  %v12175 = vsub.f32 %v12173, %v12174
  %v12176 = vand.u32 %v12175, 4294901760
  %12177 = vmatprep.subr.mxu0 %v12176
  %v12178 = vand.u32 %v10632, 4294901760
  %v12179 = vsub.f32 %v10632, %v12178
  %v12180 = vand.u32 %v12179, 4294901760
  %v12181 = vsub.f32 %v12179, %v12180
  %v12182 = vand.u32 %v12181, 4294901760
  %12183 = vmatpush1.xpose.msra.mxu0 %v12182
  %v12184 = vand.u32 %v10635, 4294901760
  %v12185 = vsub.f32 %v10635, %v12184
  %v12186 = vand.u32 %v12185, 4294901760
  %v12187 = vsub.f32 %v12185, %v12186
  %v12188 = vand.u32 %v12187, 4294901760
  %12189 = vmatprep.subr.mxu0 %v12188
  %v12190 = vand.u32 %v10634, 4294901760
  %v12191 = vsub.f32 %v10634, %v12190
  %v12192 = vand.u32 %v12191, 4294901760
  %v12193 = vsub.f32 %v12191, %v12192
  %v12194 = vand.u32 %v12193, 4294901760
  %12195 = vmatpush1.xpose.msra.mxu0 %v12194
  %v12196 = vand.u32 %v10637, 4294901760
  %v12197 = vsub.f32 %v10637, %v12196
  %v12198 = vand.u32 %v12197, 4294901760
  %v12199 = vsub.f32 %v12197, %v12198
  %v12200 = vand.u32 %v12199, 4294901760
  %12201 = vmatprep.subr.mxu0 %v12200
  %v12202 = vand.u32 %v10636, 4294901760
  %v12203 = vsub.f32 %v10636, %v12202
  %v12204 = vand.u32 %v12203, 4294901760
  %v12205 = vsub.f32 %v12203, %v12204
  %v12206 = vand.u32 %v12205, 4294901760
  %12207 = vmatpush1.xpose.msra.mxu0 %v12206
  %v12208 = vand.u32 %v10639, 4294901760
  %v12209 = vsub.f32 %v10639, %v12208
  %v12210 = vand.u32 %v12209, 4294901760
  %v12211 = vsub.f32 %v12209, %v12210
  %v12212 = vand.u32 %v12211, 4294901760
  %12213 = vmatprep.subr.mxu0 %v12212
  %v12214 = vand.u32 %v10638, 4294901760
  %v12215 = vsub.f32 %v10638, %v12214
  %v12216 = vand.u32 %v12215, 4294901760
  %v12217 = vsub.f32 %v12215, %v12216
  %v12218 = vand.u32 %v12217, 4294901760
  %12219 = vmatpush1.xpose.msra.mxu0 %v12218
  %v12220 = vand.u32 %v10641, 4294901760
  %v12221 = vsub.f32 %v10641, %v12220
  %v12222 = vand.u32 %v12221, 4294901760
  %v12223 = vsub.f32 %v12221, %v12222
  %v12224 = vand.u32 %v12223, 4294901760
  %12225 = vmatprep.subr.mxu0 %v12224
  %v12226 = vand.u32 %v10640, 4294901760
  %v12227 = vsub.f32 %v10640, %v12226
  %v12228 = vand.u32 %v12227, 4294901760
  %v12229 = vsub.f32 %v12227, %v12228
  %v12230 = vand.u32 %v12229, 4294901760
  %12231 = vmatpush1.xpose.msra.mxu0 %v12230
  %v12232 = vand.u32 %v10643, 4294901760
  %v12233 = vsub.f32 %v10643, %v12232
  %v12234 = vand.u32 %v12233, 4294901760
  %v12235 = vsub.f32 %v12233, %v12234
  %v12236 = vand.u32 %v12235, 4294901760
  %12237 = vmatprep.subr.mxu0 %v12236
  %v12238 = vand.u32 %v10642, 4294901760
  %v12239 = vsub.f32 %v10642, %v12238
  %v12240 = vand.u32 %v12239, 4294901760
  %v12241 = vsub.f32 %v12239, %v12240
  %v12242 = vand.u32 %v12241, 4294901760
  %12243 = vmatpush1.xpose.msra.mxu0 %v12242
  %v12244 = vand.u32 %v10645, 4294901760
  %v12245 = vsub.f32 %v10645, %v12244
  %v12246 = vand.u32 %v12245, 4294901760
  %v12247 = vsub.f32 %v12245, %v12246
  %v12248 = vand.u32 %v12247, 4294901760
  %12249 = vmatprep.subr.mxu0 %v12248
  %v12250 = vand.u32 %v10644, 4294901760
  %v12251 = vsub.f32 %v10644, %v12250
  %v12252 = vand.u32 %v12251, 4294901760
  %v12253 = vsub.f32 %v12251, %v12252
  %v12254 = vand.u32 %v12253, 4294901760
  %12255 = vmatpush1.xpose.msra.mxu0 %v12254
  %12256 = vmatprep.subr.mxu0 0.0
  %12257 = vmatpush1.xpose.msra.mxu0 0.0
  %12258 = vmatprep.subr.mxu0 0.0
  %12259 = vmatpush1.xpose.msra.mxu0 0.0
  %12260 = vmatprep.subr.mxu0 0.0
  %12261 = vmatpush1.xpose.msra.mxu0 0.0
  %12262 = vmatprep.subr.mxu0 0.0
  %12263 = vmatpush1.xpose.msra.mxu0 0.0
  %12264 = vmatprep.subr.mxu0 0.0
  %12265 = vmatpush1.xpose.msra.mxu0 0.0
  %12266 = vmatprep.subr.mxu0 0.0
  %12267 = vmatpush1.xpose.msra.mxu0 0.0
  %12268 = vmatprep.subr.mxu0 0.0
  %12269 = vmatpush1.xpose.msra.mxu0 0.0
  %12270 = vmatprep.subr.mxu0 0.0
  %12271 = vmatpush1.xpose.msra.mxu0 0.0
  %12272 = vmatprep.subr.mxu0 0.0
  %12273 = vmatpush1.xpose.msra.mxu0 0.0
  %12274 = vmatprep.subr.mxu0 0.0
  %12275 = vmatpush1.xpose.msra.mxu0 0.0
  %12276 = vmatprep.subr.mxu0 0.0
  %12277 = vmatpush1.xpose.msra.mxu0 0.0
  %12278 = vmatprep.subr.mxu0 0.0
  %12279 = vmatpush1.xpose.msra.mxu0 0.0
  %12280 = vmatprep.subr.mxu0 0.0
  %12281 = vmatpush1.xpose.msra.mxu0 0.0
  %12282 = vmatprep.subr.mxu0 0.0
  %12283 = vmatpush1.xpose.msra.mxu0 0.0
  %12284 = vmatprep.subr.mxu0 0.0
  %12285 = vmatpush1.xpose.msra.mxu0 0.0
  %12286 = vmatprep.subr.mxu0 0.0
  %12287 = vmatpush1.xpose.msra.mxu0 0.0
  %v12288 = vand.u32 %v10665, 4294901760
  %12289 = vmatprep.mubr.f32.mxu0 %v12288
  %v12290 = vand.u32 %v10661, 4294901760
  %12291 = vmatmul.mubr.f32.gmra.mrb[0].mxu0 %v12290
  %v12292 = vpop.f32.mrb[0].mxu0
  %v12293 = vadd.f32 %v12061, %v12292
  %v12294 = vpop.f32.mrb[0].mxu0
  %12295 = vdwg.mxu0
  %v12296 = vand.u32 %v10615, 4294901760
  %v12297 = vsub.f32 %v10615, %v12296
  %12298 = vmatprep.subr.mxu0 %v12297
  %v12299 = vand.u32 %v10614, 4294901760
  %v12300 = vsub.f32 %v10614, %v12299
  %12301 = vmatpush1.xpose.msra.mxu0 %v12300
  %v12302 = vand.u32 %v10617, 4294901760
  %v12303 = vsub.f32 %v10617, %v12302
  %12304 = vmatprep.subr.mxu0 %v12303
  %v12305 = vand.u32 %v10616, 4294901760
  %v12306 = vsub.f32 %v10616, %v12305
  %12307 = vmatpush1.xpose.msra.mxu0 %v12306
  %v12308 = vand.u32 %v10619, 4294901760
  %v12309 = vsub.f32 %v10619, %v12308
  %12310 = vmatprep.subr.mxu0 %v12309
  %v12311 = vand.u32 %v10618, 4294901760
  %v12312 = vsub.f32 %v10618, %v12311
  %12313 = vmatpush1.xpose.msra.mxu0 %v12312
  %v12314 = vand.u32 %v10621, 4294901760
  %v12315 = vsub.f32 %v10621, %v12314
  %12316 = vmatprep.subr.mxu0 %v12315
  %v12317 = vand.u32 %v10620, 4294901760
  %v12318 = vsub.f32 %v10620, %v12317
  %12319 = vmatpush1.xpose.msra.mxu0 %v12318
  %v12320 = vand.u32 %v10623, 4294901760
  %v12321 = vsub.f32 %v10623, %v12320
  %12322 = vmatprep.subr.mxu0 %v12321
  %v12323 = vand.u32 %v10622, 4294901760
  %v12324 = vsub.f32 %v10622, %v12323
  %12325 = vmatpush1.xpose.msra.mxu0 %v12324
  %v12326 = vand.u32 %v10625, 4294901760
  %v12327 = vsub.f32 %v10625, %v12326
  %12328 = vmatprep.subr.mxu0 %v12327
  %v12329 = vand.u32 %v10624, 4294901760
  %v12330 = vsub.f32 %v10624, %v12329
  %12331 = vmatpush1.xpose.msra.mxu0 %v12330
  %v12332 = vand.u32 %v10627, 4294901760
  %v12333 = vsub.f32 %v10627, %v12332
  %12334 = vmatprep.subr.mxu0 %v12333
  %v12335 = vand.u32 %v10626, 4294901760
  %v12336 = vsub.f32 %v10626, %v12335
  %12337 = vmatpush1.xpose.msra.mxu0 %v12336
  %v12338 = vand.u32 %v10629, 4294901760
  %v12339 = vsub.f32 %v10629, %v12338
  %12340 = vmatprep.subr.mxu0 %v12339
  %v12341 = vand.u32 %v10628, 4294901760
  %v12342 = vsub.f32 %v10628, %v12341
  %12343 = vmatpush1.xpose.msra.mxu0 %v12342
  %v12344 = vand.u32 %v10631, 4294901760
  %v12345 = vsub.f32 %v10631, %v12344
  %12346 = vmatprep.subr.mxu0 %v12345
  %v12347 = vand.u32 %v10630, 4294901760
  %v12348 = vsub.f32 %v10630, %v12347
  %12349 = vmatpush1.xpose.msra.mxu0 %v12348
  %v12350 = vand.u32 %v10633, 4294901760
  %v12351 = vsub.f32 %v10633, %v12350
  %12352 = vmatprep.subr.mxu0 %v12351
  %v12353 = vand.u32 %v10632, 4294901760
  %v12354 = vsub.f32 %v10632, %v12353
  %12355 = vmatpush1.xpose.msra.mxu0 %v12354
  %v12356 = vand.u32 %v10635, 4294901760
  %v12357 = vsub.f32 %v10635, %v12356
  %12358 = vmatprep.subr.mxu0 %v12357
  %v12359 = vand.u32 %v10634, 4294901760
  %v12360 = vsub.f32 %v10634, %v12359
  %12361 = vmatpush1.xpose.msra.mxu0 %v12360
  %v12362 = vand.u32 %v10637, 4294901760
  %v12363 = vsub.f32 %v10637, %v12362
  %12364 = vmatprep.subr.mxu0 %v12363
  %v12365 = vand.u32 %v10636, 4294901760
  %v12366 = vsub.f32 %v10636, %v12365
  %12367 = vmatpush1.xpose.msra.mxu0 %v12366
  %v12368 = vand.u32 %v10639, 4294901760
  %v12369 = vsub.f32 %v10639, %v12368
  %12370 = vmatprep.subr.mxu0 %v12369
  %v12371 = vand.u32 %v10638, 4294901760
  %v12372 = vsub.f32 %v10638, %v12371
  %12373 = vmatpush1.xpose.msra.mxu0 %v12372
  %v12374 = vand.u32 %v10641, 4294901760
  %v12375 = vsub.f32 %v10641, %v12374
  %12376 = vmatprep.subr.mxu0 %v12375
  %v12377 = vand.u32 %v10640, 4294901760
  %v12378 = vsub.f32 %v10640, %v12377
  %12379 = vmatpush1.xpose.msra.mxu0 %v12378
  %v12380 = vand.u32 %v10643, 4294901760
  %v12381 = vsub.f32 %v10643, %v12380
  %12382 = vmatprep.subr.mxu0 %v12381
  %v12383 = vand.u32 %v10642, 4294901760
  %v12384 = vsub.f32 %v10642, %v12383
  %12385 = vmatpush1.xpose.msra.mxu0 %v12384
  %v12386 = vand.u32 %v10645, 4294901760
  %v12387 = vsub.f32 %v10645, %v12386
  %12388 = vmatprep.subr.mxu0 %v12387
  %v12389 = vand.u32 %v10644, 4294901760
  %v12390 = vsub.f32 %v10644, %v12389
  %12391 = vmatpush1.xpose.msra.mxu0 %v12390
  %12392 = vmatprep.subr.mxu0 0.0
  %12393 = vmatpush1.xpose.msra.mxu0 0.0
  %12394 = vmatprep.subr.mxu0 0.0
  %12395 = vmatpush1.xpose.msra.mxu0 0.0
  %12396 = vmatprep.subr.mxu0 0.0
  %12397 = vmatpush1.xpose.msra.mxu0 0.0
  %12398 = vmatprep.subr.mxu0 0.0
  %12399 = vmatpush1.xpose.msra.mxu0 0.0
  %12400 = vmatprep.subr.mxu0 0.0
  %12401 = vmatpush1.xpose.msra.mxu0 0.0
  %12402 = vmatprep.subr.mxu0 0.0
  %12403 = vmatpush1.xpose.msra.mxu0 0.0
  %12404 = vmatprep.subr.mxu0 0.0
  %12405 = vmatpush1.xpose.msra.mxu0 0.0
  %12406 = vmatprep.subr.mxu0 0.0
  %12407 = vmatpush1.xpose.msra.mxu0 0.0
  %12408 = vmatprep.subr.mxu0 0.0
  %12409 = vmatpush1.xpose.msra.mxu0 0.0
  %12410 = vmatprep.subr.mxu0 0.0
  %12411 = vmatpush1.xpose.msra.mxu0 0.0
  %12412 = vmatprep.subr.mxu0 0.0
  %12413 = vmatpush1.xpose.msra.mxu0 0.0
  %12414 = vmatprep.subr.mxu0 0.0
  %12415 = vmatpush1.xpose.msra.mxu0 0.0
  %12416 = vmatprep.subr.mxu0 0.0
  %12417 = vmatpush1.xpose.msra.mxu0 0.0
  %12418 = vmatprep.subr.mxu0 0.0
  %12419 = vmatpush1.xpose.msra.mxu0 0.0
  %12420 = vmatprep.subr.mxu0 0.0
  %12421 = vmatpush1.xpose.msra.mxu0 0.0
  %12422 = vmatprep.subr.mxu0 0.0
  %12423 = vmatpush1.xpose.msra.mxu0 0.0
  %v12424 = vand.u32 %v10665, 4294901760
  %v12425 = vsub.f32 %v10665, %v12424
  %12426 = vmatprep.mubr.f32.mxu0 %v12425
  %v12427 = vand.u32 %v10661, 4294901760
  %v12428 = vsub.f32 %v10661, %v12427
  %12429 = vmatmul.mubr.f32.gmra.mrb[0].mxu0 %v12428
  %v12430 = vpop.f32.mrb[0].mxu0
  %v12431 = vadd.f32 %v12293, %v12430
  %v12432 = vpop.f32.mrb[0].mxu0
  %12433 = vdwg.mxu0
  %v12434 = vand.u32 %v10615, 4294901760
  %12435 = vmatprep.subr.mxu0 %v12434
  %v12436 = vand.u32 %v10614, 4294901760
  %12437 = vmatpush1.xpose.msra.mxu0 %v12436
  %v12438 = vand.u32 %v10617, 4294901760
  %12439 = vmatprep.subr.mxu0 %v12438
  %v12440 = vand.u32 %v10616, 4294901760
  %12441 = vmatpush1.xpose.msra.mxu0 %v12440
  %v12442 = vand.u32 %v10619, 4294901760
  %12443 = vmatprep.subr.mxu0 %v12442
  %v12444 = vand.u32 %v10618, 4294901760
  %12445 = vmatpush1.xpose.msra.mxu0 %v12444
  %v12446 = vand.u32 %v10621, 4294901760
  %12447 = vmatprep.subr.mxu0 %v12446
  %v12448 = vand.u32 %v10620, 4294901760
  %12449 = vmatpush1.xpose.msra.mxu0 %v12448
  %v12450 = vand.u32 %v10623, 4294901760
  %12451 = vmatprep.subr.mxu0 %v12450
  %v12452 = vand.u32 %v10622, 4294901760
  %12453 = vmatpush1.xpose.msra.mxu0 %v12452
  %v12454 = vand.u32 %v10625, 4294901760
  %12455 = vmatprep.subr.mxu0 %v12454
  %v12456 = vand.u32 %v10624, 4294901760
  %12457 = vmatpush1.xpose.msra.mxu0 %v12456
  %v12458 = vand.u32 %v10627, 4294901760
  %12459 = vmatprep.subr.mxu0 %v12458
  %v12460 = vand.u32 %v10626, 4294901760
  %12461 = vmatpush1.xpose.msra.mxu0 %v12460
  %v12462 = vand.u32 %v10629, 4294901760
  %12463 = vmatprep.subr.mxu0 %v12462
  %v12464 = vand.u32 %v10628, 4294901760
  %12465 = vmatpush1.xpose.msra.mxu0 %v12464
  %v12466 = vand.u32 %v10631, 4294901760
  %12467 = vmatprep.subr.mxu0 %v12466
  %v12468 = vand.u32 %v10630, 4294901760
  %12469 = vmatpush1.xpose.msra.mxu0 %v12468
  %v12470 = vand.u32 %v10633, 4294901760
  %12471 = vmatprep.subr.mxu0 %v12470
  %v12472 = vand.u32 %v10632, 4294901760
  %12473 = vmatpush1.xpose.msra.mxu0 %v12472
  %v12474 = vand.u32 %v10635, 4294901760
  %12475 = vmatprep.subr.mxu0 %v12474
  %v12476 = vand.u32 %v10634, 4294901760
  %12477 = vmatpush1.xpose.msra.mxu0 %v12476
  %v12478 = vand.u32 %v10637, 4294901760
  %12479 = vmatprep.subr.mxu0 %v12478
  %v12480 = vand.u32 %v10636, 4294901760
  %12481 = vmatpush1.xpose.msra.mxu0 %v12480
  %v12482 = vand.u32 %v10639, 4294901760
  %12483 = vmatprep.subr.mxu0 %v12482
  %v12484 = vand.u32 %v10638, 4294901760
  %12485 = vmatpush1.xpose.msra.mxu0 %v12484
  %v12486 = vand.u32 %v10641, 4294901760
  %12487 = vmatprep.subr.mxu0 %v12486
  %v12488 = vand.u32 %v10640, 4294901760
  %12489 = vmatpush1.xpose.msra.mxu0 %v12488
  %v12490 = vand.u32 %v10643, 4294901760
  %12491 = vmatprep.subr.mxu0 %v12490
  %v12492 = vand.u32 %v10642, 4294901760
  %12493 = vmatpush1.xpose.msra.mxu0 %v12492
  %v12494 = vand.u32 %v10645, 4294901760
  %12495 = vmatprep.subr.mxu0 %v12494
  %v12496 = vand.u32 %v10644, 4294901760
  %12497 = vmatpush1.xpose.msra.mxu0 %v12496
  %12498 = vmatprep.subr.mxu0 0.0
  %12499 = vmatpush1.xpose.msra.mxu0 0.0
  %12500 = vmatprep.subr.mxu0 0.0
  %12501 = vmatpush1.xpose.msra.mxu0 0.0
  %12502 = vmatprep.subr.mxu0 0.0
  %12503 = vmatpush1.xpose.msra.mxu0 0.0
  %12504 = vmatprep.subr.mxu0 0.0
  %12505 = vmatpush1.xpose.msra.mxu0 0.0
  %12506 = vmatprep.subr.mxu0 0.0
  %12507 = vmatpush1.xpose.msra.mxu0 0.0
  %12508 = vmatprep.subr.mxu0 0.0
  %12509 = vmatpush1.xpose.msra.mxu0 0.0
  %12510 = vmatprep.subr.mxu0 0.0
  %12511 = vmatpush1.xpose.msra.mxu0 0.0
  %12512 = vmatprep.subr.mxu0 0.0
  %12513 = vmatpush1.xpose.msra.mxu0 0.0
  %12514 = vmatprep.subr.mxu0 0.0
  %12515 = vmatpush1.xpose.msra.mxu0 0.0
  %12516 = vmatprep.subr.mxu0 0.0
  %12517 = vmatpush1.xpose.msra.mxu0 0.0
  %12518 = vmatprep.subr.mxu0 0.0
  %12519 = vmatpush1.xpose.msra.mxu0 0.0
  %12520 = vmatprep.subr.mxu0 0.0
  %12521 = vmatpush1.xpose.msra.mxu0 0.0
  %12522 = vmatprep.subr.mxu0 0.0
  %12523 = vmatpush1.xpose.msra.mxu0 0.0
  %12524 = vmatprep.subr.mxu0 0.0
  %12525 = vmatpush1.xpose.msra.mxu0 0.0
  %12526 = vmatprep.subr.mxu0 0.0
  %12527 = vmatpush1.xpose.msra.mxu0 0.0
  %12528 = vmatprep.subr.mxu0 0.0
  %12529 = vmatpush1.xpose.msra.mxu0 0.0
  %v12530 = vand.u32 %v10665, 4294901760
  %v12531 = vsub.f32 %v10665, %v12530
  %v12532 = vand.u32 %v12531, 4294901760
  %12533 = vmatprep.mubr.f32.mxu0 %v12532
  %v12534 = vand.u32 %v10661, 4294901760
  %v12535 = vsub.f32 %v10661, %v12534
  %v12536 = vand.u32 %v12535, 4294901760
  %12537 = vmatmul.mubr.f32.gmra.mrb[0].mxu0 %v12536
  %v12538 = vpop.f32.mrb[0].mxu0
  %v12539 = vadd.f32 %v12431, %v12538
  %v12540 = vpop.f32.mrb[0].mxu0
  %12541 = vdwg.mxu0
  %v12542 = vand.u32 %v10615, 4294901760
  %v12543 = vsub.f32 %v10615, %v12542
  %v12544 = vand.u32 %v12543, 4294901760
  %12545 = vmatprep.subr.mxu0 %v12544
  %v12546 = vand.u32 %v10614, 4294901760
  %v12547 = vsub.f32 %v10614, %v12546
  %v12548 = vand.u32 %v12547, 4294901760
  %12549 = vmatpush1.xpose.msra.mxu0 %v12548
  %v12550 = vand.u32 %v10617, 4294901760
  %v12551 = vsub.f32 %v10617, %v12550
  %v12552 = vand.u32 %v12551, 4294901760
  %12553 = vmatprep.subr.mxu0 %v12552
  %v12554 = vand.u32 %v10616, 4294901760
  %v12555 = vsub.f32 %v10616, %v12554
  %v12556 = vand.u32 %v12555, 4294901760
  %12557 = vmatpush1.xpose.msra.mxu0 %v12556
  %v12558 = vand.u32 %v10619, 4294901760
  %v12559 = vsub.f32 %v10619, %v12558
  %v12560 = vand.u32 %v12559, 4294901760
  %12561 = vmatprep.subr.mxu0 %v12560
  %v12562 = vand.u32 %v10618, 4294901760
  %v12563 = vsub.f32 %v10618, %v12562
  %v12564 = vand.u32 %v12563, 4294901760
  %12565 = vmatpush1.xpose.msra.mxu0 %v12564
  %v12566 = vand.u32 %v10621, 4294901760
  %v12567 = vsub.f32 %v10621, %v12566
  %v12568 = vand.u32 %v12567, 4294901760
  %12569 = vmatprep.subr.mxu0 %v12568
  %v12570 = vand.u32 %v10620, 4294901760
  %v12571 = vsub.f32 %v10620, %v12570
  %v12572 = vand.u32 %v12571, 4294901760
  %12573 = vmatpush1.xpose.msra.mxu0 %v12572
  %v12574 = vand.u32 %v10623, 4294901760
  %v12575 = vsub.f32 %v10623, %v12574
  %v12576 = vand.u32 %v12575, 4294901760
  %12577 = vmatprep.subr.mxu0 %v12576
  %v12578 = vand.u32 %v10622, 4294901760
  %v12579 = vsub.f32 %v10622, %v12578
  %v12580 = vand.u32 %v12579, 4294901760
  %12581 = vmatpush1.xpose.msra.mxu0 %v12580
  %v12582 = vand.u32 %v10625, 4294901760
  %v12583 = vsub.f32 %v10625, %v12582
  %v12584 = vand.u32 %v12583, 4294901760
  %12585 = vmatprep.subr.mxu0 %v12584
  %v12586 = vand.u32 %v10624, 4294901760
  %v12587 = vsub.f32 %v10624, %v12586
  %v12588 = vand.u32 %v12587, 4294901760
  %12589 = vmatpush1.xpose.msra.mxu0 %v12588
  %v12590 = vand.u32 %v10627, 4294901760
  %v12591 = vsub.f32 %v10627, %v12590
  %v12592 = vand.u32 %v12591, 4294901760
  %12593 = vmatprep.subr.mxu0 %v12592
  %v12594 = vand.u32 %v10626, 4294901760
  %v12595 = vsub.f32 %v10626, %v12594
  %v12596 = vand.u32 %v12595, 4294901760
  %12597 = vmatpush1.xpose.msra.mxu0 %v12596
  %v12598 = vand.u32 %v10629, 4294901760
  %v12599 = vsub.f32 %v10629, %v12598
  %v12600 = vand.u32 %v12599, 4294901760
  %12601 = vmatprep.subr.mxu0 %v12600
  %v12602 = vand.u32 %v10628, 4294901760
  %v12603 = vsub.f32 %v10628, %v12602
  %v12604 = vand.u32 %v12603, 4294901760
  %12605 = vmatpush1.xpose.msra.mxu0 %v12604
  %v12606 = vand.u32 %v10631, 4294901760
  %v12607 = vsub.f32 %v10631, %v12606
  %v12608 = vand.u32 %v12607, 4294901760
  %12609 = vmatprep.subr.mxu0 %v12608
  %v12610 = vand.u32 %v10630, 4294901760
  %v12611 = vsub.f32 %v10630, %v12610
  %v12612 = vand.u32 %v12611, 4294901760
  %12613 = vmatpush1.xpose.msra.mxu0 %v12612
  %v12614 = vand.u32 %v10633, 4294901760
  %v12615 = vsub.f32 %v10633, %v12614
  %v12616 = vand.u32 %v12615, 4294901760
  %12617 = vmatprep.subr.mxu0 %v12616
  %v12618 = vand.u32 %v10632, 4294901760
  %v12619 = vsub.f32 %v10632, %v12618
  %v12620 = vand.u32 %v12619, 4294901760
  %12621 = vmatpush1.xpose.msra.mxu0 %v12620
  %v12622 = vand.u32 %v10635, 4294901760
  %v12623 = vsub.f32 %v10635, %v12622
  %v12624 = vand.u32 %v12623, 4294901760
  %12625 = vmatprep.subr.mxu0 %v12624
  %v12626 = vand.u32 %v10634, 4294901760
  %v12627 = vsub.f32 %v10634, %v12626
  %v12628 = vand.u32 %v12627, 4294901760
  %12629 = vmatpush1.xpose.msra.mxu0 %v12628
  %v12630 = vand.u32 %v10637, 4294901760
  %v12631 = vsub.f32 %v10637, %v12630
  %v12632 = vand.u32 %v12631, 4294901760
  %12633 = vmatprep.subr.mxu0 %v12632
  %v12634 = vand.u32 %v10636, 4294901760
  %v12635 = vsub.f32 %v10636, %v12634
  %v12636 = vand.u32 %v12635, 4294901760
  %12637 = vmatpush1.xpose.msra.mxu0 %v12636
  %v12638 = vand.u32 %v10639, 4294901760
  %v12639 = vsub.f32 %v10639, %v12638
  %v12640 = vand.u32 %v12639, 4294901760
  %12641 = vmatprep.subr.mxu0 %v12640
  %v12642 = vand.u32 %v10638, 4294901760
  %v12643 = vsub.f32 %v10638, %v12642
  %v12644 = vand.u32 %v12643, 4294901760
  %12645 = vmatpush1.xpose.msra.mxu0 %v12644
  %v12646 = vand.u32 %v10641, 4294901760
  %v12647 = vsub.f32 %v10641, %v12646
  %v12648 = vand.u32 %v12647, 4294901760
  %12649 = vmatprep.subr.mxu0 %v12648
  %v12650 = vand.u32 %v10640, 4294901760
  %v12651 = vsub.f32 %v10640, %v12650
  %v12652 = vand.u32 %v12651, 4294901760
  %12653 = vmatpush1.xpose.msra.mxu0 %v12652
  %v12654 = vand.u32 %v10643, 4294901760
  %v12655 = vsub.f32 %v10643, %v12654
  %v12656 = vand.u32 %v12655, 4294901760
  %12657 = vmatprep.subr.mxu0 %v12656
  %v12658 = vand.u32 %v10642, 4294901760
  %v12659 = vsub.f32 %v10642, %v12658
  %v12660 = vand.u32 %v12659, 4294901760
  %12661 = vmatpush1.xpose.msra.mxu0 %v12660
  %v12662 = vand.u32 %v10645, 4294901760
  %v12663 = vsub.f32 %v10645, %v12662
  %v12664 = vand.u32 %v12663, 4294901760
  %12665 = vmatprep.subr.mxu0 %v12664
  %v12666 = vand.u32 %v10644, 4294901760
  %v12667 = vsub.f32 %v10644, %v12666
  %v12668 = vand.u32 %v12667, 4294901760
  %12669 = vmatpush1.xpose.msra.mxu0 %v12668
  %12670 = vmatprep.subr.mxu0 0.0
  %12671 = vmatpush1.xpose.msra.mxu0 0.0
  %12672 = vmatprep.subr.mxu0 0.0
  %12673 = vmatpush1.xpose.msra.mxu0 0.0
  %12674 = vmatprep.subr.mxu0 0.0
  %12675 = vmatpush1.xpose.msra.mxu0 0.0
  %12676 = vmatprep.subr.mxu0 0.0
  %12677 = vmatpush1.xpose.msra.mxu0 0.0
  %12678 = vmatprep.subr.mxu0 0.0
  %12679 = vmatpush1.xpose.msra.mxu0 0.0
  %12680 = vmatprep.subr.mxu0 0.0
  %12681 = vmatpush1.xpose.msra.mxu0 0.0
  %12682 = vmatprep.subr.mxu0 0.0
  %12683 = vmatpush1.xpose.msra.mxu0 0.0
  %12684 = vmatprep.subr.mxu0 0.0
  %12685 = vmatpush1.xpose.msra.mxu0 0.0
  %12686 = vmatprep.subr.mxu0 0.0
  %12687 = vmatpush1.xpose.msra.mxu0 0.0
  %12688 = vmatprep.subr.mxu0 0.0
  %12689 = vmatpush1.xpose.msra.mxu0 0.0
  %12690 = vmatprep.subr.mxu0 0.0
  %12691 = vmatpush1.xpose.msra.mxu0 0.0
  %12692 = vmatprep.subr.mxu0 0.0
  %12693 = vmatpush1.xpose.msra.mxu0 0.0
  %12694 = vmatprep.subr.mxu0 0.0
  %12695 = vmatpush1.xpose.msra.mxu0 0.0
  %12696 = vmatprep.subr.mxu0 0.0
  %12697 = vmatpush1.xpose.msra.mxu0 0.0
  %12698 = vmatprep.subr.mxu0 0.0
  %12699 = vmatpush1.xpose.msra.mxu0 0.0
  %12700 = vmatprep.subr.mxu0 0.0
  %12701 = vmatpush1.xpose.msra.mxu0 0.0
  %v12702 = vand.u32 %v10665, 4294901760
  %12703 = vmatprep.mubr.f32.mxu0 %v12702
  %v12704 = vand.u32 %v10661, 4294901760
  %12705 = vmatmul.mubr.f32.gmra.mrb[0].mxu0 %v12704
  %v12706 = vpop.f32.mrb[0].mxu0
  %v12707 = vadd.f32 %v12539, %v12706
  %v12708 = vpop.f32.mrb[0].mxu0
  %12709 = vdwg.mxu0
  %v12710 = vand.u32 %v10615, 4294901760
  %12711 = vmatprep.subr.mxu0 %v12710
  %v12712 = vand.u32 %v10614, 4294901760
  %12713 = vmatpush1.xpose.msra.mxu0 %v12712
  %v12714 = vand.u32 %v10617, 4294901760
  %12715 = vmatprep.subr.mxu0 %v12714
  %v12716 = vand.u32 %v10616, 4294901760
  %12717 = vmatpush1.xpose.msra.mxu0 %v12716
  %v12718 = vand.u32 %v10619, 4294901760
  %12719 = vmatprep.subr.mxu0 %v12718
  %v12720 = vand.u32 %v10618, 4294901760
  %12721 = vmatpush1.xpose.msra.mxu0 %v12720
  %v12722 = vand.u32 %v10621, 4294901760
  %12723 = vmatprep.subr.mxu0 %v12722
  %v12724 = vand.u32 %v10620, 4294901760
  %12725 = vmatpush1.xpose.msra.mxu0 %v12724
  %v12726 = vand.u32 %v10623, 4294901760
  %12727 = vmatprep.subr.mxu0 %v12726
  %v12728 = vand.u32 %v10622, 4294901760
  %12729 = vmatpush1.xpose.msra.mxu0 %v12728
  %v12730 = vand.u32 %v10625, 4294901760
  %12731 = vmatprep.subr.mxu0 %v12730
  %v12732 = vand.u32 %v10624, 4294901760
  %12733 = vmatpush1.xpose.msra.mxu0 %v12732
  %v12734 = vand.u32 %v10627, 4294901760
  %12735 = vmatprep.subr.mxu0 %v12734
  %v12736 = vand.u32 %v10626, 4294901760
  %12737 = vmatpush1.xpose.msra.mxu0 %v12736
  %v12738 = vand.u32 %v10629, 4294901760
  %12739 = vmatprep.subr.mxu0 %v12738
  %v12740 = vand.u32 %v10628, 4294901760
  %12741 = vmatpush1.xpose.msra.mxu0 %v12740
  %v12742 = vand.u32 %v10631, 4294901760
  %12743 = vmatprep.subr.mxu0 %v12742
  %v12744 = vand.u32 %v10630, 4294901760
  %12745 = vmatpush1.xpose.msra.mxu0 %v12744
  %v12746 = vand.u32 %v10633, 4294901760
  %12747 = vmatprep.subr.mxu0 %v12746
  %v12748 = vand.u32 %v10632, 4294901760
  %12749 = vmatpush1.xpose.msra.mxu0 %v12748
  %v12750 = vand.u32 %v10635, 4294901760
  %12751 = vmatprep.subr.mxu0 %v12750
  %v12752 = vand.u32 %v10634, 4294901760
  %12753 = vmatpush1.xpose.msra.mxu0 %v12752
  %v12754 = vand.u32 %v10637, 4294901760
  %12755 = vmatprep.subr.mxu0 %v12754
  %v12756 = vand.u32 %v10636, 4294901760
  %12757 = vmatpush1.xpose.msra.mxu0 %v12756
  %v12758 = vand.u32 %v10639, 4294901760
  %12759 = vmatprep.subr.mxu0 %v12758
  %v12760 = vand.u32 %v10638, 4294901760
  %12761 = vmatpush1.xpose.msra.mxu0 %v12760
  %v12762 = vand.u32 %v10641, 4294901760
  %12763 = vmatprep.subr.mxu0 %v12762
  %v12764 = vand.u32 %v10640, 4294901760
  %12765 = vmatpush1.xpose.msra.mxu0 %v12764
  %v12766 = vand.u32 %v10643, 4294901760
  %12767 = vmatprep.subr.mxu0 %v12766
  %v12768 = vand.u32 %v10642, 4294901760
  %12769 = vmatpush1.xpose.msra.mxu0 %v12768
  %v12770 = vand.u32 %v10645, 4294901760
  %12771 = vmatprep.subr.mxu0 %v12770
  %v12772 = vand.u32 %v10644, 4294901760
  %12773 = vmatpush1.xpose.msra.mxu0 %v12772
  %12774 = vmatprep.subr.mxu0 0.0
  %12775 = vmatpush1.xpose.msra.mxu0 0.0
  %12776 = vmatprep.subr.mxu0 0.0
  %12777 = vmatpush1.xpose.msra.mxu0 0.0
  %12778 = vmatprep.subr.mxu0 0.0
  %12779 = vmatpush1.xpose.msra.mxu0 0.0
  %12780 = vmatprep.subr.mxu0 0.0
  %12781 = vmatpush1.xpose.msra.mxu0 0.0
  %12782 = vmatprep.subr.mxu0 0.0
  %12783 = vmatpush1.xpose.msra.mxu0 0.0
  %12784 = vmatprep.subr.mxu0 0.0
  %12785 = vmatpush1.xpose.msra.mxu0 0.0
  %12786 = vmatprep.subr.mxu0 0.0
  %12787 = vmatpush1.xpose.msra.mxu0 0.0
  %12788 = vmatprep.subr.mxu0 0.0
  %12789 = vmatpush1.xpose.msra.mxu0 0.0
  %12790 = vmatprep.subr.mxu0 0.0
  %12791 = vmatpush1.xpose.msra.mxu0 0.0
  %12792 = vmatprep.subr.mxu0 0.0
  %12793 = vmatpush1.xpose.msra.mxu0 0.0
  %12794 = vmatprep.subr.mxu0 0.0
  %12795 = vmatpush1.xpose.msra.mxu0 0.0
  %12796 = vmatprep.subr.mxu0 0.0
  %12797 = vmatpush1.xpose.msra.mxu0 0.0
  %12798 = vmatprep.subr.mxu0 0.0
  %12799 = vmatpush1.xpose.msra.mxu0 0.0
  %12800 = vmatprep.subr.mxu0 0.0
  %12801 = vmatpush1.xpose.msra.mxu0 0.0
  %12802 = vmatprep.subr.mxu0 0.0
  %12803 = vmatpush1.xpose.msra.mxu0 0.0
  %12804 = vmatprep.subr.mxu0 0.0
  %12805 = vmatpush1.xpose.msra.mxu0 0.0
  %v12806 = vand.u32 %v10665, 4294901760
  %12807 = vmatprep.mubr.f32.mxu0 %v12806
  %v12808 = vand.u32 %v10661, 4294901760
  %12809 = vmatmul.mubr.f32.gmra.mrb[0].mxu0 %v12808
  %v12810 = vpop.f32.mrb[0].mxu0
  %v12811 = vadd.f32 %v12707, %v12810
  %v12812 = vpop.f32.mrb[0].mxu0
  %12813 = vdwg.mxu0
  %v12817 = vcombine.low %v11948, %v11950
  %v12819 = vunpack.c.l.s4 1966171168
  %v12820 = vunpack.c.0.s8 %v12819
  %v12821 = vlaneseq
  %v12822 = vshrl.u32 %v12821, 7
  %v12823 = vsub.s32 %v12820, %v12822
  %v12824 = vrot.slane %v12817, %v12823
  %v12826 = vunpack.c.l.s4 1966171168
  %v12827 = vunpack.c.0.s8 %v12826
  %v12828 = vlaneseq
  %v12829 = vshrl.u32 %v12828, 7
  %v12830 = vsub.s32 %v12827, %v12829
  %v12831 = vrot.slane %v12811, %v12830
  %v12832 = vcombine.low %v12824, %v12831
  %v12834 = vunpack.c.l.s4 1966171168
  %v12835 = vunpack.c.0.s8 %v12834
  %v12836 = vlaneseq
  %v12837 = vshrl.u32 %v12836, 7
  %v12838 = vsub.s32 %v12835, %v12837
  %v12839 = vrot.slane %v12832, %v12838
  %v12841 = vlaneseq
  %vm12842 = vcmp.ge.s32.totalorder %v12841, 0
  %vm12843 = vcmp.lt.s32.totalorder %v12841, 384
  %vm12844 = vmand %vm12842, %vm12843
  %12845 = vst.msk [vmem:[%s9] sm:$0x7] %vm12844, %v12839
  // Predicated region
  $region38: #{soft_q_forward.1} parent=0 // pred_check
    _
  $region39: #{soft_q_forward.1} parent=0 // pred_check_branch
    %12847 = sbr.rel (0) target = $region41
  $region40: #{soft_q_forward.1} parent=0 // pred_region
    _
  $region41: #{soft_q_forward.1} parent=0 // pred_fallthru
    _
  // Predicated region
  $region42: #{soft_q_forward.1} parent=0 // pred_check
    _
  $region43: #{soft_q_forward.1} parent=0 // pred_check_branch
    %12849 = sbr.rel (0) target = $region45
  $region44: #{soft_q_forward.1} parent=0 // pred_region
    _
  $region45: #{soft_q_forward.1} parent=0 // pred_fallthru
    _

</llo_original>
